<compile_context>
chip_gen: v6e
topology: v6e:2x2x1
jax: 0.10.0
libtpu: 0.0.40
codegen_flags: <defaults>
</compile_context>

<pallas_src>
import functools

import jax
import jax.numpy as jnp
from jax.experimental import pallas as pl
from jax.experimental.pallas import tpu as pltpu


# ------------------------------------------------------------------ kernel --

def _inception_kernel(x_ref, wbig_ref, bbig_ref, w4_ref, b4_ref,
                      w22_ref, w32_ref, o_ref,
                      pool_pad, y2_pad, y3_pad, p2_ref, p3_ref, pooled_ref,
                      *, H, W, c1, c3r, c5r):
    """Whole Inception block for one block of B_t images (one grid step).

    Output channel layout (single lane-dense store, no separate concat pass):
      [0, c1) branch1 | [c1, c1+ch3) branch2 | [.., +ch5) branch3 | rest branch4
    All BatchNorms are pre-folded into the 1x1 weights/biases in the wrapper.
    """
    B_t, M, Cin = x_ref.shape
    ch3 = w22_ref.shape[1]
    ch5 = w32_ref.shape[1]
    ctot = o_ref.shape[-1]
    cdt = x_ref.dtype
    odt = o_ref.dtype

    # ---- border init of the padded scratches: thin strips only (interiors are
    #      fully overwritten for every image).  Runs every grid step so it stays
    #      correct when the "parallel" batch axis is split across TensorCores.
    pool_pad[pl.ds(0, 1), :, :] = jnp.full((1, W + 2, Cin), -jnp.inf, cdt)
    pool_pad[pl.ds(H + 1, 1), :, :] = jnp.full((1, W + 2, Cin), -jnp.inf, cdt)
    pool_pad[:, pl.ds(0, 1), :] = jnp.full((H + 2, 1, Cin), -jnp.inf, cdt)
    pool_pad[:, pl.ds(W + 1, 1), :] = jnp.full((H + 2, 1, Cin), -jnp.inf, cdt)

    y2_pad[pl.ds(0, 1), :, :] = jnp.zeros((1, W + 2, c3r), cdt)
    y2_pad[pl.ds(H + 1, 1), :, :] = jnp.zeros((1, W + 2, c3r), cdt)
    y2_pad[:, pl.ds(0, 1), :] = jnp.zeros((H + 2, 1, c3r), cdt)
    y2_pad[:, pl.ds(W + 1, 1), :] = jnp.zeros((H + 2, 1, c3r), cdt)

    y3_pad[pl.ds(0, 2), :, :] = jnp.zeros((2, W + 4, c5r), cdt)
    y3_pad[pl.ds(H + 2, 2), :, :] = jnp.zeros((2, W + 4, c5r), cdt)
    y3_pad[:, pl.ds(0, 2), :] = jnp.zeros((H + 4, 2, c5r), cdt)
    y3_pad[:, pl.ds(W + 2, 2), :] = jnp.zeros((H + 4, 2, c5r), cdt)

    # ---- fused 1x1 stage: ONE MXU matmul for [branch1 | y2(+BN2) | y3(+BN3)],
    #      directly on the flat (B_t*M, Cin) block (no in-kernel relayout).
    xf = x_ref[...].reshape(B_t * M, Cin)
    y = jnp.dot(xf, wbig_ref[...],
                preferred_element_type=jnp.float32) + bbig_ref[...]

    # ---- per-image: maxpool + im2col patch extraction (all VMEM-resident).
    for b in range(B_t):
        img = xf[b * M:(b + 1) * M, :].reshape(H, W, Cin)

        # branch4 pool: 3x3 max, stride 1, pad 1 (-inf border); running max
        # starts at the always-valid centre tap -> 8 compares, no full init.
        pool_pad[pl.ds(1, H), pl.ds(1, W), :] = img
        pooled_b = img
        for kh in range(3):
            for kw in range(3):
                if kh == 1 and kw == 1:
                    continue
                pooled_b = jnp.maximum(
                    pooled_b, pool_pad[pl.ds(kh, H), pl.ds(kw, W), :])
        pooled_ref[pl.ds(b * M, M), :] = pooled_b.reshape(M, Cin)

        # branch2: zero-padded y2 -> im2col patches (M, 9*c3r); y2 never
        # leaves VMEM.  (bf16 truncation of y2 is accepted; see tolerances.)
        y2_pad[pl.ds(1, H), pl.ds(1, W), :] = (
            y[b * M:(b + 1) * M, c1:c1 + c3r].reshape(H, W, c3r).astype(cdt))
        for kh in range(3):
            for kw in range(3):
                t = kh * 3 + kw
                p2_ref[pl.ds(b * M, M), pl.ds(t * c3r, c3r)] = (
                    y2_pad[pl.ds(kh, H), pl.ds(kw, W), :].reshape(M, c3r))

        # branch3: zero-padded y3 -> im2col patches (M, 25*c5r).
        y3_pad[pl.ds(2, H), pl.ds(2, W), :] = (
            y[b * M:(b + 1) * M, c1 + c3r:c1 + c3r + c5r]
            .reshape(H, W, c5r).astype(cdt))
        for kh in range(5):
            for kw in range(5):
                t = kh * 5 + kw
                p3_ref[pl.ds(b * M, M), pl.ds(t * c5r, c5r)] = (
                    y3_pad[pl.ds(kh, H), pl.ds(kw, W), :].reshape(M, c5r))

    # ---- conv / pool-projection branches: one big MXU matmul each
    #      (contraction depth 9*c3r / 25*c5r / Cin), f32 accumulation.
    b2 = jnp.dot(p2_ref[...], w22_ref[...], preferred_element_type=jnp.float32)
    b3 = jnp.dot(p3_ref[...], w32_ref[...], preferred_element_type=jnp.float32)
    b4 = jnp.dot(pooled_ref[...], w4_ref[...],
                 preferred_element_type=jnp.float32) + b4_ref[...]

    # ---- single lane-dense store of the concatenated output slab.
    out = jnp.concatenate([y[:, :c1], b2, b3, b4], axis=-1).astype(odt)
    o_ref[...] = out.reshape(B_t, M, ctot)


# ----------------------------------------------------------------- wrapper --

def _resident_spec(arr):
    """Full-array block, same block index every step -> stays resident in VMEM."""
    nd = arr.ndim
    return pl.BlockSpec(arr.shape, lambda n, nd=nd: (0,) * nd)


def inception_forward(x_nchw, p, compute_dtype=jnp.bfloat16, out_dtype=None,
                      images_per_block=None, vmem_limit_bytes=None):
    """Inception forward; accepts / returns NCHW like the PyTorch module."""
    f32 = jnp.float32
    N, Cin, H, W = x_nchw.shape
    M = H * W

    def io(w):  # (O, I, 1, 1) OIHW 1x1 conv weight -> (I, O)
        return jnp.transpose(w[:, :, 0, 0], (1, 0)).astype(f32)

    w1_io, w21_io = io(p['w1']), io(p['w21'])
    w31_io, w4_io = io(p['w31']), io(p['w4'])
    s0, t0 = p['s0'].astype(f32), p['t0'].astype(f32)
    s2, t2 = p['s2'].astype(f32), p['t2'].astype(f32)
    s3, t3 = p['s3'].astype(f32), p['t3'].astype(f32)
    s4, t4 = p['s4'].astype(f32), p['t4'].astype(f32)

    # Eval-mode BN folding:
    #   BN0(x) @ Wio           = x @ (s0[:,None] * Wio) + t0 @ Wio
    #   (...) * s_out + t_out  = x @ (s0[:,None]*Wio*s_out) + (t0@Wio)*s_out + t_out
    w1f, b1f = s0[:, None] * w1_io, t0 @ w1_io
    w21f = s0[:, None] * w21_io * s2[None, :]
    b21f = (t0 @ w21_io) * s2 + t2
    w31f = s0[:, None] * w31_io * s3[None, :]
    b31f = (t0 @ w31_io) * s3 + t3
    wbig = jnp.concatenate([w1f, w21f, w31f], axis=1)           # (Cin, c1+c3r+c5r)
    bbig = jnp.concatenate([b1f, b21f, b31f], axis=0)[None, :]  # (1,  c1+c3r+c5r)
    w4f = s4[:, None] * w4_io                                   # (Cin, pool_proj)
    b4f = (t4 @ w4_io)[None, :]                                 # (1,  pool_proj)

    c1 = w1_io.shape[1]
    ch3, c3r = p['w22'].shape[0], p['w22'].shape[1]
    ch5, c5r = p['w32'].shape[0], p['w32'].shape[1]
    cpool = w4_io.shape[1]
    ctot = c1 + ch3 + ch5 + cpool
    n1 = c1 + c3r + c5r

    # KxK conv weights -> im2col layout (K*K*Cred, Cout): the patch column
    # block for tap (kh, kw) multiplies W[:, :, kh, kw].T.
    w22 = jnp.transpose(p['w22'], (2, 3, 1, 0)).reshape(9 * c3r, ch3)
    w32 = jnp.transpose(p['w32'], (2, 3, 1, 0)).reshape(25 * c5r, ch5)

    cdt = compute_dtype
    odt = compute_dtype if out_dtype is None else out_dtype
    ci, oi = jnp.dtype(cdt).itemsize, jnp.dtype(odt).itemsize

    def vmem_need(bt):
        io_blocks = 2 * bt * M * Cin * ci + 2 * bt * M * ctot * oi
        weights = 2 * ((Cin * n1 + Cin * cpool + 9 * c3r * ch3
                        + 25 * c5r * ch5) * ci + (n1 + cpool) * 4)
        scratch = ((H + 2) * (W + 2) * (Cin + c3r)
                   + (H + 4) * (W + 4) * c5r
                   + bt * M * (9 * c3r + 25 * c5r + Cin)) * ci
        f32_tmp = bt * M * (n1 + ch3 + ch5 + cpool + ctot) * 4
        return io_blocks + weights + scratch + f32_tmp

    if images_per_block is None:
        budget = 24 << 20          # conservative vs v7x's 64 MiB VMEM per TC
        images_per_block = 1
        for d in range(1, N + 1):
            if N % d:
                continue
            if N >= 2 and N // d < 2:
                continue            # keep >= 2 grid steps for the megacore split
            if vmem_need(d) <= budget:
                images_per_block = d
    B_t = images_per_block
    assert N % B_t == 0, (N, B_t)

    if vmem_limit_bytes is None:    # derived from actual need, not a blanket value
        vmem_limit_bytes = min(max(int(1.5 * vmem_need(B_t)) + (2 << 20),
                                   4 << 20), 48 << 20)

    # NCHW -> flat (N, H*W, C) in the compute dtype; the reshape is free in HBM.
    x_flat = jnp.transpose(x_nchw, (0, 2, 3, 1)).reshape(N, M, Cin).astype(cdt)
    wbig_c, w4_c = wbig.astype(cdt), w4f.astype(cdt)
    w22_c, w32_c = w22.astype(cdt), w32.astype(cdt)

    kernel = functools.partial(_inception_kernel, H=H, W=W,
                               c1=c1, c3r=c3r, c5r=c5r)

    out_flat = pl.pallas_call(
        kernel,
        grid=(N // B_t,),
        in_specs=[
            pl.BlockSpec((B_t, M, Cin), lambda n: (n, 0, 0)),   # B_t images/step
            _resident_spec(wbig_c), _resident_spec(bbig),
            _resident_spec(w4_c), _resident_spec(b4f),
            _resident_spec(w22_c), _resident_spec(w32_c),
        ],
        out_specs=pl.BlockSpec((B_t, M, ctot), lambda n: (n, 0, 0)),
        out_shape=jax.ShapeDtypeStruct((N, M, ctot), odt),
        scratch_shapes=[
            pltpu.VMEM((H + 2, W + 2, Cin), cdt),     # -inf padded x (maxpool)
            pltpu.VMEM((H + 2, W + 2, c3r), cdt),     # zero-padded y2
            pltpu.VMEM((H + 4, W + 4, c5r), cdt),     # zero-padded y3
            pltpu.VMEM((B_t * M, 9 * c3r), cdt),      # im2col patches, 3x3
            pltpu.VMEM((B_t * M, 25 * c5r), cdt),     # im2col patches, 5x5
            pltpu.VMEM((B_t * M, Cin), cdt),          # pooled x (branch4)
        ],
        compiler_params=pltpu.CompilerParams(
            dimension_semantics=("parallel",),        # 2-TC parts split the batch
            vmem_limit_bytes=vmem_limit_bytes),
    )(x_flat, wbig_c, bbig, w4_c, b4f, w22_c, w32_c)

    # TODO(synk): downstream consumers could keep this flat NHWC layout; the
    #             transpose exists only to match the PyTorch module's NCHW
    #             output (and runs in the narrow output dtype).
    return jnp.transpose(out_flat.reshape(N, H, W, ctot), (0, 3, 1, 2))


# ---------------------------------------------------------------- reference --

def ref_forward(x, p):
    def bn(z, s, t):
        return z * s[None, :, None, None] + t[None, :, None, None]

    def conv(z, w, pad):
        return jax.lax.conv_general_dilated(
            z, w, window_strides=(1, 1), padding=((pad, pad), (pad, pad)),
            dimension_numbers=('NCHW', 'OIHW', 'NCHW'))

    xp = jnp.pad(x, ((0, 0), (0, 0), (1, 1), (1, 1)), constant_values=-jnp.inf)
    pooled = jax.lax.reduce_window(xp, -jnp.inf, jax.lax.max,
                                   (1, 1, 3, 3), (1, 1, 1, 1), 'VALID')
    b4 = conv(bn(pooled, p['s4'], p['t4']), p['w4'], 0)
    xb = bn(x, p['s0'], p['t0'])
    b1 = conv(xb, p['w1'], 0)
    b2 = conv(bn(conv(xb, p['w21'], 0), p['s2'], p['t2']), p['w22'], 1)
    b3 = conv(bn(conv(xb, p['w31'], 0), p['s3'], p['t3']), p['w32'], 2)
    return jnp.concatenate([b1, b2, b3, b4], axis=1)


# --------------------------------------------------------------------- main --

def _bn_params(key, c, eps=1e-3):
    k1, k2, k3, k4 = jax.random.split(key, 4)
    gamma = 1.0 + 0.1 * jax.random.normal(k1, (c,), jnp.float32)
    beta = 0.1 * jax.random.normal(k2, (c,), jnp.float32)
    mean = 0.1 * jax.random.normal(k3, (c,), jnp.float32)
    var = jnp.abs(jax.random.normal(k4, (c,), jnp.float32)) + 0.5
    scale = gamma / jnp.sqrt(var + eps)
    shift = beta - mean * scale
    return scale, shift


def _conv_w(key, cout, cin, k):
    return 0.1 * jax.random.normal(key, (cout, cin, k, k), jnp.float32)


if __name__ == "__main__":
    N, Cin, H, W = 2, 4, 16, 16
    ch1x1, ch3x3red, ch3x3, ch5x5red, ch5x5, pool_proj = 4, 4, 8, 4, 8, 4

    key = jax.random.PRNGKey(0)
    ks = jax.random.split(key, 11)

    s0, t0 = _bn_params(ks[0], Cin)           # outer self.bn
    s2, t2 = _bn_params(ks[1], ch3x3red)      # branch2_2.bn
    s3, t3 = _bn_params(ks[2], ch5x5red)      # branch3_2.bn
    s4, t4 = _bn_params(ks[3], Cin)           # branch4.bn

    params = dict(
        s0=s0, t0=t0, s2=s2, t2=t2, s3=s3, t3=t3, s4=s4, t4=t4,
        w1=_conv_w(ks[4], ch1x1, Cin, 1),
        w21=_conv_w(ks[5], ch3x3red, Cin, 1),
        w22=_conv_w(ks[6], ch3x3, ch3x3red, 3),
        w31=_conv_w(ks[7], ch5x5red, Cin, 1),
        w32=_conv_w(ks[8], ch5x5, ch5x5red, 5),
        w4=_conv_w(ks[9], pool_proj, Cin, 1),
    )

    x = jax.random.normal(ks[10], (N, Cin, H, W), jnp.float32)
    ref = ref_forward(x, params)
    out_shape = (N, ch1x1 + ch3x3 + ch5x5 + pool_proj, H, W)

    # Tight structural check with f32 compute / f32 output inside the kernel.
    out_f32 = jax.block_until_ready(
        inception_forward(x, params, compute_dtype=jnp.float32))
    assert out_f32.shape == out_shape, out_f32.shape
    assert jnp.allclose(out_f32, ref, rtol=1e-4, atol=1e-4), \
        float(jnp.max(jnp.abs(out_f32 - ref)))

    # Default bf16 compute + bf16 output (MXU/HBM-friendly), f32 accumulation.
    out = jax.block_until_ready(inception_forward(x, params))
    assert out.shape == out_shape, out.shape
    assert jnp.allclose(out, ref, rtol=5e-2, atol=5e-2), \
        float(jnp.max(jnp.abs(out.astype(jnp.float32) - ref)))

    print("KERNEL_OK")
</pallas_src>

<mosaic_0001>
module attributes {stable_mosaic.version = 11 : i64} {
  func.func @_inception_kernel(%arg0: i32, %arg1: memref<1x256x4xf32, #tpu.memory_space<vmem>>, %arg2: memref<4x12xf32, #tpu.memory_space<vmem>>, %arg3: memref<1x12xf32, #tpu.memory_space<vmem>>, %arg4: memref<4x4xf32, #tpu.memory_space<vmem>>, %arg5: memref<1x4xf32, #tpu.memory_space<vmem>>, %arg6: memref<36x8xf32, #tpu.memory_space<vmem>>, %arg7: memref<100x8xf32, #tpu.memory_space<vmem>>, %arg8: memref<1x256x24xf32, #tpu.memory_space<vmem>>, %arg9: memref<18x18x4xf32, #tpu.memory_space<vmem>>, %arg10: memref<18x18x4xf32, #tpu.memory_space<vmem>>, %arg11: memref<20x20x4xf32, #tpu.memory_space<vmem>>, %arg12: memref<256x36xf32, #tpu.memory_space<vmem>>, %arg13: memref<256x100xf32, #tpu.memory_space<vmem>>, %arg14: memref<256x4xf32, #tpu.memory_space<vmem>>) attributes {dimension_semantics = [#tpu.dimension_semantics<parallel>], iteration_bounds = array<i64: 2>, scalar_prefetch = 0 : i64, scratch_operands = 6 : i64, tpu.core_type = #tpu.core_type<tc>, window_params = [{transform_indices = @transform_0, window_bounds = array<i64: 1, 256, 4>}, {pipeline_mode = #tpu.pipeline_mode<synchronous>, transform_indices = @transform_1, window_bounds = array<i64: 4, 12>}, {pipeline_mode = #tpu.pipeline_mode<synchronous>, transform_indices = @transform_2, window_bounds = array<i64: 1, 12>}, {pipeline_mode = #tpu.pipeline_mode<synchronous>, transform_indices = @transform_3, window_bounds = array<i64: 4, 4>}, {pipeline_mode = #tpu.pipeline_mode<synchronous>, transform_indices = @transform_4, window_bounds = array<i64: 1, 4>}, {pipeline_mode = #tpu.pipeline_mode<synchronous>, transform_indices = @transform_5, window_bounds = array<i64: 36, 8>}, {pipeline_mode = #tpu.pipeline_mode<synchronous>, transform_indices = @transform_6, window_bounds = array<i64: 100, 8>}, {transform_indices = @transform_7, window_bounds = array<i64: 1, 256, 24>}]} {
    %cst = arith.constant 0xFF800000 : f32
    %0 = vector.broadcast %cst : f32 to vector<1x18x4xf32>
    %c0 = arith.constant 0 : index
    %c0_0 = arith.constant 0 : index
    %c0_1 = arith.constant 0 : index
    %1 = vector.load %arg9[%c0, %c0_0, %c0_1] : memref<18x18x4xf32, #tpu.memory_space<vmem>>, vector<1x18x4xf32>
    tpu.vector_store %arg9[%c0, %c0_0, %c0_1], %0 {strides = array<i32>} : memref<18x18x4xf32, #tpu.memory_space<vmem>>, vector<1x18x4xf32>,
    %cst_2 = arith.constant 0xFF800000 : f32
    %2 = vector.broadcast %cst_2 : f32 to vector<1x18x4xf32>
    %c17 = arith.constant 17 : index
    %c0_3 = arith.constant 0 : index
    %c0_4 = arith.constant 0 : index
    %3 = vector.load %arg9[%c17, %c0_3, %c0_4] : memref<18x18x4xf32, #tpu.memory_space<vmem>>, vector<1x18x4xf32>
    tpu.vector_store %arg9[%c17, %c0_3, %c0_4], %2 {strides = array<i32>} : memref<18x18x4xf32, #tpu.memory_space<vmem>>, vector<1x18x4xf32>,
    %cst_5 = arith.constant 0xFF800000 : f32
    %4 = vector.broadcast %cst_5 : f32 to vector<18x1x4xf32>
    %c0_6 = arith.constant 0 : index
    %c0_7 = arith.constant 0 : index
    %c0_8 = arith.constant 0 : index
    %5 = vector.load %arg9[%c0_6, %c0_7, %c0_8] : memref<18x18x4xf32, #tpu.memory_space<vmem>>, vector<18x1x4xf32>
    tpu.vector_store %arg9[%c0_6, %c0_7, %c0_8], %4 {strides = array<i32>} : memref<18x18x4xf32, #tpu.memory_space<vmem>>, vector<18x1x4xf32>,
    %cst_9 = arith.constant 0xFF800000 : f32
    %6 = vector.broadcast %cst_9 : f32 to vector<18x1x4xf32>
    %c0_10 = arith.constant 0 : index
    %c17_11 = arith.constant 17 : index
    %c0_12 = arith.constant 0 : index
    %7 = vector.load %arg9[%c0_10, %c17_11, %c0_12] : memref<18x18x4xf32, #tpu.memory_space<vmem>>, vector<18x1x4xf32>
    tpu.vector_store %arg9[%c0_10, %c17_11, %c0_12], %6 {strides = array<i32>} : memref<18x18x4xf32, #tpu.memory_space<vmem>>, vector<18x1x4xf32>,
    %cst_13 = arith.constant 0.000000e+00 : f32
    %8 = vector.broadcast %cst_13 : f32 to vector<1x18x4xf32>
    %c0_14 = arith.constant 0 : index
    %c0_15 = arith.constant 0 : index
    %c0_16 = arith.constant 0 : index
    %9 = vector.load %arg10[%c0_14, %c0_15, %c0_16] : memref<18x18x4xf32, #tpu.memory_space<vmem>>, vector<1x18x4xf32>
    tpu.vector_store %arg10[%c0_14, %c0_15, %c0_16], %8 {strides = array<i32>} : memref<18x18x4xf32, #tpu.memory_space<vmem>>, vector<1x18x4xf32>,
    %cst_17 = arith.constant 0.000000e+00 : f32
    %10 = vector.broadcast %cst_17 : f32 to vector<1x18x4xf32>
    %c17_18 = arith.constant 17 : index
    %c0_19 = arith.constant 0 : index
    %c0_20 = arith.constant 0 : index
    %11 = vector.load %arg10[%c17_18, %c0_19, %c0_20] : memref<18x18x4xf32, #tpu.memory_space<vmem>>, vector<1x18x4xf32>
    tpu.vector_store %arg10[%c17_18, %c0_19, %c0_20], %10 {strides = array<i32>} : memref<18x18x4xf32, #tpu.memory_space<vmem>>, vector<1x18x4xf32>,
    %cst_21 = arith.constant 0.000000e+00 : f32
    %12 = vector.broadcast %cst_21 : f32 to vector<18x1x4xf32>
    %c0_22 = arith.constant 0 : index
    %c0_23 = arith.constant 0 : index
    %c0_24 = arith.constant 0 : index
    %13 = vector.load %arg10[%c0_22, %c0_23, %c0_24] : memref<18x18x4xf32, #tpu.memory_space<vmem>>, vector<18x1x4xf32>
    tpu.vector_store %arg10[%c0_22, %c0_23, %c0_24], %12 {strides = array<i32>} : memref<18x18x4xf32, #tpu.memory_space<vmem>>, vector<18x1x4xf32>,
    %cst_25 = arith.constant 0.000000e+00 : f32
    %14 = vector.broadcast %cst_25 : f32 to vector<18x1x4xf32>
    %c0_26 = arith.constant 0 : index
    %c17_27 = arith.constant 17 : index
    %c0_28 = arith.constant 0 : index
    %15 = vector.load %arg10[%c0_26, %c17_27, %c0_28] : memref<18x18x4xf32, #tpu.memory_space<vmem>>, vector<18x1x4xf32>
    tpu.vector_store %arg10[%c0_26, %c17_27, %c0_28], %14 {strides = array<i32>} : memref<18x18x4xf32, #tpu.memory_space<vmem>>, vector<18x1x4xf32>,
    %cst_29 = arith.constant 0.000000e+00 : f32
    %16 = vector.broadcast %cst_29 : f32 to vector<2x20x4xf32>
    %c0_30 = arith.constant 0 : index
    %c0_31 = arith.constant 0 : index
    %c0_32 = arith.constant 0 : index
    %17 = vector.load %arg11[%c0_30, %c0_31, %c0_32] : memref<20x20x4xf32, #tpu.memory_space<vmem>>, vector<2x20x4xf32>
    tpu.vector_store %arg11[%c0_30, %c0_31, %c0_32], %16 {strides = array<i32>} : memref<20x20x4xf32, #tpu.memory_space<vmem>>, vector<2x20x4xf32>,
    %cst_33 = arith.constant 0.000000e+00 : f32
    %18 = vector.broadcast %cst_33 : f32 to vector<2x20x4xf32>
    %c18 = arith.constant 18 : index
    %c0_34 = arith.constant 0 : index
    %c0_35 = arith.constant 0 : index
    %19 = vector.load %arg11[%c18, %c0_34, %c0_35] : memref<20x20x4xf32, #tpu.memory_space<vmem>>, vector<2x20x4xf32>
    tpu.vector_store %arg11[%c18, %c0_34, %c0_35], %18 {strides = array<i32>} : memref<20x20x4xf32, #tpu.memory_space<vmem>>, vector<2x20x4xf32>,
    %cst_36 = arith.constant 0.000000e+00 : f32
    %20 = vector.broadcast %cst_36 : f32 to vector<20x2x4xf32>
    %c0_37 = arith.constant 0 : index
    %c0_38 = arith.constant 0 : index
    %c0_39 = arith.constant 0 : index
    %21 = vector.load %arg11[%c0_37, %c0_38, %c0_39] : memref<20x20x4xf32, #tpu.memory_space<vmem>>, vector<20x2x4xf32>
    tpu.vector_store %arg11[%c0_37, %c0_38, %c0_39], %20 {strides = array<i32>} : memref<20x20x4xf32, #tpu.memory_space<vmem>>, vector<20x2x4xf32>,
    %cst_40 = arith.constant 0.000000e+00 : f32
    %22 = vector.broadcast %cst_40 : f32 to vector<20x2x4xf32>
    %c0_41 = arith.constant 0 : index
    %c18_42 = arith.constant 18 : index
    %c0_43 = arith.constant 0 : index
    %23 = vector.load %arg11[%c0_41, %c18_42, %c0_43] : memref<20x20x4xf32, #tpu.memory_space<vmem>>, vector<20x2x4xf32>
    tpu.vector_store %arg11[%c0_41, %c18_42, %c0_43], %22 {strides = array<i32>} : memref<20x20x4xf32, #tpu.memory_space<vmem>>, vector<20x2x4xf32>,
    %c0_44 = arith.constant 0 : index
    %c0_45 = arith.constant 0 : index
    %c0_46 = arith.constant 0 : index
    %24 = vector.load %arg1[%c0_44, %c0_45, %c0_46] : memref<1x256x4xf32, #tpu.memory_space<vmem>>, vector<1x256x4xf32>
    %25 = vector.shape_cast %24 : vector<1x256x4xf32> to vector<256x4xf32>
    %c0_47 = arith.constant 0 : index
    %c0_48 = arith.constant 0 : index
    %26 = vector.load %arg2[%c0_47, %c0_48] : memref<4x12xf32, #tpu.memory_space<vmem>>, vector<4x12xf32>
    %cst_49 = arith.constant dense<0.000000e+00> : vector<256x12xf32>
    %27 = tpu.matmul %25, %26, %cst_49 {dimension_numbers = #tpu.dot_dimension_numbers<[1], [0], [0], [1], [0, 0, 1, 1], [], []>} : vector<256x4xf32>, vector<4x12xf32>, vector<256x12xf32> -> vector<256x12xf32>
    %c0_50 = arith.constant 0 : index
    %c0_51 = arith.constant 0 : index
    %28 = vector.load %arg3[%c0_50, %c0_51] : memref<1x12xf32, #tpu.memory_space<vmem>>, vector<1x12xf32>
    %29 = vector.broadcast %28 : vector<1x12xf32> to vector<256x12xf32>
    %30 = arith.addf %27, %29 : vector<256x12xf32>
    %31 = vector.shape_cast %25 : vector<256x4xf32> to vector<16x16x4xf32>
    %c1 = arith.constant 1 : index
    %c1_52 = arith.constant 1 : index
    %c0_53 = arith.constant 0 : index
    %32 = vector.load %arg9[%c1, %c1_52, %c0_53] : memref<18x18x4xf32, #tpu.memory_space<vmem>>, vector<16x16x4xf32>
    tpu.vector_store %arg9[%c1, %c1_52, %c0_53], %31 {strides = array<i32>} : memref<18x18x4xf32, #tpu.memory_space<vmem>>, vector<16x16x4xf32>,
    %c0_54 = arith.constant 0 : index
    %c0_55 = arith.constant 0 : index
    %c0_56 = arith.constant 0 : index
    %33 = vector.load %arg9[%c0_54, %c0_55, %c0_56] : memref<18x18x4xf32, #tpu.memory_space<vmem>>, vector<16x16x4xf32>
    %34 = arith.maximumf %31, %33 : vector<16x16x4xf32>
    %c0_57 = arith.constant 0 : index
    %c1_58 = arith.constant 1 : index
    %c0_59 = arith.constant 0 : index
    %35 = vector.load %arg9[%c0_57, %c1_58, %c0_59] : memref<18x18x4xf32, #tpu.memory_space<vmem>>, vector<16x16x4xf32>
    %36 = arith.maximumf %34, %35 : vector<16x16x4xf32>
    %c0_60 = arith.constant 0 : index
    %c2 = arith.constant 2 : index
    %c0_61 = arith.constant 0 : index
    %37 = vector.load %arg9[%c0_60, %c2, %c0_61] : memref<18x18x4xf32, #tpu.memory_space<vmem>>, vector<16x16x4xf32>
    %38 = arith.maximumf %36, %37 : vector<16x16x4xf32>
    %c1_62 = arith.constant 1 : index
    %c0_63 = arith.constant 0 : index
    %c0_64 = arith.constant 0 : index
    %39 = vector.load %arg9[%c1_62, %c0_63, %c0_64] : memref<18x18x4xf32, #tpu.memory_space<vmem>>, vector<16x16x4xf32>
    %40 = arith.maximumf %38, %39 : vector<16x16x4xf32>
    %c1_65 = arith.constant 1 : index
    %c2_66 = arith.constant 2 : index
    %c0_67 = arith.constant 0 : index
    %41 = vector.load %arg9[%c1_65, %c2_66, %c0_67] : memref<18x18x4xf32, #tpu.memory_space<vmem>>, vector<16x16x4xf32>
    %42 = arith.maximumf %40, %41 : vector<16x16x4xf32>
    %c2_68 = arith.constant 2 : index
    %c0_69 = arith.constant 0 : index
    %c0_70 = arith.constant 0 : index
    %43 = vector.load %arg9[%c2_68, %c0_69, %c0_70] : memref<18x18x4xf32, #tpu.memory_space<vmem>>, vector<16x16x4xf32>
    %44 = arith.maximumf %42, %43 : vector<16x16x4xf32>
    %c2_71 = arith.constant 2 : index
    %c1_72 = arith.constant 1 : index
    %c0_73 = arith.constant 0 : index
    %45 = vector.load %arg9[%c2_71, %c1_72, %c0_73] : memref<18x18x4xf32, #tpu.memory_space<vmem>>, vector<16x16x4xf32>
    %46 = arith.maximumf %44, %45 : vector<16x16x4xf32>
    %c2_74 = arith.constant 2 : index
    %c2_75 = arith.constant 2 : index
    %c0_76 = arith.constant 0 : index
    %47 = vector.load %arg9[%c2_74, %c2_75, %c0_76] : memref<18x18x4xf32, #tpu.memory_space<vmem>>, vector<16x16x4xf32>
    %48 = arith.maximumf %46, %47 : vector<16x16x4xf32>
    %49 = vector.shape_cast %48 : vector<16x16x4xf32> to vector<256x4xf32>
    %c0_77 = arith.constant 0 : index
    %c0_78 = arith.constant 0 : index
    %50 = vector.load %arg14[%c0_77, %c0_78] : memref<256x4xf32, #tpu.memory_space<vmem>>, vector<256x4xf32>
    tpu.vector_store %arg14[%c0_77, %c0_78], %49 {strides = array<i32>} : memref<256x4xf32, #tpu.memory_space<vmem>>, vector<256x4xf32>,
    %51 = vector.extract_strided_slice %30 {offsets = [0, 4], sizes = [256, 4], strides = [1, 1]} : vector<256x12xf32> to vector<256x4xf32>
    %52 = vector.shape_cast %51 : vector<256x4xf32> to vector<16x16x4xf32>
    %c1_79 = arith.constant 1 : index
    %c1_80 = arith.constant 1 : index
    %c0_81 = arith.constant 0 : index
    %53 = vector.load %arg10[%c1_79, %c1_80, %c0_81] : memref<18x18x4xf32, #tpu.memory_space<vmem>>, vector<16x16x4xf32>
    tpu.vector_store %arg10[%c1_79, %c1_80, %c0_81], %52 {strides = array<i32>} : memref<18x18x4xf32, #tpu.memory_space<vmem>>, vector<16x16x4xf32>,
    %c0_82 = arith.constant 0 : index
    %c0_83 = arith.constant 0 : index
    %c0_84 = arith.constant 0 : index
    %54 = vector.load %arg10[%c0_82, %c0_83, %c0_84] : memref<18x18x4xf32, #tpu.memory_space<vmem>>, vector<16x16x4xf32>
    %55 = vector.shape_cast %54 : vector<16x16x4xf32> to vector<256x4xf32>
    %c0_85 = arith.constant 0 : index
    %c0_86 = arith.constant 0 : index
    %56 = vector.load %arg12[%c0_85, %c0_86] : memref<256x36xf32, #tpu.memory_space<vmem>>, vector<256x4xf32>
    tpu.vector_store %arg12[%c0_85, %c0_86], %55 {strides = array<i32>} : memref<256x36xf32, #tpu.memory_space<vmem>>, vector<256x4xf32>,
    %c0_87 = arith.constant 0 : index
    %c1_88 = arith.constant 1 : index
    %c0_89 = arith.constant 0 : index
    %57 = vector.load %arg10[%c0_87, %c1_88, %c0_89] : memref<18x18x4xf32, #tpu.memory_space<vmem>>, vector<16x16x4xf32>
    %58 = vector.shape_cast %57 : vector<16x16x4xf32> to vector<256x4xf32>
    %c0_90 = arith.constant 0 : index
    %c4 = arith.constant 4 : index
    %59 = vector.load %arg12[%c0_90, %c4] : memref<256x36xf32, #tpu.memory_space<vmem>>, vector<256x4xf32>
    tpu.vector_store %arg12[%c0_90, %c4], %58 {strides = array<i32>} : memref<256x36xf32, #tpu.memory_space<vmem>>, vector<256x4xf32>,
    %c0_91 = arith.constant 0 : index
    %c2_92 = arith.constant 2 : index
    %c0_93 = arith.constant 0 : index
    %60 = vector.load %arg10[%c0_91, %c2_92, %c0_93] : memref<18x18x4xf32, #tpu.memory_space<vmem>>, vector<16x16x4xf32>
    %61 = vector.shape_cast %60 : vector<16x16x4xf32> to vector<256x4xf32>
    %c0_94 = arith.constant 0 : index
    %c8 = arith.constant 8 : index
    %62 = vector.load %arg12[%c0_94, %c8] : memref<256x36xf32, #tpu.memory_space<vmem>>, vector<256x4xf32>
    tpu.vector_store %arg12[%c0_94, %c8], %61 {strides = array<i32>} : memref<256x36xf32, #tpu.memory_space<vmem>>, vector<256x4xf32>,
    %c1_95 = arith.constant 1 : index
    %c0_96 = arith.constant 0 : index
    %c0_97 = arith.constant 0 : index
    %63 = vector.load %arg10[%c1_95, %c0_96, %c0_97] : memref<18x18x4xf32, #tpu.memory_space<vmem>>, vector<16x16x4xf32>
    %64 = vector.shape_cast %63 : vector<16x16x4xf32> to vector<256x4xf32>
    %c0_98 = arith.constant 0 : index
    %c12 = arith.constant 12 : index
    %65 = vector.load %arg12[%c0_98, %c12] : memref<256x36xf32, #tpu.memory_space<vmem>>, vector<256x4xf32>
    tpu.vector_store %arg12[%c0_98, %c12], %64 {strides = array<i32>} : memref<256x36xf32, #tpu.memory_space<vmem>>, vector<256x4xf32>,
    %c1_99 = arith.constant 1 : index
    %c1_100 = arith.constant 1 : index
    %c0_101 = arith.constant 0 : index
    %66 = vector.load %arg10[%c1_99, %c1_100, %c0_101] : memref<18x18x4xf32, #tpu.memory_space<vmem>>, vector<16x16x4xf32>
    %67 = vector.shape_cast %66 : vector<16x16x4xf32> to vector<256x4xf32>
    %c0_102 = arith.constant 0 : index
    %c16 = arith.constant 16 : index
    %68 = vector.load %arg12[%c0_102, %c16] : memref<256x36xf32, #tpu.memory_space<vmem>>, vector<256x4xf32>
    tpu.vector_store %arg12[%c0_102, %c16], %67 {strides = array<i32>} : memref<256x36xf32, #tpu.memory_space<vmem>>, vector<256x4xf32>,
    %c1_103 = arith.constant 1 : index
    %c2_104 = arith.constant 2 : index
    %c0_105 = arith.constant 0 : index
    %69 = vector.load %arg10[%c1_103, %c2_104, %c0_105] : memref<18x18x4xf32, #tpu.memory_space<vmem>>, vector<16x16x4xf32>
    %70 = vector.shape_cast %69 : vector<16x16x4xf32> to vector<256x4xf32>
    %c0_106 = arith.constant 0 : index
    %c20 = arith.constant 20 : index
    %71 = vector.load %arg12[%c0_106, %c20] : memref<256x36xf32, #tpu.memory_space<vmem>>, vector<256x4xf32>
    tpu.vector_store %arg12[%c0_106, %c20], %70 {strides = array<i32>} : memref<256x36xf32, #tpu.memory_space<vmem>>, vector<256x4xf32>,
    %c2_107 = arith.constant 2 : index
    %c0_108 = arith.constant 0 : index
    %c0_109 = arith.constant 0 : index
    %72 = vector.load %arg10[%c2_107, %c0_108, %c0_109] : memref<18x18x4xf32, #tpu.memory_space<vmem>>, vector<16x16x4xf32>
    %73 = vector.shape_cast %72 : vector<16x16x4xf32> to vector<256x4xf32>
    %c0_110 = arith.constant 0 : index
    %c24 = arith.constant 24 : index
    %74 = vector.load %arg12[%c0_110, %c24] : memref<256x36xf32, #tpu.memory_space<vmem>>, vector<256x4xf32>
    tpu.vector_store %arg12[%c0_110, %c24], %73 {strides = array<i32>} : memref<256x36xf32, #tpu.memory_space<vmem>>, vector<256x4xf32>,
    %c2_111 = arith.constant 2 : index
    %c1_112 = arith.constant 1 : index
    %c0_113 = arith.constant 0 : index
    %75 = vector.load %arg10[%c2_111, %c1_112, %c0_113] : memref<18x18x4xf32, #tpu.memory_space<vmem>>, vector<16x16x4xf32>
    %76 = vector.shape_cast %75 : vector<16x16x4xf32> to vector<256x4xf32>
    %c0_114 = arith.constant 0 : index
    %c28 = arith.constant 28 : index
    %77 = vector.load %arg12[%c0_114, %c28] : memref<256x36xf32, #tpu.memory_space<vmem>>, vector<256x4xf32>
    tpu.vector_store %arg12[%c0_114, %c28], %76 {strides = array<i32>} : memref<256x36xf32, #tpu.memory_space<vmem>>, vector<256x4xf32>,
    %c2_115 = arith.constant 2 : index
    %c2_116 = arith.constant 2 : index
    %c0_117 = arith.constant 0 : index
    %78 = vector.load %arg10[%c2_115, %c2_116, %c0_117] : memref<18x18x4xf32, #tpu.memory_space<vmem>>, vector<16x16x4xf32>
    %79 = vector.shape_cast %78 : vector<16x16x4xf32> to vector<256x4xf32>
    %c0_118 = arith.constant 0 : index
    %c32 = arith.constant 32 : index
    %80 = vector.load %arg12[%c0_118, %c32] : memref<256x36xf32, #tpu.memory_space<vmem>>, vector<256x4xf32>
    tpu.vector_store %arg12[%c0_118, %c32], %79 {strides = array<i32>} : memref<256x36xf32, #tpu.memory_space<vmem>>, vector<256x4xf32>,
    %81 = vector.extract_strided_slice %30 {offsets = [0, 8], sizes = [256, 4], strides = [1, 1]} : vector<256x12xf32> to vector<256x4xf32>
    %82 = vector.shape_cast %81 : vector<256x4xf32> to vector<16x16x4xf32>
    %c2_119 = arith.constant 2 : index
    %c2_120 = arith.constant 2 : index
    %c0_121 = arith.constant 0 : index
    %83 = vector.load %arg11[%c2_119, %c2_120, %c0_121] : memref<20x20x4xf32, #tpu.memory_space<vmem>>, vector<16x16x4xf32>
    tpu.vector_store %arg11[%c2_119, %c2_120, %c0_121], %82 {strides = array<i32>} : memref<20x20x4xf32, #tpu.memory_space<vmem>>, vector<16x16x4xf32>,
    %c0_122 = arith.constant 0 : index
    %c0_123 = arith.constant 0 : index
    %c0_124 = arith.constant 0 : index
    %84 = vector.load %arg11[%c0_122, %c0_123, %c0_124] : memref<20x20x4xf32, #tpu.memory_space<vmem>>, vector<16x16x4xf32>
    %85 = vector.shape_cast %84 : vector<16x16x4xf32> to vector<256x4xf32>
    %c0_125 = arith.constant 0 : index
    %c0_126 = arith.constant 0 : index
    %86 = vector.load %arg13[%c0_125, %c0_126] : memref<256x100xf32, #tpu.memory_space<vmem>>, vector<256x4xf32>
    tpu.vector_store %arg13[%c0_125, %c0_126], %85 {strides = array<i32>} : memref<256x100xf32, #tpu.memory_space<vmem>>, vector<256x4xf32>,
    %c0_127 = arith.constant 0 : index
    %c1_128 = arith.constant 1 : index
    %c0_129 = arith.constant 0 : index
    %87 = vector.load %arg11[%c0_127, %c1_128, %c0_129] : memref<20x20x4xf32, #tpu.memory_space<vmem>>, vector<16x16x4xf32>
    %88 = vector.shape_cast %87 : vector<16x16x4xf32> to vector<256x4xf32>
    %c0_130 = arith.constant 0 : index
    %c4_131 = arith.constant 4 : index
    %89 = vector.load %arg13[%c0_130, %c4_131] : memref<256x100xf32, #tpu.memory_space<vmem>>, vector<256x4xf32>
    tpu.vector_store %arg13[%c0_130, %c4_131], %88 {strides = array<i32>} : memref<256x100xf32, #tpu.memory_space<vmem>>, vector<256x4xf32>,
    %c0_132 = arith.constant 0 : index
    %c2_133 = arith.constant 2 : index
    %c0_134 = arith.constant 0 : index
    %90 = vector.load %arg11[%c0_132, %c2_133, %c0_134] : memref<20x20x4xf32, #tpu.memory_space<vmem>>, vector<16x16x4xf32>
    %91 = vector.shape_cast %90 : vector<16x16x4xf32> to vector<256x4xf32>
    %c0_135 = arith.constant 0 : index
    %c8_136 = arith.constant 8 : index
    %92 = vector.load %arg13[%c0_135, %c8_136] : memref<256x100xf32, #tpu.memory_space<vmem>>, vector<256x4xf32>
    tpu.vector_store %arg13[%c0_135, %c8_136], %91 {strides = array<i32>} : memref<256x100xf32, #tpu.memory_space<vmem>>, vector<256x4xf32>,
    %c0_137 = arith.constant 0 : index
    %c3 = arith.constant 3 : index
    %c0_138 = arith.constant 0 : index
    %93 = vector.load %arg11[%c0_137, %c3, %c0_138] : memref<20x20x4xf32, #tpu.memory_space<vmem>>, vector<16x16x4xf32>
    %94 = vector.shape_cast %93 : vector<16x16x4xf32> to vector<256x4xf32>
    %c0_139 = arith.constant 0 : index
    %c12_140 = arith.constant 12 : index
    %95 = vector.load %arg13[%c0_139, %c12_140] : memref<256x100xf32, #tpu.memory_space<vmem>>, vector<256x4xf32>
    tpu.vector_store %arg13[%c0_139, %c12_140], %94 {strides = array<i32>} : memref<256x100xf32, #tpu.memory_space<vmem>>, vector<256x4xf32>,
    %c0_141 = arith.constant 0 : index
    %c4_142 = arith.constant 4 : index
    %c0_143 = arith.constant 0 : index
    %96 = vector.load %arg11[%c0_141, %c4_142, %c0_143] : memref<20x20x4xf32, #tpu.memory_space<vmem>>, vector<16x16x4xf32>
    %97 = vector.shape_cast %96 : vector<16x16x4xf32> to vector<256x4xf32>
    %c0_144 = arith.constant 0 : index
    %c16_145 = arith.constant 16 : index
    %98 = vector.load %arg13[%c0_144, %c16_145] : memref<256x100xf32, #tpu.memory_space<vmem>>, vector<256x4xf32>
    tpu.vector_store %arg13[%c0_144, %c16_145], %97 {strides = array<i32>} : memref<256x100xf32, #tpu.memory_space<vmem>>, vector<256x4xf32>,
    %c1_146 = arith.constant 1 : index
    %c0_147 = arith.constant 0 : index
    %c0_148 = arith.constant 0 : index
    %99 = vector.load %arg11[%c1_146, %c0_147, %c0_148] : memref<20x20x4xf32, #tpu.memory_space<vmem>>, vector<16x16x4xf32>
    %100 = vector.shape_cast %99 : vector<16x16x4xf32> to vector<256x4xf32>
    %c0_149 = arith.constant 0 : index
    %c20_150 = arith.constant 20 : index
    %101 = vector.load %arg13[%c0_149, %c20_150] : memref<256x100xf32, #tpu.memory_space<vmem>>, vector<256x4xf32>
    tpu.vector_store %arg13[%c0_149, %c20_150], %100 {strides = array<i32>} : memref<256x100xf32, #tpu.memory_space<vmem>>, vector<256x4xf32>,
    %c1_151 = arith.constant 1 : index
    %c1_152 = arith.constant 1 : index
    %c0_153 = arith.constant 0 : index
    %102 = vector.load %arg11[%c1_151, %c1_152, %c0_153] : memref<20x20x4xf32, #tpu.memory_space<vmem>>, vector<16x16x4xf32>
    %103 = vector.shape_cast %102 : vector<16x16x4xf32> to vector<256x4xf32>
    %c0_154 = arith.constant 0 : index
    %c24_155 = arith.constant 24 : index
    %104 = vector.load %arg13[%c0_154, %c24_155] : memref<256x100xf32, #tpu.memory_space<vmem>>, vector<256x4xf32>
    tpu.vector_store %arg13[%c0_154, %c24_155], %103 {strides = array<i32>} : memref<256x100xf32, #tpu.memory_space<vmem>>, vector<256x4xf32>,
    %c1_156 = arith.constant 1 : index
    %c2_157 = arith.constant 2 : index
    %c0_158 = arith.constant 0 : index
    %105 = vector.load %arg11[%c1_156, %c2_157, %c0_158] : memref<20x20x4xf32, #tpu.memory_space<vmem>>, vector<16x16x4xf32>
    %106 = vector.shape_cast %105 : vector<16x16x4xf32> to vector<256x4xf32>
    %c0_159 = arith.constant 0 : index
    %c28_160 = arith.constant 28 : index
    %107 = vector.load %arg13[%c0_159, %c28_160] : memref<256x100xf32, #tpu.memory_space<vmem>>, vector<256x4xf32>
    tpu.vector_store %arg13[%c0_159, %c28_160], %106 {strides = array<i32>} : memref<256x100xf32, #tpu.memory_space<vmem>>, vector<256x4xf32>,
    %c1_161 = arith.constant 1 : index
    %c3_162 = arith.constant 3 : index
    %c0_163 = arith.constant 0 : index
    %108 = vector.load %arg11[%c1_161, %c3_162, %c0_163] : memref<20x20x4xf32, #tpu.memory_space<vmem>>, vector<16x16x4xf32>
    %109 = vector.shape_cast %108 : vector<16x16x4xf32> to vector<256x4xf32>
    %c0_164 = arith.constant 0 : index
    %c32_165 = arith.constant 32 : index
    %110 = vector.load %arg13[%c0_164, %c32_165] : memref<256x100xf32, #tpu.memory_space<vmem>>, vector<256x4xf32>
    tpu.vector_store %arg13[%c0_164, %c32_165], %109 {strides = array<i32>} : memref<256x100xf32, #tpu.memory_space<vmem>>, vector<256x4xf32>,
    %c1_166 = arith.constant 1 : index
    %c4_167 = arith.constant 4 : index
    %c0_168 = arith.constant 0 : index
    %111 = vector.load %arg11[%c1_166, %c4_167, %c0_168] : memref<20x20x4xf32, #tpu.memory_space<vmem>>, vector<16x16x4xf32>
    %112 = vector.shape_cast %111 : vector<16x16x4xf32> to vector<256x4xf32>
    %c0_169 = arith.constant 0 : index
    %c36 = arith.constant 36 : index
    %113 = vector.load %arg13[%c0_169, %c36] : memref<256x100xf32, #tpu.memory_space<vmem>>, vector<256x4xf32>
    tpu.vector_store %arg13[%c0_169, %c36], %112 {strides = array<i32>} : memref<256x100xf32, #tpu.memory_space<vmem>>, vector<256x4xf32>,
    %c2_170 = arith.constant 2 : index
    %c0_171 = arith.constant 0 : index
    %c0_172 = arith.constant 0 : index
    %114 = vector.load %arg11[%c2_170, %c0_171, %c0_172] : memref<20x20x4xf32, #tpu.memory_space<vmem>>, vector<16x16x4xf32>
    %115 = vector.shape_cast %114 : vector<16x16x4xf32> to vector<256x4xf32>
    %c0_173 = arith.constant 0 : index
    %c40 = arith.constant 40 : index
    %116 = vector.load %arg13[%c0_173, %c40] : memref<256x100xf32, #tpu.memory_space<vmem>>, vector<256x4xf32>
    tpu.vector_store %arg13[%c0_173, %c40], %115 {strides = array<i32>} : memref<256x100xf32, #tpu.memory_space<vmem>>, vector<256x4xf32>,
    %c2_174 = arith.constant 2 : index
    %c1_175 = arith.constant 1 : index
    %c0_176 = arith.constant 0 : index
    %117 = vector.load %arg11[%c2_174, %c1_175, %c0_176] : memref<20x20x4xf32, #tpu.memory_space<vmem>>, vector<16x16x4xf32>
    %118 = vector.shape_cast %117 : vector<16x16x4xf32> to vector<256x4xf32>
    %c0_177 = arith.constant 0 : index
    %c44 = arith.constant 44 : index
    %119 = vector.load %arg13[%c0_177, %c44] : memref<256x100xf32, #tpu.memory_space<vmem>>, vector<256x4xf32>
    tpu.vector_store %arg13[%c0_177, %c44], %118 {strides = array<i32>} : memref<256x100xf32, #tpu.memory_space<vmem>>, vector<256x4xf32>,
    %c2_178 = arith.constant 2 : index
    %c2_179 = arith.constant 2 : index
    %c0_180 = arith.constant 0 : index
    %120 = vector.load %arg11[%c2_178, %c2_179, %c0_180] : memref<20x20x4xf32, #tpu.memory_space<vmem>>, vector<16x16x4xf32>
    %121 = vector.shape_cast %120 : vector<16x16x4xf32> to vector<256x4xf32>
    %c0_181 = arith.constant 0 : index
    %c48 = arith.constant 48 : index
    %122 = vector.load %arg13[%c0_181, %c48] : memref<256x100xf32, #tpu.memory_space<vmem>>, vector<256x4xf32>
    tpu.vector_store %arg13[%c0_181, %c48], %121 {strides = array<i32>} : memref<256x100xf32, #tpu.memory_space<vmem>>, vector<256x4xf32>,
    %c2_182 = arith.constant 2 : index
    %c3_183 = arith.constant 3 : index
    %c0_184 = arith.constant 0 : index
    %123 = vector.load %arg11[%c2_182, %c3_183, %c0_184] : memref<20x20x4xf32, #tpu.memory_space<vmem>>, vector<16x16x4xf32>
    %124 = vector.shape_cast %123 : vector<16x16x4xf32> to vector<256x4xf32>
    %c0_185 = arith.constant 0 : index
    %c52 = arith.constant 52 : index
    %125 = vector.load %arg13[%c0_185, %c52] : memref<256x100xf32, #tpu.memory_space<vmem>>, vector<256x4xf32>
    tpu.vector_store %arg13[%c0_185, %c52], %124 {strides = array<i32>} : memref<256x100xf32, #tpu.memory_space<vmem>>, vector<256x4xf32>,
    %c2_186 = arith.constant 2 : index
    %c4_187 = arith.constant 4 : index
    %c0_188 = arith.constant 0 : index
    %126 = vector.load %arg11[%c2_186, %c4_187, %c0_188] : memref<20x20x4xf32, #tpu.memory_space<vmem>>, vector<16x16x4xf32>
    %127 = vector.shape_cast %126 : vector<16x16x4xf32> to vector<256x4xf32>
    %c0_189 = arith.constant 0 : index
    %c56 = arith.constant 56 : index
    %128 = vector.load %arg13[%c0_189, %c56] : memref<256x100xf32, #tpu.memory_space<vmem>>, vector<256x4xf32>
    tpu.vector_store %arg13[%c0_189, %c56], %127 {strides = array<i32>} : memref<256x100xf32, #tpu.memory_space<vmem>>, vector<256x4xf32>,
    %c3_190 = arith.constant 3 : index
    %c0_191 = arith.constant 0 : index
    %c0_192 = arith.constant 0 : index
    %129 = vector.load %arg11[%c3_190, %c0_191, %c0_192] : memref<20x20x4xf32, #tpu.memory_space<vmem>>, vector<16x16x4xf32>
    %130 = vector.shape_cast %129 : vector<16x16x4xf32> to vector<256x4xf32>
    %c0_193 = arith.constant 0 : index
    %c60 = arith.constant 60 : index
    %131 = vector.load %arg13[%c0_193, %c60] : memref<256x100xf32, #tpu.memory_space<vmem>>, vector<256x4xf32>
    tpu.vector_store %arg13[%c0_193, %c60], %130 {strides = array<i32>} : memref<256x100xf32, #tpu.memory_space<vmem>>, vector<256x4xf32>,
    %c3_194 = arith.constant 3 : index
    %c1_195 = arith.constant 1 : index
    %c0_196 = arith.constant 0 : index
    %132 = vector.load %arg11[%c3_194, %c1_195, %c0_196] : memref<20x20x4xf32, #tpu.memory_space<vmem>>, vector<16x16x4xf32>
    %133 = vector.shape_cast %132 : vector<16x16x4xf32> to vector<256x4xf32>
    %c0_197 = arith.constant 0 : index
    %c64 = arith.constant 64 : index
    %134 = vector.load %arg13[%c0_197, %c64] : memref<256x100xf32, #tpu.memory_space<vmem>>, vector<256x4xf32>
    tpu.vector_store %arg13[%c0_197, %c64], %133 {strides = array<i32>} : memref<256x100xf32, #tpu.memory_space<vmem>>, vector<256x4xf32>,
    %c3_198 = arith.constant 3 : index
    %c2_199 = arith.constant 2 : index
    %c0_200 = arith.constant 0 : index
    %135 = vector.load %arg11[%c3_198, %c2_199, %c0_200] : memref<20x20x4xf32, #tpu.memory_space<vmem>>, vector<16x16x4xf32>
    %136 = vector.shape_cast %135 : vector<16x16x4xf32> to vector<256x4xf32>
    %c0_201 = arith.constant 0 : index
    %c68 = arith.constant 68 : index
    %137 = vector.load %arg13[%c0_201, %c68] : memref<256x100xf32, #tpu.memory_space<vmem>>, vector<256x4xf32>
    tpu.vector_store %arg13[%c0_201, %c68], %136 {strides = array<i32>} : memref<256x100xf32, #tpu.memory_space<vmem>>, vector<256x4xf32>,
    %c3_202 = arith.constant 3 : index
    %c3_203 = arith.constant 3 : index
    %c0_204 = arith.constant 0 : index
    %138 = vector.load %arg11[%c3_202, %c3_203, %c0_204] : memref<20x20x4xf32, #tpu.memory_space<vmem>>, vector<16x16x4xf32>
    %139 = vector.shape_cast %138 : vector<16x16x4xf32> to vector<256x4xf32>
    %c0_205 = arith.constant 0 : index
    %c72 = arith.constant 72 : index
    %140 = vector.load %arg13[%c0_205, %c72] : memref<256x100xf32, #tpu.memory_space<vmem>>, vector<256x4xf32>
    tpu.vector_store %arg13[%c0_205, %c72], %139 {strides = array<i32>} : memref<256x100xf32, #tpu.memory_space<vmem>>, vector<256x4xf32>,
    %c3_206 = arith.constant 3 : index
    %c4_207 = arith.constant 4 : index
    %c0_208 = arith.constant 0 : index
    %141 = vector.load %arg11[%c3_206, %c4_207, %c0_208] : memref<20x20x4xf32, #tpu.memory_space<vmem>>, vector<16x16x4xf32>
    %142 = vector.shape_cast %141 : vector<16x16x4xf32> to vector<256x4xf32>
    %c0_209 = arith.constant 0 : index
    %c76 = arith.constant 76 : index
    %143 = vector.load %arg13[%c0_209, %c76] : memref<256x100xf32, #tpu.memory_space<vmem>>, vector<256x4xf32>
    tpu.vector_store %arg13[%c0_209, %c76], %142 {strides = array<i32>} : memref<256x100xf32, #tpu.memory_space<vmem>>, vector<256x4xf32>,
    %c4_210 = arith.constant 4 : index
    %c0_211 = arith.constant 0 : index
    %c0_212 = arith.constant 0 : index
    %144 = vector.load %arg11[%c4_210, %c0_211, %c0_212] : memref<20x20x4xf32, #tpu.memory_space<vmem>>, vector<16x16x4xf32>
    %145 = vector.shape_cast %144 : vector<16x16x4xf32> to vector<256x4xf32>
    %c0_213 = arith.constant 0 : index
    %c80 = arith.constant 80 : index
    %146 = vector.load %arg13[%c0_213, %c80] : memref<256x100xf32, #tpu.memory_space<vmem>>, vector<256x4xf32>
    tpu.vector_store %arg13[%c0_213, %c80], %145 {strides = array<i32>} : memref<256x100xf32, #tpu.memory_space<vmem>>, vector<256x4xf32>,
    %c4_214 = arith.constant 4 : index
    %c1_215 = arith.constant 1 : index
    %c0_216 = arith.constant 0 : index
    %147 = vector.load %arg11[%c4_214, %c1_215, %c0_216] : memref<20x20x4xf32, #tpu.memory_space<vmem>>, vector<16x16x4xf32>
    %148 = vector.shape_cast %147 : vector<16x16x4xf32> to vector<256x4xf32>
    %c0_217 = arith.constant 0 : index
    %c84 = arith.constant 84 : index
    %149 = vector.load %arg13[%c0_217, %c84] : memref<256x100xf32, #tpu.memory_space<vmem>>, vector<256x4xf32>
    tpu.vector_store %arg13[%c0_217, %c84], %148 {strides = array<i32>} : memref<256x100xf32, #tpu.memory_space<vmem>>, vector<256x4xf32>,
    %c4_218 = arith.constant 4 : index
    %c2_219 = arith.constant 2 : index
    %c0_220 = arith.constant 0 : index
    %150 = vector.load %arg11[%c4_218, %c2_219, %c0_220] : memref<20x20x4xf32, #tpu.memory_space<vmem>>, vector<16x16x4xf32>
    %151 = vector.shape_cast %150 : vector<16x16x4xf32> to vector<256x4xf32>
    %c0_221 = arith.constant 0 : index
    %c88 = arith.constant 88 : index
    %152 = vector.load %arg13[%c0_221, %c88] : memref<256x100xf32, #tpu.memory_space<vmem>>, vector<256x4xf32>
    tpu.vector_store %arg13[%c0_221, %c88], %151 {strides = array<i32>} : memref<256x100xf32, #tpu.memory_space<vmem>>, vector<256x4xf32>,
    %c4_222 = arith.constant 4 : index
    %c3_223 = arith.constant 3 : index
    %c0_224 = arith.constant 0 : index
    %153 = vector.load %arg11[%c4_222, %c3_223, %c0_224] : memref<20x20x4xf32, #tpu.memory_space<vmem>>, vector<16x16x4xf32>
    %154 = vector.shape_cast %153 : vector<16x16x4xf32> to vector<256x4xf32>
    %c0_225 = arith.constant 0 : index
    %c92 = arith.constant 92 : index
    %155 = vector.load %arg13[%c0_225, %c92] : memref<256x100xf32, #tpu.memory_space<vmem>>, vector<256x4xf32>
    tpu.vector_store %arg13[%c0_225, %c92], %154 {strides = array<i32>} : memref<256x100xf32, #tpu.memory_space<vmem>>, vector<256x4xf32>,
    %c4_226 = arith.constant 4 : index
    %c4_227 = arith.constant 4 : index
    %c0_228 = arith.constant 0 : index
    %156 = vector.load %arg11[%c4_226, %c4_227, %c0_228] : memref<20x20x4xf32, #tpu.memory_space<vmem>>, vector<16x16x4xf32>
    %157 = vector.shape_cast %156 : vector<16x16x4xf32> to vector<256x4xf32>
    %c0_229 = arith.constant 0 : index
    %c96 = arith.constant 96 : index
    %158 = vector.load %arg13[%c0_229, %c96] : memref<256x100xf32, #tpu.memory_space<vmem>>, vector<256x4xf32>
    tpu.vector_store %arg13[%c0_229, %c96], %157 {strides = array<i32>} : memref<256x100xf32, #tpu.memory_space<vmem>>, vector<256x4xf32>,
    %c0_230 = arith.constant 0 : index
    %c0_231 = arith.constant 0 : index
    %159 = vector.load %arg12[%c0_230, %c0_231] : memref<256x36xf32, #tpu.memory_space<vmem>>, vector<256x36xf32>
    %c0_232 = arith.constant 0 : index
    %c0_233 = arith.constant 0 : index
    %160 = vector.load %arg6[%c0_232, %c0_233] : memref<36x8xf32, #tpu.memory_space<vmem>>, vector<36x8xf32>
    %cst_234 = arith.constant dense<0.000000e+00> : vector<256x8xf32>
    %161 = tpu.matmul %159, %160, %cst_234 {dimension_numbers = #tpu.dot_dimension_numbers<[1], [0], [0], [1], [0, 0, 1, 1], [], []>} : vector<256x36xf32>, vector<36x8xf32>, vector<256x8xf32> -> vector<256x8xf32>
    %c0_235 = arith.constant 0 : index
    %c0_236 = arith.constant 0 : index
    %162 = vector.load %arg13[%c0_235, %c0_236] : memref<256x100xf32, #tpu.memory_space<vmem>>, vector<256x100xf32>
    %c0_237 = arith.constant 0 : index
    %c0_238 = arith.constant 0 : index
    %163 = vector.load %arg7[%c0_237, %c0_238] : memref<100x8xf32, #tpu.memory_space<vmem>>, vector<100x8xf32>
    %cst_239 = arith.constant dense<0.000000e+00> : vector<256x8xf32>
    %164 = tpu.matmul %162, %163, %cst_239 {dimension_numbers = #tpu.dot_dimension_numbers<[1], [0], [0], [1], [0, 0, 1, 1], [], []>} : vector<256x100xf32>, vector<100x8xf32>, vector<256x8xf32> -> vector<256x8xf32>
    %c0_240 = arith.constant 0 : index
    %c0_241 = arith.constant 0 : index
    %165 = vector.load %arg14[%c0_240, %c0_241] : memref<256x4xf32, #tpu.memory_space<vmem>>, vector<256x4xf32>
    %c0_242 = arith.constant 0 : index
    %c0_243 = arith.constant 0 : index
    %166 = vector.load %arg4[%c0_242, %c0_243] : memref<4x4xf32, #tpu.memory_space<vmem>>, vector<4x4xf32>
    %cst_244 = arith.constant dense<0.000000e+00> : vector<256x4xf32>
    %167 = tpu.matmul %165, %166, %cst_244 {dimension_numbers = #tpu.dot_dimension_numbers<[1], [0], [0], [1], [0, 0, 1, 1], [], []>} : vector<256x4xf32>, vector<4x4xf32>, vector<256x4xf32> -> vector<256x4xf32>
    %c0_245 = arith.constant 0 : index
    %c0_246 = arith.constant 0 : index
    %168 = vector.load %arg5[%c0_245, %c0_246] : memref<1x4xf32, #tpu.memory_space<vmem>>, vector<1x4xf32>
    %169 = vector.broadcast %168 : vector<1x4xf32> to vector<256x4xf32>
    %170 = arith.addf %167, %169 : vector<256x4xf32>
    %171 = vector.extract_strided_slice %30 {offsets = [0, 0], sizes = [256, 4], strides = [1, 1]} : vector<256x12xf32> to vector<256x4xf32>
    %172 = tpu.concatenate %171, %161, %164, %170 in 1 : vector<256x4xf32>, vector<256x8xf32>, vector<256x8xf32>, vector<256x4xf32> -> vector<256x24xf32>
    %173 = vector.shape_cast %172 : vector<256x24xf32> to vector<1x256x24xf32>
    %c0_247 = arith.constant 0 : index
    %c0_248 = arith.constant 0 : index
    %c0_249 = arith.constant 0 : index
    %174 = vector.load %arg8[%c0_247, %c0_248, %c0_249] : memref<1x256x24xf32, #tpu.memory_space<vmem>>, vector<1x256x24xf32>
    tpu.vector_store %arg8[%c0_247, %c0_248, %c0_249], %173 {strides = array<i32>} : memref<1x256x24xf32, #tpu.memory_space<vmem>>, vector<1x256x24xf32>,
    return
  }
  func.func @transform_0(%arg0: i32) -> (i32, i32, i32) {
    %c0_i32 = arith.constant 0 : i32
    %c0_i32_0 = arith.constant 0 : i32
    %c0_i32_1 = arith.constant 0 : i32
    return %arg0, %c0_i32, %c0_i32_0 : i32, i32, i32
  }
  func.func @transform_1(%arg0: i32) -> (i32, i32) {
    %c0_i32 = arith.constant 0 : i32
    %c0_i32_0 = arith.constant 0 : i32
    %c0_i32_1 = arith.constant 0 : i32
    return %c0_i32, %c0_i32_0 : i32, i32
  }
  func.func @transform_2(%arg0: i32) -> (i32, i32) {
    %c0_i32 = arith.constant 0 : i32
    %c0_i32_0 = arith.constant 0 : i32
    %c0_i32_1 = arith.constant 0 : i32
    return %c0_i32, %c0_i32_0 : i32, i32
  }
  func.func @transform_3(%arg0: i32) -> (i32, i32) {
    %c0_i32 = arith.constant 0 : i32
    %c0_i32_0 = arith.constant 0 : i32
    %c0_i32_1 = arith.constant 0 : i32
    return %c0_i32, %c0_i32_0 : i32, i32
  }
  func.func @transform_4(%arg0: i32) -> (i32, i32) {
    %c0_i32 = arith.constant 0 : i32
    %c0_i32_0 = arith.constant 0 : i32
    %c0_i32_1 = arith.constant 0 : i32
    return %c0_i32, %c0_i32_0 : i32, i32
  }
  func.func @transform_5(%arg0: i32) -> (i32, i32) {
    %c0_i32 = arith.constant 0 : i32
    %c0_i32_0 = arith.constant 0 : i32
    %c0_i32_1 = arith.constant 0 : i32
    return %c0_i32, %c0_i32_0 : i32, i32
  }
  func.func @transform_6(%arg0: i32) -> (i32, i32) {
    %c0_i32 = arith.constant 0 : i32
    %c0_i32_0 = arith.constant 0 : i32
    %c0_i32_1 = arith.constant 0 : i32
    return %c0_i32, %c0_i32_0 : i32, i32
  }
  func.func @transform_7(%arg0: i32) -> (i32, i32, i32) {
    %c0_i32 = arith.constant 0 : i32
    %c0_i32_0 = arith.constant 0 : i32
    %c0_i32_1 = arith.constant 0 : i32
    return %arg0, %c0_i32, %c0_i32_0 : i32, i32, i32
  }
}

</mosaic_0001>

<llo_original>
// kernel: tpu_custom_call.1
$region0: #{tpu_custom_call.1}
  #allocation0 [shape = 'u32[]', space=smem, size = 0x4, offset = 0x4, fixed_abs, tag = 'smem constant byte address 0x4 - core index']
  #allocation1 [shape = 'u32[144,128]{1,0:T(1,128)}', space=vmem, size = 0x12000, scoped, tag = 'internal scratch']
  #allocation2 [shape = 'f32[18,18,4]{2,1,0:T(8,128)}', space=vmem, size = 0x36000, scoped, tag = 'scratch operand']
  #allocation3 [shape = 'f32[18,18,4]{2,1,0:T(8,128)}', space=vmem, size = 0x36000, scoped, tag = 'scratch operand']
  #allocation4 [shape = 'f32[20,20,4]{2,1,0:T(8,128)}', space=vmem, size = 0x3c000, scoped, tag = 'scratch operand']
  #allocation5 [shape = 'f32[256,36]{1,0:T(8,128)}', space=vmem, size = 0x20000, scoped, tag = 'scratch operand']
  #allocation6 [shape = 'f32[256,100]{1,0:T(8,128)}', space=vmem, size = 0x20000, scoped, tag = 'scratch operand']
  #allocation7 [shape = 'f32[256,4]{1,0:T(8,128)}', space=vmem, size = 0x20000, scoped, tag = 'scratch operand']
  %s0 = inlined_call_operand.vmem [shape: f32[2,256,4], index: 0, kind: input, shape index: {}]
  %s1 = inlined_call_operand.vmem [shape: f32[4,12], index: 1, kind: input, shape index: {}]
  %s2 = inlined_call_operand.vmem [shape: f32[1,12], index: 2, kind: input, shape index: {}]
  %s3 = inlined_call_operand.vmem [shape: f32[4,4], index: 3, kind: input, shape index: {}]
  %s4 = inlined_call_operand.vmem [shape: f32[1,4], index: 4, kind: input, shape index: {}]
  %s5 = inlined_call_operand.vmem [shape: f32[36,8], index: 5, kind: input, shape index: {}]
  %s6 = inlined_call_operand.vmem [shape: f32[100,8], index: 6, kind: input, shape index: {}]
  %s7 = inlined_call_operand.vmem [shape: f32[2,256,24], index: 7, kind: output, shape index: {}]
  %s8 = sld [smem:[#allocation0]]
  $region61: #{tpu_custom_call.1} parent=0
    _
  %s10 = ssub.s32 1, %s8
  %s11 = scalar_select 0, %s10, %s8
  loop: start=0, step=1, limit=4
  $region2: #{tpu_custom_call.1} parent=0 // loop_pre_header
    _
  $region3: #{tpu_custom_call.1} parent=0 // loop_header
    %s13 = sphi 0, %s17
    %p14 = scmp.ge.s32.totalorder %s13, 4
    %s23 = sphi 0, %s25
    %s26 = sphi 0, %s23
    %s27 = sphi 0, %s26
    %s43 = sphi 0, %s27
    %s47 = sphi 0, %s47
    %s49 = sphi 0, %s47
    %s50 = sphi 0, %s49
    %s64 = sphi 0, %s50
    %s68 = sphi 0, %s68
    %s70 = sphi 0, %s68
    %s71 = sphi 0, %s70
    %s85 = sphi 0, %s71
    %s89 = sphi 0, %s89
    %s91 = sphi 0, %s89
    %s92 = sphi 0, %s91
    %s106 = sphi 0, %s92
    %s110 = sphi 0, %s110
    %s112 = sphi 0, %s110
    %s113 = sphi 0, %s112
    %s127 = sphi 0, %s113
    %s131 = sphi 0, %s131
    %s133 = sphi 0, %s131
    %s134 = sphi 0, %s133
    %s148 = sphi 0, %s134
    %s152 = sphi 0, %s152
    %s154 = sphi 0, %s152
    %s155 = sphi 0, %s154
    %s169 = sphi 0, %s155
    %s175 = sphi 0, %s177
    %s178 = sphi 0, %s175
    %s179 = sphi 0, %s178
    %s195 = sphi 0, %s179
  $region4: #{tpu_custom_call.1} parent=0 // loop_header_branch
    %16 = sbr.rel (%p14) target = $region8
  $region5: #{tpu_custom_call.1} parent=0 // loop_body
    %s18 = ssub.s32 %s13, 1
    %s19 = ssub.s32 %s13, 2
    %s20 = sadd.s32 %s13, 1
    %s21 = ssub.s32 %s13, %s20
    %p22 = scmp.eq.s32.totalorder %s21, 0
    %s24 = sadd.s32 %s23, 1
    %s25 = scalar_select %p22, %s23, %s24
    %p28 = pneg %p22
    %p29 = scmp.eq.s32.totalorder %s13, 1
    %p30 = por %p28, %p29
    %p31 = scmp.ne.s32.totalorder %s23, %s26
    %p32 = scmp.eq.s32.totalorder %s13, 0
    %p33 = por %p31, %p32
    %p34 = scmp.ne.s32.totalorder %s23, %s26
    %p35 = scmp.eq.s32.totalorder %s18, 1
    %p36 = por %p34, %p35
    %p37 = scmp.ne.s32.totalorder %s26, %s27
    %p38 = scmp.eq.s32.totalorder %s18, 0
    %p39 = por %p37, %p38
    %p40 = scmp.ne.s32.totalorder %s26, %s27
    %p41 = scmp.eq.s32.totalorder %s19, 1
    %p42 = por %p40, %p41
    %p44 = scmp.ne.s32.totalorder %s27, %s43
    %p45 = scmp.eq.s32.totalorder %s19, 0
    %p46 = por %p44, %p45
    %s48 = sadd.s32 %s47, 1
    %p51 = scmp.eq.s32.totalorder %s13, 1
    %p52 = scmp.ne.s32.totalorder %s47, %s49
    %p53 = scmp.eq.s32.totalorder %s13, 0
    %p54 = por %p52, %p53
    %p55 = scmp.ne.s32.totalorder %s47, %s49
    %p56 = scmp.eq.s32.totalorder %s18, 1
    %p57 = por %p55, %p56
    %p58 = scmp.ne.s32.totalorder %s49, %s50
    %p59 = scmp.eq.s32.totalorder %s18, 0
    %p60 = por %p58, %p59
    %p61 = scmp.ne.s32.totalorder %s49, %s50
    %p62 = scmp.eq.s32.totalorder %s19, 1
    %p63 = por %p61, %p62
    %p65 = scmp.ne.s32.totalorder %s50, %s64
    %p66 = scmp.eq.s32.totalorder %s19, 0
    %p67 = por %p65, %p66
    %s69 = sadd.s32 %s68, 1
    %p72 = scmp.eq.s32.totalorder %s13, 1
    %p73 = scmp.ne.s32.totalorder %s68, %s70
    %p74 = scmp.eq.s32.totalorder %s13, 0
    %p75 = por %p73, %p74
    %p76 = scmp.ne.s32.totalorder %s68, %s70
    %p77 = scmp.eq.s32.totalorder %s18, 1
    %p78 = por %p76, %p77
    %p79 = scmp.ne.s32.totalorder %s70, %s71
    %p80 = scmp.eq.s32.totalorder %s18, 0
    %p81 = por %p79, %p80
    %p82 = scmp.ne.s32.totalorder %s70, %s71
    %p83 = scmp.eq.s32.totalorder %s19, 1
    %p84 = por %p82, %p83
    %p86 = scmp.ne.s32.totalorder %s71, %s85
    %p87 = scmp.eq.s32.totalorder %s19, 0
    %p88 = por %p86, %p87
    %s90 = sadd.s32 %s89, 1
    %p93 = scmp.eq.s32.totalorder %s13, 1
    %p94 = scmp.ne.s32.totalorder %s89, %s91
    %p95 = scmp.eq.s32.totalorder %s13, 0
    %p96 = por %p94, %p95
    %p97 = scmp.ne.s32.totalorder %s89, %s91
    %p98 = scmp.eq.s32.totalorder %s18, 1
    %p99 = por %p97, %p98
    %p100 = scmp.ne.s32.totalorder %s91, %s92
    %p101 = scmp.eq.s32.totalorder %s18, 0
    %p102 = por %p100, %p101
    %p103 = scmp.ne.s32.totalorder %s91, %s92
    %p104 = scmp.eq.s32.totalorder %s19, 1
    %p105 = por %p103, %p104
    %p107 = scmp.ne.s32.totalorder %s92, %s106
    %p108 = scmp.eq.s32.totalorder %s19, 0
    %p109 = por %p107, %p108
    %s111 = sadd.s32 %s110, 1
    %p114 = scmp.eq.s32.totalorder %s13, 1
    %p115 = scmp.ne.s32.totalorder %s110, %s112
    %p116 = scmp.eq.s32.totalorder %s13, 0
    %p117 = por %p115, %p116
    %p118 = scmp.ne.s32.totalorder %s110, %s112
    %p119 = scmp.eq.s32.totalorder %s18, 1
    %p120 = por %p118, %p119
    %p121 = scmp.ne.s32.totalorder %s112, %s113
    %p122 = scmp.eq.s32.totalorder %s18, 0
    %p123 = por %p121, %p122
    %p124 = scmp.ne.s32.totalorder %s112, %s113
    %p125 = scmp.eq.s32.totalorder %s19, 1
    %p126 = por %p124, %p125
    %p128 = scmp.ne.s32.totalorder %s113, %s127
    %p129 = scmp.eq.s32.totalorder %s19, 0
    %p130 = por %p128, %p129
    %s132 = sadd.s32 %s131, 1
    %p135 = scmp.eq.s32.totalorder %s13, 1
    %p136 = scmp.ne.s32.totalorder %s131, %s133
    %p137 = scmp.eq.s32.totalorder %s13, 0
    %p138 = por %p136, %p137
    %p139 = scmp.ne.s32.totalorder %s131, %s133
    %p140 = scmp.eq.s32.totalorder %s18, 1
    %p141 = por %p139, %p140
    %p142 = scmp.ne.s32.totalorder %s133, %s134
    %p143 = scmp.eq.s32.totalorder %s18, 0
    %p144 = por %p142, %p143
    %p145 = scmp.ne.s32.totalorder %s133, %s134
    %p146 = scmp.eq.s32.totalorder %s19, 1
    %p147 = por %p145, %p146
    %p149 = scmp.ne.s32.totalorder %s134, %s148
    %p150 = scmp.eq.s32.totalorder %s19, 0
    %p151 = por %p149, %p150
    %s153 = sadd.s32 %s152, 1
    %p156 = scmp.eq.s32.totalorder %s13, 1
    %p157 = scmp.ne.s32.totalorder %s152, %s154
    %p158 = scmp.eq.s32.totalorder %s13, 0
    %p159 = por %p157, %p158
    %p160 = scmp.ne.s32.totalorder %s152, %s154
    %p161 = scmp.eq.s32.totalorder %s18, 1
    %p162 = por %p160, %p161
    %p163 = scmp.ne.s32.totalorder %s154, %s155
    %p164 = scmp.eq.s32.totalorder %s18, 0
    %p165 = por %p163, %p164
    %p166 = scmp.ne.s32.totalorder %s154, %s155
    %p167 = scmp.eq.s32.totalorder %s19, 1
    %p168 = por %p166, %p167
    %p170 = scmp.ne.s32.totalorder %s155, %s169
    %p171 = scmp.eq.s32.totalorder %s19, 0
    %p172 = por %p170, %p171
    %s173 = ssub.s32 %s13, %s20
    %p174 = scmp.eq.s32.totalorder %s173, 0
    %s176 = sadd.s32 %s175, 1
    %s177 = scalar_select %p174, %s175, %s176
    %p180 = pneg %p174
    %p181 = scmp.eq.s32.totalorder %s13, 1
    %p182 = por %p180, %p181
    %p183 = scmp.ne.s32.totalorder %s175, %s178
    %p184 = scmp.eq.s32.totalorder %s13, 0
    %p185 = por %p183, %p184
    %p186 = scmp.ne.s32.totalorder %s175, %s178
    %p187 = scmp.eq.s32.totalorder %s18, 1
    %p188 = por %p186, %p187
    %p189 = scmp.ne.s32.totalorder %s178, %s179
    %p190 = scmp.eq.s32.totalorder %s18, 0
    %p191 = por %p189, %p190
    %p192 = scmp.ne.s32.totalorder %s178, %s179
    %p193 = scmp.eq.s32.totalorder %s19, 1
    %p194 = por %p192, %p193
    %p196 = scmp.ne.s32.totalorder %s179, %s195
    %p197 = scmp.eq.s32.totalorder %s19, 0
    %p198 = por %p196, %p197
    %p199 = scmp.le.s32.totalorder 1, %s13
    %p200 = scmp.lt.s32.totalorder %s13, 3
    %p201 = pnand %p199, %p200
    %p202 = pneg %p201
    // Predicated region
    $region9: #{tpu_custom_call.1} parent=5 // pred_check
      _
    $region10: #{tpu_custom_call.1} parent=5 // pred_check_branch
      %204 = sbr.rel (%p201) target = $region12
    $region11: #{tpu_custom_call.1} parent=5 // pred_region
      %s205 = ssub.s32 %s13, 1
      // Predicated region
      $region13: #{tpu_custom_call.1} parent=11 // pred_check
        %p206 = pneg %p60
      $region14: #{tpu_custom_call.1} parent=11 // pred_check_branch
        %208 = sbr.rel (%p206) target = $region16
      $region15: #{tpu_custom_call.1} parent=11 // pred_region
        _
      $region16: #{tpu_custom_call.1} parent=11 // pred_fallthru
        _
      // Predicated region
      $region17: #{tpu_custom_call.1} parent=11 // pred_check
        %p209 = pneg %p81
      $region18: #{tpu_custom_call.1} parent=11 // pred_check_branch
        %211 = sbr.rel (%p209) target = $region20
      $region19: #{tpu_custom_call.1} parent=11 // pred_region
        _
      $region20: #{tpu_custom_call.1} parent=11 // pred_fallthru
        _
      // Predicated region
      $region21: #{tpu_custom_call.1} parent=11 // pred_check
        %p212 = pneg %p102
      $region22: #{tpu_custom_call.1} parent=11 // pred_check_branch
        %214 = sbr.rel (%p212) target = $region24
      $region23: #{tpu_custom_call.1} parent=11 // pred_region
        _
      $region24: #{tpu_custom_call.1} parent=11 // pred_fallthru
        _
      // Predicated region
      $region25: #{tpu_custom_call.1} parent=11 // pred_check
        %p215 = pneg %p123
      $region26: #{tpu_custom_call.1} parent=11 // pred_check_branch
        %217 = sbr.rel (%p215) target = $region28
      $region27: #{tpu_custom_call.1} parent=11 // pred_region
        _
      $region28: #{tpu_custom_call.1} parent=11 // pred_fallthru
        _
      // Predicated region
      $region29: #{tpu_custom_call.1} parent=11 // pred_check
        %p218 = pneg %p144
      $region30: #{tpu_custom_call.1} parent=11 // pred_check_branch
        %220 = sbr.rel (%p218) target = $region32
      $region31: #{tpu_custom_call.1} parent=11 // pred_region
        _
      $region32: #{tpu_custom_call.1} parent=11 // pred_fallthru
        _
      // Predicated region
      $region33: #{tpu_custom_call.1} parent=11 // pred_check
        %p221 = pneg %p165
      $region34: #{tpu_custom_call.1} parent=11 // pred_check_branch
        %223 = sbr.rel (%p221) target = $region36
      $region35: #{tpu_custom_call.1} parent=11 // pred_region
        _
      $region36: #{tpu_custom_call.1} parent=11 // pred_fallthru
        _
    $region12: #{tpu_custom_call.1} parent=5 // pred_fallthru
      _
    %p224 = scmp.lt.s32.totalorder %s13, 2
    // Predicated region
    $region37: #{tpu_custom_call.1} parent=5 // pred_check
      %p225 = pneg %p224
    $region38: #{tpu_custom_call.1} parent=5 // pred_check_branch
      %227 = sbr.rel (%p225) target = $region40
    $region39: #{tpu_custom_call.1} parent=5 // pred_region
      // Predicated region
      $region41: #{tpu_custom_call.1} parent=39 // pred_check
        %p228 = pneg %p33
      $region42: #{tpu_custom_call.1} parent=39 // pred_check_branch
        %230 = sbr.rel (%p228) target = $region44
      $region43: #{tpu_custom_call.1} parent=39 // pred_region
        %p231 = scmp.lt.s32.totalorder %s13, 1
        %s232 = scalar_select %p231, %s13, 1
        %s233 = smul.addr %s232, 32
        %s234 = smul.addr %s233, 8
        %s235 = scalar_lea.vmem %s0, %s234
      $region44: #{tpu_custom_call.1} parent=39 // pred_fallthru
        _
    $region40: #{tpu_custom_call.1} parent=5 // pred_fallthru
      _
    %p236 = scmp.le.s32.totalorder 1, %s13
    %p237 = scmp.lt.s32.totalorder %s13, 3
    %p238 = pnand %p236, %p237
    %p239 = pneg %p238
    // Predicated region
    $region45: #{tpu_custom_call.1} parent=5 // pred_check
      _
    $region46: #{tpu_custom_call.1} parent=5 // pred_check_branch
      %241 = sbr.rel (%p238) target = $region48
    $region47: #{tpu_custom_call.1} parent=5 // pred_region
      %s242 = ssub.s32 %s13, 1
      %p243 = scmp.lt.s32.totalorder %s18, 1
      %s244 = scalar_select %p243, %s18, 1
      %s245 = smul.addr %s244, 32
      %s246 = smul.addr %s245, 8
      %s247 = scalar_lea.vmem %s0, %s246
      %p248 = pneg %p39
      %p249 = pneg %p36
      %p250 = pneg %p60
      %p251 = pneg %p57
      %p252 = pneg %p81
      %p253 = pneg %p78
      %p254 = pneg %p102
      %p255 = pneg %p99
      %p256 = pneg %p123
      %p257 = pneg %p120
      %p258 = pneg %p144
      %p259 = pneg %p141
      %p260 = pneg %p165
      %p261 = pneg %p162
      %p262 = pneg %p191
      %p263 = pneg %p188
      %p264 = scmp.lt.s32.totalorder %s18, 1
      %s265 = scalar_select %p264, %s18, 1
      %s266 = smul.addr %s265, 32
      %s267 = smul.addr %s266, 8
      %s268 = scalar_lea.vmem %s7, %s267
      %p269 = scmp.lt.s32.totalorder %s18, 1
      %s270 = scalar_select %p269, %s18, 1
      %s271 = smul.addr %s270, 32
      %s272 = smul.addr %s271, 8
      %s273 = scalar_lea.vmem %s0, %s272
      %p274 = scmp.lt.s32.totalorder %s18, 1
      %s275 = scalar_select %p274, %s18, 1
      %s276 = smul.addr %s275, 32
      %s277 = smul.addr %s276, 8
      %s278 = scalar_lea.vmem %s7, %s277
      %vm279 = vcmask 31744
      %280 = vst.msk [vmem:[#allocation2] sm:$0xff] %vm279, -inf
      %281 = vst.msk [vmem:[#allocation2 + $0x8] sm:$0xff] %vm279, -inf
      %vm282 = vcmask 25600
      %283 = vst.msk [vmem:[#allocation2 + $0x10] sm:$0x3] %vm282, -inf
      %s284 = scalar_lea.vmem [#allocation2], 408
      %285 = vst.msk [vmem:[%s284] sm:$0xff] %vm279, -inf
      %286 = vst.msk [vmem:[%s284 + $0x8] sm:$0xff] %vm279, -inf
      %287 = vst.msk [vmem:[%s284 + $0x10] sm:$0x3] %vm282, -inf
      %vm288 = vcmask 24576
      %289 = vst.msk [vmem:[#allocation2] sm:$0x1] %vm288, -inf
      %290 = vst.msk [vmem:[#allocation2 + $0x18] sm:$0x1] %vm288, -inf
      %291 = vst.msk [vmem:[#allocation2 + $0x30] sm:$0x1] %vm288, -inf
      %292 = vst.msk [vmem:[#allocation2 + $0x48] sm:$0x1] %vm288, -inf
      %293 = vst.msk [vmem:[#allocation2 + $0x60] sm:$0x1] %vm288, -inf
      %294 = vst.msk [vmem:[#allocation2 + $0x78] sm:$0x1] %vm288, -inf
      %295 = vst.msk [vmem:[#allocation2 + $0x90] sm:$0x1] %vm288, -inf
      %296 = vst.msk [vmem:[#allocation2 + $0xa8] sm:$0x1] %vm288, -inf
      %297 = vst.msk [vmem:[#allocation2 + $0xc0] sm:$0x1] %vm288, -inf
      %298 = vst.msk [vmem:[#allocation2 + $0xd8] sm:$0x1] %vm288, -inf
      %299 = vst.msk [vmem:[#allocation2 + $0xf0] sm:$0x1] %vm288, -inf
      %300 = vst.msk [vmem:[#allocation2 + $0x108] sm:$0x1] %vm288, -inf
      %301 = vst.msk [vmem:[#allocation2 + $0x120] sm:$0x1] %vm288, -inf
      %302 = vst.msk [vmem:[#allocation2 + $0x138] sm:$0x1] %vm288, -inf
      %303 = vst.msk [vmem:[#allocation2 + $0x150] sm:$0x1] %vm288, -inf
      %304 = vst.msk [vmem:[#allocation2 + $0x168] sm:$0x1] %vm288, -inf
      %305 = vst.msk [vmem:[#allocation2 + $0x180] sm:$0x1] %vm288, -inf
      %306 = vst.msk [vmem:[#allocation2 + $0x198] sm:$0x1] %vm288, -inf
      %307 = vst.msk [vmem:[#allocation2 + $0x11] sm:$0x1] %vm288, -inf
      %308 = vst.msk [vmem:[#allocation2 + $0x29] sm:$0x1] %vm288, -inf
      %309 = vst.msk [vmem:[#allocation2 + $0x41] sm:$0x1] %vm288, -inf
      %310 = vst.msk [vmem:[#allocation2 + $0x59] sm:$0x1] %vm288, -inf
      %311 = vst.msk [vmem:[#allocation2 + $0x71] sm:$0x1] %vm288, -inf
      %312 = vst.msk [vmem:[#allocation2 + $0x89] sm:$0x1] %vm288, -inf
      %313 = vst.msk [vmem:[#allocation2 + $0xa1] sm:$0x1] %vm288, -inf
      %314 = vst.msk [vmem:[#allocation2 + $0xb9] sm:$0x1] %vm288, -inf
      %315 = vst.msk [vmem:[#allocation2 + $0xd1] sm:$0x1] %vm288, -inf
      %316 = vst.msk [vmem:[#allocation2 + $0xe9] sm:$0x1] %vm288, -inf
      %317 = vst.msk [vmem:[#allocation2 + $0x101] sm:$0x1] %vm288, -inf
      %318 = vst.msk [vmem:[#allocation2 + $0x119] sm:$0x1] %vm288, -inf
      %319 = vst.msk [vmem:[#allocation2 + $0x131] sm:$0x1] %vm288, -inf
      %320 = vst.msk [vmem:[#allocation2 + $0x149] sm:$0x1] %vm288, -inf
      %321 = vst.msk [vmem:[#allocation2 + $0x161] sm:$0x1] %vm288, -inf
      %322 = vst.msk [vmem:[#allocation2 + $0x179] sm:$0x1] %vm288, -inf
      %323 = vst.msk [vmem:[#allocation2 + $0x191] sm:$0x1] %vm288, -inf
      %324 = vst.msk [vmem:[#allocation2 + $0x1a9] sm:$0x1] %vm288, -inf
      %325 = vst.msk [vmem:[#allocation3] sm:$0xff] %vm279, 0.0
      %326 = vst.msk [vmem:[#allocation3 + $0x8] sm:$0xff] %vm279, 0.0
      %327 = vst.msk [vmem:[#allocation3 + $0x10] sm:$0x3] %vm282, 0.0
      %s328 = scalar_lea.vmem [#allocation3], 408
      %329 = vst.msk [vmem:[%s328] sm:$0xff] %vm279, 0.0
      %330 = vst.msk [vmem:[%s328 + $0x8] sm:$0xff] %vm279, 0.0
      %331 = vst.msk [vmem:[%s328 + $0x10] sm:$0x3] %vm282, 0.0
      %332 = vst.msk [vmem:[#allocation3] sm:$0x1] %vm288, 0.0
      %333 = vst.msk [vmem:[#allocation3 + $0x18] sm:$0x1] %vm288, 0.0
      %334 = vst.msk [vmem:[#allocation3 + $0x30] sm:$0x1] %vm288, 0.0
      %335 = vst.msk [vmem:[#allocation3 + $0x48] sm:$0x1] %vm288, 0.0
      %336 = vst.msk [vmem:[#allocation3 + $0x60] sm:$0x1] %vm288, 0.0
      %337 = vst.msk [vmem:[#allocation3 + $0x78] sm:$0x1] %vm288, 0.0
      %338 = vst.msk [vmem:[#allocation3 + $0x90] sm:$0x1] %vm288, 0.0
      %339 = vst.msk [vmem:[#allocation3 + $0xa8] sm:$0x1] %vm288, 0.0
      %340 = vst.msk [vmem:[#allocation3 + $0xc0] sm:$0x1] %vm288, 0.0
      %341 = vst.msk [vmem:[#allocation3 + $0xd8] sm:$0x1] %vm288, 0.0
      %342 = vst.msk [vmem:[#allocation3 + $0xf0] sm:$0x1] %vm288, 0.0
      %343 = vst.msk [vmem:[#allocation3 + $0x108] sm:$0x1] %vm288, 0.0
      %344 = vst.msk [vmem:[#allocation3 + $0x120] sm:$0x1] %vm288, 0.0
      %345 = vst.msk [vmem:[#allocation3 + $0x138] sm:$0x1] %vm288, 0.0
      %346 = vst.msk [vmem:[#allocation3 + $0x150] sm:$0x1] %vm288, 0.0
      %347 = vst.msk [vmem:[#allocation3 + $0x168] sm:$0x1] %vm288, 0.0
      %348 = vst.msk [vmem:[#allocation3 + $0x180] sm:$0x1] %vm288, 0.0
      %349 = vst.msk [vmem:[#allocation3 + $0x198] sm:$0x1] %vm288, 0.0
      %350 = vst.msk [vmem:[#allocation3 + $0x11] sm:$0x1] %vm288, 0.0
      %351 = vst.msk [vmem:[#allocation3 + $0x29] sm:$0x1] %vm288, 0.0
      %352 = vst.msk [vmem:[#allocation3 + $0x41] sm:$0x1] %vm288, 0.0
      %353 = vst.msk [vmem:[#allocation3 + $0x59] sm:$0x1] %vm288, 0.0
      %354 = vst.msk [vmem:[#allocation3 + $0x71] sm:$0x1] %vm288, 0.0
      %355 = vst.msk [vmem:[#allocation3 + $0x89] sm:$0x1] %vm288, 0.0
      %356 = vst.msk [vmem:[#allocation3 + $0xa1] sm:$0x1] %vm288, 0.0
      %357 = vst.msk [vmem:[#allocation3 + $0xb9] sm:$0x1] %vm288, 0.0
      %358 = vst.msk [vmem:[#allocation3 + $0xd1] sm:$0x1] %vm288, 0.0
      %359 = vst.msk [vmem:[#allocation3 + $0xe9] sm:$0x1] %vm288, 0.0
      %360 = vst.msk [vmem:[#allocation3 + $0x101] sm:$0x1] %vm288, 0.0
      %361 = vst.msk [vmem:[#allocation3 + $0x119] sm:$0x1] %vm288, 0.0
      %362 = vst.msk [vmem:[#allocation3 + $0x131] sm:$0x1] %vm288, 0.0
      %363 = vst.msk [vmem:[#allocation3 + $0x149] sm:$0x1] %vm288, 0.0
      %364 = vst.msk [vmem:[#allocation3 + $0x161] sm:$0x1] %vm288, 0.0
      %365 = vst.msk [vmem:[#allocation3 + $0x179] sm:$0x1] %vm288, 0.0
      %366 = vst.msk [vmem:[#allocation3 + $0x191] sm:$0x1] %vm288, 0.0
      %367 = vst.msk [vmem:[#allocation3 + $0x1a9] sm:$0x1] %vm288, 0.0
      %368 = vst.msk [vmem:[#allocation4] sm:$0xff] %vm279, 0.0
      %369 = vst.msk [vmem:[#allocation4 + $0x8] sm:$0xff] %vm279, 0.0
      %vm370 = vcmask 27648
      %371 = vst.msk [vmem:[#allocation4 + $0x10] sm:$0xf] %vm370, 0.0
      %372 = vst.msk [vmem:[#allocation4 + $0x18] sm:$0xff] %vm279, 0.0
      %373 = vst.msk [vmem:[#allocation4 + $0x20] sm:$0xff] %vm279, 0.0
      %374 = vst.msk [vmem:[#allocation4 + $0x28] sm:$0xf] %vm370, 0.0
      %s375 = scalar_lea.vmem [#allocation4], 432
      %376 = vst.msk [vmem:[%s375] sm:$0xff] %vm279, 0.0
      %377 = vst.msk [vmem:[%s375 + $0x8] sm:$0xff] %vm279, 0.0
      %378 = vst.msk [vmem:[%s375 + $0x10] sm:$0xf] %vm370, 0.0
      %379 = vst.msk [vmem:[%s375 + $0x18] sm:$0xff] %vm279, 0.0
      %380 = vst.msk [vmem:[%s375 + $0x20] sm:$0xff] %vm279, 0.0
      %381 = vst.msk [vmem:[%s375 + $0x28] sm:$0xf] %vm370, 0.0
      %382 = vst.msk [vmem:[#allocation4] sm:$0x3] %vm282, 0.0
      %383 = vst.msk [vmem:[#allocation4 + $0x18] sm:$0x3] %vm282, 0.0
      %384 = vst.msk [vmem:[#allocation4 + $0x30] sm:$0x3] %vm282, 0.0
      %385 = vst.msk [vmem:[#allocation4 + $0x48] sm:$0x3] %vm282, 0.0
      %386 = vst.msk [vmem:[#allocation4 + $0x60] sm:$0x3] %vm282, 0.0
      %387 = vst.msk [vmem:[#allocation4 + $0x78] sm:$0x3] %vm282, 0.0
      %388 = vst.msk [vmem:[#allocation4 + $0x90] sm:$0x3] %vm282, 0.0
      %389 = vst.msk [vmem:[#allocation4 + $0xa8] sm:$0x3] %vm282, 0.0
      %390 = vst.msk [vmem:[#allocation4 + $0xc0] sm:$0x3] %vm282, 0.0
      %391 = vst.msk [vmem:[#allocation4 + $0xd8] sm:$0x3] %vm282, 0.0
      %392 = vst.msk [vmem:[#allocation4 + $0xf0] sm:$0x3] %vm282, 0.0
      %393 = vst.msk [vmem:[#allocation4 + $0x108] sm:$0x3] %vm282, 0.0
      %394 = vst.msk [vmem:[#allocation4 + $0x120] sm:$0x3] %vm282, 0.0
      %395 = vst.msk [vmem:[#allocation4 + $0x138] sm:$0x3] %vm282, 0.0
      %396 = vst.msk [vmem:[#allocation4 + $0x150] sm:$0x3] %vm282, 0.0
      %397 = vst.msk [vmem:[#allocation4 + $0x168] sm:$0x3] %vm282, 0.0
      %398 = vst.msk [vmem:[#allocation4 + $0x180] sm:$0x3] %vm282, 0.0
      %399 = vst.msk [vmem:[#allocation4 + $0x198] sm:$0x3] %vm282, 0.0
      %400 = vst.msk [vmem:[#allocation4 + $0x1b0] sm:$0x3] %vm282, 0.0
      %401 = vst.msk [vmem:[#allocation4 + $0x1c8] sm:$0x3] %vm282, 0.0
      %402 = vst.msk [vmem:[#allocation4 + $0x12] sm:$0x3] %vm282, 0.0
      %403 = vst.msk [vmem:[#allocation4 + $0x2a] sm:$0x3] %vm282, 0.0
      %404 = vst.msk [vmem:[#allocation4 + $0x42] sm:$0x3] %vm282, 0.0
      %405 = vst.msk [vmem:[#allocation4 + $0x5a] sm:$0x3] %vm282, 0.0
      %406 = vst.msk [vmem:[#allocation4 + $0x72] sm:$0x3] %vm282, 0.0
      %407 = vst.msk [vmem:[#allocation4 + $0x8a] sm:$0x3] %vm282, 0.0
      %408 = vst.msk [vmem:[#allocation4 + $0xa2] sm:$0x3] %vm282, 0.0
      %409 = vst.msk [vmem:[#allocation4 + $0xba] sm:$0x3] %vm282, 0.0
      %410 = vst.msk [vmem:[#allocation4 + $0xd2] sm:$0x3] %vm282, 0.0
      %411 = vst.msk [vmem:[#allocation4 + $0xea] sm:$0x3] %vm282, 0.0
      %412 = vst.msk [vmem:[#allocation4 + $0x102] sm:$0x3] %vm282, 0.0
      %413 = vst.msk [vmem:[#allocation4 + $0x11a] sm:$0x3] %vm282, 0.0
      %414 = vst.msk [vmem:[#allocation4 + $0x132] sm:$0x3] %vm282, 0.0
      %415 = vst.msk [vmem:[#allocation4 + $0x14a] sm:$0x3] %vm282, 0.0
      %416 = vst.msk [vmem:[#allocation4 + $0x162] sm:$0x3] %vm282, 0.0
      %417 = vst.msk [vmem:[#allocation4 + $0x17a] sm:$0x3] %vm282, 0.0
      %418 = vst.msk [vmem:[#allocation4 + $0x192] sm:$0x3] %vm282, 0.0
      %419 = vst.msk [vmem:[#allocation4 + $0x1aa] sm:$0x3] %vm282, 0.0
      %420 = vst.msk [vmem:[#allocation4 + $0x1c2] sm:$0x3] %vm282, 0.0
      %421 = vst.msk [vmem:[#allocation4 + $0x1da] sm:$0x3] %vm282, 0.0
      %v422 = vld [vmem:[%s273] sm:$0xff]
      %v423 = vld [vmem:[%s273 + $0x8] sm:$0xff]
      %v424 = vld [vmem:[%s273 + $0x10] sm:$0xff]
      %v425 = vld [vmem:[%s273 + $0x18] sm:$0xff]
      %v426 = vld [vmem:[%s273 + $0x20] sm:$0xff]
      %v427 = vld [vmem:[%s273 + $0x28] sm:$0xff]
      %v428 = vld [vmem:[%s273 + $0x30] sm:$0xff]
      %v429 = vld [vmem:[%s273 + $0x38] sm:$0xff]
      %v430 = vld [vmem:[%s273 + $0x40] sm:$0xff]
      %v431 = vld [vmem:[%s273 + $0x48] sm:$0xff]
      %v432 = vld [vmem:[%s273 + $0x50] sm:$0xff]
      %v433 = vld [vmem:[%s273 + $0x58] sm:$0xff]
      %v434 = vld [vmem:[%s273 + $0x60] sm:$0xff]
      %v435 = vld [vmem:[%s273 + $0x68] sm:$0xff]
      %v436 = vld [vmem:[%s273 + $0x70] sm:$0xff]
      %v437 = vld [vmem:[%s273 + $0x78] sm:$0xff]
      %v438 = vld [vmem:[%s273 + $0x80] sm:$0xff]
      %v439 = vld [vmem:[%s273 + $0x88] sm:$0xff]
      %v440 = vld [vmem:[%s273 + $0x90] sm:$0xff]
      %v441 = vld [vmem:[%s273 + $0x98] sm:$0xff]
      %v442 = vld [vmem:[%s273 + $0xa0] sm:$0xff]
      %v443 = vld [vmem:[%s273 + $0xa8] sm:$0xff]
      %v444 = vld [vmem:[%s273 + $0xb0] sm:$0xff]
      %v445 = vld [vmem:[%s273 + $0xb8] sm:$0xff]
      %v446 = vld [vmem:[%s273 + $0xc0] sm:$0xff]
      %v447 = vld [vmem:[%s273 + $0xc8] sm:$0xff]
      %v448 = vld [vmem:[%s273 + $0xd0] sm:$0xff]
      %v449 = vld [vmem:[%s273 + $0xd8] sm:$0xff]
      %v450 = vld [vmem:[%s273 + $0xe0] sm:$0xff]
      %v451 = vld [vmem:[%s273 + $0xe8] sm:$0xff]
      %v452 = vld [vmem:[%s273 + $0xf0] sm:$0xff]
      %v453 = vld [vmem:[%s273 + $0xf8] sm:$0xff]
      %v454 = vld [vmem:[%s1] sm:$0xf]
      %v455 = vld [vmem:[%s2] sm:$0x1]
      %v457 = vlaneseq
      %v458 = vshrl.u32 %v457, 7
      %v459 = vsub.s32 0, %v458
      %v460 = vrot.slane %v455, %v459
      %v463 = vsel %vm279, %v422, 0
      %v466 = vsel %vm279, %v423, 0
      %v469 = vsel %vm279, %v424, 0
      %v472 = vsel %vm279, %v425, 0
      %v475 = vsel %vm279, %v426, 0
      %v478 = vsel %vm279, %v427, 0
      %v481 = vsel %vm279, %v428, 0
      %v484 = vsel %vm279, %v429, 0
      %v487 = vsel %vm279, %v430, 0
      %v490 = vsel %vm279, %v431, 0
      %v493 = vsel %vm279, %v432, 0
      %v496 = vsel %vm279, %v433, 0
      %v499 = vsel %vm279, %v434, 0
      %v502 = vsel %vm279, %v435, 0
      %v505 = vsel %vm279, %v436, 0
      %v508 = vsel %vm279, %v437, 0
      %v511 = vsel %vm279, %v438, 0
      %v514 = vsel %vm279, %v439, 0
      %v517 = vsel %vm279, %v440, 0
      %v520 = vsel %vm279, %v441, 0
      %v523 = vsel %vm279, %v442, 0
      %v526 = vsel %vm279, %v443, 0
      %v529 = vsel %vm279, %v444, 0
      %v532 = vsel %vm279, %v445, 0
      %v535 = vsel %vm279, %v446, 0
      %v538 = vsel %vm279, %v447, 0
      %v541 = vsel %vm279, %v448, 0
      %v544 = vsel %vm279, %v449, 0
      %v547 = vsel %vm279, %v450, 0
      %v550 = vsel %vm279, %v451, 0
      %v553 = vsel %vm279, %v452, 0
      %v556 = vsel %vm279, %v453, 0
      %vm558 = vcmask 1043456
      %v560 = vsel %vm558, %v454, 0
      %562 = vmatprep.subr.mxu0 0.0
      %563 = vmatpush1.msra.mxu0 0.0
      %564 = vmatprep.subr.mxu0 0.0
      %565 = vmatpush1.msra.mxu0 0.0
      %566 = vmatprep.subr.mxu0 0.0
      %567 = vmatpush1.msra.mxu0 0.0
      %568 = vmatprep.subr.mxu0 0.0
      %569 = vmatpush1.msra.mxu0 0.0
      %570 = vmatprep.subr.mxu0 0.0
      %571 = vmatpush1.msra.mxu0 0.0
      %572 = vmatprep.subr.mxu0 0.0
      %573 = vmatpush1.msra.mxu0 0.0
      %574 = vmatprep.subr.mxu0 0.0
      %575 = vmatpush1.msra.mxu0 0.0
      %576 = vmatprep.subr.mxu0 0.0
      %577 = vmatpush1.msra.mxu0 0.0
      %578 = vmatprep.subr.mxu0 0.0
      %579 = vmatpush1.msra.mxu0 0.0
      %580 = vmatprep.subr.mxu0 0.0
      %581 = vmatpush1.msra.mxu0 0.0
      %582 = vmatprep.subr.mxu0 0.0
      %583 = vmatpush1.msra.mxu0 0.0
      %584 = vmatprep.subr.mxu0 0.0
      %585 = vmatpush1.msra.mxu0 0.0
      %586 = vmatprep.subr.mxu0 0.0
      %587 = vmatpush1.msra.mxu0 0.0
      %588 = vmatprep.subr.mxu0 0.0
      %589 = vmatpush1.msra.mxu0 0.0
      %590 = vmatprep.subr.mxu0 0.0
      %591 = vmatpush1.msra.mxu0 0.0
      %592 = vmatprep.subr.mxu0 0.0
      %593 = vmatpush1.msra.mxu0 %v560
      %594 = vmatprep.subr.mxu0 0.0
      %595 = vmatpush2.msra.mxu0 0.0
      %596 = vmatprep.subr.mxu0 0.0
      %597 = vmatpush2.msra.mxu0 0.0
      %598 = vmatprep.subr.mxu0 0.0
      %599 = vmatpush2.msra.mxu0 0.0
      %600 = vmatprep.subr.mxu0 0.0
      %601 = vmatpush2.msra.mxu0 0.0
      %602 = vmatprep.subr.mxu0 0.0
      %603 = vmatpush2.msra.mxu0 0.0
      %604 = vmatprep.subr.mxu0 0.0
      %605 = vmatpush2.msra.mxu0 0.0
      %606 = vmatprep.subr.mxu0 0.0
      %607 = vmatpush2.msra.mxu0 0.0
      %608 = vmatprep.subr.mxu0 0.0
      %609 = vmatpush2.msra.mxu0 0.0
      %610 = vmatprep.subr.mxu0 0.0
      %611 = vmatpush2.msra.mxu0 0.0
      %612 = vmatprep.subr.mxu0 0.0
      %613 = vmatpush2.msra.mxu0 0.0
      %614 = vmatprep.subr.mxu0 0.0
      %615 = vmatpush2.msra.mxu0 0.0
      %616 = vmatprep.subr.mxu0 0.0
      %617 = vmatpush2.msra.mxu0 0.0
      %618 = vmatprep.subr.mxu0 0.0
      %619 = vmatpush2.msra.mxu0 0.0
      %620 = vmatprep.subr.mxu0 0.0
      %621 = vmatpush2.msra.mxu0 0.0
      %622 = vmatprep.subr.mxu0 0.0
      %623 = vmatpush2.msra.mxu0 0.0
      %624 = vmatprep.subr.mxu0 0.0
      %625 = vmatpush2.msra.mxu0 0.0
      %626 = vmatprep.mubr.f32.mxu0 0.0
      %627 = vmatmul.mubr.f32.gmra.mxu0 %v463
      %v628 = vpop.f32.mrf.mxu0
      %v629 = vadd.f32 %v460, %v628
      %v630 = vpop.f32.mrf.mxu0
      %631 = vmatprep.mubr.f32.mxu0 0.0
      %632 = vmatmul.mubr.f32.gmra.mxu0 %v466
      %v633 = vpop.f32.mrf.mxu0
      %v634 = vadd.f32 %v460, %v633
      %v635 = vpop.f32.mrf.mxu0
      %636 = vmatprep.mubr.f32.mxu0 0.0
      %637 = vmatmul.mubr.f32.gmra.mxu0 %v469
      %v638 = vpop.f32.mrf.mxu0
      %v639 = vadd.f32 %v460, %v638
      %v640 = vpop.f32.mrf.mxu0
      %641 = vmatprep.mubr.f32.mxu0 0.0
      %642 = vmatmul.mubr.f32.gmra.mxu0 %v472
      %v643 = vpop.f32.mrf.mxu0
      %v644 = vadd.f32 %v460, %v643
      %v645 = vpop.f32.mrf.mxu0
      %646 = vmatprep.mubr.f32.mxu0 0.0
      %647 = vmatmul.mubr.f32.gmra.mxu0 %v475
      %v648 = vpop.f32.mrf.mxu0
      %v649 = vadd.f32 %v460, %v648
      %v650 = vpop.f32.mrf.mxu0
      %651 = vmatprep.mubr.f32.mxu0 0.0
      %652 = vmatmul.mubr.f32.gmra.mxu0 %v478
      %v653 = vpop.f32.mrf.mxu0
      %v654 = vadd.f32 %v460, %v653
      %v655 = vpop.f32.mrf.mxu0
      %656 = vmatprep.mubr.f32.mxu0 0.0
      %657 = vmatmul.mubr.f32.gmra.mxu0 %v481
      %v658 = vpop.f32.mrf.mxu0
      %v659 = vadd.f32 %v460, %v658
      %v660 = vpop.f32.mrf.mxu0
      %661 = vmatprep.mubr.f32.mxu0 0.0
      %662 = vmatmul.mubr.f32.gmra.mxu0 %v484
      %v663 = vpop.f32.mrf.mxu0
      %v664 = vadd.f32 %v460, %v663
      %v665 = vpop.f32.mrf.mxu0
      %666 = vmatprep.mubr.f32.mxu0 0.0
      %667 = vmatmul.mubr.f32.gmra.mxu0 %v487
      %v668 = vpop.f32.mrf.mxu0
      %v669 = vadd.f32 %v460, %v668
      %v670 = vpop.f32.mrf.mxu0
      %671 = vmatprep.mubr.f32.mxu0 0.0
      %672 = vmatmul.mubr.f32.gmra.mxu0 %v490
      %v673 = vpop.f32.mrf.mxu0
      %v674 = vadd.f32 %v460, %v673
      %v675 = vpop.f32.mrf.mxu0
      %676 = vmatprep.mubr.f32.mxu0 0.0
      %677 = vmatmul.mubr.f32.gmra.mxu0 %v493
      %v678 = vpop.f32.mrf.mxu0
      %v679 = vadd.f32 %v460, %v678
      %v680 = vpop.f32.mrf.mxu0
      %681 = vmatprep.mubr.f32.mxu0 0.0
      %682 = vmatmul.mubr.f32.gmra.mxu0 %v496
      %v683 = vpop.f32.mrf.mxu0
      %v684 = vadd.f32 %v460, %v683
      %v685 = vpop.f32.mrf.mxu0
      %686 = vmatprep.mubr.f32.mxu0 0.0
      %687 = vmatmul.mubr.f32.gmra.mxu0 %v499
      %v688 = vpop.f32.mrf.mxu0
      %v689 = vadd.f32 %v460, %v688
      %v690 = vpop.f32.mrf.mxu0
      %691 = vmatprep.mubr.f32.mxu0 0.0
      %692 = vmatmul.mubr.f32.gmra.mxu0 %v502
      %v693 = vpop.f32.mrf.mxu0
      %v694 = vadd.f32 %v460, %v693
      %v695 = vpop.f32.mrf.mxu0
      %696 = vmatprep.mubr.f32.mxu0 0.0
      %697 = vmatmul.mubr.f32.gmra.mxu0 %v505
      %v698 = vpop.f32.mrf.mxu0
      %v699 = vadd.f32 %v460, %v698
      %v700 = vpop.f32.mrf.mxu0
      %701 = vmatprep.mubr.f32.mxu0 0.0
      %702 = vmatmul.mubr.f32.gmra.mxu0 %v508
      %v703 = vpop.f32.mrf.mxu0
      %v704 = vadd.f32 %v460, %v703
      %v705 = vpop.f32.mrf.mxu0
      %706 = vmatprep.mubr.f32.mxu0 0.0
      %707 = vmatmul.mubr.f32.gmra.mxu0 %v511
      %v708 = vpop.f32.mrf.mxu0
      %v709 = vadd.f32 %v460, %v708
      %v710 = vpop.f32.mrf.mxu0
      %711 = vmatprep.mubr.f32.mxu0 0.0
      %712 = vmatmul.mubr.f32.gmra.mxu0 %v514
      %v713 = vpop.f32.mrf.mxu0
      %v714 = vadd.f32 %v460, %v713
      %v715 = vpop.f32.mrf.mxu0
      %716 = vmatprep.mubr.f32.mxu0 0.0
      %717 = vmatmul.mubr.f32.gmra.mxu0 %v517
      %v718 = vpop.f32.mrf.mxu0
      %v719 = vadd.f32 %v460, %v718
      %v720 = vpop.f32.mrf.mxu0
      %721 = vmatprep.mubr.f32.mxu0 0.0
      %722 = vmatmul.mubr.f32.gmra.mxu0 %v520
      %v723 = vpop.f32.mrf.mxu0
      %v724 = vadd.f32 %v460, %v723
      %v725 = vpop.f32.mrf.mxu0
      %726 = vmatprep.mubr.f32.mxu0 0.0
      %727 = vmatmul.mubr.f32.gmra.mxu0 %v523
      %v728 = vpop.f32.mrf.mxu0
      %v729 = vadd.f32 %v460, %v728
      %v730 = vpop.f32.mrf.mxu0
      %731 = vmatprep.mubr.f32.mxu0 0.0
      %732 = vmatmul.mubr.f32.gmra.mxu0 %v526
      %v733 = vpop.f32.mrf.mxu0
      %v734 = vadd.f32 %v460, %v733
      %v735 = vpop.f32.mrf.mxu0
      %736 = vmatprep.mubr.f32.mxu0 0.0
      %737 = vmatmul.mubr.f32.gmra.mxu0 %v529
      %v738 = vpop.f32.mrf.mxu0
      %v739 = vadd.f32 %v460, %v738
      %v740 = vpop.f32.mrf.mxu0
      %741 = vmatprep.mubr.f32.mxu0 0.0
      %742 = vmatmul.mubr.f32.gmra.mxu0 %v532
      %v743 = vpop.f32.mrf.mxu0
      %v744 = vadd.f32 %v460, %v743
      %v745 = vpop.f32.mrf.mxu0
      %746 = vmatprep.mubr.f32.mxu0 0.0
      %747 = vmatmul.mubr.f32.gmra.mxu0 %v535
      %v748 = vpop.f32.mrf.mxu0
      %v749 = vadd.f32 %v460, %v748
      %v750 = vpop.f32.mrf.mxu0
      %751 = vmatprep.mubr.f32.mxu0 0.0
      %752 = vmatmul.mubr.f32.gmra.mxu0 %v538
      %v753 = vpop.f32.mrf.mxu0
      %v754 = vadd.f32 %v460, %v753
      %v755 = vpop.f32.mrf.mxu0
      %756 = vmatprep.mubr.f32.mxu0 0.0
      %757 = vmatmul.mubr.f32.gmra.mxu0 %v541
      %v758 = vpop.f32.mrf.mxu0
      %v759 = vadd.f32 %v460, %v758
      %v760 = vpop.f32.mrf.mxu0
      %761 = vmatprep.mubr.f32.mxu0 0.0
      %762 = vmatmul.mubr.f32.gmra.mxu0 %v544
      %v763 = vpop.f32.mrf.mxu0
      %v764 = vadd.f32 %v460, %v763
      %v765 = vpop.f32.mrf.mxu0
      %766 = vmatprep.mubr.f32.mxu0 0.0
      %767 = vmatmul.mubr.f32.gmra.mxu0 %v547
      %v768 = vpop.f32.mrf.mxu0
      %v769 = vadd.f32 %v460, %v768
      %v770 = vpop.f32.mrf.mxu0
      %771 = vmatprep.mubr.f32.mxu0 0.0
      %772 = vmatmul.mubr.f32.gmra.mxu0 %v550
      %v773 = vpop.f32.mrf.mxu0
      %v774 = vadd.f32 %v460, %v773
      %v775 = vpop.f32.mrf.mxu0
      %776 = vmatprep.mubr.f32.mxu0 0.0
      %777 = vmatmul.mubr.f32.gmra.mxu0 %v553
      %v778 = vpop.f32.mrf.mxu0
      %v779 = vadd.f32 %v460, %v778
      %v780 = vpop.f32.mrf.mxu0
      %781 = vmatprep.mubr.f32.mxu0 0.0
      %782 = vmatmul.mubr.f32.gmra.mxu0 %v556
      %v783 = vpop.f32.mrf.mxu0
      %v784 = vadd.f32 %v460, %v783
      %v785 = vpop.f32.mrf.mxu0
      %786 = vdwg.mxu0
      %s787 = scalar_lea.vmem [#allocation2], 24
      %788 = vst.msk [vmem:[%s787 + $0x1] sm:$0xff] %vm279, %v422
      %789 = vst.msk [vmem:[%s787 + $0x9] sm:$0xff] %vm279, %v423
      %790 = vst.msk [vmem:[%s787 + $0x19] sm:$0xff] %vm279, %v424
      %791 = vst.msk [vmem:[%s787 + $0x21] sm:$0xff] %vm279, %v425
      %792 = vst.msk [vmem:[%s787 + $0x31] sm:$0xff] %vm279, %v426
      %793 = vst.msk [vmem:[%s787 + $0x39] sm:$0xff] %vm279, %v427
      %794 = vst.msk [vmem:[%s787 + $0x49] sm:$0xff] %vm279, %v428
      %795 = vst.msk [vmem:[%s787 + $0x51] sm:$0xff] %vm279, %v429
      %796 = vst.msk [vmem:[%s787 + $0x61] sm:$0xff] %vm279, %v430
      %797 = vst.msk [vmem:[%s787 + $0x69] sm:$0xff] %vm279, %v431
      %798 = vst.msk [vmem:[%s787 + $0x79] sm:$0xff] %vm279, %v432
      %799 = vst.msk [vmem:[%s787 + $0x81] sm:$0xff] %vm279, %v433
      %800 = vst.msk [vmem:[%s787 + $0x91] sm:$0xff] %vm279, %v434
      %801 = vst.msk [vmem:[%s787 + $0x99] sm:$0xff] %vm279, %v435
      %802 = vst.msk [vmem:[%s787 + $0xa9] sm:$0xff] %vm279, %v436
      %803 = vst.msk [vmem:[%s787 + $0xb1] sm:$0xff] %vm279, %v437
      %804 = vst.msk [vmem:[%s787 + $0xc1] sm:$0xff] %vm279, %v438
      %805 = vst.msk [vmem:[%s787 + $0xc9] sm:$0xff] %vm279, %v439
      %806 = vst.msk [vmem:[%s787 + $0xd9] sm:$0xff] %vm279, %v440
      %807 = vst.msk [vmem:[%s787 + $0xe1] sm:$0xff] %vm279, %v441
      %808 = vst.msk [vmem:[%s787 + $0xf1] sm:$0xff] %vm279, %v442
      %809 = vst.msk [vmem:[%s787 + $0xf9] sm:$0xff] %vm279, %v443
      %810 = vst.msk [vmem:[%s787 + $0x109] sm:$0xff] %vm279, %v444
      %811 = vst.msk [vmem:[%s787 + $0x111] sm:$0xff] %vm279, %v445
      %812 = vst.msk [vmem:[%s787 + $0x121] sm:$0xff] %vm279, %v446
      %813 = vst.msk [vmem:[%s787 + $0x129] sm:$0xff] %vm279, %v447
      %814 = vst.msk [vmem:[%s787 + $0x139] sm:$0xff] %vm279, %v448
      %815 = vst.msk [vmem:[%s787 + $0x141] sm:$0xff] %vm279, %v449
      %816 = vst.msk [vmem:[%s787 + $0x151] sm:$0xff] %vm279, %v450
      %817 = vst.msk [vmem:[%s787 + $0x159] sm:$0xff] %vm279, %v451
      %818 = vst.msk [vmem:[%s787 + $0x169] sm:$0xff] %vm279, %v452
      %819 = vst.msk [vmem:[%s787 + $0x171] sm:$0xff] %vm279, %v453
      %v820 = vld [vmem:[#allocation2] sm:$0xff]
      %v821 = vld [vmem:[#allocation2 + $0x8] sm:$0xff]
      %v822 = vld [vmem:[#allocation2 + $0x18] sm:$0xff]
      %v823 = vld [vmem:[#allocation2 + $0x20] sm:$0xff]
      %v824 = vld [vmem:[#allocation2 + $0x30] sm:$0xff]
      %v825 = vld [vmem:[#allocation2 + $0x38] sm:$0xff]
      %v826 = vld [vmem:[#allocation2 + $0x48] sm:$0xff]
      %v827 = vld [vmem:[#allocation2 + $0x50] sm:$0xff]
      %v828 = vld [vmem:[#allocation2 + $0x60] sm:$0xff]
      %v829 = vld [vmem:[#allocation2 + $0x68] sm:$0xff]
      %v830 = vld [vmem:[#allocation2 + $0x78] sm:$0xff]
      %v831 = vld [vmem:[#allocation2 + $0x80] sm:$0xff]
      %v832 = vld [vmem:[#allocation2 + $0x90] sm:$0xff]
      %v833 = vld [vmem:[#allocation2 + $0x98] sm:$0xff]
      %v834 = vld [vmem:[#allocation2 + $0xa8] sm:$0xff]
      %v835 = vld [vmem:[#allocation2 + $0xb0] sm:$0xff]
      %v836 = vld [vmem:[#allocation2 + $0xc0] sm:$0xff]
      %v837 = vld [vmem:[#allocation2 + $0xc8] sm:$0xff]
      %v838 = vld [vmem:[#allocation2 + $0xd8] sm:$0xff]
      %v839 = vld [vmem:[#allocation2 + $0xe0] sm:$0xff]
      %v840 = vld [vmem:[#allocation2 + $0xf0] sm:$0xff]
      %v841 = vld [vmem:[#allocation2 + $0xf8] sm:$0xff]
      %v842 = vld [vmem:[#allocation2 + $0x108] sm:$0xff]
      %v843 = vld [vmem:[#allocation2 + $0x110] sm:$0xff]
      %v844 = vld [vmem:[#allocation2 + $0x120] sm:$0xff]
      %v845 = vld [vmem:[#allocation2 + $0x128] sm:$0xff]
      %v846 = vld [vmem:[#allocation2 + $0x138] sm:$0xff]
      %v847 = vld [vmem:[#allocation2 + $0x140] sm:$0xff]
      %v848 = vld [vmem:[#allocation2 + $0x150] sm:$0xff]
      %v849 = vld [vmem:[#allocation2 + $0x158] sm:$0xff]
      %v850 = vld [vmem:[#allocation2 + $0x168] sm:$0xff]
      %v851 = vld [vmem:[#allocation2 + $0x170] sm:$0xff]
      %v852 = vmax.f32 %v422, %v820
      %v853 = vmax.f32 %v423, %v821
      %v854 = vmax.f32 %v424, %v822
      %v855 = vmax.f32 %v425, %v823
      %v856 = vmax.f32 %v426, %v824
      %v857 = vmax.f32 %v427, %v825
      %v858 = vmax.f32 %v428, %v826
      %v859 = vmax.f32 %v429, %v827
      %v860 = vmax.f32 %v430, %v828
      %v861 = vmax.f32 %v431, %v829
      %v862 = vmax.f32 %v432, %v830
      %v863 = vmax.f32 %v433, %v831
      %v864 = vmax.f32 %v434, %v832
      %v865 = vmax.f32 %v435, %v833
      %v866 = vmax.f32 %v436, %v834
      %v867 = vmax.f32 %v437, %v835
      %v868 = vmax.f32 %v438, %v836
      %v869 = vmax.f32 %v439, %v837
      %v870 = vmax.f32 %v440, %v838
      %v871 = vmax.f32 %v441, %v839
      %v872 = vmax.f32 %v442, %v840
      %v873 = vmax.f32 %v443, %v841
      %v874 = vmax.f32 %v444, %v842
      %v875 = vmax.f32 %v445, %v843
      %v876 = vmax.f32 %v446, %v844
      %v877 = vmax.f32 %v447, %v845
      %v878 = vmax.f32 %v448, %v846
      %v879 = vmax.f32 %v449, %v847
      %v880 = vmax.f32 %v450, %v848
      %v881 = vmax.f32 %v451, %v849
      %v882 = vmax.f32 %v452, %v850
      %v883 = vmax.f32 %v453, %v851
      %v884 = vld [vmem:[#allocation2 + $0x1] sm:$0xff]
      %v885 = vld [vmem:[#allocation2 + $0x9] sm:$0xff]
      %v886 = vld [vmem:[#allocation2 + $0x19] sm:$0xff]
      %v887 = vld [vmem:[#allocation2 + $0x21] sm:$0xff]
      %v888 = vld [vmem:[#allocation2 + $0x31] sm:$0xff]
      %v889 = vld [vmem:[#allocation2 + $0x39] sm:$0xff]
      %v890 = vld [vmem:[#allocation2 + $0x49] sm:$0xff]
      %v891 = vld [vmem:[#allocation2 + $0x51] sm:$0xff]
      %v892 = vld [vmem:[#allocation2 + $0x61] sm:$0xff]
      %v893 = vld [vmem:[#allocation2 + $0x69] sm:$0xff]
      %v894 = vld [vmem:[#allocation2 + $0x79] sm:$0xff]
      %v895 = vld [vmem:[#allocation2 + $0x81] sm:$0xff]
      %v896 = vld [vmem:[#allocation2 + $0x91] sm:$0xff]
      %v897 = vld [vmem:[#allocation2 + $0x99] sm:$0xff]
      %v898 = vld [vmem:[#allocation2 + $0xa9] sm:$0xff]
      %v899 = vld [vmem:[#allocation2 + $0xb1] sm:$0xff]
      %v900 = vld [vmem:[#allocation2 + $0xc1] sm:$0xff]
      %v901 = vld [vmem:[#allocation2 + $0xc9] sm:$0xff]
      %v902 = vld [vmem:[#allocation2 + $0xd9] sm:$0xff]
      %v903 = vld [vmem:[#allocation2 + $0xe1] sm:$0xff]
      %v904 = vld [vmem:[#allocation2 + $0xf1] sm:$0xff]
      %v905 = vld [vmem:[#allocation2 + $0xf9] sm:$0xff]
      %v906 = vld [vmem:[#allocation2 + $0x109] sm:$0xff]
      %v907 = vld [vmem:[#allocation2 + $0x111] sm:$0xff]
      %v908 = vld [vmem:[#allocation2 + $0x121] sm:$0xff]
      %v909 = vld [vmem:[#allocation2 + $0x129] sm:$0xff]
      %v910 = vld [vmem:[#allocation2 + $0x139] sm:$0xff]
      %v911 = vld [vmem:[#allocation2 + $0x141] sm:$0xff]
      %v912 = vld [vmem:[#allocation2 + $0x151] sm:$0xff]
      %v913 = vld [vmem:[#allocation2 + $0x159] sm:$0xff]
      %v914 = vld [vmem:[#allocation2 + $0x169] sm:$0xff]
      %v915 = vld [vmem:[#allocation2 + $0x171] sm:$0xff]
      %v916 = vmax.f32 %v852, %v884
      %v917 = vmax.f32 %v853, %v885
      %v918 = vmax.f32 %v854, %v886
      %v919 = vmax.f32 %v855, %v887
      %v920 = vmax.f32 %v856, %v888
      %v921 = vmax.f32 %v857, %v889
      %v922 = vmax.f32 %v858, %v890
      %v923 = vmax.f32 %v859, %v891
      %v924 = vmax.f32 %v860, %v892
      %v925 = vmax.f32 %v861, %v893
      %v926 = vmax.f32 %v862, %v894
      %v927 = vmax.f32 %v863, %v895
      %v928 = vmax.f32 %v864, %v896
      %v929 = vmax.f32 %v865, %v897
      %v930 = vmax.f32 %v866, %v898
      %v931 = vmax.f32 %v867, %v899
      %v932 = vmax.f32 %v868, %v900
      %v933 = vmax.f32 %v869, %v901
      %v934 = vmax.f32 %v870, %v902
      %v935 = vmax.f32 %v871, %v903
      %v936 = vmax.f32 %v872, %v904
      %v937 = vmax.f32 %v873, %v905
      %v938 = vmax.f32 %v874, %v906
      %v939 = vmax.f32 %v875, %v907
      %v940 = vmax.f32 %v876, %v908
      %v941 = vmax.f32 %v877, %v909
      %v942 = vmax.f32 %v878, %v910
      %v943 = vmax.f32 %v879, %v911
      %v944 = vmax.f32 %v880, %v912
      %v945 = vmax.f32 %v881, %v913
      %v946 = vmax.f32 %v882, %v914
      %v947 = vmax.f32 %v883, %v915
      %v948 = vld [vmem:[#allocation2 + $0x2] sm:$0xff]
      %v949 = vld [vmem:[#allocation2 + $0xa] sm:$0xff]
      %v950 = vld [vmem:[#allocation2 + $0x1a] sm:$0xff]
      %v951 = vld [vmem:[#allocation2 + $0x22] sm:$0xff]
      %v952 = vld [vmem:[#allocation2 + $0x32] sm:$0xff]
      %v953 = vld [vmem:[#allocation2 + $0x3a] sm:$0xff]
      %v954 = vld [vmem:[#allocation2 + $0x4a] sm:$0xff]
      %v955 = vld [vmem:[#allocation2 + $0x52] sm:$0xff]
      %v956 = vld [vmem:[#allocation2 + $0x62] sm:$0xff]
      %v957 = vld [vmem:[#allocation2 + $0x6a] sm:$0xff]
      %v958 = vld [vmem:[#allocation2 + $0x7a] sm:$0xff]
      %v959 = vld [vmem:[#allocation2 + $0x82] sm:$0xff]
      %v960 = vld [vmem:[#allocation2 + $0x92] sm:$0xff]
      %v961 = vld [vmem:[#allocation2 + $0x9a] sm:$0xff]
      %v962 = vld [vmem:[#allocation2 + $0xaa] sm:$0xff]
      %v963 = vld [vmem:[#allocation2 + $0xb2] sm:$0xff]
      %v964 = vld [vmem:[#allocation2 + $0xc2] sm:$0xff]
      %v965 = vld [vmem:[#allocation2 + $0xca] sm:$0xff]
      %v966 = vld [vmem:[#allocation2 + $0xda] sm:$0xff]
      %v967 = vld [vmem:[#allocation2 + $0xe2] sm:$0xff]
      %v968 = vld [vmem:[#allocation2 + $0xf2] sm:$0xff]
      %v969 = vld [vmem:[#allocation2 + $0xfa] sm:$0xff]
      %v970 = vld [vmem:[#allocation2 + $0x10a] sm:$0xff]
      %v971 = vld [vmem:[#allocation2 + $0x112] sm:$0xff]
      %v972 = vld [vmem:[#allocation2 + $0x122] sm:$0xff]
      %v973 = vld [vmem:[#allocation2 + $0x12a] sm:$0xff]
      %v974 = vld [vmem:[#allocation2 + $0x13a] sm:$0xff]
      %v975 = vld [vmem:[#allocation2 + $0x142] sm:$0xff]
      %v976 = vld [vmem:[#allocation2 + $0x152] sm:$0xff]
      %v977 = vld [vmem:[#allocation2 + $0x15a] sm:$0xff]
      %v978 = vld [vmem:[#allocation2 + $0x16a] sm:$0xff]
      %v979 = vld [vmem:[#allocation2 + $0x172] sm:$0xff]
      %v980 = vmax.f32 %v916, %v948
      %v981 = vmax.f32 %v917, %v949
      %v982 = vmax.f32 %v918, %v950
      %v983 = vmax.f32 %v919, %v951
      %v984 = vmax.f32 %v920, %v952
      %v985 = vmax.f32 %v921, %v953
      %v986 = vmax.f32 %v922, %v954
      %v987 = vmax.f32 %v923, %v955
      %v988 = vmax.f32 %v924, %v956
      %v989 = vmax.f32 %v925, %v957
      %v990 = vmax.f32 %v926, %v958
      %v991 = vmax.f32 %v927, %v959
      %v992 = vmax.f32 %v928, %v960
      %v993 = vmax.f32 %v929, %v961
      %v994 = vmax.f32 %v930, %v962
      %v995 = vmax.f32 %v931, %v963
      %v996 = vmax.f32 %v932, %v964
      %v997 = vmax.f32 %v933, %v965
      %v998 = vmax.f32 %v934, %v966
      %v999 = vmax.f32 %v935, %v967
      %v1000 = vmax.f32 %v936, %v968
      %v1001 = vmax.f32 %v937, %v969
      %v1002 = vmax.f32 %v938, %v970
      %v1003 = vmax.f32 %v939, %v971
      %v1004 = vmax.f32 %v940, %v972
      %v1005 = vmax.f32 %v941, %v973
      %v1006 = vmax.f32 %v942, %v974
      %v1007 = vmax.f32 %v943, %v975
      %v1008 = vmax.f32 %v944, %v976
      %v1009 = vmax.f32 %v945, %v977
      %v1010 = vmax.f32 %v946, %v978
      %v1011 = vmax.f32 %v947, %v979
      %v1012 = vld [vmem:[%s787] sm:$0xff]
      %v1013 = vld [vmem:[%s787 + $0x8] sm:$0xff]
      %v1014 = vld [vmem:[%s787 + $0x18] sm:$0xff]
      %v1015 = vld [vmem:[%s787 + $0x20] sm:$0xff]
      %v1016 = vld [vmem:[%s787 + $0x30] sm:$0xff]
      %v1017 = vld [vmem:[%s787 + $0x38] sm:$0xff]
      %v1018 = vld [vmem:[%s787 + $0x48] sm:$0xff]
      %v1019 = vld [vmem:[%s787 + $0x50] sm:$0xff]
      %v1020 = vld [vmem:[%s787 + $0x60] sm:$0xff]
      %v1021 = vld [vmem:[%s787 + $0x68] sm:$0xff]
      %v1022 = vld [vmem:[%s787 + $0x78] sm:$0xff]
      %v1023 = vld [vmem:[%s787 + $0x80] sm:$0xff]
      %v1024 = vld [vmem:[%s787 + $0x90] sm:$0xff]
      %v1025 = vld [vmem:[%s787 + $0x98] sm:$0xff]
      %v1026 = vld [vmem:[%s787 + $0xa8] sm:$0xff]
      %v1027 = vld [vmem:[%s787 + $0xb0] sm:$0xff]
      %v1028 = vld [vmem:[%s787 + $0xc0] sm:$0xff]
      %v1029 = vld [vmem:[%s787 + $0xc8] sm:$0xff]
      %v1030 = vld [vmem:[%s787 + $0xd8] sm:$0xff]
      %v1031 = vld [vmem:[%s787 + $0xe0] sm:$0xff]
      %v1032 = vld [vmem:[%s787 + $0xf0] sm:$0xff]
      %v1033 = vld [vmem:[%s787 + $0xf8] sm:$0xff]
      %v1034 = vld [vmem:[%s787 + $0x108] sm:$0xff]
      %v1035 = vld [vmem:[%s787 + $0x110] sm:$0xff]
      %v1036 = vld [vmem:[%s787 + $0x120] sm:$0xff]
      %v1037 = vld [vmem:[%s787 + $0x128] sm:$0xff]
      %v1038 = vld [vmem:[%s787 + $0x138] sm:$0xff]
      %v1039 = vld [vmem:[%s787 + $0x140] sm:$0xff]
      %v1040 = vld [vmem:[%s787 + $0x150] sm:$0xff]
      %v1041 = vld [vmem:[%s787 + $0x158] sm:$0xff]
      %v1042 = vld [vmem:[%s787 + $0x168] sm:$0xff]
      %v1043 = vld [vmem:[%s787 + $0x170] sm:$0xff]
      %v1044 = vmax.f32 %v980, %v1012
      %v1045 = vmax.f32 %v981, %v1013
      %v1046 = vmax.f32 %v982, %v1014
      %v1047 = vmax.f32 %v983, %v1015
      %v1048 = vmax.f32 %v984, %v1016
      %v1049 = vmax.f32 %v985, %v1017
      %v1050 = vmax.f32 %v986, %v1018
      %v1051 = vmax.f32 %v987, %v1019
      %v1052 = vmax.f32 %v988, %v1020
      %v1053 = vmax.f32 %v989, %v1021
      %v1054 = vmax.f32 %v990, %v1022
      %v1055 = vmax.f32 %v991, %v1023
      %v1056 = vmax.f32 %v992, %v1024
      %v1057 = vmax.f32 %v993, %v1025
      %v1058 = vmax.f32 %v994, %v1026
      %v1059 = vmax.f32 %v995, %v1027
      %v1060 = vmax.f32 %v996, %v1028
      %v1061 = vmax.f32 %v997, %v1029
      %v1062 = vmax.f32 %v998, %v1030
      %v1063 = vmax.f32 %v999, %v1031
      %v1064 = vmax.f32 %v1000, %v1032
      %v1065 = vmax.f32 %v1001, %v1033
      %v1066 = vmax.f32 %v1002, %v1034
      %v1067 = vmax.f32 %v1003, %v1035
      %v1068 = vmax.f32 %v1004, %v1036
      %v1069 = vmax.f32 %v1005, %v1037
      %v1070 = vmax.f32 %v1006, %v1038
      %v1071 = vmax.f32 %v1007, %v1039
      %v1072 = vmax.f32 %v1008, %v1040
      %v1073 = vmax.f32 %v1009, %v1041
      %v1074 = vmax.f32 %v1010, %v1042
      %v1075 = vmax.f32 %v1011, %v1043
      %v1076 = vld [vmem:[%s787 + $0x2] sm:$0xff]
      %v1077 = vld [vmem:[%s787 + $0xa] sm:$0xff]
      %v1078 = vld [vmem:[%s787 + $0x1a] sm:$0xff]
      %v1079 = vld [vmem:[%s787 + $0x22] sm:$0xff]
      %v1080 = vld [vmem:[%s787 + $0x32] sm:$0xff]
      %v1081 = vld [vmem:[%s787 + $0x3a] sm:$0xff]
      %v1082 = vld [vmem:[%s787 + $0x4a] sm:$0xff]
      %v1083 = vld [vmem:[%s787 + $0x52] sm:$0xff]
      %v1084 = vld [vmem:[%s787 + $0x62] sm:$0xff]
      %v1085 = vld [vmem:[%s787 + $0x6a] sm:$0xff]
      %v1086 = vld [vmem:[%s787 + $0x7a] sm:$0xff]
      %v1087 = vld [vmem:[%s787 + $0x82] sm:$0xff]
      %v1088 = vld [vmem:[%s787 + $0x92] sm:$0xff]
      %v1089 = vld [vmem:[%s787 + $0x9a] sm:$0xff]
      %v1090 = vld [vmem:[%s787 + $0xaa] sm:$0xff]
      %v1091 = vld [vmem:[%s787 + $0xb2] sm:$0xff]
      %v1092 = vld [vmem:[%s787 + $0xc2] sm:$0xff]
      %v1093 = vld [vmem:[%s787 + $0xca] sm:$0xff]
      %v1094 = vld [vmem:[%s787 + $0xda] sm:$0xff]
      %v1095 = vld [vmem:[%s787 + $0xe2] sm:$0xff]
      %v1096 = vld [vmem:[%s787 + $0xf2] sm:$0xff]
      %v1097 = vld [vmem:[%s787 + $0xfa] sm:$0xff]
      %v1098 = vld [vmem:[%s787 + $0x10a] sm:$0xff]
      %v1099 = vld [vmem:[%s787 + $0x112] sm:$0xff]
      %v1100 = vld [vmem:[%s787 + $0x122] sm:$0xff]
      %v1101 = vld [vmem:[%s787 + $0x12a] sm:$0xff]
      %v1102 = vld [vmem:[%s787 + $0x13a] sm:$0xff]
      %v1103 = vld [vmem:[%s787 + $0x142] sm:$0xff]
      %v1104 = vld [vmem:[%s787 + $0x152] sm:$0xff]
      %v1105 = vld [vmem:[%s787 + $0x15a] sm:$0xff]
      %v1106 = vld [vmem:[%s787 + $0x16a] sm:$0xff]
      %v1107 = vld [vmem:[%s787 + $0x172] sm:$0xff]
      %v1108 = vmax.f32 %v1044, %v1076
      %v1109 = vmax.f32 %v1045, %v1077
      %v1110 = vmax.f32 %v1046, %v1078
      %v1111 = vmax.f32 %v1047, %v1079
      %v1112 = vmax.f32 %v1048, %v1080
      %v1113 = vmax.f32 %v1049, %v1081
      %v1114 = vmax.f32 %v1050, %v1082
      %v1115 = vmax.f32 %v1051, %v1083
      %v1116 = vmax.f32 %v1052, %v1084
      %v1117 = vmax.f32 %v1053, %v1085
      %v1118 = vmax.f32 %v1054, %v1086
      %v1119 = vmax.f32 %v1055, %v1087
      %v1120 = vmax.f32 %v1056, %v1088
      %v1121 = vmax.f32 %v1057, %v1089
      %v1122 = vmax.f32 %v1058, %v1090
      %v1123 = vmax.f32 %v1059, %v1091
      %v1124 = vmax.f32 %v1060, %v1092
      %v1125 = vmax.f32 %v1061, %v1093
      %v1126 = vmax.f32 %v1062, %v1094
      %v1127 = vmax.f32 %v1063, %v1095
      %v1128 = vmax.f32 %v1064, %v1096
      %v1129 = vmax.f32 %v1065, %v1097
      %v1130 = vmax.f32 %v1066, %v1098
      %v1131 = vmax.f32 %v1067, %v1099
      %v1132 = vmax.f32 %v1068, %v1100
      %v1133 = vmax.f32 %v1069, %v1101
      %v1134 = vmax.f32 %v1070, %v1102
      %v1135 = vmax.f32 %v1071, %v1103
      %v1136 = vmax.f32 %v1072, %v1104
      %v1137 = vmax.f32 %v1073, %v1105
      %v1138 = vmax.f32 %v1074, %v1106
      %v1139 = vmax.f32 %v1075, %v1107
      %s1140 = scalar_lea.vmem [#allocation2], 48
      %v1141 = vld [vmem:[%s1140] sm:$0xff]
      %v1142 = vld [vmem:[%s1140 + $0x8] sm:$0xff]
      %v1143 = vld [vmem:[%s1140 + $0x18] sm:$0xff]
      %v1144 = vld [vmem:[%s1140 + $0x20] sm:$0xff]
      %v1145 = vld [vmem:[%s1140 + $0x30] sm:$0xff]
      %v1146 = vld [vmem:[%s1140 + $0x38] sm:$0xff]
      %v1147 = vld [vmem:[%s1140 + $0x48] sm:$0xff]
      %v1148 = vld [vmem:[%s1140 + $0x50] sm:$0xff]
      %v1149 = vld [vmem:[%s1140 + $0x60] sm:$0xff]
      %v1150 = vld [vmem:[%s1140 + $0x68] sm:$0xff]
      %v1151 = vld [vmem:[%s1140 + $0x78] sm:$0xff]
      %v1152 = vld [vmem:[%s1140 + $0x80] sm:$0xff]
      %v1153 = vld [vmem:[%s1140 + $0x90] sm:$0xff]
      %v1154 = vld [vmem:[%s1140 + $0x98] sm:$0xff]
      %v1155 = vld [vmem:[%s1140 + $0xa8] sm:$0xff]
      %v1156 = vld [vmem:[%s1140 + $0xb0] sm:$0xff]
      %v1157 = vld [vmem:[%s1140 + $0xc0] sm:$0xff]
      %v1158 = vld [vmem:[%s1140 + $0xc8] sm:$0xff]
      %v1159 = vld [vmem:[%s1140 + $0xd8] sm:$0xff]
      %v1160 = vld [vmem:[%s1140 + $0xe0] sm:$0xff]
      %v1161 = vld [vmem:[%s1140 + $0xf0] sm:$0xff]
      %v1162 = vld [vmem:[%s1140 + $0xf8] sm:$0xff]
      %v1163 = vld [vmem:[%s1140 + $0x108] sm:$0xff]
      %v1164 = vld [vmem:[%s1140 + $0x110] sm:$0xff]
      %v1165 = vld [vmem:[%s1140 + $0x120] sm:$0xff]
      %v1166 = vld [vmem:[%s1140 + $0x128] sm:$0xff]
      %v1167 = vld [vmem:[%s1140 + $0x138] sm:$0xff]
      %v1168 = vld [vmem:[%s1140 + $0x140] sm:$0xff]
      %v1169 = vld [vmem:[%s1140 + $0x150] sm:$0xff]
      %v1170 = vld [vmem:[%s1140 + $0x158] sm:$0xff]
      %v1171 = vld [vmem:[%s1140 + $0x168] sm:$0xff]
      %v1172 = vld [vmem:[%s1140 + $0x170] sm:$0xff]
      %v1173 = vmax.f32 %v1108, %v1141
      %v1174 = vmax.f32 %v1109, %v1142
      %v1175 = vmax.f32 %v1110, %v1143
      %v1176 = vmax.f32 %v1111, %v1144
      %v1177 = vmax.f32 %v1112, %v1145
      %v1178 = vmax.f32 %v1113, %v1146
      %v1179 = vmax.f32 %v1114, %v1147
      %v1180 = vmax.f32 %v1115, %v1148
      %v1181 = vmax.f32 %v1116, %v1149
      %v1182 = vmax.f32 %v1117, %v1150
      %v1183 = vmax.f32 %v1118, %v1151
      %v1184 = vmax.f32 %v1119, %v1152
      %v1185 = vmax.f32 %v1120, %v1153
      %v1186 = vmax.f32 %v1121, %v1154
      %v1187 = vmax.f32 %v1122, %v1155
      %v1188 = vmax.f32 %v1123, %v1156
      %v1189 = vmax.f32 %v1124, %v1157
      %v1190 = vmax.f32 %v1125, %v1158
      %v1191 = vmax.f32 %v1126, %v1159
      %v1192 = vmax.f32 %v1127, %v1160
      %v1193 = vmax.f32 %v1128, %v1161
      %v1194 = vmax.f32 %v1129, %v1162
      %v1195 = vmax.f32 %v1130, %v1163
      %v1196 = vmax.f32 %v1131, %v1164
      %v1197 = vmax.f32 %v1132, %v1165
      %v1198 = vmax.f32 %v1133, %v1166
      %v1199 = vmax.f32 %v1134, %v1167
      %v1200 = vmax.f32 %v1135, %v1168
      %v1201 = vmax.f32 %v1136, %v1169
      %v1202 = vmax.f32 %v1137, %v1170
      %v1203 = vmax.f32 %v1138, %v1171
      %v1204 = vmax.f32 %v1139, %v1172
      %v1205 = vld [vmem:[%s1140 + $0x1] sm:$0xff]
      %v1206 = vld [vmem:[%s1140 + $0x9] sm:$0xff]
      %v1207 = vld [vmem:[%s1140 + $0x19] sm:$0xff]
      %v1208 = vld [vmem:[%s1140 + $0x21] sm:$0xff]
      %v1209 = vld [vmem:[%s1140 + $0x31] sm:$0xff]
      %v1210 = vld [vmem:[%s1140 + $0x39] sm:$0xff]
      %v1211 = vld [vmem:[%s1140 + $0x49] sm:$0xff]
      %v1212 = vld [vmem:[%s1140 + $0x51] sm:$0xff]
      %v1213 = vld [vmem:[%s1140 + $0x61] sm:$0xff]
      %v1214 = vld [vmem:[%s1140 + $0x69] sm:$0xff]
      %v1215 = vld [vmem:[%s1140 + $0x79] sm:$0xff]
      %v1216 = vld [vmem:[%s1140 + $0x81] sm:$0xff]
      %v1217 = vld [vmem:[%s1140 + $0x91] sm:$0xff]
      %v1218 = vld [vmem:[%s1140 + $0x99] sm:$0xff]
      %v1219 = vld [vmem:[%s1140 + $0xa9] sm:$0xff]
      %v1220 = vld [vmem:[%s1140 + $0xb1] sm:$0xff]
      %v1221 = vld [vmem:[%s1140 + $0xc1] sm:$0xff]
      %v1222 = vld [vmem:[%s1140 + $0xc9] sm:$0xff]
      %v1223 = vld [vmem:[%s1140 + $0xd9] sm:$0xff]
      %v1224 = vld [vmem:[%s1140 + $0xe1] sm:$0xff]
      %v1225 = vld [vmem:[%s1140 + $0xf1] sm:$0xff]
      %v1226 = vld [vmem:[%s1140 + $0xf9] sm:$0xff]
      %v1227 = vld [vmem:[%s1140 + $0x109] sm:$0xff]
      %v1228 = vld [vmem:[%s1140 + $0x111] sm:$0xff]
      %v1229 = vld [vmem:[%s1140 + $0x121] sm:$0xff]
      %v1230 = vld [vmem:[%s1140 + $0x129] sm:$0xff]
      %v1231 = vld [vmem:[%s1140 + $0x139] sm:$0xff]
      %v1232 = vld [vmem:[%s1140 + $0x141] sm:$0xff]
      %v1233 = vld [vmem:[%s1140 + $0x151] sm:$0xff]
      %v1234 = vld [vmem:[%s1140 + $0x159] sm:$0xff]
      %v1235 = vld [vmem:[%s1140 + $0x169] sm:$0xff]
      %v1236 = vld [vmem:[%s1140 + $0x171] sm:$0xff]
      %v1237 = vmax.f32 %v1173, %v1205
      %v1238 = vmax.f32 %v1174, %v1206
      %v1239 = vmax.f32 %v1175, %v1207
      %v1240 = vmax.f32 %v1176, %v1208
      %v1241 = vmax.f32 %v1177, %v1209
      %v1242 = vmax.f32 %v1178, %v1210
      %v1243 = vmax.f32 %v1179, %v1211
      %v1244 = vmax.f32 %v1180, %v1212
      %v1245 = vmax.f32 %v1181, %v1213
      %v1246 = vmax.f32 %v1182, %v1214
      %v1247 = vmax.f32 %v1183, %v1215
      %v1248 = vmax.f32 %v1184, %v1216
      %v1249 = vmax.f32 %v1185, %v1217
      %v1250 = vmax.f32 %v1186, %v1218
      %v1251 = vmax.f32 %v1187, %v1219
      %v1252 = vmax.f32 %v1188, %v1220
      %v1253 = vmax.f32 %v1189, %v1221
      %v1254 = vmax.f32 %v1190, %v1222
      %v1255 = vmax.f32 %v1191, %v1223
      %v1256 = vmax.f32 %v1192, %v1224
      %v1257 = vmax.f32 %v1193, %v1225
      %v1258 = vmax.f32 %v1194, %v1226
      %v1259 = vmax.f32 %v1195, %v1227
      %v1260 = vmax.f32 %v1196, %v1228
      %v1261 = vmax.f32 %v1197, %v1229
      %v1262 = vmax.f32 %v1198, %v1230
      %v1263 = vmax.f32 %v1199, %v1231
      %v1264 = vmax.f32 %v1200, %v1232
      %v1265 = vmax.f32 %v1201, %v1233
      %v1266 = vmax.f32 %v1202, %v1234
      %v1267 = vmax.f32 %v1203, %v1235
      %v1268 = vmax.f32 %v1204, %v1236
      %v1269 = vld [vmem:[%s1140 + $0x2] sm:$0xff]
      %v1270 = vld [vmem:[%s1140 + $0xa] sm:$0xff]
      %v1271 = vld [vmem:[%s1140 + $0x1a] sm:$0xff]
      %v1272 = vld [vmem:[%s1140 + $0x22] sm:$0xff]
      %v1273 = vld [vmem:[%s1140 + $0x32] sm:$0xff]
      %v1274 = vld [vmem:[%s1140 + $0x3a] sm:$0xff]
      %v1275 = vld [vmem:[%s1140 + $0x4a] sm:$0xff]
      %v1276 = vld [vmem:[%s1140 + $0x52] sm:$0xff]
      %v1277 = vld [vmem:[%s1140 + $0x62] sm:$0xff]
      %v1278 = vld [vmem:[%s1140 + $0x6a] sm:$0xff]
      %v1279 = vld [vmem:[%s1140 + $0x7a] sm:$0xff]
      %v1280 = vld [vmem:[%s1140 + $0x82] sm:$0xff]
      %v1281 = vld [vmem:[%s1140 + $0x92] sm:$0xff]
      %v1282 = vld [vmem:[%s1140 + $0x9a] sm:$0xff]
      %v1283 = vld [vmem:[%s1140 + $0xaa] sm:$0xff]
      %v1284 = vld [vmem:[%s1140 + $0xb2] sm:$0xff]
      %v1285 = vld [vmem:[%s1140 + $0xc2] sm:$0xff]
      %v1286 = vld [vmem:[%s1140 + $0xca] sm:$0xff]
      %v1287 = vld [vmem:[%s1140 + $0xda] sm:$0xff]
      %v1288 = vld [vmem:[%s1140 + $0xe2] sm:$0xff]
      %v1289 = vld [vmem:[%s1140 + $0xf2] sm:$0xff]
      %v1290 = vld [vmem:[%s1140 + $0xfa] sm:$0xff]
      %v1291 = vld [vmem:[%s1140 + $0x10a] sm:$0xff]
      %v1292 = vld [vmem:[%s1140 + $0x112] sm:$0xff]
      %v1293 = vld [vmem:[%s1140 + $0x122] sm:$0xff]
      %v1294 = vld [vmem:[%s1140 + $0x12a] sm:$0xff]
      %v1295 = vld [vmem:[%s1140 + $0x13a] sm:$0xff]
      %v1296 = vld [vmem:[%s1140 + $0x142] sm:$0xff]
      %v1297 = vld [vmem:[%s1140 + $0x152] sm:$0xff]
      %v1298 = vld [vmem:[%s1140 + $0x15a] sm:$0xff]
      %v1299 = vld [vmem:[%s1140 + $0x16a] sm:$0xff]
      %v1300 = vld [vmem:[%s1140 + $0x172] sm:$0xff]
      %v1301 = vmax.f32 %v1237, %v1269
      %v1302 = vmax.f32 %v1238, %v1270
      %v1303 = vmax.f32 %v1239, %v1271
      %v1304 = vmax.f32 %v1240, %v1272
      %v1305 = vmax.f32 %v1241, %v1273
      %v1306 = vmax.f32 %v1242, %v1274
      %v1307 = vmax.f32 %v1243, %v1275
      %v1308 = vmax.f32 %v1244, %v1276
      %v1309 = vmax.f32 %v1245, %v1277
      %v1310 = vmax.f32 %v1246, %v1278
      %v1311 = vmax.f32 %v1247, %v1279
      %v1312 = vmax.f32 %v1248, %v1280
      %v1313 = vmax.f32 %v1249, %v1281
      %v1314 = vmax.f32 %v1250, %v1282
      %v1315 = vmax.f32 %v1251, %v1283
      %v1316 = vmax.f32 %v1252, %v1284
      %v1317 = vmax.f32 %v1253, %v1285
      %v1318 = vmax.f32 %v1254, %v1286
      %v1319 = vmax.f32 %v1255, %v1287
      %v1320 = vmax.f32 %v1256, %v1288
      %v1321 = vmax.f32 %v1257, %v1289
      %v1322 = vmax.f32 %v1258, %v1290
      %v1323 = vmax.f32 %v1259, %v1291
      %v1324 = vmax.f32 %v1260, %v1292
      %v1325 = vmax.f32 %v1261, %v1293
      %v1326 = vmax.f32 %v1262, %v1294
      %v1327 = vmax.f32 %v1263, %v1295
      %v1328 = vmax.f32 %v1264, %v1296
      %v1329 = vmax.f32 %v1265, %v1297
      %v1330 = vmax.f32 %v1266, %v1298
      %v1331 = vmax.f32 %v1267, %v1299
      %v1332 = vmax.f32 %v1268, %v1300
      %1333 = vst.msk [vmem:[#allocation7] sm:$0xff] %vm279, %v1301
      %1334 = vst.msk [vmem:[#allocation7 + $0x8] sm:$0xff] %vm279, %v1302
      %1335 = vst.msk [vmem:[#allocation7 + $0x10] sm:$0xff] %vm279, %v1303
      %1336 = vst.msk [vmem:[#allocation7 + $0x18] sm:$0xff] %vm279, %v1304
      %1337 = vst.msk [vmem:[#allocation7 + $0x20] sm:$0xff] %vm279, %v1305
      %1338 = vst.msk [vmem:[#allocation7 + $0x28] sm:$0xff] %vm279, %v1306
      %1339 = vst.msk [vmem:[#allocation7 + $0x30] sm:$0xff] %vm279, %v1307
      %1340 = vst.msk [vmem:[#allocation7 + $0x38] sm:$0xff] %vm279, %v1308
      %1341 = vst.msk [vmem:[#allocation7 + $0x40] sm:$0xff] %vm279, %v1309
      %1342 = vst.msk [vmem:[#allocation7 + $0x48] sm:$0xff] %vm279, %v1310
      %1343 = vst.msk [vmem:[#allocation7 + $0x50] sm:$0xff] %vm279, %v1311
      %1344 = vst.msk [vmem:[#allocation7 + $0x58] sm:$0xff] %vm279, %v1312
      %1345 = vst.msk [vmem:[#allocation7 + $0x60] sm:$0xff] %vm279, %v1313
      %1346 = vst.msk [vmem:[#allocation7 + $0x68] sm:$0xff] %vm279, %v1314
      %1347 = vst.msk [vmem:[#allocation7 + $0x70] sm:$0xff] %vm279, %v1315
      %1348 = vst.msk [vmem:[#allocation7 + $0x78] sm:$0xff] %vm279, %v1316
      %1349 = vst.msk [vmem:[#allocation7 + $0x80] sm:$0xff] %vm279, %v1317
      %1350 = vst.msk [vmem:[#allocation7 + $0x88] sm:$0xff] %vm279, %v1318
      %1351 = vst.msk [vmem:[#allocation7 + $0x90] sm:$0xff] %vm279, %v1319
      %1352 = vst.msk [vmem:[#allocation7 + $0x98] sm:$0xff] %vm279, %v1320
      %1353 = vst.msk [vmem:[#allocation7 + $0xa0] sm:$0xff] %vm279, %v1321
      %1354 = vst.msk [vmem:[#allocation7 + $0xa8] sm:$0xff] %vm279, %v1322
      %1355 = vst.msk [vmem:[#allocation7 + $0xb0] sm:$0xff] %vm279, %v1323
      %1356 = vst.msk [vmem:[#allocation7 + $0xb8] sm:$0xff] %vm279, %v1324
      %1357 = vst.msk [vmem:[#allocation7 + $0xc0] sm:$0xff] %vm279, %v1325
      %1358 = vst.msk [vmem:[#allocation7 + $0xc8] sm:$0xff] %vm279, %v1326
      %1359 = vst.msk [vmem:[#allocation7 + $0xd0] sm:$0xff] %vm279, %v1327
      %1360 = vst.msk [vmem:[#allocation7 + $0xd8] sm:$0xff] %vm279, %v1328
      %1361 = vst.msk [vmem:[#allocation7 + $0xe0] sm:$0xff] %vm279, %v1329
      %1362 = vst.msk [vmem:[#allocation7 + $0xe8] sm:$0xff] %vm279, %v1330
      %1363 = vst.msk [vmem:[#allocation7 + $0xf0] sm:$0xff] %vm279, %v1331
      %1364 = vst.msk [vmem:[#allocation7 + $0xf8] sm:$0xff] %vm279, %v1332
      %1397 = vrot.lane.b32.xlu0 %v629, 124
      %v1398 = vpop.permute.xlu0 %1397
      %1399 = vrot.lane.b32.xlu0 %v634, 124
      %v1400 = vpop.permute.xlu0 %1399
      %1401 = vrot.lane.b32.xlu0 %v639, 124
      %v1402 = vpop.permute.xlu0 %1401
      %1403 = vrot.lane.b32.xlu0 %v644, 124
      %v1404 = vpop.permute.xlu0 %1403
      %1405 = vrot.lane.b32.xlu0 %v649, 124
      %v1406 = vpop.permute.xlu0 %1405
      %1407 = vrot.lane.b32.xlu0 %v654, 124
      %v1408 = vpop.permute.xlu0 %1407
      %1409 = vrot.lane.b32.xlu0 %v659, 124
      %v1410 = vpop.permute.xlu0 %1409
      %1411 = vrot.lane.b32.xlu0 %v664, 124
      %v1412 = vpop.permute.xlu0 %1411
      %1413 = vrot.lane.b32.xlu0 %v669, 124
      %v1414 = vpop.permute.xlu0 %1413
      %1415 = vrot.lane.b32.xlu0 %v674, 124
      %v1416 = vpop.permute.xlu0 %1415
      %1417 = vrot.lane.b32.xlu0 %v679, 124
      %v1418 = vpop.permute.xlu0 %1417
      %1419 = vrot.lane.b32.xlu0 %v684, 124
      %v1420 = vpop.permute.xlu0 %1419
      %1421 = vrot.lane.b32.xlu0 %v689, 124
      %v1422 = vpop.permute.xlu0 %1421
      %1423 = vrot.lane.b32.xlu0 %v694, 124
      %v1424 = vpop.permute.xlu0 %1423
      %1425 = vrot.lane.b32.xlu0 %v699, 124
      %v1426 = vpop.permute.xlu0 %1425
      %1427 = vrot.lane.b32.xlu0 %v704, 124
      %v1428 = vpop.permute.xlu0 %1427
      %1429 = vrot.lane.b32.xlu0 %v709, 124
      %v1430 = vpop.permute.xlu0 %1429
      %1431 = vrot.lane.b32.xlu0 %v714, 124
      %v1432 = vpop.permute.xlu0 %1431
      %1433 = vrot.lane.b32.xlu0 %v719, 124
      %v1434 = vpop.permute.xlu0 %1433
      %1435 = vrot.lane.b32.xlu0 %v724, 124
      %v1436 = vpop.permute.xlu0 %1435
      %1437 = vrot.lane.b32.xlu0 %v729, 124
      %v1438 = vpop.permute.xlu0 %1437
      %1439 = vrot.lane.b32.xlu0 %v734, 124
      %v1440 = vpop.permute.xlu0 %1439
      %1441 = vrot.lane.b32.xlu0 %v739, 124
      %v1442 = vpop.permute.xlu0 %1441
      %1443 = vrot.lane.b32.xlu0 %v744, 124
      %v1444 = vpop.permute.xlu0 %1443
      %1445 = vrot.lane.b32.xlu0 %v749, 124
      %v1446 = vpop.permute.xlu0 %1445
      %1447 = vrot.lane.b32.xlu0 %v754, 124
      %v1448 = vpop.permute.xlu0 %1447
      %1449 = vrot.lane.b32.xlu0 %v759, 124
      %v1450 = vpop.permute.xlu0 %1449
      %1451 = vrot.lane.b32.xlu0 %v764, 124
      %v1452 = vpop.permute.xlu0 %1451
      %1453 = vrot.lane.b32.xlu0 %v769, 124
      %v1454 = vpop.permute.xlu0 %1453
      %1455 = vrot.lane.b32.xlu0 %v774, 124
      %v1456 = vpop.permute.xlu0 %1455
      %1457 = vrot.lane.b32.xlu0 %v779, 124
      %v1458 = vpop.permute.xlu0 %1457
      %1459 = vrot.lane.b32.xlu0 %v784, 124
      %v1460 = vpop.permute.xlu0 %1459
      %s1493 = scalar_lea.vmem [#allocation3], 24
      %1494 = vst.msk [vmem:[%s1493 + $0x1] sm:$0xff] %vm279, %v1398
      %1495 = vst.msk [vmem:[%s1493 + $0x9] sm:$0xff] %vm279, %v1400
      %1496 = vst.msk [vmem:[%s1493 + $0x19] sm:$0xff] %vm279, %v1402
      %1497 = vst.msk [vmem:[%s1493 + $0x21] sm:$0xff] %vm279, %v1404
      %1498 = vst.msk [vmem:[%s1493 + $0x31] sm:$0xff] %vm279, %v1406
      %1499 = vst.msk [vmem:[%s1493 + $0x39] sm:$0xff] %vm279, %v1408
      %1500 = vst.msk [vmem:[%s1493 + $0x49] sm:$0xff] %vm279, %v1410
      %1501 = vst.msk [vmem:[%s1493 + $0x51] sm:$0xff] %vm279, %v1412
      %1502 = vst.msk [vmem:[%s1493 + $0x61] sm:$0xff] %vm279, %v1414
      %1503 = vst.msk [vmem:[%s1493 + $0x69] sm:$0xff] %vm279, %v1416
      %1504 = vst.msk [vmem:[%s1493 + $0x79] sm:$0xff] %vm279, %v1418
      %1505 = vst.msk [vmem:[%s1493 + $0x81] sm:$0xff] %vm279, %v1420
      %1506 = vst.msk [vmem:[%s1493 + $0x91] sm:$0xff] %vm279, %v1422
      %1507 = vst.msk [vmem:[%s1493 + $0x99] sm:$0xff] %vm279, %v1424
      %1508 = vst.msk [vmem:[%s1493 + $0xa9] sm:$0xff] %vm279, %v1426
      %1509 = vst.msk [vmem:[%s1493 + $0xb1] sm:$0xff] %vm279, %v1428
      %1510 = vst.msk [vmem:[%s1493 + $0xc1] sm:$0xff] %vm279, %v1430
      %1511 = vst.msk [vmem:[%s1493 + $0xc9] sm:$0xff] %vm279, %v1432
      %1512 = vst.msk [vmem:[%s1493 + $0xd9] sm:$0xff] %vm279, %v1434
      %1513 = vst.msk [vmem:[%s1493 + $0xe1] sm:$0xff] %vm279, %v1436
      %1514 = vst.msk [vmem:[%s1493 + $0xf1] sm:$0xff] %vm279, %v1438
      %1515 = vst.msk [vmem:[%s1493 + $0xf9] sm:$0xff] %vm279, %v1440
      %1516 = vst.msk [vmem:[%s1493 + $0x109] sm:$0xff] %vm279, %v1442
      %1517 = vst.msk [vmem:[%s1493 + $0x111] sm:$0xff] %vm279, %v1444
      %1518 = vst.msk [vmem:[%s1493 + $0x121] sm:$0xff] %vm279, %v1446
      %1519 = vst.msk [vmem:[%s1493 + $0x129] sm:$0xff] %vm279, %v1448
      %1520 = vst.msk [vmem:[%s1493 + $0x139] sm:$0xff] %vm279, %v1450
      %1521 = vst.msk [vmem:[%s1493 + $0x141] sm:$0xff] %vm279, %v1452
      %1522 = vst.msk [vmem:[%s1493 + $0x151] sm:$0xff] %vm279, %v1454
      %1523 = vst.msk [vmem:[%s1493 + $0x159] sm:$0xff] %vm279, %v1456
      %1524 = vst.msk [vmem:[%s1493 + $0x169] sm:$0xff] %vm279, %v1458
      %1525 = vst.msk [vmem:[%s1493 + $0x171] sm:$0xff] %vm279, %v1460
      %v1526 = vld [vmem:[#allocation3] sm:$0xff]
      %v1527 = vld [vmem:[#allocation3 + $0x8] sm:$0xff]
      %v1528 = vld [vmem:[#allocation3 + $0x18] sm:$0xff]
      %v1529 = vld [vmem:[#allocation3 + $0x20] sm:$0xff]
      %v1530 = vld [vmem:[#allocation3 + $0x30] sm:$0xff]
      %v1531 = vld [vmem:[#allocation3 + $0x38] sm:$0xff]
      %v1532 = vld [vmem:[#allocation3 + $0x48] sm:$0xff]
      %v1533 = vld [vmem:[#allocation3 + $0x50] sm:$0xff]
      %v1534 = vld [vmem:[#allocation3 + $0x60] sm:$0xff]
      %v1535 = vld [vmem:[#allocation3 + $0x68] sm:$0xff]
      %v1536 = vld [vmem:[#allocation3 + $0x78] sm:$0xff]
      %v1537 = vld [vmem:[#allocation3 + $0x80] sm:$0xff]
      %v1538 = vld [vmem:[#allocation3 + $0x90] sm:$0xff]
      %v1539 = vld [vmem:[#allocation3 + $0x98] sm:$0xff]
      %v1540 = vld [vmem:[#allocation3 + $0xa8] sm:$0xff]
      %v1541 = vld [vmem:[#allocation3 + $0xb0] sm:$0xff]
      %v1542 = vld [vmem:[#allocation3 + $0xc0] sm:$0xff]
      %v1543 = vld [vmem:[#allocation3 + $0xc8] sm:$0xff]
      %v1544 = vld [vmem:[#allocation3 + $0xd8] sm:$0xff]
      %v1545 = vld [vmem:[#allocation3 + $0xe0] sm:$0xff]
      %v1546 = vld [vmem:[#allocation3 + $0xf0] sm:$0xff]
      %v1547 = vld [vmem:[#allocation3 + $0xf8] sm:$0xff]
      %v1548 = vld [vmem:[#allocation3 + $0x108] sm:$0xff]
      %v1549 = vld [vmem:[#allocation3 + $0x110] sm:$0xff]
      %v1550 = vld [vmem:[#allocation3 + $0x120] sm:$0xff]
      %v1551 = vld [vmem:[#allocation3 + $0x128] sm:$0xff]
      %v1552 = vld [vmem:[#allocation3 + $0x138] sm:$0xff]
      %v1553 = vld [vmem:[#allocation3 + $0x140] sm:$0xff]
      %v1554 = vld [vmem:[#allocation3 + $0x150] sm:$0xff]
      %v1555 = vld [vmem:[#allocation3 + $0x158] sm:$0xff]
      %v1556 = vld [vmem:[#allocation3 + $0x168] sm:$0xff]
      %v1557 = vld [vmem:[#allocation3 + $0x170] sm:$0xff]
      %1558 = vst.msk [vmem:[#allocation5] sm:$0xff] %vm279, %v1526
      %1559 = vst.msk [vmem:[#allocation5 + $0x8] sm:$0xff] %vm279, %v1527
      %1560 = vst.msk [vmem:[#allocation5 + $0x10] sm:$0xff] %vm279, %v1528
      %1561 = vst.msk [vmem:[#allocation5 + $0x18] sm:$0xff] %vm279, %v1529
      %1562 = vst.msk [vmem:[#allocation5 + $0x20] sm:$0xff] %vm279, %v1530
      %1563 = vst.msk [vmem:[#allocation5 + $0x28] sm:$0xff] %vm279, %v1531
      %1564 = vst.msk [vmem:[#allocation5 + $0x30] sm:$0xff] %vm279, %v1532
      %1565 = vst.msk [vmem:[#allocation5 + $0x38] sm:$0xff] %vm279, %v1533
      %1566 = vst.msk [vmem:[#allocation5 + $0x40] sm:$0xff] %vm279, %v1534
      %1567 = vst.msk [vmem:[#allocation5 + $0x48] sm:$0xff] %vm279, %v1535
      %1568 = vst.msk [vmem:[#allocation5 + $0x50] sm:$0xff] %vm279, %v1536
      %1569 = vst.msk [vmem:[#allocation5 + $0x58] sm:$0xff] %vm279, %v1537
      %1570 = vst.msk [vmem:[#allocation5 + $0x60] sm:$0xff] %vm279, %v1538
      %1571 = vst.msk [vmem:[#allocation5 + $0x68] sm:$0xff] %vm279, %v1539
      %1572 = vst.msk [vmem:[#allocation5 + $0x70] sm:$0xff] %vm279, %v1540
      %1573 = vst.msk [vmem:[#allocation5 + $0x78] sm:$0xff] %vm279, %v1541
      %1574 = vst.msk [vmem:[#allocation5 + $0x80] sm:$0xff] %vm279, %v1542
      %1575 = vst.msk [vmem:[#allocation5 + $0x88] sm:$0xff] %vm279, %v1543
      %1576 = vst.msk [vmem:[#allocation5 + $0x90] sm:$0xff] %vm279, %v1544
      %1577 = vst.msk [vmem:[#allocation5 + $0x98] sm:$0xff] %vm279, %v1545
      %1578 = vst.msk [vmem:[#allocation5 + $0xa0] sm:$0xff] %vm279, %v1546
      %1579 = vst.msk [vmem:[#allocation5 + $0xa8] sm:$0xff] %vm279, %v1547
      %1580 = vst.msk [vmem:[#allocation5 + $0xb0] sm:$0xff] %vm279, %v1548
      %1581 = vst.msk [vmem:[#allocation5 + $0xb8] sm:$0xff] %vm279, %v1549
      %1582 = vst.msk [vmem:[#allocation5 + $0xc0] sm:$0xff] %vm279, %v1550
      %1583 = vst.msk [vmem:[#allocation5 + $0xc8] sm:$0xff] %vm279, %v1551
      %1584 = vst.msk [vmem:[#allocation5 + $0xd0] sm:$0xff] %vm279, %v1552
      %1585 = vst.msk [vmem:[#allocation5 + $0xd8] sm:$0xff] %vm279, %v1553
      %1586 = vst.msk [vmem:[#allocation5 + $0xe0] sm:$0xff] %vm279, %v1554
      %1587 = vst.msk [vmem:[#allocation5 + $0xe8] sm:$0xff] %vm279, %v1555
      %1588 = vst.msk [vmem:[#allocation5 + $0xf0] sm:$0xff] %vm279, %v1556
      %1589 = vst.msk [vmem:[#allocation5 + $0xf8] sm:$0xff] %vm279, %v1557
      %v1590 = vld [vmem:[#allocation3 + $0x1] sm:$0xff]
      %v1591 = vld [vmem:[#allocation3 + $0x9] sm:$0xff]
      %v1592 = vld [vmem:[#allocation3 + $0x19] sm:$0xff]
      %v1593 = vld [vmem:[#allocation3 + $0x21] sm:$0xff]
      %v1594 = vld [vmem:[#allocation3 + $0x31] sm:$0xff]
      %v1595 = vld [vmem:[#allocation3 + $0x39] sm:$0xff]
      %v1596 = vld [vmem:[#allocation3 + $0x49] sm:$0xff]
      %v1597 = vld [vmem:[#allocation3 + $0x51] sm:$0xff]
      %v1598 = vld [vmem:[#allocation3 + $0x61] sm:$0xff]
      %v1599 = vld [vmem:[#allocation3 + $0x69] sm:$0xff]
      %v1600 = vld [vmem:[#allocation3 + $0x79] sm:$0xff]
      %v1601 = vld [vmem:[#allocation3 + $0x81] sm:$0xff]
      %v1602 = vld [vmem:[#allocation3 + $0x91] sm:$0xff]
      %v1603 = vld [vmem:[#allocation3 + $0x99] sm:$0xff]
      %v1604 = vld [vmem:[#allocation3 + $0xa9] sm:$0xff]
      %v1605 = vld [vmem:[#allocation3 + $0xb1] sm:$0xff]
      %v1606 = vld [vmem:[#allocation3 + $0xc1] sm:$0xff]
      %v1607 = vld [vmem:[#allocation3 + $0xc9] sm:$0xff]
      %v1608 = vld [vmem:[#allocation3 + $0xd9] sm:$0xff]
      %v1609 = vld [vmem:[#allocation3 + $0xe1] sm:$0xff]
      %v1610 = vld [vmem:[#allocation3 + $0xf1] sm:$0xff]
      %v1611 = vld [vmem:[#allocation3 + $0xf9] sm:$0xff]
      %v1612 = vld [vmem:[#allocation3 + $0x109] sm:$0xff]
      %v1613 = vld [vmem:[#allocation3 + $0x111] sm:$0xff]
      %v1614 = vld [vmem:[#allocation3 + $0x121] sm:$0xff]
      %v1615 = vld [vmem:[#allocation3 + $0x129] sm:$0xff]
      %v1616 = vld [vmem:[#allocation3 + $0x139] sm:$0xff]
      %v1617 = vld [vmem:[#allocation3 + $0x141] sm:$0xff]
      %v1618 = vld [vmem:[#allocation3 + $0x151] sm:$0xff]
      %v1619 = vld [vmem:[#allocation3 + $0x159] sm:$0xff]
      %v1620 = vld [vmem:[#allocation3 + $0x169] sm:$0xff]
      %v1621 = vld [vmem:[#allocation3 + $0x171] sm:$0xff]
      %1654 = vrot.lane.b32.xlu0 %v1590, 4
      %v1655 = vpop.permute.xlu0 %1654
      %1656 = vrot.lane.b32.xlu0 %v1591, 4
      %v1657 = vpop.permute.xlu0 %1656
      %1658 = vrot.lane.b32.xlu0 %v1592, 4
      %v1659 = vpop.permute.xlu0 %1658
      %1660 = vrot.lane.b32.xlu0 %v1593, 4
      %v1661 = vpop.permute.xlu0 %1660
      %1662 = vrot.lane.b32.xlu0 %v1594, 4
      %v1663 = vpop.permute.xlu0 %1662
      %1664 = vrot.lane.b32.xlu0 %v1595, 4
      %v1665 = vpop.permute.xlu0 %1664
      %1666 = vrot.lane.b32.xlu0 %v1596, 4
      %v1667 = vpop.permute.xlu0 %1666
      %1668 = vrot.lane.b32.xlu0 %v1597, 4
      %v1669 = vpop.permute.xlu0 %1668
      %1670 = vrot.lane.b32.xlu0 %v1598, 4
      %v1671 = vpop.permute.xlu0 %1670
      %1672 = vrot.lane.b32.xlu0 %v1599, 4
      %v1673 = vpop.permute.xlu0 %1672
      %1674 = vrot.lane.b32.xlu0 %v1600, 4
      %v1675 = vpop.permute.xlu0 %1674
      %1676 = vrot.lane.b32.xlu0 %v1601, 4
      %v1677 = vpop.permute.xlu0 %1676
      %1678 = vrot.lane.b32.xlu0 %v1602, 4
      %v1679 = vpop.permute.xlu0 %1678
      %1680 = vrot.lane.b32.xlu0 %v1603, 4
      %v1681 = vpop.permute.xlu0 %1680
      %1682 = vrot.lane.b32.xlu0 %v1604, 4
      %v1683 = vpop.permute.xlu0 %1682
      %1684 = vrot.lane.b32.xlu0 %v1605, 4
      %v1685 = vpop.permute.xlu0 %1684
      %1686 = vrot.lane.b32.xlu0 %v1606, 4
      %v1687 = vpop.permute.xlu0 %1686
      %1688 = vrot.lane.b32.xlu0 %v1607, 4
      %v1689 = vpop.permute.xlu0 %1688
      %1690 = vrot.lane.b32.xlu0 %v1608, 4
      %v1691 = vpop.permute.xlu0 %1690
      %1692 = vrot.lane.b32.xlu0 %v1609, 4
      %v1693 = vpop.permute.xlu0 %1692
      %1694 = vrot.lane.b32.xlu0 %v1610, 4
      %v1695 = vpop.permute.xlu0 %1694
      %1696 = vrot.lane.b32.xlu0 %v1611, 4
      %v1697 = vpop.permute.xlu0 %1696
      %1698 = vrot.lane.b32.xlu0 %v1612, 4
      %v1699 = vpop.permute.xlu0 %1698
      %1700 = vrot.lane.b32.xlu0 %v1613, 4
      %v1701 = vpop.permute.xlu0 %1700
      %1702 = vrot.lane.b32.xlu0 %v1614, 4
      %v1703 = vpop.permute.xlu0 %1702
      %1704 = vrot.lane.b32.xlu0 %v1615, 4
      %v1705 = vpop.permute.xlu0 %1704
      %1706 = vrot.lane.b32.xlu0 %v1616, 4
      %v1707 = vpop.permute.xlu0 %1706
      %1708 = vrot.lane.b32.xlu0 %v1617, 4
      %v1709 = vpop.permute.xlu0 %1708
      %1710 = vrot.lane.b32.xlu0 %v1618, 4
      %v1711 = vpop.permute.xlu0 %1710
      %1712 = vrot.lane.b32.xlu0 %v1619, 4
      %v1713 = vpop.permute.xlu0 %1712
      %1714 = vrot.lane.b32.xlu0 %v1620, 4
      %v1715 = vpop.permute.xlu0 %1714
      %1716 = vrot.lane.b32.xlu0 %v1621, 4
      %v1717 = vpop.permute.xlu0 %1716
      %vm1750 = vcmask 64544
      %1751 = vst.msk [vmem:[#allocation5] sm:$0xff] %vm1750, %v1655
      %1752 = vst.msk [vmem:[#allocation5 + $0x8] sm:$0xff] %vm1750, %v1657
      %1753 = vst.msk [vmem:[#allocation5 + $0x10] sm:$0xff] %vm1750, %v1659
      %1754 = vst.msk [vmem:[#allocation5 + $0x18] sm:$0xff] %vm1750, %v1661
      %1755 = vst.msk [vmem:[#allocation5 + $0x20] sm:$0xff] %vm1750, %v1663
      %1756 = vst.msk [vmem:[#allocation5 + $0x28] sm:$0xff] %vm1750, %v1665
      %1757 = vst.msk [vmem:[#allocation5 + $0x30] sm:$0xff] %vm1750, %v1667
      %1758 = vst.msk [vmem:[#allocation5 + $0x38] sm:$0xff] %vm1750, %v1669
      %1759 = vst.msk [vmem:[#allocation5 + $0x40] sm:$0xff] %vm1750, %v1671
      %1760 = vst.msk [vmem:[#allocation5 + $0x48] sm:$0xff] %vm1750, %v1673
      %1761 = vst.msk [vmem:[#allocation5 + $0x50] sm:$0xff] %vm1750, %v1675
      %1762 = vst.msk [vmem:[#allocation5 + $0x58] sm:$0xff] %vm1750, %v1677
      %1763 = vst.msk [vmem:[#allocation5 + $0x60] sm:$0xff] %vm1750, %v1679
      %1764 = vst.msk [vmem:[#allocation5 + $0x68] sm:$0xff] %vm1750, %v1681
      %1765 = vst.msk [vmem:[#allocation5 + $0x70] sm:$0xff] %vm1750, %v1683
      %1766 = vst.msk [vmem:[#allocation5 + $0x78] sm:$0xff] %vm1750, %v1685
      %1767 = vst.msk [vmem:[#allocation5 + $0x80] sm:$0xff] %vm1750, %v1687
      %1768 = vst.msk [vmem:[#allocation5 + $0x88] sm:$0xff] %vm1750, %v1689
      %1769 = vst.msk [vmem:[#allocation5 + $0x90] sm:$0xff] %vm1750, %v1691
      %1770 = vst.msk [vmem:[#allocation5 + $0x98] sm:$0xff] %vm1750, %v1693
      %1771 = vst.msk [vmem:[#allocation5 + $0xa0] sm:$0xff] %vm1750, %v1695
      %1772 = vst.msk [vmem:[#allocation5 + $0xa8] sm:$0xff] %vm1750, %v1697
      %1773 = vst.msk [vmem:[#allocation5 + $0xb0] sm:$0xff] %vm1750, %v1699
      %1774 = vst.msk [vmem:[#allocation5 + $0xb8] sm:$0xff] %vm1750, %v1701
      %1775 = vst.msk [vmem:[#allocation5 + $0xc0] sm:$0xff] %vm1750, %v1703
      %1776 = vst.msk [vmem:[#allocation5 + $0xc8] sm:$0xff] %vm1750, %v1705
      %1777 = vst.msk [vmem:[#allocation5 + $0xd0] sm:$0xff] %vm1750, %v1707
      %1778 = vst.msk [vmem:[#allocation5 + $0xd8] sm:$0xff] %vm1750, %v1709
      %1779 = vst.msk [vmem:[#allocation5 + $0xe0] sm:$0xff] %vm1750, %v1711
      %1780 = vst.msk [vmem:[#allocation5 + $0xe8] sm:$0xff] %vm1750, %v1713
      %1781 = vst.msk [vmem:[#allocation5 + $0xf0] sm:$0xff] %vm1750, %v1715
      %1782 = vst.msk [vmem:[#allocation5 + $0xf8] sm:$0xff] %vm1750, %v1717
      %v1783 = vld [vmem:[#allocation3 + $0x2] sm:$0xff]
      %v1784 = vld [vmem:[#allocation3 + $0xa] sm:$0xff]
      %v1785 = vld [vmem:[#allocation3 + $0x1a] sm:$0xff]
      %v1786 = vld [vmem:[#allocation3 + $0x22] sm:$0xff]
      %v1787 = vld [vmem:[#allocation3 + $0x32] sm:$0xff]
      %v1788 = vld [vmem:[#allocation3 + $0x3a] sm:$0xff]
      %v1789 = vld [vmem:[#allocation3 + $0x4a] sm:$0xff]
      %v1790 = vld [vmem:[#allocation3 + $0x52] sm:$0xff]
      %v1791 = vld [vmem:[#allocation3 + $0x62] sm:$0xff]
      %v1792 = vld [vmem:[#allocation3 + $0x6a] sm:$0xff]
      %v1793 = vld [vmem:[#allocation3 + $0x7a] sm:$0xff]
      %v1794 = vld [vmem:[#allocation3 + $0x82] sm:$0xff]
      %v1795 = vld [vmem:[#allocation3 + $0x92] sm:$0xff]
      %v1796 = vld [vmem:[#allocation3 + $0x9a] sm:$0xff]
      %v1797 = vld [vmem:[#allocation3 + $0xaa] sm:$0xff]
      %v1798 = vld [vmem:[#allocation3 + $0xb2] sm:$0xff]
      %v1799 = vld [vmem:[#allocation3 + $0xc2] sm:$0xff]
      %v1800 = vld [vmem:[#allocation3 + $0xca] sm:$0xff]
      %v1801 = vld [vmem:[#allocation3 + $0xda] sm:$0xff]
      %v1802 = vld [vmem:[#allocation3 + $0xe2] sm:$0xff]
      %v1803 = vld [vmem:[#allocation3 + $0xf2] sm:$0xff]
      %v1804 = vld [vmem:[#allocation3 + $0xfa] sm:$0xff]
      %v1805 = vld [vmem:[#allocation3 + $0x10a] sm:$0xff]
      %v1806 = vld [vmem:[#allocation3 + $0x112] sm:$0xff]
      %v1807 = vld [vmem:[#allocation3 + $0x122] sm:$0xff]
      %v1808 = vld [vmem:[#allocation3 + $0x12a] sm:$0xff]
      %v1809 = vld [vmem:[#allocation3 + $0x13a] sm:$0xff]
      %v1810 = vld [vmem:[#allocation3 + $0x142] sm:$0xff]
      %v1811 = vld [vmem:[#allocation3 + $0x152] sm:$0xff]
      %v1812 = vld [vmem:[#allocation3 + $0x15a] sm:$0xff]
      %v1813 = vld [vmem:[#allocation3 + $0x16a] sm:$0xff]
      %v1814 = vld [vmem:[#allocation3 + $0x172] sm:$0xff]
      %1847 = vrot.lane.b32.xlu0 %v1783, 8
      %v1848 = vpop.permute.xlu0 %1847
      %1849 = vrot.lane.b32.xlu0 %v1784, 8
      %v1850 = vpop.permute.xlu0 %1849
      %1851 = vrot.lane.b32.xlu0 %v1785, 8
      %v1852 = vpop.permute.xlu0 %1851
      %1853 = vrot.lane.b32.xlu0 %v1786, 8
      %v1854 = vpop.permute.xlu0 %1853
      %1855 = vrot.lane.b32.xlu0 %v1787, 8
      %v1856 = vpop.permute.xlu0 %1855
      %1857 = vrot.lane.b32.xlu0 %v1788, 8
      %v1858 = vpop.permute.xlu0 %1857
      %1859 = vrot.lane.b32.xlu0 %v1789, 8
      %v1860 = vpop.permute.xlu0 %1859
      %1861 = vrot.lane.b32.xlu0 %v1790, 8
      %v1862 = vpop.permute.xlu0 %1861
      %1863 = vrot.lane.b32.xlu0 %v1791, 8
      %v1864 = vpop.permute.xlu0 %1863
      %1865 = vrot.lane.b32.xlu0 %v1792, 8
      %v1866 = vpop.permute.xlu0 %1865
      %1867 = vrot.lane.b32.xlu0 %v1793, 8
      %v1868 = vpop.permute.xlu0 %1867
      %1869 = vrot.lane.b32.xlu0 %v1794, 8
      %v1870 = vpop.permute.xlu0 %1869
      %1871 = vrot.lane.b32.xlu0 %v1795, 8
      %v1872 = vpop.permute.xlu0 %1871
      %1873 = vrot.lane.b32.xlu0 %v1796, 8
      %v1874 = vpop.permute.xlu0 %1873
      %1875 = vrot.lane.b32.xlu0 %v1797, 8
      %v1876 = vpop.permute.xlu0 %1875
      %1877 = vrot.lane.b32.xlu0 %v1798, 8
      %v1878 = vpop.permute.xlu0 %1877
      %1879 = vrot.lane.b32.xlu0 %v1799, 8
      %v1880 = vpop.permute.xlu0 %1879
      %1881 = vrot.lane.b32.xlu0 %v1800, 8
      %v1882 = vpop.permute.xlu0 %1881
      %1883 = vrot.lane.b32.xlu0 %v1801, 8
      %v1884 = vpop.permute.xlu0 %1883
      %1885 = vrot.lane.b32.xlu0 %v1802, 8
      %v1886 = vpop.permute.xlu0 %1885
      %1887 = vrot.lane.b32.xlu0 %v1803, 8
      %v1888 = vpop.permute.xlu0 %1887
      %1889 = vrot.lane.b32.xlu0 %v1804, 8
      %v1890 = vpop.permute.xlu0 %1889
      %1891 = vrot.lane.b32.xlu0 %v1805, 8
      %v1892 = vpop.permute.xlu0 %1891
      %1893 = vrot.lane.b32.xlu0 %v1806, 8
      %v1894 = vpop.permute.xlu0 %1893
      %1895 = vrot.lane.b32.xlu0 %v1807, 8
      %v1896 = vpop.permute.xlu0 %1895
      %1897 = vrot.lane.b32.xlu0 %v1808, 8
      %v1898 = vpop.permute.xlu0 %1897
      %1899 = vrot.lane.b32.xlu0 %v1809, 8
      %v1900 = vpop.permute.xlu0 %1899
      %1901 = vrot.lane.b32.xlu0 %v1810, 8
      %v1902 = vpop.permute.xlu0 %1901
      %1903 = vrot.lane.b32.xlu0 %v1811, 8
      %v1904 = vpop.permute.xlu0 %1903
      %1905 = vrot.lane.b32.xlu0 %v1812, 8
      %v1906 = vpop.permute.xlu0 %1905
      %1907 = vrot.lane.b32.xlu0 %v1813, 8
      %v1908 = vpop.permute.xlu0 %1907
      %1909 = vrot.lane.b32.xlu0 %v1814, 8
      %v1910 = vpop.permute.xlu0 %1909
      %vm1943 = vcmask 97344
      %1944 = vst.msk [vmem:[#allocation5] sm:$0xff] %vm1943, %v1848
      %1945 = vst.msk [vmem:[#allocation5 + $0x8] sm:$0xff] %vm1943, %v1850
      %1946 = vst.msk [vmem:[#allocation5 + $0x10] sm:$0xff] %vm1943, %v1852
      %1947 = vst.msk [vmem:[#allocation5 + $0x18] sm:$0xff] %vm1943, %v1854
      %1948 = vst.msk [vmem:[#allocation5 + $0x20] sm:$0xff] %vm1943, %v1856
      %1949 = vst.msk [vmem:[#allocation5 + $0x28] sm:$0xff] %vm1943, %v1858
      %1950 = vst.msk [vmem:[#allocation5 + $0x30] sm:$0xff] %vm1943, %v1860
      %1951 = vst.msk [vmem:[#allocation5 + $0x38] sm:$0xff] %vm1943, %v1862
      %1952 = vst.msk [vmem:[#allocation5 + $0x40] sm:$0xff] %vm1943, %v1864
      %1953 = vst.msk [vmem:[#allocation5 + $0x48] sm:$0xff] %vm1943, %v1866
      %1954 = vst.msk [vmem:[#allocation5 + $0x50] sm:$0xff] %vm1943, %v1868
      %1955 = vst.msk [vmem:[#allocation5 + $0x58] sm:$0xff] %vm1943, %v1870
      %1956 = vst.msk [vmem:[#allocation5 + $0x60] sm:$0xff] %vm1943, %v1872
      %1957 = vst.msk [vmem:[#allocation5 + $0x68] sm:$0xff] %vm1943, %v1874
      %1958 = vst.msk [vmem:[#allocation5 + $0x70] sm:$0xff] %vm1943, %v1876
      %1959 = vst.msk [vmem:[#allocation5 + $0x78] sm:$0xff] %vm1943, %v1878
      %1960 = vst.msk [vmem:[#allocation5 + $0x80] sm:$0xff] %vm1943, %v1880
      %1961 = vst.msk [vmem:[#allocation5 + $0x88] sm:$0xff] %vm1943, %v1882
      %1962 = vst.msk [vmem:[#allocation5 + $0x90] sm:$0xff] %vm1943, %v1884
      %1963 = vst.msk [vmem:[#allocation5 + $0x98] sm:$0xff] %vm1943, %v1886
      %1964 = vst.msk [vmem:[#allocation5 + $0xa0] sm:$0xff] %vm1943, %v1888
      %1965 = vst.msk [vmem:[#allocation5 + $0xa8] sm:$0xff] %vm1943, %v1890
      %1966 = vst.msk [vmem:[#allocation5 + $0xb0] sm:$0xff] %vm1943, %v1892
      %1967 = vst.msk [vmem:[#allocation5 + $0xb8] sm:$0xff] %vm1943, %v1894
      %1968 = vst.msk [vmem:[#allocation5 + $0xc0] sm:$0xff] %vm1943, %v1896
      %1969 = vst.msk [vmem:[#allocation5 + $0xc8] sm:$0xff] %vm1943, %v1898
      %1970 = vst.msk [vmem:[#allocation5 + $0xd0] sm:$0xff] %vm1943, %v1900
      %1971 = vst.msk [vmem:[#allocation5 + $0xd8] sm:$0xff] %vm1943, %v1902
      %1972 = vst.msk [vmem:[#allocation5 + $0xe0] sm:$0xff] %vm1943, %v1904
      %1973 = vst.msk [vmem:[#allocation5 + $0xe8] sm:$0xff] %vm1943, %v1906
      %1974 = vst.msk [vmem:[#allocation5 + $0xf0] sm:$0xff] %vm1943, %v1908
      %1975 = vst.msk [vmem:[#allocation5 + $0xf8] sm:$0xff] %vm1943, %v1910
      %v1976 = vld [vmem:[%s1493] sm:$0xff]
      %v1977 = vld [vmem:[%s1493 + $0x8] sm:$0xff]
      %v1978 = vld [vmem:[%s1493 + $0x18] sm:$0xff]
      %v1979 = vld [vmem:[%s1493 + $0x20] sm:$0xff]
      %v1980 = vld [vmem:[%s1493 + $0x30] sm:$0xff]
      %v1981 = vld [vmem:[%s1493 + $0x38] sm:$0xff]
      %v1982 = vld [vmem:[%s1493 + $0x48] sm:$0xff]
      %v1983 = vld [vmem:[%s1493 + $0x50] sm:$0xff]
      %v1984 = vld [vmem:[%s1493 + $0x60] sm:$0xff]
      %v1985 = vld [vmem:[%s1493 + $0x68] sm:$0xff]
      %v1986 = vld [vmem:[%s1493 + $0x78] sm:$0xff]
      %v1987 = vld [vmem:[%s1493 + $0x80] sm:$0xff]
      %v1988 = vld [vmem:[%s1493 + $0x90] sm:$0xff]
      %v1989 = vld [vmem:[%s1493 + $0x98] sm:$0xff]
      %v1990 = vld [vmem:[%s1493 + $0xa8] sm:$0xff]
      %v1991 = vld [vmem:[%s1493 + $0xb0] sm:$0xff]
      %v1992 = vld [vmem:[%s1493 + $0xc0] sm:$0xff]
      %v1993 = vld [vmem:[%s1493 + $0xc8] sm:$0xff]
      %v1994 = vld [vmem:[%s1493 + $0xd8] sm:$0xff]
      %v1995 = vld [vmem:[%s1493 + $0xe0] sm:$0xff]
      %v1996 = vld [vmem:[%s1493 + $0xf0] sm:$0xff]
      %v1997 = vld [vmem:[%s1493 + $0xf8] sm:$0xff]
      %v1998 = vld [vmem:[%s1493 + $0x108] sm:$0xff]
      %v1999 = vld [vmem:[%s1493 + $0x110] sm:$0xff]
      %v2000 = vld [vmem:[%s1493 + $0x120] sm:$0xff]
      %v2001 = vld [vmem:[%s1493 + $0x128] sm:$0xff]
      %v2002 = vld [vmem:[%s1493 + $0x138] sm:$0xff]
      %v2003 = vld [vmem:[%s1493 + $0x140] sm:$0xff]
      %v2004 = vld [vmem:[%s1493 + $0x150] sm:$0xff]
      %v2005 = vld [vmem:[%s1493 + $0x158] sm:$0xff]
      %v2006 = vld [vmem:[%s1493 + $0x168] sm:$0xff]
      %v2007 = vld [vmem:[%s1493 + $0x170] sm:$0xff]
      %2040 = vrot.lane.b32.xlu0 %v1976, 12
      %v2041 = vpop.permute.xlu0 %2040
      %2042 = vrot.lane.b32.xlu0 %v1977, 12
      %v2043 = vpop.permute.xlu0 %2042
      %2044 = vrot.lane.b32.xlu0 %v1978, 12
      %v2045 = vpop.permute.xlu0 %2044
      %2046 = vrot.lane.b32.xlu0 %v1979, 12
      %v2047 = vpop.permute.xlu0 %2046
      %2048 = vrot.lane.b32.xlu0 %v1980, 12
      %v2049 = vpop.permute.xlu0 %2048
      %2050 = vrot.lane.b32.xlu0 %v1981, 12
      %v2051 = vpop.permute.xlu0 %2050
      %2052 = vrot.lane.b32.xlu0 %v1982, 12
      %v2053 = vpop.permute.xlu0 %2052
      %2054 = vrot.lane.b32.xlu0 %v1983, 12
      %v2055 = vpop.permute.xlu0 %2054
      %2056 = vrot.lane.b32.xlu0 %v1984, 12
      %v2057 = vpop.permute.xlu0 %2056
      %2058 = vrot.lane.b32.xlu0 %v1985, 12
      %v2059 = vpop.permute.xlu0 %2058
      %2060 = vrot.lane.b32.xlu0 %v1986, 12
      %v2061 = vpop.permute.xlu0 %2060
      %2062 = vrot.lane.b32.xlu0 %v1987, 12
      %v2063 = vpop.permute.xlu0 %2062
      %2064 = vrot.lane.b32.xlu0 %v1988, 12
      %v2065 = vpop.permute.xlu0 %2064
      %2066 = vrot.lane.b32.xlu0 %v1989, 12
      %v2067 = vpop.permute.xlu0 %2066
      %2068 = vrot.lane.b32.xlu0 %v1990, 12
      %v2069 = vpop.permute.xlu0 %2068
      %2070 = vrot.lane.b32.xlu0 %v1991, 12
      %v2071 = vpop.permute.xlu0 %2070
      %2072 = vrot.lane.b32.xlu0 %v1992, 12
      %v2073 = vpop.permute.xlu0 %2072
      %2074 = vrot.lane.b32.xlu0 %v1993, 12
      %v2075 = vpop.permute.xlu0 %2074
      %2076 = vrot.lane.b32.xlu0 %v1994, 12
      %v2077 = vpop.permute.xlu0 %2076
      %2078 = vrot.lane.b32.xlu0 %v1995, 12
      %v2079 = vpop.permute.xlu0 %2078
      %2080 = vrot.lane.b32.xlu0 %v1996, 12
      %v2081 = vpop.permute.xlu0 %2080
      %2082 = vrot.lane.b32.xlu0 %v1997, 12
      %v2083 = vpop.permute.xlu0 %2082
      %2084 = vrot.lane.b32.xlu0 %v1998, 12
      %v2085 = vpop.permute.xlu0 %2084
      %2086 = vrot.lane.b32.xlu0 %v1999, 12
      %v2087 = vpop.permute.xlu0 %2086
      %2088 = vrot.lane.b32.xlu0 %v2000, 12
      %v2089 = vpop.permute.xlu0 %2088
      %2090 = vrot.lane.b32.xlu0 %v2001, 12
      %v2091 = vpop.permute.xlu0 %2090
      %2092 = vrot.lane.b32.xlu0 %v2002, 12
      %v2093 = vpop.permute.xlu0 %2092
      %2094 = vrot.lane.b32.xlu0 %v2003, 12
      %v2095 = vpop.permute.xlu0 %2094
      %2096 = vrot.lane.b32.xlu0 %v2004, 12
      %v2097 = vpop.permute.xlu0 %2096
      %2098 = vrot.lane.b32.xlu0 %v2005, 12
      %v2099 = vpop.permute.xlu0 %2098
      %2100 = vrot.lane.b32.xlu0 %v2006, 12
      %v2101 = vpop.permute.xlu0 %2100
      %2102 = vrot.lane.b32.xlu0 %v2007, 12
      %v2103 = vpop.permute.xlu0 %2102
      %vm2136 = vcmask 130144
      %2137 = vst.msk [vmem:[#allocation5] sm:$0xff] %vm2136, %v2041
      %2138 = vst.msk [vmem:[#allocation5 + $0x8] sm:$0xff] %vm2136, %v2043
      %2139 = vst.msk [vmem:[#allocation5 + $0x10] sm:$0xff] %vm2136, %v2045
      %2140 = vst.msk [vmem:[#allocation5 + $0x18] sm:$0xff] %vm2136, %v2047
      %2141 = vst.msk [vmem:[#allocation5 + $0x20] sm:$0xff] %vm2136, %v2049
      %2142 = vst.msk [vmem:[#allocation5 + $0x28] sm:$0xff] %vm2136, %v2051
      %2143 = vst.msk [vmem:[#allocation5 + $0x30] sm:$0xff] %vm2136, %v2053
      %2144 = vst.msk [vmem:[#allocation5 + $0x38] sm:$0xff] %vm2136, %v2055
      %2145 = vst.msk [vmem:[#allocation5 + $0x40] sm:$0xff] %vm2136, %v2057
      %2146 = vst.msk [vmem:[#allocation5 + $0x48] sm:$0xff] %vm2136, %v2059
      %2147 = vst.msk [vmem:[#allocation5 + $0x50] sm:$0xff] %vm2136, %v2061
      %2148 = vst.msk [vmem:[#allocation5 + $0x58] sm:$0xff] %vm2136, %v2063
      %2149 = vst.msk [vmem:[#allocation5 + $0x60] sm:$0xff] %vm2136, %v2065
      %2150 = vst.msk [vmem:[#allocation5 + $0x68] sm:$0xff] %vm2136, %v2067
      %2151 = vst.msk [vmem:[#allocation5 + $0x70] sm:$0xff] %vm2136, %v2069
      %2152 = vst.msk [vmem:[#allocation5 + $0x78] sm:$0xff] %vm2136, %v2071
      %2153 = vst.msk [vmem:[#allocation5 + $0x80] sm:$0xff] %vm2136, %v2073
      %2154 = vst.msk [vmem:[#allocation5 + $0x88] sm:$0xff] %vm2136, %v2075
      %2155 = vst.msk [vmem:[#allocation5 + $0x90] sm:$0xff] %vm2136, %v2077
      %2156 = vst.msk [vmem:[#allocation5 + $0x98] sm:$0xff] %vm2136, %v2079
      %2157 = vst.msk [vmem:[#allocation5 + $0xa0] sm:$0xff] %vm2136, %v2081
      %2158 = vst.msk [vmem:[#allocation5 + $0xa8] sm:$0xff] %vm2136, %v2083
      %2159 = vst.msk [vmem:[#allocation5 + $0xb0] sm:$0xff] %vm2136, %v2085
      %2160 = vst.msk [vmem:[#allocation5 + $0xb8] sm:$0xff] %vm2136, %v2087
      %2161 = vst.msk [vmem:[#allocation5 + $0xc0] sm:$0xff] %vm2136, %v2089
      %2162 = vst.msk [vmem:[#allocation5 + $0xc8] sm:$0xff] %vm2136, %v2091
      %2163 = vst.msk [vmem:[#allocation5 + $0xd0] sm:$0xff] %vm2136, %v2093
      %2164 = vst.msk [vmem:[#allocation5 + $0xd8] sm:$0xff] %vm2136, %v2095
      %2165 = vst.msk [vmem:[#allocation5 + $0xe0] sm:$0xff] %vm2136, %v2097
      %2166 = vst.msk [vmem:[#allocation5 + $0xe8] sm:$0xff] %vm2136, %v2099
      %2167 = vst.msk [vmem:[#allocation5 + $0xf0] sm:$0xff] %vm2136, %v2101
      %2168 = vst.msk [vmem:[#allocation5 + $0xf8] sm:$0xff] %vm2136, %v2103
      %v2169 = vld [vmem:[%s1493 + $0x1] sm:$0xff]
      %v2170 = vld [vmem:[%s1493 + $0x9] sm:$0xff]
      %v2171 = vld [vmem:[%s1493 + $0x19] sm:$0xff]
      %v2172 = vld [vmem:[%s1493 + $0x21] sm:$0xff]
      %v2173 = vld [vmem:[%s1493 + $0x31] sm:$0xff]
      %v2174 = vld [vmem:[%s1493 + $0x39] sm:$0xff]
      %v2175 = vld [vmem:[%s1493 + $0x49] sm:$0xff]
      %v2176 = vld [vmem:[%s1493 + $0x51] sm:$0xff]
      %v2177 = vld [vmem:[%s1493 + $0x61] sm:$0xff]
      %v2178 = vld [vmem:[%s1493 + $0x69] sm:$0xff]
      %v2179 = vld [vmem:[%s1493 + $0x79] sm:$0xff]
      %v2180 = vld [vmem:[%s1493 + $0x81] sm:$0xff]
      %v2181 = vld [vmem:[%s1493 + $0x91] sm:$0xff]
      %v2182 = vld [vmem:[%s1493 + $0x99] sm:$0xff]
      %v2183 = vld [vmem:[%s1493 + $0xa9] sm:$0xff]
      %v2184 = vld [vmem:[%s1493 + $0xb1] sm:$0xff]
      %v2185 = vld [vmem:[%s1493 + $0xc1] sm:$0xff]
      %v2186 = vld [vmem:[%s1493 + $0xc9] sm:$0xff]
      %v2187 = vld [vmem:[%s1493 + $0xd9] sm:$0xff]
      %v2188 = vld [vmem:[%s1493 + $0xe1] sm:$0xff]
      %v2189 = vld [vmem:[%s1493 + $0xf1] sm:$0xff]
      %v2190 = vld [vmem:[%s1493 + $0xf9] sm:$0xff]
      %v2191 = vld [vmem:[%s1493 + $0x109] sm:$0xff]
      %v2192 = vld [vmem:[%s1493 + $0x111] sm:$0xff]
      %v2193 = vld [vmem:[%s1493 + $0x121] sm:$0xff]
      %v2194 = vld [vmem:[%s1493 + $0x129] sm:$0xff]
      %v2195 = vld [vmem:[%s1493 + $0x139] sm:$0xff]
      %v2196 = vld [vmem:[%s1493 + $0x141] sm:$0xff]
      %v2197 = vld [vmem:[%s1493 + $0x151] sm:$0xff]
      %v2198 = vld [vmem:[%s1493 + $0x159] sm:$0xff]
      %v2199 = vld [vmem:[%s1493 + $0x169] sm:$0xff]
      %v2200 = vld [vmem:[%s1493 + $0x171] sm:$0xff]
      %2233 = vrot.lane.b32.xlu0 %v2169, 16
      %v2234 = vpop.permute.xlu0 %2233
      %2235 = vrot.lane.b32.xlu0 %v2170, 16
      %v2236 = vpop.permute.xlu0 %2235
      %2237 = vrot.lane.b32.xlu0 %v2171, 16
      %v2238 = vpop.permute.xlu0 %2237
      %2239 = vrot.lane.b32.xlu0 %v2172, 16
      %v2240 = vpop.permute.xlu0 %2239
      %2241 = vrot.lane.b32.xlu0 %v2173, 16
      %v2242 = vpop.permute.xlu0 %2241
      %2243 = vrot.lane.b32.xlu0 %v2174, 16
      %v2244 = vpop.permute.xlu0 %2243
      %2245 = vrot.lane.b32.xlu0 %v2175, 16
      %v2246 = vpop.permute.xlu0 %2245
      %2247 = vrot.lane.b32.xlu0 %v2176, 16
      %v2248 = vpop.permute.xlu0 %2247
      %2249 = vrot.lane.b32.xlu0 %v2177, 16
      %v2250 = vpop.permute.xlu0 %2249
      %2251 = vrot.lane.b32.xlu0 %v2178, 16
      %v2252 = vpop.permute.xlu0 %2251
      %2253 = vrot.lane.b32.xlu0 %v2179, 16
      %v2254 = vpop.permute.xlu0 %2253
      %2255 = vrot.lane.b32.xlu0 %v2180, 16
      %v2256 = vpop.permute.xlu0 %2255
      %2257 = vrot.lane.b32.xlu0 %v2181, 16
      %v2258 = vpop.permute.xlu0 %2257
      %2259 = vrot.lane.b32.xlu0 %v2182, 16
      %v2260 = vpop.permute.xlu0 %2259
      %2261 = vrot.lane.b32.xlu0 %v2183, 16
      %v2262 = vpop.permute.xlu0 %2261
      %2263 = vrot.lane.b32.xlu0 %v2184, 16
      %v2264 = vpop.permute.xlu0 %2263
      %2265 = vrot.lane.b32.xlu0 %v2185, 16
      %v2266 = vpop.permute.xlu0 %2265
      %2267 = vrot.lane.b32.xlu0 %v2186, 16
      %v2268 = vpop.permute.xlu0 %2267
      %2269 = vrot.lane.b32.xlu0 %v2187, 16
      %v2270 = vpop.permute.xlu0 %2269
      %2271 = vrot.lane.b32.xlu0 %v2188, 16
      %v2272 = vpop.permute.xlu0 %2271
      %2273 = vrot.lane.b32.xlu0 %v2189, 16
      %v2274 = vpop.permute.xlu0 %2273
      %2275 = vrot.lane.b32.xlu0 %v2190, 16
      %v2276 = vpop.permute.xlu0 %2275
      %2277 = vrot.lane.b32.xlu0 %v2191, 16
      %v2278 = vpop.permute.xlu0 %2277
      %2279 = vrot.lane.b32.xlu0 %v2192, 16
      %v2280 = vpop.permute.xlu0 %2279
      %2281 = vrot.lane.b32.xlu0 %v2193, 16
      %v2282 = vpop.permute.xlu0 %2281
      %2283 = vrot.lane.b32.xlu0 %v2194, 16
      %v2284 = vpop.permute.xlu0 %2283
      %2285 = vrot.lane.b32.xlu0 %v2195, 16
      %v2286 = vpop.permute.xlu0 %2285
      %2287 = vrot.lane.b32.xlu0 %v2196, 16
      %v2288 = vpop.permute.xlu0 %2287
      %2289 = vrot.lane.b32.xlu0 %v2197, 16
      %v2290 = vpop.permute.xlu0 %2289
      %2291 = vrot.lane.b32.xlu0 %v2198, 16
      %v2292 = vpop.permute.xlu0 %2291
      %2293 = vrot.lane.b32.xlu0 %v2199, 16
      %v2294 = vpop.permute.xlu0 %2293
      %2295 = vrot.lane.b32.xlu0 %v2200, 16
      %v2296 = vpop.permute.xlu0 %2295
      %vm2329 = vcmask 162944
      %2330 = vst.msk [vmem:[#allocation5] sm:$0xff] %vm2329, %v2234
      %2331 = vst.msk [vmem:[#allocation5 + $0x8] sm:$0xff] %vm2329, %v2236
      %2332 = vst.msk [vmem:[#allocation5 + $0x10] sm:$0xff] %vm2329, %v2238
      %2333 = vst.msk [vmem:[#allocation5 + $0x18] sm:$0xff] %vm2329, %v2240
      %2334 = vst.msk [vmem:[#allocation5 + $0x20] sm:$0xff] %vm2329, %v2242
      %2335 = vst.msk [vmem:[#allocation5 + $0x28] sm:$0xff] %vm2329, %v2244
      %2336 = vst.msk [vmem:[#allocation5 + $0x30] sm:$0xff] %vm2329, %v2246
      %2337 = vst.msk [vmem:[#allocation5 + $0x38] sm:$0xff] %vm2329, %v2248
      %2338 = vst.msk [vmem:[#allocation5 + $0x40] sm:$0xff] %vm2329, %v2250
      %2339 = vst.msk [vmem:[#allocation5 + $0x48] sm:$0xff] %vm2329, %v2252
      %2340 = vst.msk [vmem:[#allocation5 + $0x50] sm:$0xff] %vm2329, %v2254
      %2341 = vst.msk [vmem:[#allocation5 + $0x58] sm:$0xff] %vm2329, %v2256
      %2342 = vst.msk [vmem:[#allocation5 + $0x60] sm:$0xff] %vm2329, %v2258
      %2343 = vst.msk [vmem:[#allocation5 + $0x68] sm:$0xff] %vm2329, %v2260
      %2344 = vst.msk [vmem:[#allocation5 + $0x70] sm:$0xff] %vm2329, %v2262
      %2345 = vst.msk [vmem:[#allocation5 + $0x78] sm:$0xff] %vm2329, %v2264
      %2346 = vst.msk [vmem:[#allocation5 + $0x80] sm:$0xff] %vm2329, %v2266
      %2347 = vst.msk [vmem:[#allocation5 + $0x88] sm:$0xff] %vm2329, %v2268
      %2348 = vst.msk [vmem:[#allocation5 + $0x90] sm:$0xff] %vm2329, %v2270
      %2349 = vst.msk [vmem:[#allocation5 + $0x98] sm:$0xff] %vm2329, %v2272
      %2350 = vst.msk [vmem:[#allocation5 + $0xa0] sm:$0xff] %vm2329, %v2274
      %2351 = vst.msk [vmem:[#allocation5 + $0xa8] sm:$0xff] %vm2329, %v2276
      %2352 = vst.msk [vmem:[#allocation5 + $0xb0] sm:$0xff] %vm2329, %v2278
      %2353 = vst.msk [vmem:[#allocation5 + $0xb8] sm:$0xff] %vm2329, %v2280
      %2354 = vst.msk [vmem:[#allocation5 + $0xc0] sm:$0xff] %vm2329, %v2282
      %2355 = vst.msk [vmem:[#allocation5 + $0xc8] sm:$0xff] %vm2329, %v2284
      %2356 = vst.msk [vmem:[#allocation5 + $0xd0] sm:$0xff] %vm2329, %v2286
      %2357 = vst.msk [vmem:[#allocation5 + $0xd8] sm:$0xff] %vm2329, %v2288
      %2358 = vst.msk [vmem:[#allocation5 + $0xe0] sm:$0xff] %vm2329, %v2290
      %2359 = vst.msk [vmem:[#allocation5 + $0xe8] sm:$0xff] %vm2329, %v2292
      %2360 = vst.msk [vmem:[#allocation5 + $0xf0] sm:$0xff] %vm2329, %v2294
      %2361 = vst.msk [vmem:[#allocation5 + $0xf8] sm:$0xff] %vm2329, %v2296
      %v2362 = vld [vmem:[%s1493 + $0x2] sm:$0xff]
      %v2363 = vld [vmem:[%s1493 + $0xa] sm:$0xff]
      %v2364 = vld [vmem:[%s1493 + $0x1a] sm:$0xff]
      %v2365 = vld [vmem:[%s1493 + $0x22] sm:$0xff]
      %v2366 = vld [vmem:[%s1493 + $0x32] sm:$0xff]
      %v2367 = vld [vmem:[%s1493 + $0x3a] sm:$0xff]
      %v2368 = vld [vmem:[%s1493 + $0x4a] sm:$0xff]
      %v2369 = vld [vmem:[%s1493 + $0x52] sm:$0xff]
      %v2370 = vld [vmem:[%s1493 + $0x62] sm:$0xff]
      %v2371 = vld [vmem:[%s1493 + $0x6a] sm:$0xff]
      %v2372 = vld [vmem:[%s1493 + $0x7a] sm:$0xff]
      %v2373 = vld [vmem:[%s1493 + $0x82] sm:$0xff]
      %v2374 = vld [vmem:[%s1493 + $0x92] sm:$0xff]
      %v2375 = vld [vmem:[%s1493 + $0x9a] sm:$0xff]
      %v2376 = vld [vmem:[%s1493 + $0xaa] sm:$0xff]
      %v2377 = vld [vmem:[%s1493 + $0xb2] sm:$0xff]
      %v2378 = vld [vmem:[%s1493 + $0xc2] sm:$0xff]
      %v2379 = vld [vmem:[%s1493 + $0xca] sm:$0xff]
      %v2380 = vld [vmem:[%s1493 + $0xda] sm:$0xff]
      %v2381 = vld [vmem:[%s1493 + $0xe2] sm:$0xff]
      %v2382 = vld [vmem:[%s1493 + $0xf2] sm:$0xff]
      %v2383 = vld [vmem:[%s1493 + $0xfa] sm:$0xff]
      %v2384 = vld [vmem:[%s1493 + $0x10a] sm:$0xff]
      %v2385 = vld [vmem:[%s1493 + $0x112] sm:$0xff]
      %v2386 = vld [vmem:[%s1493 + $0x122] sm:$0xff]
      %v2387 = vld [vmem:[%s1493 + $0x12a] sm:$0xff]
      %v2388 = vld [vmem:[%s1493 + $0x13a] sm:$0xff]
      %v2389 = vld [vmem:[%s1493 + $0x142] sm:$0xff]
      %v2390 = vld [vmem:[%s1493 + $0x152] sm:$0xff]
      %v2391 = vld [vmem:[%s1493 + $0x15a] sm:$0xff]
      %v2392 = vld [vmem:[%s1493 + $0x16a] sm:$0xff]
      %v2393 = vld [vmem:[%s1493 + $0x172] sm:$0xff]
      %2426 = vrot.lane.b32.xlu0 %v2362, 20
      %v2427 = vpop.permute.xlu0 %2426
      %2428 = vrot.lane.b32.xlu0 %v2363, 20
      %v2429 = vpop.permute.xlu0 %2428
      %2430 = vrot.lane.b32.xlu0 %v2364, 20
      %v2431 = vpop.permute.xlu0 %2430
      %2432 = vrot.lane.b32.xlu0 %v2365, 20
      %v2433 = vpop.permute.xlu0 %2432
      %2434 = vrot.lane.b32.xlu0 %v2366, 20
      %v2435 = vpop.permute.xlu0 %2434
      %2436 = vrot.lane.b32.xlu0 %v2367, 20
      %v2437 = vpop.permute.xlu0 %2436
      %2438 = vrot.lane.b32.xlu0 %v2368, 20
      %v2439 = vpop.permute.xlu0 %2438
      %2440 = vrot.lane.b32.xlu0 %v2369, 20
      %v2441 = vpop.permute.xlu0 %2440
      %2442 = vrot.lane.b32.xlu0 %v2370, 20
      %v2443 = vpop.permute.xlu0 %2442
      %2444 = vrot.lane.b32.xlu0 %v2371, 20
      %v2445 = vpop.permute.xlu0 %2444
      %2446 = vrot.lane.b32.xlu0 %v2372, 20
      %v2447 = vpop.permute.xlu0 %2446
      %2448 = vrot.lane.b32.xlu0 %v2373, 20
      %v2449 = vpop.permute.xlu0 %2448
      %2450 = vrot.lane.b32.xlu0 %v2374, 20
      %v2451 = vpop.permute.xlu0 %2450
      %2452 = vrot.lane.b32.xlu0 %v2375, 20
      %v2453 = vpop.permute.xlu0 %2452
      %2454 = vrot.lane.b32.xlu0 %v2376, 20
      %v2455 = vpop.permute.xlu0 %2454
      %2456 = vrot.lane.b32.xlu0 %v2377, 20
      %v2457 = vpop.permute.xlu0 %2456
      %2458 = vrot.lane.b32.xlu0 %v2378, 20
      %v2459 = vpop.permute.xlu0 %2458
      %2460 = vrot.lane.b32.xlu0 %v2379, 20
      %v2461 = vpop.permute.xlu0 %2460
      %2462 = vrot.lane.b32.xlu0 %v2380, 20
      %v2463 = vpop.permute.xlu0 %2462
      %2464 = vrot.lane.b32.xlu0 %v2381, 20
      %v2465 = vpop.permute.xlu0 %2464
      %2466 = vrot.lane.b32.xlu0 %v2382, 20
      %v2467 = vpop.permute.xlu0 %2466
      %2468 = vrot.lane.b32.xlu0 %v2383, 20
      %v2469 = vpop.permute.xlu0 %2468
      %2470 = vrot.lane.b32.xlu0 %v2384, 20
      %v2471 = vpop.permute.xlu0 %2470
      %2472 = vrot.lane.b32.xlu0 %v2385, 20
      %v2473 = vpop.permute.xlu0 %2472
      %2474 = vrot.lane.b32.xlu0 %v2386, 20
      %v2475 = vpop.permute.xlu0 %2474
      %2476 = vrot.lane.b32.xlu0 %v2387, 20
      %v2477 = vpop.permute.xlu0 %2476
      %2478 = vrot.lane.b32.xlu0 %v2388, 20
      %v2479 = vpop.permute.xlu0 %2478
      %2480 = vrot.lane.b32.xlu0 %v2389, 20
      %v2481 = vpop.permute.xlu0 %2480
      %2482 = vrot.lane.b32.xlu0 %v2390, 20
      %v2483 = vpop.permute.xlu0 %2482
      %2484 = vrot.lane.b32.xlu0 %v2391, 20
      %v2485 = vpop.permute.xlu0 %2484
      %2486 = vrot.lane.b32.xlu0 %v2392, 20
      %v2487 = vpop.permute.xlu0 %2486
      %2488 = vrot.lane.b32.xlu0 %v2393, 20
      %v2489 = vpop.permute.xlu0 %2488
      %vm2522 = vcmask 195744
      %2523 = vst.msk [vmem:[#allocation5] sm:$0xff] %vm2522, %v2427
      %2524 = vst.msk [vmem:[#allocation5 + $0x8] sm:$0xff] %vm2522, %v2429
      %2525 = vst.msk [vmem:[#allocation5 + $0x10] sm:$0xff] %vm2522, %v2431
      %2526 = vst.msk [vmem:[#allocation5 + $0x18] sm:$0xff] %vm2522, %v2433
      %2527 = vst.msk [vmem:[#allocation5 + $0x20] sm:$0xff] %vm2522, %v2435
      %2528 = vst.msk [vmem:[#allocation5 + $0x28] sm:$0xff] %vm2522, %v2437
      %2529 = vst.msk [vmem:[#allocation5 + $0x30] sm:$0xff] %vm2522, %v2439
      %2530 = vst.msk [vmem:[#allocation5 + $0x38] sm:$0xff] %vm2522, %v2441
      %2531 = vst.msk [vmem:[#allocation5 + $0x40] sm:$0xff] %vm2522, %v2443
      %2532 = vst.msk [vmem:[#allocation5 + $0x48] sm:$0xff] %vm2522, %v2445
      %2533 = vst.msk [vmem:[#allocation5 + $0x50] sm:$0xff] %vm2522, %v2447
      %2534 = vst.msk [vmem:[#allocation5 + $0x58] sm:$0xff] %vm2522, %v2449
      %2535 = vst.msk [vmem:[#allocation5 + $0x60] sm:$0xff] %vm2522, %v2451
      %2536 = vst.msk [vmem:[#allocation5 + $0x68] sm:$0xff] %vm2522, %v2453
      %2537 = vst.msk [vmem:[#allocation5 + $0x70] sm:$0xff] %vm2522, %v2455
      %2538 = vst.msk [vmem:[#allocation5 + $0x78] sm:$0xff] %vm2522, %v2457
      %2539 = vst.msk [vmem:[#allocation5 + $0x80] sm:$0xff] %vm2522, %v2459
      %2540 = vst.msk [vmem:[#allocation5 + $0x88] sm:$0xff] %vm2522, %v2461
      %2541 = vst.msk [vmem:[#allocation5 + $0x90] sm:$0xff] %vm2522, %v2463
      %2542 = vst.msk [vmem:[#allocation5 + $0x98] sm:$0xff] %vm2522, %v2465
      %2543 = vst.msk [vmem:[#allocation5 + $0xa0] sm:$0xff] %vm2522, %v2467
      %2544 = vst.msk [vmem:[#allocation5 + $0xa8] sm:$0xff] %vm2522, %v2469
      %2545 = vst.msk [vmem:[#allocation5 + $0xb0] sm:$0xff] %vm2522, %v2471
      %2546 = vst.msk [vmem:[#allocation5 + $0xb8] sm:$0xff] %vm2522, %v2473
      %2547 = vst.msk [vmem:[#allocation5 + $0xc0] sm:$0xff] %vm2522, %v2475
      %2548 = vst.msk [vmem:[#allocation5 + $0xc8] sm:$0xff] %vm2522, %v2477
      %2549 = vst.msk [vmem:[#allocation5 + $0xd0] sm:$0xff] %vm2522, %v2479
      %2550 = vst.msk [vmem:[#allocation5 + $0xd8] sm:$0xff] %vm2522, %v2481
      %2551 = vst.msk [vmem:[#allocation5 + $0xe0] sm:$0xff] %vm2522, %v2483
      %2552 = vst.msk [vmem:[#allocation5 + $0xe8] sm:$0xff] %vm2522, %v2485
      %2553 = vst.msk [vmem:[#allocation5 + $0xf0] sm:$0xff] %vm2522, %v2487
      %2554 = vst.msk [vmem:[#allocation5 + $0xf8] sm:$0xff] %vm2522, %v2489
      %s2555 = scalar_lea.vmem [#allocation3], 48
      %v2556 = vld [vmem:[%s2555] sm:$0xff]
      %v2557 = vld [vmem:[%s2555 + $0x8] sm:$0xff]
      %v2558 = vld [vmem:[%s2555 + $0x18] sm:$0xff]
      %v2559 = vld [vmem:[%s2555 + $0x20] sm:$0xff]
      %v2560 = vld [vmem:[%s2555 + $0x30] sm:$0xff]
      %v2561 = vld [vmem:[%s2555 + $0x38] sm:$0xff]
      %v2562 = vld [vmem:[%s2555 + $0x48] sm:$0xff]
      %v2563 = vld [vmem:[%s2555 + $0x50] sm:$0xff]
      %v2564 = vld [vmem:[%s2555 + $0x60] sm:$0xff]
      %v2565 = vld [vmem:[%s2555 + $0x68] sm:$0xff]
      %v2566 = vld [vmem:[%s2555 + $0x78] sm:$0xff]
      %v2567 = vld [vmem:[%s2555 + $0x80] sm:$0xff]
      %v2568 = vld [vmem:[%s2555 + $0x90] sm:$0xff]
      %v2569 = vld [vmem:[%s2555 + $0x98] sm:$0xff]
      %v2570 = vld [vmem:[%s2555 + $0xa8] sm:$0xff]
      %v2571 = vld [vmem:[%s2555 + $0xb0] sm:$0xff]
      %v2572 = vld [vmem:[%s2555 + $0xc0] sm:$0xff]
      %v2573 = vld [vmem:[%s2555 + $0xc8] sm:$0xff]
      %v2574 = vld [vmem:[%s2555 + $0xd8] sm:$0xff]
      %v2575 = vld [vmem:[%s2555 + $0xe0] sm:$0xff]
      %v2576 = vld [vmem:[%s2555 + $0xf0] sm:$0xff]
      %v2577 = vld [vmem:[%s2555 + $0xf8] sm:$0xff]
      %v2578 = vld [vmem:[%s2555 + $0x108] sm:$0xff]
      %v2579 = vld [vmem:[%s2555 + $0x110] sm:$0xff]
      %v2580 = vld [vmem:[%s2555 + $0x120] sm:$0xff]
      %v2581 = vld [vmem:[%s2555 + $0x128] sm:$0xff]
      %v2582 = vld [vmem:[%s2555 + $0x138] sm:$0xff]
      %v2583 = vld [vmem:[%s2555 + $0x140] sm:$0xff]
      %v2584 = vld [vmem:[%s2555 + $0x150] sm:$0xff]
      %v2585 = vld [vmem:[%s2555 + $0x158] sm:$0xff]
      %v2586 = vld [vmem:[%s2555 + $0x168] sm:$0xff]
      %v2587 = vld [vmem:[%s2555 + $0x170] sm:$0xff]
      %2620 = vrot.lane.b32.xlu0 %v2556, 24
      %v2621 = vpop.permute.xlu0 %2620
      %2622 = vrot.lane.b32.xlu0 %v2557, 24
      %v2623 = vpop.permute.xlu0 %2622
      %2624 = vrot.lane.b32.xlu0 %v2558, 24
      %v2625 = vpop.permute.xlu0 %2624
      %2626 = vrot.lane.b32.xlu0 %v2559, 24
      %v2627 = vpop.permute.xlu0 %2626
      %2628 = vrot.lane.b32.xlu0 %v2560, 24
      %v2629 = vpop.permute.xlu0 %2628
      %2630 = vrot.lane.b32.xlu0 %v2561, 24
      %v2631 = vpop.permute.xlu0 %2630
      %2632 = vrot.lane.b32.xlu0 %v2562, 24
      %v2633 = vpop.permute.xlu0 %2632
      %2634 = vrot.lane.b32.xlu0 %v2563, 24
      %v2635 = vpop.permute.xlu0 %2634
      %2636 = vrot.lane.b32.xlu0 %v2564, 24
      %v2637 = vpop.permute.xlu0 %2636
      %2638 = vrot.lane.b32.xlu0 %v2565, 24
      %v2639 = vpop.permute.xlu0 %2638
      %2640 = vrot.lane.b32.xlu0 %v2566, 24
      %v2641 = vpop.permute.xlu0 %2640
      %2642 = vrot.lane.b32.xlu0 %v2567, 24
      %v2643 = vpop.permute.xlu0 %2642
      %2644 = vrot.lane.b32.xlu0 %v2568, 24
      %v2645 = vpop.permute.xlu0 %2644
      %2646 = vrot.lane.b32.xlu0 %v2569, 24
      %v2647 = vpop.permute.xlu0 %2646
      %2648 = vrot.lane.b32.xlu0 %v2570, 24
      %v2649 = vpop.permute.xlu0 %2648
      %2650 = vrot.lane.b32.xlu0 %v2571, 24
      %v2651 = vpop.permute.xlu0 %2650
      %2652 = vrot.lane.b32.xlu0 %v2572, 24
      %v2653 = vpop.permute.xlu0 %2652
      %2654 = vrot.lane.b32.xlu0 %v2573, 24
      %v2655 = vpop.permute.xlu0 %2654
      %2656 = vrot.lane.b32.xlu0 %v2574, 24
      %v2657 = vpop.permute.xlu0 %2656
      %2658 = vrot.lane.b32.xlu0 %v2575, 24
      %v2659 = vpop.permute.xlu0 %2658
      %2660 = vrot.lane.b32.xlu0 %v2576, 24
      %v2661 = vpop.permute.xlu0 %2660
      %2662 = vrot.lane.b32.xlu0 %v2577, 24
      %v2663 = vpop.permute.xlu0 %2662
      %2664 = vrot.lane.b32.xlu0 %v2578, 24
      %v2665 = vpop.permute.xlu0 %2664
      %2666 = vrot.lane.b32.xlu0 %v2579, 24
      %v2667 = vpop.permute.xlu0 %2666
      %2668 = vrot.lane.b32.xlu0 %v2580, 24
      %v2669 = vpop.permute.xlu0 %2668
      %2670 = vrot.lane.b32.xlu0 %v2581, 24
      %v2671 = vpop.permute.xlu0 %2670
      %2672 = vrot.lane.b32.xlu0 %v2582, 24
      %v2673 = vpop.permute.xlu0 %2672
      %2674 = vrot.lane.b32.xlu0 %v2583, 24
      %v2675 = vpop.permute.xlu0 %2674
      %2676 = vrot.lane.b32.xlu0 %v2584, 24
      %v2677 = vpop.permute.xlu0 %2676
      %2678 = vrot.lane.b32.xlu0 %v2585, 24
      %v2679 = vpop.permute.xlu0 %2678
      %2680 = vrot.lane.b32.xlu0 %v2586, 24
      %v2681 = vpop.permute.xlu0 %2680
      %2682 = vrot.lane.b32.xlu0 %v2587, 24
      %v2683 = vpop.permute.xlu0 %2682
      %vm2716 = vcmask 228544
      %2717 = vst.msk [vmem:[#allocation5] sm:$0xff] %vm2716, %v2621
      %2718 = vst.msk [vmem:[#allocation5 + $0x8] sm:$0xff] %vm2716, %v2623
      %2719 = vst.msk [vmem:[#allocation5 + $0x10] sm:$0xff] %vm2716, %v2625
      %2720 = vst.msk [vmem:[#allocation5 + $0x18] sm:$0xff] %vm2716, %v2627
      %2721 = vst.msk [vmem:[#allocation5 + $0x20] sm:$0xff] %vm2716, %v2629
      %2722 = vst.msk [vmem:[#allocation5 + $0x28] sm:$0xff] %vm2716, %v2631
      %2723 = vst.msk [vmem:[#allocation5 + $0x30] sm:$0xff] %vm2716, %v2633
      %2724 = vst.msk [vmem:[#allocation5 + $0x38] sm:$0xff] %vm2716, %v2635
      %2725 = vst.msk [vmem:[#allocation5 + $0x40] sm:$0xff] %vm2716, %v2637
      %2726 = vst.msk [vmem:[#allocation5 + $0x48] sm:$0xff] %vm2716, %v2639
      %2727 = vst.msk [vmem:[#allocation5 + $0x50] sm:$0xff] %vm2716, %v2641
      %2728 = vst.msk [vmem:[#allocation5 + $0x58] sm:$0xff] %vm2716, %v2643
      %2729 = vst.msk [vmem:[#allocation5 + $0x60] sm:$0xff] %vm2716, %v2645
      %2730 = vst.msk [vmem:[#allocation5 + $0x68] sm:$0xff] %vm2716, %v2647
      %2731 = vst.msk [vmem:[#allocation5 + $0x70] sm:$0xff] %vm2716, %v2649
      %2732 = vst.msk [vmem:[#allocation5 + $0x78] sm:$0xff] %vm2716, %v2651
      %2733 = vst.msk [vmem:[#allocation5 + $0x80] sm:$0xff] %vm2716, %v2653
      %2734 = vst.msk [vmem:[#allocation5 + $0x88] sm:$0xff] %vm2716, %v2655
      %2735 = vst.msk [vmem:[#allocation5 + $0x90] sm:$0xff] %vm2716, %v2657
      %2736 = vst.msk [vmem:[#allocation5 + $0x98] sm:$0xff] %vm2716, %v2659
      %2737 = vst.msk [vmem:[#allocation5 + $0xa0] sm:$0xff] %vm2716, %v2661
      %2738 = vst.msk [vmem:[#allocation5 + $0xa8] sm:$0xff] %vm2716, %v2663
      %2739 = vst.msk [vmem:[#allocation5 + $0xb0] sm:$0xff] %vm2716, %v2665
      %2740 = vst.msk [vmem:[#allocation5 + $0xb8] sm:$0xff] %vm2716, %v2667
      %2741 = vst.msk [vmem:[#allocation5 + $0xc0] sm:$0xff] %vm2716, %v2669
      %2742 = vst.msk [vmem:[#allocation5 + $0xc8] sm:$0xff] %vm2716, %v2671
      %2743 = vst.msk [vmem:[#allocation5 + $0xd0] sm:$0xff] %vm2716, %v2673
      %2744 = vst.msk [vmem:[#allocation5 + $0xd8] sm:$0xff] %vm2716, %v2675
      %2745 = vst.msk [vmem:[#allocation5 + $0xe0] sm:$0xff] %vm2716, %v2677
      %2746 = vst.msk [vmem:[#allocation5 + $0xe8] sm:$0xff] %vm2716, %v2679
      %2747 = vst.msk [vmem:[#allocation5 + $0xf0] sm:$0xff] %vm2716, %v2681
      %2748 = vst.msk [vmem:[#allocation5 + $0xf8] sm:$0xff] %vm2716, %v2683
      %v2749 = vld [vmem:[%s2555 + $0x1] sm:$0xff]
      %v2750 = vld [vmem:[%s2555 + $0x9] sm:$0xff]
      %v2751 = vld [vmem:[%s2555 + $0x19] sm:$0xff]
      %v2752 = vld [vmem:[%s2555 + $0x21] sm:$0xff]
      %v2753 = vld [vmem:[%s2555 + $0x31] sm:$0xff]
      %v2754 = vld [vmem:[%s2555 + $0x39] sm:$0xff]
      %v2755 = vld [vmem:[%s2555 + $0x49] sm:$0xff]
      %v2756 = vld [vmem:[%s2555 + $0x51] sm:$0xff]
      %v2757 = vld [vmem:[%s2555 + $0x61] sm:$0xff]
      %v2758 = vld [vmem:[%s2555 + $0x69] sm:$0xff]
      %v2759 = vld [vmem:[%s2555 + $0x79] sm:$0xff]
      %v2760 = vld [vmem:[%s2555 + $0x81] sm:$0xff]
      %v2761 = vld [vmem:[%s2555 + $0x91] sm:$0xff]
      %v2762 = vld [vmem:[%s2555 + $0x99] sm:$0xff]
      %v2763 = vld [vmem:[%s2555 + $0xa9] sm:$0xff]
      %v2764 = vld [vmem:[%s2555 + $0xb1] sm:$0xff]
      %v2765 = vld [vmem:[%s2555 + $0xc1] sm:$0xff]
      %v2766 = vld [vmem:[%s2555 + $0xc9] sm:$0xff]
      %v2767 = vld [vmem:[%s2555 + $0xd9] sm:$0xff]
      %v2768 = vld [vmem:[%s2555 + $0xe1] sm:$0xff]
      %v2769 = vld [vmem:[%s2555 + $0xf1] sm:$0xff]
      %v2770 = vld [vmem:[%s2555 + $0xf9] sm:$0xff]
      %v2771 = vld [vmem:[%s2555 + $0x109] sm:$0xff]
      %v2772 = vld [vmem:[%s2555 + $0x111] sm:$0xff]
      %v2773 = vld [vmem:[%s2555 + $0x121] sm:$0xff]
      %v2774 = vld [vmem:[%s2555 + $0x129] sm:$0xff]
      %v2775 = vld [vmem:[%s2555 + $0x139] sm:$0xff]
      %v2776 = vld [vmem:[%s2555 + $0x141] sm:$0xff]
      %v2777 = vld [vmem:[%s2555 + $0x151] sm:$0xff]
      %v2778 = vld [vmem:[%s2555 + $0x159] sm:$0xff]
      %v2779 = vld [vmem:[%s2555 + $0x169] sm:$0xff]
      %v2780 = vld [vmem:[%s2555 + $0x171] sm:$0xff]
      %2813 = vrot.lane.b32.xlu0 %v2749, 28
      %v2814 = vpop.permute.xlu0 %2813
      %2815 = vrot.lane.b32.xlu0 %v2750, 28
      %v2816 = vpop.permute.xlu0 %2815
      %2817 = vrot.lane.b32.xlu0 %v2751, 28
      %v2818 = vpop.permute.xlu0 %2817
      %2819 = vrot.lane.b32.xlu0 %v2752, 28
      %v2820 = vpop.permute.xlu0 %2819
      %2821 = vrot.lane.b32.xlu0 %v2753, 28
      %v2822 = vpop.permute.xlu0 %2821
      %2823 = vrot.lane.b32.xlu0 %v2754, 28
      %v2824 = vpop.permute.xlu0 %2823
      %2825 = vrot.lane.b32.xlu0 %v2755, 28
      %v2826 = vpop.permute.xlu0 %2825
      %2827 = vrot.lane.b32.xlu0 %v2756, 28
      %v2828 = vpop.permute.xlu0 %2827
      %2829 = vrot.lane.b32.xlu0 %v2757, 28
      %v2830 = vpop.permute.xlu0 %2829
      %2831 = vrot.lane.b32.xlu0 %v2758, 28
      %v2832 = vpop.permute.xlu0 %2831
      %2833 = vrot.lane.b32.xlu0 %v2759, 28
      %v2834 = vpop.permute.xlu0 %2833
      %2835 = vrot.lane.b32.xlu0 %v2760, 28
      %v2836 = vpop.permute.xlu0 %2835
      %2837 = vrot.lane.b32.xlu0 %v2761, 28
      %v2838 = vpop.permute.xlu0 %2837
      %2839 = vrot.lane.b32.xlu0 %v2762, 28
      %v2840 = vpop.permute.xlu0 %2839
      %2841 = vrot.lane.b32.xlu0 %v2763, 28
      %v2842 = vpop.permute.xlu0 %2841
      %2843 = vrot.lane.b32.xlu0 %v2764, 28
      %v2844 = vpop.permute.xlu0 %2843
      %2845 = vrot.lane.b32.xlu0 %v2765, 28
      %v2846 = vpop.permute.xlu0 %2845
      %2847 = vrot.lane.b32.xlu0 %v2766, 28
      %v2848 = vpop.permute.xlu0 %2847
      %2849 = vrot.lane.b32.xlu0 %v2767, 28
      %v2850 = vpop.permute.xlu0 %2849
      %2851 = vrot.lane.b32.xlu0 %v2768, 28
      %v2852 = vpop.permute.xlu0 %2851
      %2853 = vrot.lane.b32.xlu0 %v2769, 28
      %v2854 = vpop.permute.xlu0 %2853
      %2855 = vrot.lane.b32.xlu0 %v2770, 28
      %v2856 = vpop.permute.xlu0 %2855
      %2857 = vrot.lane.b32.xlu0 %v2771, 28
      %v2858 = vpop.permute.xlu0 %2857
      %2859 = vrot.lane.b32.xlu0 %v2772, 28
      %v2860 = vpop.permute.xlu0 %2859
      %2861 = vrot.lane.b32.xlu0 %v2773, 28
      %v2862 = vpop.permute.xlu0 %2861
      %2863 = vrot.lane.b32.xlu0 %v2774, 28
      %v2864 = vpop.permute.xlu0 %2863
      %2865 = vrot.lane.b32.xlu0 %v2775, 28
      %v2866 = vpop.permute.xlu0 %2865
      %2867 = vrot.lane.b32.xlu0 %v2776, 28
      %v2868 = vpop.permute.xlu0 %2867
      %2869 = vrot.lane.b32.xlu0 %v2777, 28
      %v2870 = vpop.permute.xlu0 %2869
      %2871 = vrot.lane.b32.xlu0 %v2778, 28
      %v2872 = vpop.permute.xlu0 %2871
      %2873 = vrot.lane.b32.xlu0 %v2779, 28
      %v2874 = vpop.permute.xlu0 %2873
      %2875 = vrot.lane.b32.xlu0 %v2780, 28
      %v2876 = vpop.permute.xlu0 %2875
      %vm2909 = vcmask 261344
      %2910 = vst.msk [vmem:[#allocation5] sm:$0xff] %vm2909, %v2814
      %2911 = vst.msk [vmem:[#allocation5 + $0x8] sm:$0xff] %vm2909, %v2816
      %2912 = vst.msk [vmem:[#allocation5 + $0x10] sm:$0xff] %vm2909, %v2818
      %2913 = vst.msk [vmem:[#allocation5 + $0x18] sm:$0xff] %vm2909, %v2820
      %2914 = vst.msk [vmem:[#allocation5 + $0x20] sm:$0xff] %vm2909, %v2822
      %2915 = vst.msk [vmem:[#allocation5 + $0x28] sm:$0xff] %vm2909, %v2824
      %2916 = vst.msk [vmem:[#allocation5 + $0x30] sm:$0xff] %vm2909, %v2826
      %2917 = vst.msk [vmem:[#allocation5 + $0x38] sm:$0xff] %vm2909, %v2828
      %2918 = vst.msk [vmem:[#allocation5 + $0x40] sm:$0xff] %vm2909, %v2830
      %2919 = vst.msk [vmem:[#allocation5 + $0x48] sm:$0xff] %vm2909, %v2832
      %2920 = vst.msk [vmem:[#allocation5 + $0x50] sm:$0xff] %vm2909, %v2834
      %2921 = vst.msk [vmem:[#allocation5 + $0x58] sm:$0xff] %vm2909, %v2836
      %2922 = vst.msk [vmem:[#allocation5 + $0x60] sm:$0xff] %vm2909, %v2838
      %2923 = vst.msk [vmem:[#allocation5 + $0x68] sm:$0xff] %vm2909, %v2840
      %2924 = vst.msk [vmem:[#allocation5 + $0x70] sm:$0xff] %vm2909, %v2842
      %2925 = vst.msk [vmem:[#allocation5 + $0x78] sm:$0xff] %vm2909, %v2844
      %2926 = vst.msk [vmem:[#allocation5 + $0x80] sm:$0xff] %vm2909, %v2846
      %2927 = vst.msk [vmem:[#allocation5 + $0x88] sm:$0xff] %vm2909, %v2848
      %2928 = vst.msk [vmem:[#allocation5 + $0x90] sm:$0xff] %vm2909, %v2850
      %2929 = vst.msk [vmem:[#allocation5 + $0x98] sm:$0xff] %vm2909, %v2852
      %2930 = vst.msk [vmem:[#allocation5 + $0xa0] sm:$0xff] %vm2909, %v2854
      %2931 = vst.msk [vmem:[#allocation5 + $0xa8] sm:$0xff] %vm2909, %v2856
      %2932 = vst.msk [vmem:[#allocation5 + $0xb0] sm:$0xff] %vm2909, %v2858
      %2933 = vst.msk [vmem:[#allocation5 + $0xb8] sm:$0xff] %vm2909, %v2860
      %2934 = vst.msk [vmem:[#allocation5 + $0xc0] sm:$0xff] %vm2909, %v2862
      %2935 = vst.msk [vmem:[#allocation5 + $0xc8] sm:$0xff] %vm2909, %v2864
      %2936 = vst.msk [vmem:[#allocation5 + $0xd0] sm:$0xff] %vm2909, %v2866
      %2937 = vst.msk [vmem:[#allocation5 + $0xd8] sm:$0xff] %vm2909, %v2868
      %2938 = vst.msk [vmem:[#allocation5 + $0xe0] sm:$0xff] %vm2909, %v2870
      %2939 = vst.msk [vmem:[#allocation5 + $0xe8] sm:$0xff] %vm2909, %v2872
      %2940 = vst.msk [vmem:[#allocation5 + $0xf0] sm:$0xff] %vm2909, %v2874
      %2941 = vst.msk [vmem:[#allocation5 + $0xf8] sm:$0xff] %vm2909, %v2876
      %v2942 = vld [vmem:[%s2555 + $0x2] sm:$0xff]
      %v2943 = vld [vmem:[%s2555 + $0xa] sm:$0xff]
      %v2944 = vld [vmem:[%s2555 + $0x1a] sm:$0xff]
      %v2945 = vld [vmem:[%s2555 + $0x22] sm:$0xff]
      %v2946 = vld [vmem:[%s2555 + $0x32] sm:$0xff]
      %v2947 = vld [vmem:[%s2555 + $0x3a] sm:$0xff]
      %v2948 = vld [vmem:[%s2555 + $0x4a] sm:$0xff]
      %v2949 = vld [vmem:[%s2555 + $0x52] sm:$0xff]
      %v2950 = vld [vmem:[%s2555 + $0x62] sm:$0xff]
      %v2951 = vld [vmem:[%s2555 + $0x6a] sm:$0xff]
      %v2952 = vld [vmem:[%s2555 + $0x7a] sm:$0xff]
      %v2953 = vld [vmem:[%s2555 + $0x82] sm:$0xff]
      %v2954 = vld [vmem:[%s2555 + $0x92] sm:$0xff]
      %v2955 = vld [vmem:[%s2555 + $0x9a] sm:$0xff]
      %v2956 = vld [vmem:[%s2555 + $0xaa] sm:$0xff]
      %v2957 = vld [vmem:[%s2555 + $0xb2] sm:$0xff]
      %v2958 = vld [vmem:[%s2555 + $0xc2] sm:$0xff]
      %v2959 = vld [vmem:[%s2555 + $0xca] sm:$0xff]
      %v2960 = vld [vmem:[%s2555 + $0xda] sm:$0xff]
      %v2961 = vld [vmem:[%s2555 + $0xe2] sm:$0xff]
      %v2962 = vld [vmem:[%s2555 + $0xf2] sm:$0xff]
      %v2963 = vld [vmem:[%s2555 + $0xfa] sm:$0xff]
      %v2964 = vld [vmem:[%s2555 + $0x10a] sm:$0xff]
      %v2965 = vld [vmem:[%s2555 + $0x112] sm:$0xff]
      %v2966 = vld [vmem:[%s2555 + $0x122] sm:$0xff]
      %v2967 = vld [vmem:[%s2555 + $0x12a] sm:$0xff]
      %v2968 = vld [vmem:[%s2555 + $0x13a] sm:$0xff]
      %v2969 = vld [vmem:[%s2555 + $0x142] sm:$0xff]
      %v2970 = vld [vmem:[%s2555 + $0x152] sm:$0xff]
      %v2971 = vld [vmem:[%s2555 + $0x15a] sm:$0xff]
      %v2972 = vld [vmem:[%s2555 + $0x16a] sm:$0xff]
      %v2973 = vld [vmem:[%s2555 + $0x172] sm:$0xff]
      %3006 = vrot.lane.b32.xlu0 %v2942, 32
      %v3007 = vpop.permute.xlu0 %3006
      %3008 = vrot.lane.b32.xlu0 %v2943, 32
      %v3009 = vpop.permute.xlu0 %3008
      %3010 = vrot.lane.b32.xlu0 %v2944, 32
      %v3011 = vpop.permute.xlu0 %3010
      %3012 = vrot.lane.b32.xlu0 %v2945, 32
      %v3013 = vpop.permute.xlu0 %3012
      %3014 = vrot.lane.b32.xlu0 %v2946, 32
      %v3015 = vpop.permute.xlu0 %3014
      %3016 = vrot.lane.b32.xlu0 %v2947, 32
      %v3017 = vpop.permute.xlu0 %3016
      %3018 = vrot.lane.b32.xlu0 %v2948, 32
      %v3019 = vpop.permute.xlu0 %3018
      %3020 = vrot.lane.b32.xlu0 %v2949, 32
      %v3021 = vpop.permute.xlu0 %3020
      %3022 = vrot.lane.b32.xlu0 %v2950, 32
      %v3023 = vpop.permute.xlu0 %3022
      %3024 = vrot.lane.b32.xlu0 %v2951, 32
      %v3025 = vpop.permute.xlu0 %3024
      %3026 = vrot.lane.b32.xlu0 %v2952, 32
      %v3027 = vpop.permute.xlu0 %3026
      %3028 = vrot.lane.b32.xlu0 %v2953, 32
      %v3029 = vpop.permute.xlu0 %3028
      %3030 = vrot.lane.b32.xlu0 %v2954, 32
      %v3031 = vpop.permute.xlu0 %3030
      %3032 = vrot.lane.b32.xlu0 %v2955, 32
      %v3033 = vpop.permute.xlu0 %3032
      %3034 = vrot.lane.b32.xlu0 %v2956, 32
      %v3035 = vpop.permute.xlu0 %3034
      %3036 = vrot.lane.b32.xlu0 %v2957, 32
      %v3037 = vpop.permute.xlu0 %3036
      %3038 = vrot.lane.b32.xlu0 %v2958, 32
      %v3039 = vpop.permute.xlu0 %3038
      %3040 = vrot.lane.b32.xlu0 %v2959, 32
      %v3041 = vpop.permute.xlu0 %3040
      %3042 = vrot.lane.b32.xlu0 %v2960, 32
      %v3043 = vpop.permute.xlu0 %3042
      %3044 = vrot.lane.b32.xlu0 %v2961, 32
      %v3045 = vpop.permute.xlu0 %3044
      %3046 = vrot.lane.b32.xlu0 %v2962, 32
      %v3047 = vpop.permute.xlu0 %3046
      %3048 = vrot.lane.b32.xlu0 %v2963, 32
      %v3049 = vpop.permute.xlu0 %3048
      %3050 = vrot.lane.b32.xlu0 %v2964, 32
      %v3051 = vpop.permute.xlu0 %3050
      %3052 = vrot.lane.b32.xlu0 %v2965, 32
      %v3053 = vpop.permute.xlu0 %3052
      %3054 = vrot.lane.b32.xlu0 %v2966, 32
      %v3055 = vpop.permute.xlu0 %3054
      %3056 = vrot.lane.b32.xlu0 %v2967, 32
      %v3057 = vpop.permute.xlu0 %3056
      %3058 = vrot.lane.b32.xlu0 %v2968, 32
      %v3059 = vpop.permute.xlu0 %3058
      %3060 = vrot.lane.b32.xlu0 %v2969, 32
      %v3061 = vpop.permute.xlu0 %3060
      %3062 = vrot.lane.b32.xlu0 %v2970, 32
      %v3063 = vpop.permute.xlu0 %3062
      %3064 = vrot.lane.b32.xlu0 %v2971, 32
      %v3065 = vpop.permute.xlu0 %3064
      %3066 = vrot.lane.b32.xlu0 %v2972, 32
      %v3067 = vpop.permute.xlu0 %3066
      %3068 = vrot.lane.b32.xlu0 %v2973, 32
      %v3069 = vpop.permute.xlu0 %3068
      %vm3102 = vcmask 294144
      %3103 = vst.msk [vmem:[#allocation5] sm:$0xff] %vm3102, %v3007
      %3104 = vst.msk [vmem:[#allocation5 + $0x8] sm:$0xff] %vm3102, %v3009
      %3105 = vst.msk [vmem:[#allocation5 + $0x10] sm:$0xff] %vm3102, %v3011
      %3106 = vst.msk [vmem:[#allocation5 + $0x18] sm:$0xff] %vm3102, %v3013
      %3107 = vst.msk [vmem:[#allocation5 + $0x20] sm:$0xff] %vm3102, %v3015
      %3108 = vst.msk [vmem:[#allocation5 + $0x28] sm:$0xff] %vm3102, %v3017
      %3109 = vst.msk [vmem:[#allocation5 + $0x30] sm:$0xff] %vm3102, %v3019
      %3110 = vst.msk [vmem:[#allocation5 + $0x38] sm:$0xff] %vm3102, %v3021
      %3111 = vst.msk [vmem:[#allocation5 + $0x40] sm:$0xff] %vm3102, %v3023
      %3112 = vst.msk [vmem:[#allocation5 + $0x48] sm:$0xff] %vm3102, %v3025
      %3113 = vst.msk [vmem:[#allocation5 + $0x50] sm:$0xff] %vm3102, %v3027
      %3114 = vst.msk [vmem:[#allocation5 + $0x58] sm:$0xff] %vm3102, %v3029
      %3115 = vst.msk [vmem:[#allocation5 + $0x60] sm:$0xff] %vm3102, %v3031
      %3116 = vst.msk [vmem:[#allocation5 + $0x68] sm:$0xff] %vm3102, %v3033
      %3117 = vst.msk [vmem:[#allocation5 + $0x70] sm:$0xff] %vm3102, %v3035
      %3118 = vst.msk [vmem:[#allocation5 + $0x78] sm:$0xff] %vm3102, %v3037
      %3119 = vst.msk [vmem:[#allocation5 + $0x80] sm:$0xff] %vm3102, %v3039
      %3120 = vst.msk [vmem:[#allocation5 + $0x88] sm:$0xff] %vm3102, %v3041
      %3121 = vst.msk [vmem:[#allocation5 + $0x90] sm:$0xff] %vm3102, %v3043
      %3122 = vst.msk [vmem:[#allocation5 + $0x98] sm:$0xff] %vm3102, %v3045
      %3123 = vst.msk [vmem:[#allocation5 + $0xa0] sm:$0xff] %vm3102, %v3047
      %3124 = vst.msk [vmem:[#allocation5 + $0xa8] sm:$0xff] %vm3102, %v3049
      %3125 = vst.msk [vmem:[#allocation5 + $0xb0] sm:$0xff] %vm3102, %v3051
      %3126 = vst.msk [vmem:[#allocation5 + $0xb8] sm:$0xff] %vm3102, %v3053
      %3127 = vst.msk [vmem:[#allocation5 + $0xc0] sm:$0xff] %vm3102, %v3055
      %3128 = vst.msk [vmem:[#allocation5 + $0xc8] sm:$0xff] %vm3102, %v3057
      %3129 = vst.msk [vmem:[#allocation5 + $0xd0] sm:$0xff] %vm3102, %v3059
      %3130 = vst.msk [vmem:[#allocation5 + $0xd8] sm:$0xff] %vm3102, %v3061
      %3131 = vst.msk [vmem:[#allocation5 + $0xe0] sm:$0xff] %vm3102, %v3063
      %3132 = vst.msk [vmem:[#allocation5 + $0xe8] sm:$0xff] %vm3102, %v3065
      %3133 = vst.msk [vmem:[#allocation5 + $0xf0] sm:$0xff] %vm3102, %v3067
      %3134 = vst.msk [vmem:[#allocation5 + $0xf8] sm:$0xff] %vm3102, %v3069
      %3135 = vrot.lane.b32.xlu0 %v629, 120
      %v3136 = vpop.permute.xlu0 %3135
      %3137 = vrot.lane.b32.xlu0 %v634, 120
      %v3138 = vpop.permute.xlu0 %3137
      %3139 = vrot.lane.b32.xlu0 %v639, 120
      %v3140 = vpop.permute.xlu0 %3139
      %3141 = vrot.lane.b32.xlu0 %v644, 120
      %v3142 = vpop.permute.xlu0 %3141
      %3143 = vrot.lane.b32.xlu0 %v649, 120
      %v3144 = vpop.permute.xlu0 %3143
      %3145 = vrot.lane.b32.xlu0 %v654, 120
      %v3146 = vpop.permute.xlu0 %3145
      %3147 = vrot.lane.b32.xlu0 %v659, 120
      %v3148 = vpop.permute.xlu0 %3147
      %3149 = vrot.lane.b32.xlu0 %v664, 120
      %v3150 = vpop.permute.xlu0 %3149
      %3151 = vrot.lane.b32.xlu0 %v669, 120
      %v3152 = vpop.permute.xlu0 %3151
      %3153 = vrot.lane.b32.xlu0 %v674, 120
      %v3154 = vpop.permute.xlu0 %3153
      %3155 = vrot.lane.b32.xlu0 %v679, 120
      %v3156 = vpop.permute.xlu0 %3155
      %3157 = vrot.lane.b32.xlu0 %v684, 120
      %v3158 = vpop.permute.xlu0 %3157
      %3159 = vrot.lane.b32.xlu0 %v689, 120
      %v3160 = vpop.permute.xlu0 %3159
      %3161 = vrot.lane.b32.xlu0 %v694, 120
      %v3162 = vpop.permute.xlu0 %3161
      %3163 = vrot.lane.b32.xlu0 %v699, 120
      %v3164 = vpop.permute.xlu0 %3163
      %3165 = vrot.lane.b32.xlu0 %v704, 120
      %v3166 = vpop.permute.xlu0 %3165
      %3167 = vrot.lane.b32.xlu0 %v709, 120
      %v3168 = vpop.permute.xlu0 %3167
      %3169 = vrot.lane.b32.xlu0 %v714, 120
      %v3170 = vpop.permute.xlu0 %3169
      %3171 = vrot.lane.b32.xlu0 %v719, 120
      %v3172 = vpop.permute.xlu0 %3171
      %3173 = vrot.lane.b32.xlu0 %v724, 120
      %v3174 = vpop.permute.xlu0 %3173
      %3175 = vrot.lane.b32.xlu0 %v729, 120
      %v3176 = vpop.permute.xlu0 %3175
      %3177 = vrot.lane.b32.xlu0 %v734, 120
      %v3178 = vpop.permute.xlu0 %3177
      %3179 = vrot.lane.b32.xlu0 %v739, 120
      %v3180 = vpop.permute.xlu0 %3179
      %3181 = vrot.lane.b32.xlu0 %v744, 120
      %v3182 = vpop.permute.xlu0 %3181
      %3183 = vrot.lane.b32.xlu0 %v749, 120
      %v3184 = vpop.permute.xlu0 %3183
      %3185 = vrot.lane.b32.xlu0 %v754, 120
      %v3186 = vpop.permute.xlu0 %3185
      %3187 = vrot.lane.b32.xlu0 %v759, 120
      %v3188 = vpop.permute.xlu0 %3187
      %3189 = vrot.lane.b32.xlu0 %v764, 120
      %v3190 = vpop.permute.xlu0 %3189
      %3191 = vrot.lane.b32.xlu0 %v769, 120
      %v3192 = vpop.permute.xlu0 %3191
      %3193 = vrot.lane.b32.xlu0 %v774, 120
      %v3194 = vpop.permute.xlu0 %3193
      %3195 = vrot.lane.b32.xlu0 %v779, 120
      %v3196 = vpop.permute.xlu0 %3195
      %3197 = vrot.lane.b32.xlu0 %v784, 120
      %v3198 = vpop.permute.xlu0 %3197
      %s3231 = scalar_lea.vmem [#allocation4], 48
      %3232 = vst.msk [vmem:[%s3231 + $0x2] sm:$0xff] %vm279, %v3136
      %3233 = vst.msk [vmem:[%s3231 + $0xa] sm:$0xff] %vm279, %v3138
      %3234 = vst.msk [vmem:[%s3231 + $0x1a] sm:$0xff] %vm279, %v3140
      %3235 = vst.msk [vmem:[%s3231 + $0x22] sm:$0xff] %vm279, %v3142
      %3236 = vst.msk [vmem:[%s3231 + $0x32] sm:$0xff] %vm279, %v3144
      %3237 = vst.msk [vmem:[%s3231 + $0x3a] sm:$0xff] %vm279, %v3146
      %3238 = vst.msk [vmem:[%s3231 + $0x4a] sm:$0xff] %vm279, %v3148
      %3239 = vst.msk [vmem:[%s3231 + $0x52] sm:$0xff] %vm279, %v3150
      %3240 = vst.msk [vmem:[%s3231 + $0x62] sm:$0xff] %vm279, %v3152
      %3241 = vst.msk [vmem:[%s3231 + $0x6a] sm:$0xff] %vm279, %v3154
      %3242 = vst.msk [vmem:[%s3231 + $0x7a] sm:$0xff] %vm279, %v3156
      %3243 = vst.msk [vmem:[%s3231 + $0x82] sm:$0xff] %vm279, %v3158
      %3244 = vst.msk [vmem:[%s3231 + $0x92] sm:$0xff] %vm279, %v3160
      %3245 = vst.msk [vmem:[%s3231 + $0x9a] sm:$0xff] %vm279, %v3162
      %3246 = vst.msk [vmem:[%s3231 + $0xaa] sm:$0xff] %vm279, %v3164
      %3247 = vst.msk [vmem:[%s3231 + $0xb2] sm:$0xff] %vm279, %v3166
      %3248 = vst.msk [vmem:[%s3231 + $0xc2] sm:$0xff] %vm279, %v3168
      %3249 = vst.msk [vmem:[%s3231 + $0xca] sm:$0xff] %vm279, %v3170
      %3250 = vst.msk [vmem:[%s3231 + $0xda] sm:$0xff] %vm279, %v3172
      %3251 = vst.msk [vmem:[%s3231 + $0xe2] sm:$0xff] %vm279, %v3174
      %3252 = vst.msk [vmem:[%s3231 + $0xf2] sm:$0xff] %vm279, %v3176
      %3253 = vst.msk [vmem:[%s3231 + $0xfa] sm:$0xff] %vm279, %v3178
      %3254 = vst.msk [vmem:[%s3231 + $0x10a] sm:$0xff] %vm279, %v3180
      %3255 = vst.msk [vmem:[%s3231 + $0x112] sm:$0xff] %vm279, %v3182
      %3256 = vst.msk [vmem:[%s3231 + $0x122] sm:$0xff] %vm279, %v3184
      %3257 = vst.msk [vmem:[%s3231 + $0x12a] sm:$0xff] %vm279, %v3186
      %3258 = vst.msk [vmem:[%s3231 + $0x13a] sm:$0xff] %vm279, %v3188
      %3259 = vst.msk [vmem:[%s3231 + $0x142] sm:$0xff] %vm279, %v3190
      %3260 = vst.msk [vmem:[%s3231 + $0x152] sm:$0xff] %vm279, %v3192
      %3261 = vst.msk [vmem:[%s3231 + $0x15a] sm:$0xff] %vm279, %v3194
      %3262 = vst.msk [vmem:[%s3231 + $0x16a] sm:$0xff] %vm279, %v3196
      %3263 = vst.msk [vmem:[%s3231 + $0x172] sm:$0xff] %vm279, %v3198
      %v3264 = vld [vmem:[#allocation4] sm:$0xff]
      %v3265 = vld [vmem:[#allocation4 + $0x8] sm:$0xff]
      %v3266 = vld [vmem:[#allocation4 + $0x18] sm:$0xff]
      %v3267 = vld [vmem:[#allocation4 + $0x20] sm:$0xff]
      %v3268 = vld [vmem:[#allocation4 + $0x30] sm:$0xff]
      %v3269 = vld [vmem:[#allocation4 + $0x38] sm:$0xff]
      %v3270 = vld [vmem:[#allocation4 + $0x48] sm:$0xff]
      %v3271 = vld [vmem:[#allocation4 + $0x50] sm:$0xff]
      %v3272 = vld [vmem:[#allocation4 + $0x60] sm:$0xff]
      %v3273 = vld [vmem:[#allocation4 + $0x68] sm:$0xff]
      %v3274 = vld [vmem:[#allocation4 + $0x78] sm:$0xff]
      %v3275 = vld [vmem:[#allocation4 + $0x80] sm:$0xff]
      %v3276 = vld [vmem:[#allocation4 + $0x90] sm:$0xff]
      %v3277 = vld [vmem:[#allocation4 + $0x98] sm:$0xff]
      %v3278 = vld [vmem:[#allocation4 + $0xa8] sm:$0xff]
      %v3279 = vld [vmem:[#allocation4 + $0xb0] sm:$0xff]
      %v3280 = vld [vmem:[#allocation4 + $0xc0] sm:$0xff]
      %v3281 = vld [vmem:[#allocation4 + $0xc8] sm:$0xff]
      %v3282 = vld [vmem:[#allocation4 + $0xd8] sm:$0xff]
      %v3283 = vld [vmem:[#allocation4 + $0xe0] sm:$0xff]
      %v3284 = vld [vmem:[#allocation4 + $0xf0] sm:$0xff]
      %v3285 = vld [vmem:[#allocation4 + $0xf8] sm:$0xff]
      %v3286 = vld [vmem:[#allocation4 + $0x108] sm:$0xff]
      %v3287 = vld [vmem:[#allocation4 + $0x110] sm:$0xff]
      %v3288 = vld [vmem:[#allocation4 + $0x120] sm:$0xff]
      %v3289 = vld [vmem:[#allocation4 + $0x128] sm:$0xff]
      %v3290 = vld [vmem:[#allocation4 + $0x138] sm:$0xff]
      %v3291 = vld [vmem:[#allocation4 + $0x140] sm:$0xff]
      %v3292 = vld [vmem:[#allocation4 + $0x150] sm:$0xff]
      %v3293 = vld [vmem:[#allocation4 + $0x158] sm:$0xff]
      %v3294 = vld [vmem:[#allocation4 + $0x168] sm:$0xff]
      %v3295 = vld [vmem:[#allocation4 + $0x170] sm:$0xff]
      %3296 = vst.msk [vmem:[#allocation6] sm:$0xff] %vm279, %v3264
      %3297 = vst.msk [vmem:[#allocation6 + $0x8] sm:$0xff] %vm279, %v3265
      %3298 = vst.msk [vmem:[#allocation6 + $0x10] sm:$0xff] %vm279, %v3266
      %3299 = vst.msk [vmem:[#allocation6 + $0x18] sm:$0xff] %vm279, %v3267
      %3300 = vst.msk [vmem:[#allocation6 + $0x20] sm:$0xff] %vm279, %v3268
      %3301 = vst.msk [vmem:[#allocation6 + $0x28] sm:$0xff] %vm279, %v3269
      %3302 = vst.msk [vmem:[#allocation6 + $0x30] sm:$0xff] %vm279, %v3270
      %3303 = vst.msk [vmem:[#allocation6 + $0x38] sm:$0xff] %vm279, %v3271
      %3304 = vst.msk [vmem:[#allocation6 + $0x40] sm:$0xff] %vm279, %v3272
      %3305 = vst.msk [vmem:[#allocation6 + $0x48] sm:$0xff] %vm279, %v3273
      %3306 = vst.msk [vmem:[#allocation6 + $0x50] sm:$0xff] %vm279, %v3274
      %3307 = vst.msk [vmem:[#allocation6 + $0x58] sm:$0xff] %vm279, %v3275
      %3308 = vst.msk [vmem:[#allocation6 + $0x60] sm:$0xff] %vm279, %v3276
      %3309 = vst.msk [vmem:[#allocation6 + $0x68] sm:$0xff] %vm279, %v3277
      %3310 = vst.msk [vmem:[#allocation6 + $0x70] sm:$0xff] %vm279, %v3278
      %3311 = vst.msk [vmem:[#allocation6 + $0x78] sm:$0xff] %vm279, %v3279
      %3312 = vst.msk [vmem:[#allocation6 + $0x80] sm:$0xff] %vm279, %v3280
      %3313 = vst.msk [vmem:[#allocation6 + $0x88] sm:$0xff] %vm279, %v3281
      %3314 = vst.msk [vmem:[#allocation6 + $0x90] sm:$0xff] %vm279, %v3282
      %3315 = vst.msk [vmem:[#allocation6 + $0x98] sm:$0xff] %vm279, %v3283
      %3316 = vst.msk [vmem:[#allocation6 + $0xa0] sm:$0xff] %vm279, %v3284
      %3317 = vst.msk [vmem:[#allocation6 + $0xa8] sm:$0xff] %vm279, %v3285
      %3318 = vst.msk [vmem:[#allocation6 + $0xb0] sm:$0xff] %vm279, %v3286
      %3319 = vst.msk [vmem:[#allocation6 + $0xb8] sm:$0xff] %vm279, %v3287
      %3320 = vst.msk [vmem:[#allocation6 + $0xc0] sm:$0xff] %vm279, %v3288
      %3321 = vst.msk [vmem:[#allocation6 + $0xc8] sm:$0xff] %vm279, %v3289
      %3322 = vst.msk [vmem:[#allocation6 + $0xd0] sm:$0xff] %vm279, %v3290
      %3323 = vst.msk [vmem:[#allocation6 + $0xd8] sm:$0xff] %vm279, %v3291
      %3324 = vst.msk [vmem:[#allocation6 + $0xe0] sm:$0xff] %vm279, %v3292
      %3325 = vst.msk [vmem:[#allocation6 + $0xe8] sm:$0xff] %vm279, %v3293
      %3326 = vst.msk [vmem:[#allocation6 + $0xf0] sm:$0xff] %vm279, %v3294
      %3327 = vst.msk [vmem:[#allocation6 + $0xf8] sm:$0xff] %vm279, %v3295
      %v3328 = vld [vmem:[#allocation4 + $0x1] sm:$0xff]
      %v3329 = vld [vmem:[#allocation4 + $0x9] sm:$0xff]
      %v3330 = vld [vmem:[#allocation4 + $0x19] sm:$0xff]
      %v3331 = vld [vmem:[#allocation4 + $0x21] sm:$0xff]
      %v3332 = vld [vmem:[#allocation4 + $0x31] sm:$0xff]
      %v3333 = vld [vmem:[#allocation4 + $0x39] sm:$0xff]
      %v3334 = vld [vmem:[#allocation4 + $0x49] sm:$0xff]
      %v3335 = vld [vmem:[#allocation4 + $0x51] sm:$0xff]
      %v3336 = vld [vmem:[#allocation4 + $0x61] sm:$0xff]
      %v3337 = vld [vmem:[#allocation4 + $0x69] sm:$0xff]
      %v3338 = vld [vmem:[#allocation4 + $0x79] sm:$0xff]
      %v3339 = vld [vmem:[#allocation4 + $0x81] sm:$0xff]
      %v3340 = vld [vmem:[#allocation4 + $0x91] sm:$0xff]
      %v3341 = vld [vmem:[#allocation4 + $0x99] sm:$0xff]
      %v3342 = vld [vmem:[#allocation4 + $0xa9] sm:$0xff]
      %v3343 = vld [vmem:[#allocation4 + $0xb1] sm:$0xff]
      %v3344 = vld [vmem:[#allocation4 + $0xc1] sm:$0xff]
      %v3345 = vld [vmem:[#allocation4 + $0xc9] sm:$0xff]
      %v3346 = vld [vmem:[#allocation4 + $0xd9] sm:$0xff]
      %v3347 = vld [vmem:[#allocation4 + $0xe1] sm:$0xff]
      %v3348 = vld [vmem:[#allocation4 + $0xf1] sm:$0xff]
      %v3349 = vld [vmem:[#allocation4 + $0xf9] sm:$0xff]
      %v3350 = vld [vmem:[#allocation4 + $0x109] sm:$0xff]
      %v3351 = vld [vmem:[#allocation4 + $0x111] sm:$0xff]
      %v3352 = vld [vmem:[#allocation4 + $0x121] sm:$0xff]
      %v3353 = vld [vmem:[#allocation4 + $0x129] sm:$0xff]
      %v3354 = vld [vmem:[#allocation4 + $0x139] sm:$0xff]
      %v3355 = vld [vmem:[#allocation4 + $0x141] sm:$0xff]
      %v3356 = vld [vmem:[#allocation4 + $0x151] sm:$0xff]
      %v3357 = vld [vmem:[#allocation4 + $0x159] sm:$0xff]
      %v3358 = vld [vmem:[#allocation4 + $0x169] sm:$0xff]
      %v3359 = vld [vmem:[#allocation4 + $0x171] sm:$0xff]
      %3392 = vrot.lane.b32.xlu0 %v3328, 4
      %v3393 = vpop.permute.xlu0 %3392
      %3394 = vrot.lane.b32.xlu0 %v3329, 4
      %v3395 = vpop.permute.xlu0 %3394
      %3396 = vrot.lane.b32.xlu0 %v3330, 4
      %v3397 = vpop.permute.xlu0 %3396
      %3398 = vrot.lane.b32.xlu0 %v3331, 4
      %v3399 = vpop.permute.xlu0 %3398
      %3400 = vrot.lane.b32.xlu0 %v3332, 4
      %v3401 = vpop.permute.xlu0 %3400
      %3402 = vrot.lane.b32.xlu0 %v3333, 4
      %v3403 = vpop.permute.xlu0 %3402
      %3404 = vrot.lane.b32.xlu0 %v3334, 4
      %v3405 = vpop.permute.xlu0 %3404
      %3406 = vrot.lane.b32.xlu0 %v3335, 4
      %v3407 = vpop.permute.xlu0 %3406
      %3408 = vrot.lane.b32.xlu0 %v3336, 4
      %v3409 = vpop.permute.xlu0 %3408
      %3410 = vrot.lane.b32.xlu0 %v3337, 4
      %v3411 = vpop.permute.xlu0 %3410
      %3412 = vrot.lane.b32.xlu0 %v3338, 4
      %v3413 = vpop.permute.xlu0 %3412
      %3414 = vrot.lane.b32.xlu0 %v3339, 4
      %v3415 = vpop.permute.xlu0 %3414
      %3416 = vrot.lane.b32.xlu0 %v3340, 4
      %v3417 = vpop.permute.xlu0 %3416
      %3418 = vrot.lane.b32.xlu0 %v3341, 4
      %v3419 = vpop.permute.xlu0 %3418
      %3420 = vrot.lane.b32.xlu0 %v3342, 4
      %v3421 = vpop.permute.xlu0 %3420
      %3422 = vrot.lane.b32.xlu0 %v3343, 4
      %v3423 = vpop.permute.xlu0 %3422
      %3424 = vrot.lane.b32.xlu0 %v3344, 4
      %v3425 = vpop.permute.xlu0 %3424
      %3426 = vrot.lane.b32.xlu0 %v3345, 4
      %v3427 = vpop.permute.xlu0 %3426
      %3428 = vrot.lane.b32.xlu0 %v3346, 4
      %v3429 = vpop.permute.xlu0 %3428
      %3430 = vrot.lane.b32.xlu0 %v3347, 4
      %v3431 = vpop.permute.xlu0 %3430
      %3432 = vrot.lane.b32.xlu0 %v3348, 4
      %v3433 = vpop.permute.xlu0 %3432
      %3434 = vrot.lane.b32.xlu0 %v3349, 4
      %v3435 = vpop.permute.xlu0 %3434
      %3436 = vrot.lane.b32.xlu0 %v3350, 4
      %v3437 = vpop.permute.xlu0 %3436
      %3438 = vrot.lane.b32.xlu0 %v3351, 4
      %v3439 = vpop.permute.xlu0 %3438
      %3440 = vrot.lane.b32.xlu0 %v3352, 4
      %v3441 = vpop.permute.xlu0 %3440
      %3442 = vrot.lane.b32.xlu0 %v3353, 4
      %v3443 = vpop.permute.xlu0 %3442
      %3444 = vrot.lane.b32.xlu0 %v3354, 4
      %v3445 = vpop.permute.xlu0 %3444
      %3446 = vrot.lane.b32.xlu0 %v3355, 4
      %v3447 = vpop.permute.xlu0 %3446
      %3448 = vrot.lane.b32.xlu0 %v3356, 4
      %v3449 = vpop.permute.xlu0 %3448
      %3450 = vrot.lane.b32.xlu0 %v3357, 4
      %v3451 = vpop.permute.xlu0 %3450
      %3452 = vrot.lane.b32.xlu0 %v3358, 4
      %v3453 = vpop.permute.xlu0 %3452
      %3454 = vrot.lane.b32.xlu0 %v3359, 4
      %v3455 = vpop.permute.xlu0 %3454
      %3488 = vst.msk [vmem:[#allocation6] sm:$0xff] %vm1750, %v3393
      %3489 = vst.msk [vmem:[#allocation6 + $0x8] sm:$0xff] %vm1750, %v3395
      %3490 = vst.msk [vmem:[#allocation6 + $0x10] sm:$0xff] %vm1750, %v3397
      %3491 = vst.msk [vmem:[#allocation6 + $0x18] sm:$0xff] %vm1750, %v3399
      %3492 = vst.msk [vmem:[#allocation6 + $0x20] sm:$0xff] %vm1750, %v3401
      %3493 = vst.msk [vmem:[#allocation6 + $0x28] sm:$0xff] %vm1750, %v3403
      %3494 = vst.msk [vmem:[#allocation6 + $0x30] sm:$0xff] %vm1750, %v3405
      %3495 = vst.msk [vmem:[#allocation6 + $0x38] sm:$0xff] %vm1750, %v3407
      %3496 = vst.msk [vmem:[#allocation6 + $0x40] sm:$0xff] %vm1750, %v3409
      %3497 = vst.msk [vmem:[#allocation6 + $0x48] sm:$0xff] %vm1750, %v3411
      %3498 = vst.msk [vmem:[#allocation6 + $0x50] sm:$0xff] %vm1750, %v3413
      %3499 = vst.msk [vmem:[#allocation6 + $0x58] sm:$0xff] %vm1750, %v3415
      %3500 = vst.msk [vmem:[#allocation6 + $0x60] sm:$0xff] %vm1750, %v3417
      %3501 = vst.msk [vmem:[#allocation6 + $0x68] sm:$0xff] %vm1750, %v3419
      %3502 = vst.msk [vmem:[#allocation6 + $0x70] sm:$0xff] %vm1750, %v3421
      %3503 = vst.msk [vmem:[#allocation6 + $0x78] sm:$0xff] %vm1750, %v3423
      %3504 = vst.msk [vmem:[#allocation6 + $0x80] sm:$0xff] %vm1750, %v3425
      %3505 = vst.msk [vmem:[#allocation6 + $0x88] sm:$0xff] %vm1750, %v3427
      %3506 = vst.msk [vmem:[#allocation6 + $0x90] sm:$0xff] %vm1750, %v3429
      %3507 = vst.msk [vmem:[#allocation6 + $0x98] sm:$0xff] %vm1750, %v3431
      %3508 = vst.msk [vmem:[#allocation6 + $0xa0] sm:$0xff] %vm1750, %v3433
      %3509 = vst.msk [vmem:[#allocation6 + $0xa8] sm:$0xff] %vm1750, %v3435
      %3510 = vst.msk [vmem:[#allocation6 + $0xb0] sm:$0xff] %vm1750, %v3437
      %3511 = vst.msk [vmem:[#allocation6 + $0xb8] sm:$0xff] %vm1750, %v3439
      %3512 = vst.msk [vmem:[#allocation6 + $0xc0] sm:$0xff] %vm1750, %v3441
      %3513 = vst.msk [vmem:[#allocation6 + $0xc8] sm:$0xff] %vm1750, %v3443
      %3514 = vst.msk [vmem:[#allocation6 + $0xd0] sm:$0xff] %vm1750, %v3445
      %3515 = vst.msk [vmem:[#allocation6 + $0xd8] sm:$0xff] %vm1750, %v3447
      %3516 = vst.msk [vmem:[#allocation6 + $0xe0] sm:$0xff] %vm1750, %v3449
      %3517 = vst.msk [vmem:[#allocation6 + $0xe8] sm:$0xff] %vm1750, %v3451
      %3518 = vst.msk [vmem:[#allocation6 + $0xf0] sm:$0xff] %vm1750, %v3453
      %3519 = vst.msk [vmem:[#allocation6 + $0xf8] sm:$0xff] %vm1750, %v3455
      %v3520 = vld [vmem:[#allocation4 + $0x2] sm:$0xff]
      %v3521 = vld [vmem:[#allocation4 + $0xa] sm:$0xff]
      %v3522 = vld [vmem:[#allocation4 + $0x1a] sm:$0xff]
      %v3523 = vld [vmem:[#allocation4 + $0x22] sm:$0xff]
      %v3524 = vld [vmem:[#allocation4 + $0x32] sm:$0xff]
      %v3525 = vld [vmem:[#allocation4 + $0x3a] sm:$0xff]
      %v3526 = vld [vmem:[#allocation4 + $0x4a] sm:$0xff]
      %v3527 = vld [vmem:[#allocation4 + $0x52] sm:$0xff]
      %v3528 = vld [vmem:[#allocation4 + $0x62] sm:$0xff]
      %v3529 = vld [vmem:[#allocation4 + $0x6a] sm:$0xff]
      %v3530 = vld [vmem:[#allocation4 + $0x7a] sm:$0xff]
      %v3531 = vld [vmem:[#allocation4 + $0x82] sm:$0xff]
      %v3532 = vld [vmem:[#allocation4 + $0x92] sm:$0xff]
      %v3533 = vld [vmem:[#allocation4 + $0x9a] sm:$0xff]
      %v3534 = vld [vmem:[#allocation4 + $0xaa] sm:$0xff]
      %v3535 = vld [vmem:[#allocation4 + $0xb2] sm:$0xff]
      %v3536 = vld [vmem:[#allocation4 + $0xc2] sm:$0xff]
      %v3537 = vld [vmem:[#allocation4 + $0xca] sm:$0xff]
      %v3538 = vld [vmem:[#allocation4 + $0xda] sm:$0xff]
      %v3539 = vld [vmem:[#allocation4 + $0xe2] sm:$0xff]
      %v3540 = vld [vmem:[#allocation4 + $0xf2] sm:$0xff]
      %v3541 = vld [vmem:[#allocation4 + $0xfa] sm:$0xff]
      %v3542 = vld [vmem:[#allocation4 + $0x10a] sm:$0xff]
      %v3543 = vld [vmem:[#allocation4 + $0x112] sm:$0xff]
      %v3544 = vld [vmem:[#allocation4 + $0x122] sm:$0xff]
      %v3545 = vld [vmem:[#allocation4 + $0x12a] sm:$0xff]
      %v3546 = vld [vmem:[#allocation4 + $0x13a] sm:$0xff]
      %v3547 = vld [vmem:[#allocation4 + $0x142] sm:$0xff]
      %v3548 = vld [vmem:[#allocation4 + $0x152] sm:$0xff]
      %v3549 = vld [vmem:[#allocation4 + $0x15a] sm:$0xff]
      %v3550 = vld [vmem:[#allocation4 + $0x16a] sm:$0xff]
      %v3551 = vld [vmem:[#allocation4 + $0x172] sm:$0xff]
      %3584 = vrot.lane.b32.xlu0 %v3520, 8
      %v3585 = vpop.permute.xlu0 %3584
      %3586 = vrot.lane.b32.xlu0 %v3521, 8
      %v3587 = vpop.permute.xlu0 %3586
      %3588 = vrot.lane.b32.xlu0 %v3522, 8
      %v3589 = vpop.permute.xlu0 %3588
      %3590 = vrot.lane.b32.xlu0 %v3523, 8
      %v3591 = vpop.permute.xlu0 %3590
      %3592 = vrot.lane.b32.xlu0 %v3524, 8
      %v3593 = vpop.permute.xlu0 %3592
      %3594 = vrot.lane.b32.xlu0 %v3525, 8
      %v3595 = vpop.permute.xlu0 %3594
      %3596 = vrot.lane.b32.xlu0 %v3526, 8
      %v3597 = vpop.permute.xlu0 %3596
      %3598 = vrot.lane.b32.xlu0 %v3527, 8
      %v3599 = vpop.permute.xlu0 %3598
      %3600 = vrot.lane.b32.xlu0 %v3528, 8
      %v3601 = vpop.permute.xlu0 %3600
      %3602 = vrot.lane.b32.xlu0 %v3529, 8
      %v3603 = vpop.permute.xlu0 %3602
      %3604 = vrot.lane.b32.xlu0 %v3530, 8
      %v3605 = vpop.permute.xlu0 %3604
      %3606 = vrot.lane.b32.xlu0 %v3531, 8
      %v3607 = vpop.permute.xlu0 %3606
      %3608 = vrot.lane.b32.xlu0 %v3532, 8
      %v3609 = vpop.permute.xlu0 %3608
      %3610 = vrot.lane.b32.xlu0 %v3533, 8
      %v3611 = vpop.permute.xlu0 %3610
      %3612 = vrot.lane.b32.xlu0 %v3534, 8
      %v3613 = vpop.permute.xlu0 %3612
      %3614 = vrot.lane.b32.xlu0 %v3535, 8
      %v3615 = vpop.permute.xlu0 %3614
      %3616 = vrot.lane.b32.xlu0 %v3536, 8
      %v3617 = vpop.permute.xlu0 %3616
      %3618 = vrot.lane.b32.xlu0 %v3537, 8
      %v3619 = vpop.permute.xlu0 %3618
      %3620 = vrot.lane.b32.xlu0 %v3538, 8
      %v3621 = vpop.permute.xlu0 %3620
      %3622 = vrot.lane.b32.xlu0 %v3539, 8
      %v3623 = vpop.permute.xlu0 %3622
      %3624 = vrot.lane.b32.xlu0 %v3540, 8
      %v3625 = vpop.permute.xlu0 %3624
      %3626 = vrot.lane.b32.xlu0 %v3541, 8
      %v3627 = vpop.permute.xlu0 %3626
      %3628 = vrot.lane.b32.xlu0 %v3542, 8
      %v3629 = vpop.permute.xlu0 %3628
      %3630 = vrot.lane.b32.xlu0 %v3543, 8
      %v3631 = vpop.permute.xlu0 %3630
      %3632 = vrot.lane.b32.xlu0 %v3544, 8
      %v3633 = vpop.permute.xlu0 %3632
      %3634 = vrot.lane.b32.xlu0 %v3545, 8
      %v3635 = vpop.permute.xlu0 %3634
      %3636 = vrot.lane.b32.xlu0 %v3546, 8
      %v3637 = vpop.permute.xlu0 %3636
      %3638 = vrot.lane.b32.xlu0 %v3547, 8
      %v3639 = vpop.permute.xlu0 %3638
      %3640 = vrot.lane.b32.xlu0 %v3548, 8
      %v3641 = vpop.permute.xlu0 %3640
      %3642 = vrot.lane.b32.xlu0 %v3549, 8
      %v3643 = vpop.permute.xlu0 %3642
      %3644 = vrot.lane.b32.xlu0 %v3550, 8
      %v3645 = vpop.permute.xlu0 %3644
      %3646 = vrot.lane.b32.xlu0 %v3551, 8
      %v3647 = vpop.permute.xlu0 %3646
      %3680 = vst.msk [vmem:[#allocation6] sm:$0xff] %vm1943, %v3585
      %3681 = vst.msk [vmem:[#allocation6 + $0x8] sm:$0xff] %vm1943, %v3587
      %3682 = vst.msk [vmem:[#allocation6 + $0x10] sm:$0xff] %vm1943, %v3589
      %3683 = vst.msk [vmem:[#allocation6 + $0x18] sm:$0xff] %vm1943, %v3591
      %3684 = vst.msk [vmem:[#allocation6 + $0x20] sm:$0xff] %vm1943, %v3593
      %3685 = vst.msk [vmem:[#allocation6 + $0x28] sm:$0xff] %vm1943, %v3595
      %3686 = vst.msk [vmem:[#allocation6 + $0x30] sm:$0xff] %vm1943, %v3597
      %3687 = vst.msk [vmem:[#allocation6 + $0x38] sm:$0xff] %vm1943, %v3599
      %3688 = vst.msk [vmem:[#allocation6 + $0x40] sm:$0xff] %vm1943, %v3601
      %3689 = vst.msk [vmem:[#allocation6 + $0x48] sm:$0xff] %vm1943, %v3603
      %3690 = vst.msk [vmem:[#allocation6 + $0x50] sm:$0xff] %vm1943, %v3605
      %3691 = vst.msk [vmem:[#allocation6 + $0x58] sm:$0xff] %vm1943, %v3607
      %3692 = vst.msk [vmem:[#allocation6 + $0x60] sm:$0xff] %vm1943, %v3609
      %3693 = vst.msk [vmem:[#allocation6 + $0x68] sm:$0xff] %vm1943, %v3611
      %3694 = vst.msk [vmem:[#allocation6 + $0x70] sm:$0xff] %vm1943, %v3613
      %3695 = vst.msk [vmem:[#allocation6 + $0x78] sm:$0xff] %vm1943, %v3615
      %3696 = vst.msk [vmem:[#allocation6 + $0x80] sm:$0xff] %vm1943, %v3617
      %3697 = vst.msk [vmem:[#allocation6 + $0x88] sm:$0xff] %vm1943, %v3619
      %3698 = vst.msk [vmem:[#allocation6 + $0x90] sm:$0xff] %vm1943, %v3621
      %3699 = vst.msk [vmem:[#allocation6 + $0x98] sm:$0xff] %vm1943, %v3623
      %3700 = vst.msk [vmem:[#allocation6 + $0xa0] sm:$0xff] %vm1943, %v3625
      %3701 = vst.msk [vmem:[#allocation6 + $0xa8] sm:$0xff] %vm1943, %v3627
      %3702 = vst.msk [vmem:[#allocation6 + $0xb0] sm:$0xff] %vm1943, %v3629
      %3703 = vst.msk [vmem:[#allocation6 + $0xb8] sm:$0xff] %vm1943, %v3631
      %3704 = vst.msk [vmem:[#allocation6 + $0xc0] sm:$0xff] %vm1943, %v3633
      %3705 = vst.msk [vmem:[#allocation6 + $0xc8] sm:$0xff] %vm1943, %v3635
      %3706 = vst.msk [vmem:[#allocation6 + $0xd0] sm:$0xff] %vm1943, %v3637
      %3707 = vst.msk [vmem:[#allocation6 + $0xd8] sm:$0xff] %vm1943, %v3639
      %3708 = vst.msk [vmem:[#allocation6 + $0xe0] sm:$0xff] %vm1943, %v3641
      %3709 = vst.msk [vmem:[#allocation6 + $0xe8] sm:$0xff] %vm1943, %v3643
      %3710 = vst.msk [vmem:[#allocation6 + $0xf0] sm:$0xff] %vm1943, %v3645
      %3711 = vst.msk [vmem:[#allocation6 + $0xf8] sm:$0xff] %vm1943, %v3647
      %v3712 = vld [vmem:[#allocation4 + $0x3] sm:$0xff]
      %v3713 = vld [vmem:[#allocation4 + $0xb] sm:$0xff]
      %v3714 = vld [vmem:[#allocation4 + $0x1b] sm:$0xff]
      %v3715 = vld [vmem:[#allocation4 + $0x23] sm:$0xff]
      %v3716 = vld [vmem:[#allocation4 + $0x33] sm:$0xff]
      %v3717 = vld [vmem:[#allocation4 + $0x3b] sm:$0xff]
      %v3718 = vld [vmem:[#allocation4 + $0x4b] sm:$0xff]
      %v3719 = vld [vmem:[#allocation4 + $0x53] sm:$0xff]
      %v3720 = vld [vmem:[#allocation4 + $0x63] sm:$0xff]
      %v3721 = vld [vmem:[#allocation4 + $0x6b] sm:$0xff]
      %v3722 = vld [vmem:[#allocation4 + $0x7b] sm:$0xff]
      %v3723 = vld [vmem:[#allocation4 + $0x83] sm:$0xff]
      %v3724 = vld [vmem:[#allocation4 + $0x93] sm:$0xff]
      %v3725 = vld [vmem:[#allocation4 + $0x9b] sm:$0xff]
      %v3726 = vld [vmem:[#allocation4 + $0xab] sm:$0xff]
      %v3727 = vld [vmem:[#allocation4 + $0xb3] sm:$0xff]
      %v3728 = vld [vmem:[#allocation4 + $0xc3] sm:$0xff]
      %v3729 = vld [vmem:[#allocation4 + $0xcb] sm:$0xff]
      %v3730 = vld [vmem:[#allocation4 + $0xdb] sm:$0xff]
      %v3731 = vld [vmem:[#allocation4 + $0xe3] sm:$0xff]
      %v3732 = vld [vmem:[#allocation4 + $0xf3] sm:$0xff]
      %v3733 = vld [vmem:[#allocation4 + $0xfb] sm:$0xff]
      %v3734 = vld [vmem:[#allocation4 + $0x10b] sm:$0xff]
      %v3735 = vld [vmem:[#allocation4 + $0x113] sm:$0xff]
      %v3736 = vld [vmem:[#allocation4 + $0x123] sm:$0xff]
      %v3737 = vld [vmem:[#allocation4 + $0x12b] sm:$0xff]
      %v3738 = vld [vmem:[#allocation4 + $0x13b] sm:$0xff]
      %v3739 = vld [vmem:[#allocation4 + $0x143] sm:$0xff]
      %v3740 = vld [vmem:[#allocation4 + $0x153] sm:$0xff]
      %v3741 = vld [vmem:[#allocation4 + $0x15b] sm:$0xff]
      %v3742 = vld [vmem:[#allocation4 + $0x16b] sm:$0xff]
      %v3743 = vld [vmem:[#allocation4 + $0x173] sm:$0xff]
      %3776 = vrot.lane.b32.xlu0 %v3712, 12
      %v3777 = vpop.permute.xlu0 %3776
      %3778 = vrot.lane.b32.xlu0 %v3713, 12
      %v3779 = vpop.permute.xlu0 %3778
      %3780 = vrot.lane.b32.xlu0 %v3714, 12
      %v3781 = vpop.permute.xlu0 %3780
      %3782 = vrot.lane.b32.xlu0 %v3715, 12
      %v3783 = vpop.permute.xlu0 %3782
      %3784 = vrot.lane.b32.xlu0 %v3716, 12
      %v3785 = vpop.permute.xlu0 %3784
      %3786 = vrot.lane.b32.xlu0 %v3717, 12
      %v3787 = vpop.permute.xlu0 %3786
      %3788 = vrot.lane.b32.xlu0 %v3718, 12
      %v3789 = vpop.permute.xlu0 %3788
      %3790 = vrot.lane.b32.xlu0 %v3719, 12
      %v3791 = vpop.permute.xlu0 %3790
      %3792 = vrot.lane.b32.xlu0 %v3720, 12
      %v3793 = vpop.permute.xlu0 %3792
      %3794 = vrot.lane.b32.xlu0 %v3721, 12
      %v3795 = vpop.permute.xlu0 %3794
      %3796 = vrot.lane.b32.xlu0 %v3722, 12
      %v3797 = vpop.permute.xlu0 %3796
      %3798 = vrot.lane.b32.xlu0 %v3723, 12
      %v3799 = vpop.permute.xlu0 %3798
      %3800 = vrot.lane.b32.xlu0 %v3724, 12
      %v3801 = vpop.permute.xlu0 %3800
      %3802 = vrot.lane.b32.xlu0 %v3725, 12
      %v3803 = vpop.permute.xlu0 %3802
      %3804 = vrot.lane.b32.xlu0 %v3726, 12
      %v3805 = vpop.permute.xlu0 %3804
      %3806 = vrot.lane.b32.xlu0 %v3727, 12
      %v3807 = vpop.permute.xlu0 %3806
      %3808 = vrot.lane.b32.xlu0 %v3728, 12
      %v3809 = vpop.permute.xlu0 %3808
      %3810 = vrot.lane.b32.xlu0 %v3729, 12
      %v3811 = vpop.permute.xlu0 %3810
      %3812 = vrot.lane.b32.xlu0 %v3730, 12
      %v3813 = vpop.permute.xlu0 %3812
      %3814 = vrot.lane.b32.xlu0 %v3731, 12
      %v3815 = vpop.permute.xlu0 %3814
      %3816 = vrot.lane.b32.xlu0 %v3732, 12
      %v3817 = vpop.permute.xlu0 %3816
      %3818 = vrot.lane.b32.xlu0 %v3733, 12
      %v3819 = vpop.permute.xlu0 %3818
      %3820 = vrot.lane.b32.xlu0 %v3734, 12
      %v3821 = vpop.permute.xlu0 %3820
      %3822 = vrot.lane.b32.xlu0 %v3735, 12
      %v3823 = vpop.permute.xlu0 %3822
      %3824 = vrot.lane.b32.xlu0 %v3736, 12
      %v3825 = vpop.permute.xlu0 %3824
      %3826 = vrot.lane.b32.xlu0 %v3737, 12
      %v3827 = vpop.permute.xlu0 %3826
      %3828 = vrot.lane.b32.xlu0 %v3738, 12
      %v3829 = vpop.permute.xlu0 %3828
      %3830 = vrot.lane.b32.xlu0 %v3739, 12
      %v3831 = vpop.permute.xlu0 %3830
      %3832 = vrot.lane.b32.xlu0 %v3740, 12
      %v3833 = vpop.permute.xlu0 %3832
      %3834 = vrot.lane.b32.xlu0 %v3741, 12
      %v3835 = vpop.permute.xlu0 %3834
      %3836 = vrot.lane.b32.xlu0 %v3742, 12
      %v3837 = vpop.permute.xlu0 %3836
      %3838 = vrot.lane.b32.xlu0 %v3743, 12
      %v3839 = vpop.permute.xlu0 %3838
      %3872 = vst.msk [vmem:[#allocation6] sm:$0xff] %vm2136, %v3777
      %3873 = vst.msk [vmem:[#allocation6 + $0x8] sm:$0xff] %vm2136, %v3779
      %3874 = vst.msk [vmem:[#allocation6 + $0x10] sm:$0xff] %vm2136, %v3781
      %3875 = vst.msk [vmem:[#allocation6 + $0x18] sm:$0xff] %vm2136, %v3783
      %3876 = vst.msk [vmem:[#allocation6 + $0x20] sm:$0xff] %vm2136, %v3785
      %3877 = vst.msk [vmem:[#allocation6 + $0x28] sm:$0xff] %vm2136, %v3787
      %3878 = vst.msk [vmem:[#allocation6 + $0x30] sm:$0xff] %vm2136, %v3789
      %3879 = vst.msk [vmem:[#allocation6 + $0x38] sm:$0xff] %vm2136, %v3791
      %3880 = vst.msk [vmem:[#allocation6 + $0x40] sm:$0xff] %vm2136, %v3793
      %3881 = vst.msk [vmem:[#allocation6 + $0x48] sm:$0xff] %vm2136, %v3795
      %3882 = vst.msk [vmem:[#allocation6 + $0x50] sm:$0xff] %vm2136, %v3797
      %3883 = vst.msk [vmem:[#allocation6 + $0x58] sm:$0xff] %vm2136, %v3799
      %3884 = vst.msk [vmem:[#allocation6 + $0x60] sm:$0xff] %vm2136, %v3801
      %3885 = vst.msk [vmem:[#allocation6 + $0x68] sm:$0xff] %vm2136, %v3803
      %3886 = vst.msk [vmem:[#allocation6 + $0x70] sm:$0xff] %vm2136, %v3805
      %3887 = vst.msk [vmem:[#allocation6 + $0x78] sm:$0xff] %vm2136, %v3807
      %3888 = vst.msk [vmem:[#allocation6 + $0x80] sm:$0xff] %vm2136, %v3809
      %3889 = vst.msk [vmem:[#allocation6 + $0x88] sm:$0xff] %vm2136, %v3811
      %3890 = vst.msk [vmem:[#allocation6 + $0x90] sm:$0xff] %vm2136, %v3813
      %3891 = vst.msk [vmem:[#allocation6 + $0x98] sm:$0xff] %vm2136, %v3815
      %3892 = vst.msk [vmem:[#allocation6 + $0xa0] sm:$0xff] %vm2136, %v3817
      %3893 = vst.msk [vmem:[#allocation6 + $0xa8] sm:$0xff] %vm2136, %v3819
      %3894 = vst.msk [vmem:[#allocation6 + $0xb0] sm:$0xff] %vm2136, %v3821
      %3895 = vst.msk [vmem:[#allocation6 + $0xb8] sm:$0xff] %vm2136, %v3823
      %3896 = vst.msk [vmem:[#allocation6 + $0xc0] sm:$0xff] %vm2136, %v3825
      %3897 = vst.msk [vmem:[#allocation6 + $0xc8] sm:$0xff] %vm2136, %v3827
      %3898 = vst.msk [vmem:[#allocation6 + $0xd0] sm:$0xff] %vm2136, %v3829
      %3899 = vst.msk [vmem:[#allocation6 + $0xd8] sm:$0xff] %vm2136, %v3831
      %3900 = vst.msk [vmem:[#allocation6 + $0xe0] sm:$0xff] %vm2136, %v3833
      %3901 = vst.msk [vmem:[#allocation6 + $0xe8] sm:$0xff] %vm2136, %v3835
      %3902 = vst.msk [vmem:[#allocation6 + $0xf0] sm:$0xff] %vm2136, %v3837
      %3903 = vst.msk [vmem:[#allocation6 + $0xf8] sm:$0xff] %vm2136, %v3839
      %v3904 = vld [vmem:[#allocation4 + $0x4] sm:$0xff]
      %v3905 = vld [vmem:[#allocation4 + $0xc] sm:$0xff]
      %v3906 = vld [vmem:[#allocation4 + $0x1c] sm:$0xff]
      %v3907 = vld [vmem:[#allocation4 + $0x24] sm:$0xff]
      %v3908 = vld [vmem:[#allocation4 + $0x34] sm:$0xff]
      %v3909 = vld [vmem:[#allocation4 + $0x3c] sm:$0xff]
      %v3910 = vld [vmem:[#allocation4 + $0x4c] sm:$0xff]
      %v3911 = vld [vmem:[#allocation4 + $0x54] sm:$0xff]
      %v3912 = vld [vmem:[#allocation4 + $0x64] sm:$0xff]
      %v3913 = vld [vmem:[#allocation4 + $0x6c] sm:$0xff]
      %v3914 = vld [vmem:[#allocation4 + $0x7c] sm:$0xff]
      %v3915 = vld [vmem:[#allocation4 + $0x84] sm:$0xff]
      %v3916 = vld [vmem:[#allocation4 + $0x94] sm:$0xff]
      %v3917 = vld [vmem:[#allocation4 + $0x9c] sm:$0xff]
      %v3918 = vld [vmem:[#allocation4 + $0xac] sm:$0xff]
      %v3919 = vld [vmem:[#allocation4 + $0xb4] sm:$0xff]
      %v3920 = vld [vmem:[#allocation4 + $0xc4] sm:$0xff]
      %v3921 = vld [vmem:[#allocation4 + $0xcc] sm:$0xff]
      %v3922 = vld [vmem:[#allocation4 + $0xdc] sm:$0xff]
      %v3923 = vld [vmem:[#allocation4 + $0xe4] sm:$0xff]
      %v3924 = vld [vmem:[#allocation4 + $0xf4] sm:$0xff]
      %v3925 = vld [vmem:[#allocation4 + $0xfc] sm:$0xff]
      %v3926 = vld [vmem:[#allocation4 + $0x10c] sm:$0xff]
      %v3927 = vld [vmem:[#allocation4 + $0x114] sm:$0xff]
      %v3928 = vld [vmem:[#allocation4 + $0x124] sm:$0xff]
      %v3929 = vld [vmem:[#allocation4 + $0x12c] sm:$0xff]
      %v3930 = vld [vmem:[#allocation4 + $0x13c] sm:$0xff]
      %v3931 = vld [vmem:[#allocation4 + $0x144] sm:$0xff]
      %v3932 = vld [vmem:[#allocation4 + $0x154] sm:$0xff]
      %v3933 = vld [vmem:[#allocation4 + $0x15c] sm:$0xff]
      %v3934 = vld [vmem:[#allocation4 + $0x16c] sm:$0xff]
      %v3935 = vld [vmem:[#allocation4 + $0x174] sm:$0xff]
      %3968 = vrot.lane.b32.xlu0 %v3904, 16
      %v3969 = vpop.permute.xlu0 %3968
      %3970 = vrot.lane.b32.xlu0 %v3905, 16
      %v3971 = vpop.permute.xlu0 %3970
      %3972 = vrot.lane.b32.xlu0 %v3906, 16
      %v3973 = vpop.permute.xlu0 %3972
      %3974 = vrot.lane.b32.xlu0 %v3907, 16
      %v3975 = vpop.permute.xlu0 %3974
      %3976 = vrot.lane.b32.xlu0 %v3908, 16
      %v3977 = vpop.permute.xlu0 %3976
      %3978 = vrot.lane.b32.xlu0 %v3909, 16
      %v3979 = vpop.permute.xlu0 %3978
      %3980 = vrot.lane.b32.xlu0 %v3910, 16
      %v3981 = vpop.permute.xlu0 %3980
      %3982 = vrot.lane.b32.xlu0 %v3911, 16
      %v3983 = vpop.permute.xlu0 %3982
      %3984 = vrot.lane.b32.xlu0 %v3912, 16
      %v3985 = vpop.permute.xlu0 %3984
      %3986 = vrot.lane.b32.xlu0 %v3913, 16
      %v3987 = vpop.permute.xlu0 %3986
      %3988 = vrot.lane.b32.xlu0 %v3914, 16
      %v3989 = vpop.permute.xlu0 %3988
      %3990 = vrot.lane.b32.xlu0 %v3915, 16
      %v3991 = vpop.permute.xlu0 %3990
      %3992 = vrot.lane.b32.xlu0 %v3916, 16
      %v3993 = vpop.permute.xlu0 %3992
      %3994 = vrot.lane.b32.xlu0 %v3917, 16
      %v3995 = vpop.permute.xlu0 %3994
      %3996 = vrot.lane.b32.xlu0 %v3918, 16
      %v3997 = vpop.permute.xlu0 %3996
      %3998 = vrot.lane.b32.xlu0 %v3919, 16
      %v3999 = vpop.permute.xlu0 %3998
      %4000 = vrot.lane.b32.xlu0 %v3920, 16
      %v4001 = vpop.permute.xlu0 %4000
      %4002 = vrot.lane.b32.xlu0 %v3921, 16
      %v4003 = vpop.permute.xlu0 %4002
      %4004 = vrot.lane.b32.xlu0 %v3922, 16
      %v4005 = vpop.permute.xlu0 %4004
      %4006 = vrot.lane.b32.xlu0 %v3923, 16
      %v4007 = vpop.permute.xlu0 %4006
      %4008 = vrot.lane.b32.xlu0 %v3924, 16
      %v4009 = vpop.permute.xlu0 %4008
      %4010 = vrot.lane.b32.xlu0 %v3925, 16
      %v4011 = vpop.permute.xlu0 %4010
      %4012 = vrot.lane.b32.xlu0 %v3926, 16
      %v4013 = vpop.permute.xlu0 %4012
      %4014 = vrot.lane.b32.xlu0 %v3927, 16
      %v4015 = vpop.permute.xlu0 %4014
      %4016 = vrot.lane.b32.xlu0 %v3928, 16
      %v4017 = vpop.permute.xlu0 %4016
      %4018 = vrot.lane.b32.xlu0 %v3929, 16
      %v4019 = vpop.permute.xlu0 %4018
      %4020 = vrot.lane.b32.xlu0 %v3930, 16
      %v4021 = vpop.permute.xlu0 %4020
      %4022 = vrot.lane.b32.xlu0 %v3931, 16
      %v4023 = vpop.permute.xlu0 %4022
      %4024 = vrot.lane.b32.xlu0 %v3932, 16
      %v4025 = vpop.permute.xlu0 %4024
      %4026 = vrot.lane.b32.xlu0 %v3933, 16
      %v4027 = vpop.permute.xlu0 %4026
      %4028 = vrot.lane.b32.xlu0 %v3934, 16
      %v4029 = vpop.permute.xlu0 %4028
      %4030 = vrot.lane.b32.xlu0 %v3935, 16
      %v4031 = vpop.permute.xlu0 %4030
      %4064 = vst.msk [vmem:[#allocation6] sm:$0xff] %vm2329, %v3969
      %4065 = vst.msk [vmem:[#allocation6 + $0x8] sm:$0xff] %vm2329, %v3971
      %4066 = vst.msk [vmem:[#allocation6 + $0x10] sm:$0xff] %vm2329, %v3973
      %4067 = vst.msk [vmem:[#allocation6 + $0x18] sm:$0xff] %vm2329, %v3975
      %4068 = vst.msk [vmem:[#allocation6 + $0x20] sm:$0xff] %vm2329, %v3977
      %4069 = vst.msk [vmem:[#allocation6 + $0x28] sm:$0xff] %vm2329, %v3979
      %4070 = vst.msk [vmem:[#allocation6 + $0x30] sm:$0xff] %vm2329, %v3981
      %4071 = vst.msk [vmem:[#allocation6 + $0x38] sm:$0xff] %vm2329, %v3983
      %4072 = vst.msk [vmem:[#allocation6 + $0x40] sm:$0xff] %vm2329, %v3985
      %4073 = vst.msk [vmem:[#allocation6 + $0x48] sm:$0xff] %vm2329, %v3987
      %4074 = vst.msk [vmem:[#allocation6 + $0x50] sm:$0xff] %vm2329, %v3989
      %4075 = vst.msk [vmem:[#allocation6 + $0x58] sm:$0xff] %vm2329, %v3991
      %4076 = vst.msk [vmem:[#allocation6 + $0x60] sm:$0xff] %vm2329, %v3993
      %4077 = vst.msk [vmem:[#allocation6 + $0x68] sm:$0xff] %vm2329, %v3995
      %4078 = vst.msk [vmem:[#allocation6 + $0x70] sm:$0xff] %vm2329, %v3997
      %4079 = vst.msk [vmem:[#allocation6 + $0x78] sm:$0xff] %vm2329, %v3999
      %4080 = vst.msk [vmem:[#allocation6 + $0x80] sm:$0xff] %vm2329, %v4001
      %4081 = vst.msk [vmem:[#allocation6 + $0x88] sm:$0xff] %vm2329, %v4003
      %4082 = vst.msk [vmem:[#allocation6 + $0x90] sm:$0xff] %vm2329, %v4005
      %4083 = vst.msk [vmem:[#allocation6 + $0x98] sm:$0xff] %vm2329, %v4007
      %4084 = vst.msk [vmem:[#allocation6 + $0xa0] sm:$0xff] %vm2329, %v4009
      %4085 = vst.msk [vmem:[#allocation6 + $0xa8] sm:$0xff] %vm2329, %v4011
      %4086 = vst.msk [vmem:[#allocation6 + $0xb0] sm:$0xff] %vm2329, %v4013
      %4087 = vst.msk [vmem:[#allocation6 + $0xb8] sm:$0xff] %vm2329, %v4015
      %4088 = vst.msk [vmem:[#allocation6 + $0xc0] sm:$0xff] %vm2329, %v4017
      %4089 = vst.msk [vmem:[#allocation6 + $0xc8] sm:$0xff] %vm2329, %v4019
      %4090 = vst.msk [vmem:[#allocation6 + $0xd0] sm:$0xff] %vm2329, %v4021
      %4091 = vst.msk [vmem:[#allocation6 + $0xd8] sm:$0xff] %vm2329, %v4023
      %4092 = vst.msk [vmem:[#allocation6 + $0xe0] sm:$0xff] %vm2329, %v4025
      %4093 = vst.msk [vmem:[#allocation6 + $0xe8] sm:$0xff] %vm2329, %v4027
      %4094 = vst.msk [vmem:[#allocation6 + $0xf0] sm:$0xff] %vm2329, %v4029
      %4095 = vst.msk [vmem:[#allocation6 + $0xf8] sm:$0xff] %vm2329, %v4031
      %s4096 = scalar_lea.vmem [#allocation4], 24
      %v4097 = vld [vmem:[%s4096] sm:$0xff]
      %v4098 = vld [vmem:[%s4096 + $0x8] sm:$0xff]
      %v4099 = vld [vmem:[%s4096 + $0x18] sm:$0xff]
      %v4100 = vld [vmem:[%s4096 + $0x20] sm:$0xff]
      %v4101 = vld [vmem:[%s4096 + $0x30] sm:$0xff]
      %v4102 = vld [vmem:[%s4096 + $0x38] sm:$0xff]
      %v4103 = vld [vmem:[%s4096 + $0x48] sm:$0xff]
      %v4104 = vld [vmem:[%s4096 + $0x50] sm:$0xff]
      %v4105 = vld [vmem:[%s4096 + $0x60] sm:$0xff]
      %v4106 = vld [vmem:[%s4096 + $0x68] sm:$0xff]
      %v4107 = vld [vmem:[%s4096 + $0x78] sm:$0xff]
      %v4108 = vld [vmem:[%s4096 + $0x80] sm:$0xff]
      %v4109 = vld [vmem:[%s4096 + $0x90] sm:$0xff]
      %v4110 = vld [vmem:[%s4096 + $0x98] sm:$0xff]
      %v4111 = vld [vmem:[%s4096 + $0xa8] sm:$0xff]
      %v4112 = vld [vmem:[%s4096 + $0xb0] sm:$0xff]
      %v4113 = vld [vmem:[%s4096 + $0xc0] sm:$0xff]
      %v4114 = vld [vmem:[%s4096 + $0xc8] sm:$0xff]
      %v4115 = vld [vmem:[%s4096 + $0xd8] sm:$0xff]
      %v4116 = vld [vmem:[%s4096 + $0xe0] sm:$0xff]
      %v4117 = vld [vmem:[%s4096 + $0xf0] sm:$0xff]
      %v4118 = vld [vmem:[%s4096 + $0xf8] sm:$0xff]
      %v4119 = vld [vmem:[%s4096 + $0x108] sm:$0xff]
      %v4120 = vld [vmem:[%s4096 + $0x110] sm:$0xff]
      %v4121 = vld [vmem:[%s4096 + $0x120] sm:$0xff]
      %v4122 = vld [vmem:[%s4096 + $0x128] sm:$0xff]
      %v4123 = vld [vmem:[%s4096 + $0x138] sm:$0xff]
      %v4124 = vld [vmem:[%s4096 + $0x140] sm:$0xff]
      %v4125 = vld [vmem:[%s4096 + $0x150] sm:$0xff]
      %v4126 = vld [vmem:[%s4096 + $0x158] sm:$0xff]
      %v4127 = vld [vmem:[%s4096 + $0x168] sm:$0xff]
      %v4128 = vld [vmem:[%s4096 + $0x170] sm:$0xff]
      %4161 = vrot.lane.b32.xlu0 %v4097, 20
      %v4162 = vpop.permute.xlu0 %4161
      %4163 = vrot.lane.b32.xlu0 %v4098, 20
      %v4164 = vpop.permute.xlu0 %4163
      %4165 = vrot.lane.b32.xlu0 %v4099, 20
      %v4166 = vpop.permute.xlu0 %4165
      %4167 = vrot.lane.b32.xlu0 %v4100, 20
      %v4168 = vpop.permute.xlu0 %4167
      %4169 = vrot.lane.b32.xlu0 %v4101, 20
      %v4170 = vpop.permute.xlu0 %4169
      %4171 = vrot.lane.b32.xlu0 %v4102, 20
      %v4172 = vpop.permute.xlu0 %4171
      %4173 = vrot.lane.b32.xlu0 %v4103, 20
      %v4174 = vpop.permute.xlu0 %4173
      %4175 = vrot.lane.b32.xlu0 %v4104, 20
      %v4176 = vpop.permute.xlu0 %4175
      %4177 = vrot.lane.b32.xlu0 %v4105, 20
      %v4178 = vpop.permute.xlu0 %4177
      %4179 = vrot.lane.b32.xlu0 %v4106, 20
      %v4180 = vpop.permute.xlu0 %4179
      %4181 = vrot.lane.b32.xlu0 %v4107, 20
      %v4182 = vpop.permute.xlu0 %4181
      %4183 = vrot.lane.b32.xlu0 %v4108, 20
      %v4184 = vpop.permute.xlu0 %4183
      %4185 = vrot.lane.b32.xlu0 %v4109, 20
      %v4186 = vpop.permute.xlu0 %4185
      %4187 = vrot.lane.b32.xlu0 %v4110, 20
      %v4188 = vpop.permute.xlu0 %4187
      %4189 = vrot.lane.b32.xlu0 %v4111, 20
      %v4190 = vpop.permute.xlu0 %4189
      %4191 = vrot.lane.b32.xlu0 %v4112, 20
      %v4192 = vpop.permute.xlu0 %4191
      %4193 = vrot.lane.b32.xlu0 %v4113, 20
      %v4194 = vpop.permute.xlu0 %4193
      %4195 = vrot.lane.b32.xlu0 %v4114, 20
      %v4196 = vpop.permute.xlu0 %4195
      %4197 = vrot.lane.b32.xlu0 %v4115, 20
      %v4198 = vpop.permute.xlu0 %4197
      %4199 = vrot.lane.b32.xlu0 %v4116, 20
      %v4200 = vpop.permute.xlu0 %4199
      %4201 = vrot.lane.b32.xlu0 %v4117, 20
      %v4202 = vpop.permute.xlu0 %4201
      %4203 = vrot.lane.b32.xlu0 %v4118, 20
      %v4204 = vpop.permute.xlu0 %4203
      %4205 = vrot.lane.b32.xlu0 %v4119, 20
      %v4206 = vpop.permute.xlu0 %4205
      %4207 = vrot.lane.b32.xlu0 %v4120, 20
      %v4208 = vpop.permute.xlu0 %4207
      %4209 = vrot.lane.b32.xlu0 %v4121, 20
      %v4210 = vpop.permute.xlu0 %4209
      %4211 = vrot.lane.b32.xlu0 %v4122, 20
      %v4212 = vpop.permute.xlu0 %4211
      %4213 = vrot.lane.b32.xlu0 %v4123, 20
      %v4214 = vpop.permute.xlu0 %4213
      %4215 = vrot.lane.b32.xlu0 %v4124, 20
      %v4216 = vpop.permute.xlu0 %4215
      %4217 = vrot.lane.b32.xlu0 %v4125, 20
      %v4218 = vpop.permute.xlu0 %4217
      %4219 = vrot.lane.b32.xlu0 %v4126, 20
      %v4220 = vpop.permute.xlu0 %4219
      %4221 = vrot.lane.b32.xlu0 %v4127, 20
      %v4222 = vpop.permute.xlu0 %4221
      %4223 = vrot.lane.b32.xlu0 %v4128, 20
      %v4224 = vpop.permute.xlu0 %4223
      %4257 = vst.msk [vmem:[#allocation6] sm:$0xff] %vm2522, %v4162
      %4258 = vst.msk [vmem:[#allocation6 + $0x8] sm:$0xff] %vm2522, %v4164
      %4259 = vst.msk [vmem:[#allocation6 + $0x10] sm:$0xff] %vm2522, %v4166
      %4260 = vst.msk [vmem:[#allocation6 + $0x18] sm:$0xff] %vm2522, %v4168
      %4261 = vst.msk [vmem:[#allocation6 + $0x20] sm:$0xff] %vm2522, %v4170
      %4262 = vst.msk [vmem:[#allocation6 + $0x28] sm:$0xff] %vm2522, %v4172
      %4263 = vst.msk [vmem:[#allocation6 + $0x30] sm:$0xff] %vm2522, %v4174
      %4264 = vst.msk [vmem:[#allocation6 + $0x38] sm:$0xff] %vm2522, %v4176
      %4265 = vst.msk [vmem:[#allocation6 + $0x40] sm:$0xff] %vm2522, %v4178
      %4266 = vst.msk [vmem:[#allocation6 + $0x48] sm:$0xff] %vm2522, %v4180
      %4267 = vst.msk [vmem:[#allocation6 + $0x50] sm:$0xff] %vm2522, %v4182
      %4268 = vst.msk [vmem:[#allocation6 + $0x58] sm:$0xff] %vm2522, %v4184
      %4269 = vst.msk [vmem:[#allocation6 + $0x60] sm:$0xff] %vm2522, %v4186
      %4270 = vst.msk [vmem:[#allocation6 + $0x68] sm:$0xff] %vm2522, %v4188
      %4271 = vst.msk [vmem:[#allocation6 + $0x70] sm:$0xff] %vm2522, %v4190
      %4272 = vst.msk [vmem:[#allocation6 + $0x78] sm:$0xff] %vm2522, %v4192
      %4273 = vst.msk [vmem:[#allocation6 + $0x80] sm:$0xff] %vm2522, %v4194
      %4274 = vst.msk [vmem:[#allocation6 + $0x88] sm:$0xff] %vm2522, %v4196
      %4275 = vst.msk [vmem:[#allocation6 + $0x90] sm:$0xff] %vm2522, %v4198
      %4276 = vst.msk [vmem:[#allocation6 + $0x98] sm:$0xff] %vm2522, %v4200
      %4277 = vst.msk [vmem:[#allocation6 + $0xa0] sm:$0xff] %vm2522, %v4202
      %4278 = vst.msk [vmem:[#allocation6 + $0xa8] sm:$0xff] %vm2522, %v4204
      %4279 = vst.msk [vmem:[#allocation6 + $0xb0] sm:$0xff] %vm2522, %v4206
      %4280 = vst.msk [vmem:[#allocation6 + $0xb8] sm:$0xff] %vm2522, %v4208
      %4281 = vst.msk [vmem:[#allocation6 + $0xc0] sm:$0xff] %vm2522, %v4210
      %4282 = vst.msk [vmem:[#allocation6 + $0xc8] sm:$0xff] %vm2522, %v4212
      %4283 = vst.msk [vmem:[#allocation6 + $0xd0] sm:$0xff] %vm2522, %v4214
      %4284 = vst.msk [vmem:[#allocation6 + $0xd8] sm:$0xff] %vm2522, %v4216
      %4285 = vst.msk [vmem:[#allocation6 + $0xe0] sm:$0xff] %vm2522, %v4218
      %4286 = vst.msk [vmem:[#allocation6 + $0xe8] sm:$0xff] %vm2522, %v4220
      %4287 = vst.msk [vmem:[#allocation6 + $0xf0] sm:$0xff] %vm2522, %v4222
      %4288 = vst.msk [vmem:[#allocation6 + $0xf8] sm:$0xff] %vm2522, %v4224
      %v4289 = vld [vmem:[%s4096 + $0x1] sm:$0xff]
      %v4290 = vld [vmem:[%s4096 + $0x9] sm:$0xff]
      %v4291 = vld [vmem:[%s4096 + $0x19] sm:$0xff]
      %v4292 = vld [vmem:[%s4096 + $0x21] sm:$0xff]
      %v4293 = vld [vmem:[%s4096 + $0x31] sm:$0xff]
      %v4294 = vld [vmem:[%s4096 + $0x39] sm:$0xff]
      %v4295 = vld [vmem:[%s4096 + $0x49] sm:$0xff]
      %v4296 = vld [vmem:[%s4096 + $0x51] sm:$0xff]
      %v4297 = vld [vmem:[%s4096 + $0x61] sm:$0xff]
      %v4298 = vld [vmem:[%s4096 + $0x69] sm:$0xff]
      %v4299 = vld [vmem:[%s4096 + $0x79] sm:$0xff]
      %v4300 = vld [vmem:[%s4096 + $0x81] sm:$0xff]
      %v4301 = vld [vmem:[%s4096 + $0x91] sm:$0xff]
      %v4302 = vld [vmem:[%s4096 + $0x99] sm:$0xff]
      %v4303 = vld [vmem:[%s4096 + $0xa9] sm:$0xff]
      %v4304 = vld [vmem:[%s4096 + $0xb1] sm:$0xff]
      %v4305 = vld [vmem:[%s4096 + $0xc1] sm:$0xff]
      %v4306 = vld [vmem:[%s4096 + $0xc9] sm:$0xff]
      %v4307 = vld [vmem:[%s4096 + $0xd9] sm:$0xff]
      %v4308 = vld [vmem:[%s4096 + $0xe1] sm:$0xff]
      %v4309 = vld [vmem:[%s4096 + $0xf1] sm:$0xff]
      %v4310 = vld [vmem:[%s4096 + $0xf9] sm:$0xff]
      %v4311 = vld [vmem:[%s4096 + $0x109] sm:$0xff]
      %v4312 = vld [vmem:[%s4096 + $0x111] sm:$0xff]
      %v4313 = vld [vmem:[%s4096 + $0x121] sm:$0xff]
      %v4314 = vld [vmem:[%s4096 + $0x129] sm:$0xff]
      %v4315 = vld [vmem:[%s4096 + $0x139] sm:$0xff]
      %v4316 = vld [vmem:[%s4096 + $0x141] sm:$0xff]
      %v4317 = vld [vmem:[%s4096 + $0x151] sm:$0xff]
      %v4318 = vld [vmem:[%s4096 + $0x159] sm:$0xff]
      %v4319 = vld [vmem:[%s4096 + $0x169] sm:$0xff]
      %v4320 = vld [vmem:[%s4096 + $0x171] sm:$0xff]
      %4353 = vrot.lane.b32.xlu0 %v4289, 24
      %v4354 = vpop.permute.xlu0 %4353
      %4355 = vrot.lane.b32.xlu0 %v4290, 24
      %v4356 = vpop.permute.xlu0 %4355
      %4357 = vrot.lane.b32.xlu0 %v4291, 24
      %v4358 = vpop.permute.xlu0 %4357
      %4359 = vrot.lane.b32.xlu0 %v4292, 24
      %v4360 = vpop.permute.xlu0 %4359
      %4361 = vrot.lane.b32.xlu0 %v4293, 24
      %v4362 = vpop.permute.xlu0 %4361
      %4363 = vrot.lane.b32.xlu0 %v4294, 24
      %v4364 = vpop.permute.xlu0 %4363
      %4365 = vrot.lane.b32.xlu0 %v4295, 24
      %v4366 = vpop.permute.xlu0 %4365
      %4367 = vrot.lane.b32.xlu0 %v4296, 24
      %v4368 = vpop.permute.xlu0 %4367
      %4369 = vrot.lane.b32.xlu0 %v4297, 24
      %v4370 = vpop.permute.xlu0 %4369
      %4371 = vrot.lane.b32.xlu0 %v4298, 24
      %v4372 = vpop.permute.xlu0 %4371
      %4373 = vrot.lane.b32.xlu0 %v4299, 24
      %v4374 = vpop.permute.xlu0 %4373
      %4375 = vrot.lane.b32.xlu0 %v4300, 24
      %v4376 = vpop.permute.xlu0 %4375
      %4377 = vrot.lane.b32.xlu0 %v4301, 24
      %v4378 = vpop.permute.xlu0 %4377
      %4379 = vrot.lane.b32.xlu0 %v4302, 24
      %v4380 = vpop.permute.xlu0 %4379
      %4381 = vrot.lane.b32.xlu0 %v4303, 24
      %v4382 = vpop.permute.xlu0 %4381
      %4383 = vrot.lane.b32.xlu0 %v4304, 24
      %v4384 = vpop.permute.xlu0 %4383
      %4385 = vrot.lane.b32.xlu0 %v4305, 24
      %v4386 = vpop.permute.xlu0 %4385
      %4387 = vrot.lane.b32.xlu0 %v4306, 24
      %v4388 = vpop.permute.xlu0 %4387
      %4389 = vrot.lane.b32.xlu0 %v4307, 24
      %v4390 = vpop.permute.xlu0 %4389
      %4391 = vrot.lane.b32.xlu0 %v4308, 24
      %v4392 = vpop.permute.xlu0 %4391
      %4393 = vrot.lane.b32.xlu0 %v4309, 24
      %v4394 = vpop.permute.xlu0 %4393
      %4395 = vrot.lane.b32.xlu0 %v4310, 24
      %v4396 = vpop.permute.xlu0 %4395
      %4397 = vrot.lane.b32.xlu0 %v4311, 24
      %v4398 = vpop.permute.xlu0 %4397
      %4399 = vrot.lane.b32.xlu0 %v4312, 24
      %v4400 = vpop.permute.xlu0 %4399
      %4401 = vrot.lane.b32.xlu0 %v4313, 24
      %v4402 = vpop.permute.xlu0 %4401
      %4403 = vrot.lane.b32.xlu0 %v4314, 24
      %v4404 = vpop.permute.xlu0 %4403
      %4405 = vrot.lane.b32.xlu0 %v4315, 24
      %v4406 = vpop.permute.xlu0 %4405
      %4407 = vrot.lane.b32.xlu0 %v4316, 24
      %v4408 = vpop.permute.xlu0 %4407
      %4409 = vrot.lane.b32.xlu0 %v4317, 24
      %v4410 = vpop.permute.xlu0 %4409
      %4411 = vrot.lane.b32.xlu0 %v4318, 24
      %v4412 = vpop.permute.xlu0 %4411
      %4413 = vrot.lane.b32.xlu0 %v4319, 24
      %v4414 = vpop.permute.xlu0 %4413
      %4415 = vrot.lane.b32.xlu0 %v4320, 24
      %v4416 = vpop.permute.xlu0 %4415
      %4449 = vst.msk [vmem:[#allocation6] sm:$0xff] %vm2716, %v4354
      %4450 = vst.msk [vmem:[#allocation6 + $0x8] sm:$0xff] %vm2716, %v4356
      %4451 = vst.msk [vmem:[#allocation6 + $0x10] sm:$0xff] %vm2716, %v4358
      %4452 = vst.msk [vmem:[#allocation6 + $0x18] sm:$0xff] %vm2716, %v4360
      %4453 = vst.msk [vmem:[#allocation6 + $0x20] sm:$0xff] %vm2716, %v4362
      %4454 = vst.msk [vmem:[#allocation6 + $0x28] sm:$0xff] %vm2716, %v4364
      %4455 = vst.msk [vmem:[#allocation6 + $0x30] sm:$0xff] %vm2716, %v4366
      %4456 = vst.msk [vmem:[#allocation6 + $0x38] sm:$0xff] %vm2716, %v4368
      %4457 = vst.msk [vmem:[#allocation6 + $0x40] sm:$0xff] %vm2716, %v4370
      %4458 = vst.msk [vmem:[#allocation6 + $0x48] sm:$0xff] %vm2716, %v4372
      %4459 = vst.msk [vmem:[#allocation6 + $0x50] sm:$0xff] %vm2716, %v4374
      %4460 = vst.msk [vmem:[#allocation6 + $0x58] sm:$0xff] %vm2716, %v4376
      %4461 = vst.msk [vmem:[#allocation6 + $0x60] sm:$0xff] %vm2716, %v4378
      %4462 = vst.msk [vmem:[#allocation6 + $0x68] sm:$0xff] %vm2716, %v4380
      %4463 = vst.msk [vmem:[#allocation6 + $0x70] sm:$0xff] %vm2716, %v4382
      %4464 = vst.msk [vmem:[#allocation6 + $0x78] sm:$0xff] %vm2716, %v4384
      %4465 = vst.msk [vmem:[#allocation6 + $0x80] sm:$0xff] %vm2716, %v4386
      %4466 = vst.msk [vmem:[#allocation6 + $0x88] sm:$0xff] %vm2716, %v4388
      %4467 = vst.msk [vmem:[#allocation6 + $0x90] sm:$0xff] %vm2716, %v4390
      %4468 = vst.msk [vmem:[#allocation6 + $0x98] sm:$0xff] %vm2716, %v4392
      %4469 = vst.msk [vmem:[#allocation6 + $0xa0] sm:$0xff] %vm2716, %v4394
      %4470 = vst.msk [vmem:[#allocation6 + $0xa8] sm:$0xff] %vm2716, %v4396
      %4471 = vst.msk [vmem:[#allocation6 + $0xb0] sm:$0xff] %vm2716, %v4398
      %4472 = vst.msk [vmem:[#allocation6 + $0xb8] sm:$0xff] %vm2716, %v4400
      %4473 = vst.msk [vmem:[#allocation6 + $0xc0] sm:$0xff] %vm2716, %v4402
      %4474 = vst.msk [vmem:[#allocation6 + $0xc8] sm:$0xff] %vm2716, %v4404
      %4475 = vst.msk [vmem:[#allocation6 + $0xd0] sm:$0xff] %vm2716, %v4406
      %4476 = vst.msk [vmem:[#allocation6 + $0xd8] sm:$0xff] %vm2716, %v4408
      %4477 = vst.msk [vmem:[#allocation6 + $0xe0] sm:$0xff] %vm2716, %v4410
      %4478 = vst.msk [vmem:[#allocation6 + $0xe8] sm:$0xff] %vm2716, %v4412
      %4479 = vst.msk [vmem:[#allocation6 + $0xf0] sm:$0xff] %vm2716, %v4414
      %4480 = vst.msk [vmem:[#allocation6 + $0xf8] sm:$0xff] %vm2716, %v4416
      %v4481 = vld [vmem:[%s4096 + $0x2] sm:$0xff]
      %v4482 = vld [vmem:[%s4096 + $0xa] sm:$0xff]
      %v4483 = vld [vmem:[%s4096 + $0x1a] sm:$0xff]
      %v4484 = vld [vmem:[%s4096 + $0x22] sm:$0xff]
      %v4485 = vld [vmem:[%s4096 + $0x32] sm:$0xff]
      %v4486 = vld [vmem:[%s4096 + $0x3a] sm:$0xff]
      %v4487 = vld [vmem:[%s4096 + $0x4a] sm:$0xff]
      %v4488 = vld [vmem:[%s4096 + $0x52] sm:$0xff]
      %v4489 = vld [vmem:[%s4096 + $0x62] sm:$0xff]
      %v4490 = vld [vmem:[%s4096 + $0x6a] sm:$0xff]
      %v4491 = vld [vmem:[%s4096 + $0x7a] sm:$0xff]
      %v4492 = vld [vmem:[%s4096 + $0x82] sm:$0xff]
      %v4493 = vld [vmem:[%s4096 + $0x92] sm:$0xff]
      %v4494 = vld [vmem:[%s4096 + $0x9a] sm:$0xff]
      %v4495 = vld [vmem:[%s4096 + $0xaa] sm:$0xff]
      %v4496 = vld [vmem:[%s4096 + $0xb2] sm:$0xff]
      %v4497 = vld [vmem:[%s4096 + $0xc2] sm:$0xff]
      %v4498 = vld [vmem:[%s4096 + $0xca] sm:$0xff]
      %v4499 = vld [vmem:[%s4096 + $0xda] sm:$0xff]
      %v4500 = vld [vmem:[%s4096 + $0xe2] sm:$0xff]
      %v4501 = vld [vmem:[%s4096 + $0xf2] sm:$0xff]
      %v4502 = vld [vmem:[%s4096 + $0xfa] sm:$0xff]
      %v4503 = vld [vmem:[%s4096 + $0x10a] sm:$0xff]
      %v4504 = vld [vmem:[%s4096 + $0x112] sm:$0xff]
      %v4505 = vld [vmem:[%s4096 + $0x122] sm:$0xff]
      %v4506 = vld [vmem:[%s4096 + $0x12a] sm:$0xff]
      %v4507 = vld [vmem:[%s4096 + $0x13a] sm:$0xff]
      %v4508 = vld [vmem:[%s4096 + $0x142] sm:$0xff]
      %v4509 = vld [vmem:[%s4096 + $0x152] sm:$0xff]
      %v4510 = vld [vmem:[%s4096 + $0x15a] sm:$0xff]
      %v4511 = vld [vmem:[%s4096 + $0x16a] sm:$0xff]
      %v4512 = vld [vmem:[%s4096 + $0x172] sm:$0xff]
      %4545 = vrot.lane.b32.xlu0 %v4481, 28
      %v4546 = vpop.permute.xlu0 %4545
      %4547 = vrot.lane.b32.xlu0 %v4482, 28
      %v4548 = vpop.permute.xlu0 %4547
      %4549 = vrot.lane.b32.xlu0 %v4483, 28
      %v4550 = vpop.permute.xlu0 %4549
      %4551 = vrot.lane.b32.xlu0 %v4484, 28
      %v4552 = vpop.permute.xlu0 %4551
      %4553 = vrot.lane.b32.xlu0 %v4485, 28
      %v4554 = vpop.permute.xlu0 %4553
      %4555 = vrot.lane.b32.xlu0 %v4486, 28
      %v4556 = vpop.permute.xlu0 %4555
      %4557 = vrot.lane.b32.xlu0 %v4487, 28
      %v4558 = vpop.permute.xlu0 %4557
      %4559 = vrot.lane.b32.xlu0 %v4488, 28
      %v4560 = vpop.permute.xlu0 %4559
      %4561 = vrot.lane.b32.xlu0 %v4489, 28
      %v4562 = vpop.permute.xlu0 %4561
      %4563 = vrot.lane.b32.xlu0 %v4490, 28
      %v4564 = vpop.permute.xlu0 %4563
      %4565 = vrot.lane.b32.xlu0 %v4491, 28
      %v4566 = vpop.permute.xlu0 %4565
      %4567 = vrot.lane.b32.xlu0 %v4492, 28
      %v4568 = vpop.permute.xlu0 %4567
      %4569 = vrot.lane.b32.xlu0 %v4493, 28
      %v4570 = vpop.permute.xlu0 %4569
      %4571 = vrot.lane.b32.xlu0 %v4494, 28
      %v4572 = vpop.permute.xlu0 %4571
      %4573 = vrot.lane.b32.xlu0 %v4495, 28
      %v4574 = vpop.permute.xlu0 %4573
      %4575 = vrot.lane.b32.xlu0 %v4496, 28
      %v4576 = vpop.permute.xlu0 %4575
      %4577 = vrot.lane.b32.xlu0 %v4497, 28
      %v4578 = vpop.permute.xlu0 %4577
      %4579 = vrot.lane.b32.xlu0 %v4498, 28
      %v4580 = vpop.permute.xlu0 %4579
      %4581 = vrot.lane.b32.xlu0 %v4499, 28
      %v4582 = vpop.permute.xlu0 %4581
      %4583 = vrot.lane.b32.xlu0 %v4500, 28
      %v4584 = vpop.permute.xlu0 %4583
      %4585 = vrot.lane.b32.xlu0 %v4501, 28
      %v4586 = vpop.permute.xlu0 %4585
      %4587 = vrot.lane.b32.xlu0 %v4502, 28
      %v4588 = vpop.permute.xlu0 %4587
      %4589 = vrot.lane.b32.xlu0 %v4503, 28
      %v4590 = vpop.permute.xlu0 %4589
      %4591 = vrot.lane.b32.xlu0 %v4504, 28
      %v4592 = vpop.permute.xlu0 %4591
      %4593 = vrot.lane.b32.xlu0 %v4505, 28
      %v4594 = vpop.permute.xlu0 %4593
      %4595 = vrot.lane.b32.xlu0 %v4506, 28
      %v4596 = vpop.permute.xlu0 %4595
      %4597 = vrot.lane.b32.xlu0 %v4507, 28
      %v4598 = vpop.permute.xlu0 %4597
      %4599 = vrot.lane.b32.xlu0 %v4508, 28
      %v4600 = vpop.permute.xlu0 %4599
      %4601 = vrot.lane.b32.xlu0 %v4509, 28
      %v4602 = vpop.permute.xlu0 %4601
      %4603 = vrot.lane.b32.xlu0 %v4510, 28
      %v4604 = vpop.permute.xlu0 %4603
      %4605 = vrot.lane.b32.xlu0 %v4511, 28
      %v4606 = vpop.permute.xlu0 %4605
      %4607 = vrot.lane.b32.xlu0 %v4512, 28
      %v4608 = vpop.permute.xlu0 %4607
      %4641 = vst.msk [vmem:[#allocation6] sm:$0xff] %vm2909, %v4546
      %4642 = vst.msk [vmem:[#allocation6 + $0x8] sm:$0xff] %vm2909, %v4548
      %4643 = vst.msk [vmem:[#allocation6 + $0x10] sm:$0xff] %vm2909, %v4550
      %4644 = vst.msk [vmem:[#allocation6 + $0x18] sm:$0xff] %vm2909, %v4552
      %4645 = vst.msk [vmem:[#allocation6 + $0x20] sm:$0xff] %vm2909, %v4554
      %4646 = vst.msk [vmem:[#allocation6 + $0x28] sm:$0xff] %vm2909, %v4556
      %4647 = vst.msk [vmem:[#allocation6 + $0x30] sm:$0xff] %vm2909, %v4558
      %4648 = vst.msk [vmem:[#allocation6 + $0x38] sm:$0xff] %vm2909, %v4560
      %4649 = vst.msk [vmem:[#allocation6 + $0x40] sm:$0xff] %vm2909, %v4562
      %4650 = vst.msk [vmem:[#allocation6 + $0x48] sm:$0xff] %vm2909, %v4564
      %4651 = vst.msk [vmem:[#allocation6 + $0x50] sm:$0xff] %vm2909, %v4566
      %4652 = vst.msk [vmem:[#allocation6 + $0x58] sm:$0xff] %vm2909, %v4568
      %4653 = vst.msk [vmem:[#allocation6 + $0x60] sm:$0xff] %vm2909, %v4570
      %4654 = vst.msk [vmem:[#allocation6 + $0x68] sm:$0xff] %vm2909, %v4572
      %4655 = vst.msk [vmem:[#allocation6 + $0x70] sm:$0xff] %vm2909, %v4574
      %4656 = vst.msk [vmem:[#allocation6 + $0x78] sm:$0xff] %vm2909, %v4576
      %4657 = vst.msk [vmem:[#allocation6 + $0x80] sm:$0xff] %vm2909, %v4578
      %4658 = vst.msk [vmem:[#allocation6 + $0x88] sm:$0xff] %vm2909, %v4580
      %4659 = vst.msk [vmem:[#allocation6 + $0x90] sm:$0xff] %vm2909, %v4582
      %4660 = vst.msk [vmem:[#allocation6 + $0x98] sm:$0xff] %vm2909, %v4584
      %4661 = vst.msk [vmem:[#allocation6 + $0xa0] sm:$0xff] %vm2909, %v4586
      %4662 = vst.msk [vmem:[#allocation6 + $0xa8] sm:$0xff] %vm2909, %v4588
      %4663 = vst.msk [vmem:[#allocation6 + $0xb0] sm:$0xff] %vm2909, %v4590
      %4664 = vst.msk [vmem:[#allocation6 + $0xb8] sm:$0xff] %vm2909, %v4592
      %4665 = vst.msk [vmem:[#allocation6 + $0xc0] sm:$0xff] %vm2909, %v4594
      %4666 = vst.msk [vmem:[#allocation6 + $0xc8] sm:$0xff] %vm2909, %v4596
      %4667 = vst.msk [vmem:[#allocation6 + $0xd0] sm:$0xff] %vm2909, %v4598
      %4668 = vst.msk [vmem:[#allocation6 + $0xd8] sm:$0xff] %vm2909, %v4600
      %4669 = vst.msk [vmem:[#allocation6 + $0xe0] sm:$0xff] %vm2909, %v4602
      %4670 = vst.msk [vmem:[#allocation6 + $0xe8] sm:$0xff] %vm2909, %v4604
      %4671 = vst.msk [vmem:[#allocation6 + $0xf0] sm:$0xff] %vm2909, %v4606
      %4672 = vst.msk [vmem:[#allocation6 + $0xf8] sm:$0xff] %vm2909, %v4608
      %v4673 = vld [vmem:[%s4096 + $0x3] sm:$0xff]
      %v4674 = vld [vmem:[%s4096 + $0xb] sm:$0xff]
      %v4675 = vld [vmem:[%s4096 + $0x1b] sm:$0xff]
      %v4676 = vld [vmem:[%s4096 + $0x23] sm:$0xff]
      %v4677 = vld [vmem:[%s4096 + $0x33] sm:$0xff]
      %v4678 = vld [vmem:[%s4096 + $0x3b] sm:$0xff]
      %v4679 = vld [vmem:[%s4096 + $0x4b] sm:$0xff]
      %v4680 = vld [vmem:[%s4096 + $0x53] sm:$0xff]
      %v4681 = vld [vmem:[%s4096 + $0x63] sm:$0xff]
      %v4682 = vld [vmem:[%s4096 + $0x6b] sm:$0xff]
      %v4683 = vld [vmem:[%s4096 + $0x7b] sm:$0xff]
      %v4684 = vld [vmem:[%s4096 + $0x83] sm:$0xff]
      %v4685 = vld [vmem:[%s4096 + $0x93] sm:$0xff]
      %v4686 = vld [vmem:[%s4096 + $0x9b] sm:$0xff]
      %v4687 = vld [vmem:[%s4096 + $0xab] sm:$0xff]
      %v4688 = vld [vmem:[%s4096 + $0xb3] sm:$0xff]
      %v4689 = vld [vmem:[%s4096 + $0xc3] sm:$0xff]
      %v4690 = vld [vmem:[%s4096 + $0xcb] sm:$0xff]
      %v4691 = vld [vmem:[%s4096 + $0xdb] sm:$0xff]
      %v4692 = vld [vmem:[%s4096 + $0xe3] sm:$0xff]
      %v4693 = vld [vmem:[%s4096 + $0xf3] sm:$0xff]
      %v4694 = vld [vmem:[%s4096 + $0xfb] sm:$0xff]
      %v4695 = vld [vmem:[%s4096 + $0x10b] sm:$0xff]
      %v4696 = vld [vmem:[%s4096 + $0x113] sm:$0xff]
      %v4697 = vld [vmem:[%s4096 + $0x123] sm:$0xff]
      %v4698 = vld [vmem:[%s4096 + $0x12b] sm:$0xff]
      %v4699 = vld [vmem:[%s4096 + $0x13b] sm:$0xff]
      %v4700 = vld [vmem:[%s4096 + $0x143] sm:$0xff]
      %v4701 = vld [vmem:[%s4096 + $0x153] sm:$0xff]
      %v4702 = vld [vmem:[%s4096 + $0x15b] sm:$0xff]
      %v4703 = vld [vmem:[%s4096 + $0x16b] sm:$0xff]
      %v4704 = vld [vmem:[%s4096 + $0x173] sm:$0xff]
      %4737 = vrot.lane.b32.xlu0 %v4673, 32
      %v4738 = vpop.permute.xlu0 %4737
      %4739 = vrot.lane.b32.xlu0 %v4674, 32
      %v4740 = vpop.permute.xlu0 %4739
      %4741 = vrot.lane.b32.xlu0 %v4675, 32
      %v4742 = vpop.permute.xlu0 %4741
      %4743 = vrot.lane.b32.xlu0 %v4676, 32
      %v4744 = vpop.permute.xlu0 %4743
      %4745 = vrot.lane.b32.xlu0 %v4677, 32
      %v4746 = vpop.permute.xlu0 %4745
      %4747 = vrot.lane.b32.xlu0 %v4678, 32
      %v4748 = vpop.permute.xlu0 %4747
      %4749 = vrot.lane.b32.xlu0 %v4679, 32
      %v4750 = vpop.permute.xlu0 %4749
      %4751 = vrot.lane.b32.xlu0 %v4680, 32
      %v4752 = vpop.permute.xlu0 %4751
      %4753 = vrot.lane.b32.xlu0 %v4681, 32
      %v4754 = vpop.permute.xlu0 %4753
      %4755 = vrot.lane.b32.xlu0 %v4682, 32
      %v4756 = vpop.permute.xlu0 %4755
      %4757 = vrot.lane.b32.xlu0 %v4683, 32
      %v4758 = vpop.permute.xlu0 %4757
      %4759 = vrot.lane.b32.xlu0 %v4684, 32
      %v4760 = vpop.permute.xlu0 %4759
      %4761 = vrot.lane.b32.xlu0 %v4685, 32
      %v4762 = vpop.permute.xlu0 %4761
      %4763 = vrot.lane.b32.xlu0 %v4686, 32
      %v4764 = vpop.permute.xlu0 %4763
      %4765 = vrot.lane.b32.xlu0 %v4687, 32
      %v4766 = vpop.permute.xlu0 %4765
      %4767 = vrot.lane.b32.xlu0 %v4688, 32
      %v4768 = vpop.permute.xlu0 %4767
      %4769 = vrot.lane.b32.xlu0 %v4689, 32
      %v4770 = vpop.permute.xlu0 %4769
      %4771 = vrot.lane.b32.xlu0 %v4690, 32
      %v4772 = vpop.permute.xlu0 %4771
      %4773 = vrot.lane.b32.xlu0 %v4691, 32
      %v4774 = vpop.permute.xlu0 %4773
      %4775 = vrot.lane.b32.xlu0 %v4692, 32
      %v4776 = vpop.permute.xlu0 %4775
      %4777 = vrot.lane.b32.xlu0 %v4693, 32
      %v4778 = vpop.permute.xlu0 %4777
      %4779 = vrot.lane.b32.xlu0 %v4694, 32
      %v4780 = vpop.permute.xlu0 %4779
      %4781 = vrot.lane.b32.xlu0 %v4695, 32
      %v4782 = vpop.permute.xlu0 %4781
      %4783 = vrot.lane.b32.xlu0 %v4696, 32
      %v4784 = vpop.permute.xlu0 %4783
      %4785 = vrot.lane.b32.xlu0 %v4697, 32
      %v4786 = vpop.permute.xlu0 %4785
      %4787 = vrot.lane.b32.xlu0 %v4698, 32
      %v4788 = vpop.permute.xlu0 %4787
      %4789 = vrot.lane.b32.xlu0 %v4699, 32
      %v4790 = vpop.permute.xlu0 %4789
      %4791 = vrot.lane.b32.xlu0 %v4700, 32
      %v4792 = vpop.permute.xlu0 %4791
      %4793 = vrot.lane.b32.xlu0 %v4701, 32
      %v4794 = vpop.permute.xlu0 %4793
      %4795 = vrot.lane.b32.xlu0 %v4702, 32
      %v4796 = vpop.permute.xlu0 %4795
      %4797 = vrot.lane.b32.xlu0 %v4703, 32
      %v4798 = vpop.permute.xlu0 %4797
      %4799 = vrot.lane.b32.xlu0 %v4704, 32
      %v4800 = vpop.permute.xlu0 %4799
      %4833 = vst.msk [vmem:[#allocation6] sm:$0xff] %vm3102, %v4738
      %4834 = vst.msk [vmem:[#allocation6 + $0x8] sm:$0xff] %vm3102, %v4740
      %4835 = vst.msk [vmem:[#allocation6 + $0x10] sm:$0xff] %vm3102, %v4742
      %4836 = vst.msk [vmem:[#allocation6 + $0x18] sm:$0xff] %vm3102, %v4744
      %4837 = vst.msk [vmem:[#allocation6 + $0x20] sm:$0xff] %vm3102, %v4746
      %4838 = vst.msk [vmem:[#allocation6 + $0x28] sm:$0xff] %vm3102, %v4748
      %4839 = vst.msk [vmem:[#allocation6 + $0x30] sm:$0xff] %vm3102, %v4750
      %4840 = vst.msk [vmem:[#allocation6 + $0x38] sm:$0xff] %vm3102, %v4752
      %4841 = vst.msk [vmem:[#allocation6 + $0x40] sm:$0xff] %vm3102, %v4754
      %4842 = vst.msk [vmem:[#allocation6 + $0x48] sm:$0xff] %vm3102, %v4756
      %4843 = vst.msk [vmem:[#allocation6 + $0x50] sm:$0xff] %vm3102, %v4758
      %4844 = vst.msk [vmem:[#allocation6 + $0x58] sm:$0xff] %vm3102, %v4760
      %4845 = vst.msk [vmem:[#allocation6 + $0x60] sm:$0xff] %vm3102, %v4762
      %4846 = vst.msk [vmem:[#allocation6 + $0x68] sm:$0xff] %vm3102, %v4764
      %4847 = vst.msk [vmem:[#allocation6 + $0x70] sm:$0xff] %vm3102, %v4766
      %4848 = vst.msk [vmem:[#allocation6 + $0x78] sm:$0xff] %vm3102, %v4768
      %4849 = vst.msk [vmem:[#allocation6 + $0x80] sm:$0xff] %vm3102, %v4770
      %4850 = vst.msk [vmem:[#allocation6 + $0x88] sm:$0xff] %vm3102, %v4772
      %4851 = vst.msk [vmem:[#allocation6 + $0x90] sm:$0xff] %vm3102, %v4774
      %4852 = vst.msk [vmem:[#allocation6 + $0x98] sm:$0xff] %vm3102, %v4776
      %4853 = vst.msk [vmem:[#allocation6 + $0xa0] sm:$0xff] %vm3102, %v4778
      %4854 = vst.msk [vmem:[#allocation6 + $0xa8] sm:$0xff] %vm3102, %v4780
      %4855 = vst.msk [vmem:[#allocation6 + $0xb0] sm:$0xff] %vm3102, %v4782
      %4856 = vst.msk [vmem:[#allocation6 + $0xb8] sm:$0xff] %vm3102, %v4784
      %4857 = vst.msk [vmem:[#allocation6 + $0xc0] sm:$0xff] %vm3102, %v4786
      %4858 = vst.msk [vmem:[#allocation6 + $0xc8] sm:$0xff] %vm3102, %v4788
      %4859 = vst.msk [vmem:[#allocation6 + $0xd0] sm:$0xff] %vm3102, %v4790
      %4860 = vst.msk [vmem:[#allocation6 + $0xd8] sm:$0xff] %vm3102, %v4792
      %4861 = vst.msk [vmem:[#allocation6 + $0xe0] sm:$0xff] %vm3102, %v4794
      %4862 = vst.msk [vmem:[#allocation6 + $0xe8] sm:$0xff] %vm3102, %v4796
      %4863 = vst.msk [vmem:[#allocation6 + $0xf0] sm:$0xff] %vm3102, %v4798
      %4864 = vst.msk [vmem:[#allocation6 + $0xf8] sm:$0xff] %vm3102, %v4800
      %v4865 = vld [vmem:[%s4096 + $0x4] sm:$0xff]
      %v4866 = vld [vmem:[%s4096 + $0xc] sm:$0xff]
      %v4867 = vld [vmem:[%s4096 + $0x1c] sm:$0xff]
      %v4868 = vld [vmem:[%s4096 + $0x24] sm:$0xff]
      %v4869 = vld [vmem:[%s4096 + $0x34] sm:$0xff]
      %v4870 = vld [vmem:[%s4096 + $0x3c] sm:$0xff]
      %v4871 = vld [vmem:[%s4096 + $0x4c] sm:$0xff]
      %v4872 = vld [vmem:[%s4096 + $0x54] sm:$0xff]
      %v4873 = vld [vmem:[%s4096 + $0x64] sm:$0xff]
      %v4874 = vld [vmem:[%s4096 + $0x6c] sm:$0xff]
      %v4875 = vld [vmem:[%s4096 + $0x7c] sm:$0xff]
      %v4876 = vld [vmem:[%s4096 + $0x84] sm:$0xff]
      %v4877 = vld [vmem:[%s4096 + $0x94] sm:$0xff]
      %v4878 = vld [vmem:[%s4096 + $0x9c] sm:$0xff]
      %v4879 = vld [vmem:[%s4096 + $0xac] sm:$0xff]
      %v4880 = vld [vmem:[%s4096 + $0xb4] sm:$0xff]
      %v4881 = vld [vmem:[%s4096 + $0xc4] sm:$0xff]
      %v4882 = vld [vmem:[%s4096 + $0xcc] sm:$0xff]
      %v4883 = vld [vmem:[%s4096 + $0xdc] sm:$0xff]
      %v4884 = vld [vmem:[%s4096 + $0xe4] sm:$0xff]
      %v4885 = vld [vmem:[%s4096 + $0xf4] sm:$0xff]
      %v4886 = vld [vmem:[%s4096 + $0xfc] sm:$0xff]
      %v4887 = vld [vmem:[%s4096 + $0x10c] sm:$0xff]
      %v4888 = vld [vmem:[%s4096 + $0x114] sm:$0xff]
      %v4889 = vld [vmem:[%s4096 + $0x124] sm:$0xff]
      %v4890 = vld [vmem:[%s4096 + $0x12c] sm:$0xff]
      %v4891 = vld [vmem:[%s4096 + $0x13c] sm:$0xff]
      %v4892 = vld [vmem:[%s4096 + $0x144] sm:$0xff]
      %v4893 = vld [vmem:[%s4096 + $0x154] sm:$0xff]
      %v4894 = vld [vmem:[%s4096 + $0x15c] sm:$0xff]
      %v4895 = vld [vmem:[%s4096 + $0x16c] sm:$0xff]
      %v4896 = vld [vmem:[%s4096 + $0x174] sm:$0xff]
      %4929 = vrot.lane.b32.xlu0 %v4865, 36
      %v4930 = vpop.permute.xlu0 %4929
      %4931 = vrot.lane.b32.xlu0 %v4866, 36
      %v4932 = vpop.permute.xlu0 %4931
      %4933 = vrot.lane.b32.xlu0 %v4867, 36
      %v4934 = vpop.permute.xlu0 %4933
      %4935 = vrot.lane.b32.xlu0 %v4868, 36
      %v4936 = vpop.permute.xlu0 %4935
      %4937 = vrot.lane.b32.xlu0 %v4869, 36
      %v4938 = vpop.permute.xlu0 %4937
      %4939 = vrot.lane.b32.xlu0 %v4870, 36
      %v4940 = vpop.permute.xlu0 %4939
      %4941 = vrot.lane.b32.xlu0 %v4871, 36
      %v4942 = vpop.permute.xlu0 %4941
      %4943 = vrot.lane.b32.xlu0 %v4872, 36
      %v4944 = vpop.permute.xlu0 %4943
      %4945 = vrot.lane.b32.xlu0 %v4873, 36
      %v4946 = vpop.permute.xlu0 %4945
      %4947 = vrot.lane.b32.xlu0 %v4874, 36
      %v4948 = vpop.permute.xlu0 %4947
      %4949 = vrot.lane.b32.xlu0 %v4875, 36
      %v4950 = vpop.permute.xlu0 %4949
      %4951 = vrot.lane.b32.xlu0 %v4876, 36
      %v4952 = vpop.permute.xlu0 %4951
      %4953 = vrot.lane.b32.xlu0 %v4877, 36
      %v4954 = vpop.permute.xlu0 %4953
      %4955 = vrot.lane.b32.xlu0 %v4878, 36
      %v4956 = vpop.permute.xlu0 %4955
      %4957 = vrot.lane.b32.xlu0 %v4879, 36
      %v4958 = vpop.permute.xlu0 %4957
      %4959 = vrot.lane.b32.xlu0 %v4880, 36
      %v4960 = vpop.permute.xlu0 %4959
      %4961 = vrot.lane.b32.xlu0 %v4881, 36
      %v4962 = vpop.permute.xlu0 %4961
      %4963 = vrot.lane.b32.xlu0 %v4882, 36
      %v4964 = vpop.permute.xlu0 %4963
      %4965 = vrot.lane.b32.xlu0 %v4883, 36
      %v4966 = vpop.permute.xlu0 %4965
      %4967 = vrot.lane.b32.xlu0 %v4884, 36
      %v4968 = vpop.permute.xlu0 %4967
      %4969 = vrot.lane.b32.xlu0 %v4885, 36
      %v4970 = vpop.permute.xlu0 %4969
      %4971 = vrot.lane.b32.xlu0 %v4886, 36
      %v4972 = vpop.permute.xlu0 %4971
      %4973 = vrot.lane.b32.xlu0 %v4887, 36
      %v4974 = vpop.permute.xlu0 %4973
      %4975 = vrot.lane.b32.xlu0 %v4888, 36
      %v4976 = vpop.permute.xlu0 %4975
      %4977 = vrot.lane.b32.xlu0 %v4889, 36
      %v4978 = vpop.permute.xlu0 %4977
      %4979 = vrot.lane.b32.xlu0 %v4890, 36
      %v4980 = vpop.permute.xlu0 %4979
      %4981 = vrot.lane.b32.xlu0 %v4891, 36
      %v4982 = vpop.permute.xlu0 %4981
      %4983 = vrot.lane.b32.xlu0 %v4892, 36
      %v4984 = vpop.permute.xlu0 %4983
      %4985 = vrot.lane.b32.xlu0 %v4893, 36
      %v4986 = vpop.permute.xlu0 %4985
      %4987 = vrot.lane.b32.xlu0 %v4894, 36
      %v4988 = vpop.permute.xlu0 %4987
      %4989 = vrot.lane.b32.xlu0 %v4895, 36
      %v4990 = vpop.permute.xlu0 %4989
      %4991 = vrot.lane.b32.xlu0 %v4896, 36
      %v4992 = vpop.permute.xlu0 %4991
      %vm5025 = vcmask 326944
      %5026 = vst.msk [vmem:[#allocation6] sm:$0xff] %vm5025, %v4930
      %5027 = vst.msk [vmem:[#allocation6 + $0x8] sm:$0xff] %vm5025, %v4932
      %5028 = vst.msk [vmem:[#allocation6 + $0x10] sm:$0xff] %vm5025, %v4934
      %5029 = vst.msk [vmem:[#allocation6 + $0x18] sm:$0xff] %vm5025, %v4936
      %5030 = vst.msk [vmem:[#allocation6 + $0x20] sm:$0xff] %vm5025, %v4938
      %5031 = vst.msk [vmem:[#allocation6 + $0x28] sm:$0xff] %vm5025, %v4940
      %5032 = vst.msk [vmem:[#allocation6 + $0x30] sm:$0xff] %vm5025, %v4942
      %5033 = vst.msk [vmem:[#allocation6 + $0x38] sm:$0xff] %vm5025, %v4944
      %5034 = vst.msk [vmem:[#allocation6 + $0x40] sm:$0xff] %vm5025, %v4946
      %5035 = vst.msk [vmem:[#allocation6 + $0x48] sm:$0xff] %vm5025, %v4948
      %5036 = vst.msk [vmem:[#allocation6 + $0x50] sm:$0xff] %vm5025, %v4950
      %5037 = vst.msk [vmem:[#allocation6 + $0x58] sm:$0xff] %vm5025, %v4952
      %5038 = vst.msk [vmem:[#allocation6 + $0x60] sm:$0xff] %vm5025, %v4954
      %5039 = vst.msk [vmem:[#allocation6 + $0x68] sm:$0xff] %vm5025, %v4956
      %5040 = vst.msk [vmem:[#allocation6 + $0x70] sm:$0xff] %vm5025, %v4958
      %5041 = vst.msk [vmem:[#allocation6 + $0x78] sm:$0xff] %vm5025, %v4960
      %5042 = vst.msk [vmem:[#allocation6 + $0x80] sm:$0xff] %vm5025, %v4962
      %5043 = vst.msk [vmem:[#allocation6 + $0x88] sm:$0xff] %vm5025, %v4964
      %5044 = vst.msk [vmem:[#allocation6 + $0x90] sm:$0xff] %vm5025, %v4966
      %5045 = vst.msk [vmem:[#allocation6 + $0x98] sm:$0xff] %vm5025, %v4968
      %5046 = vst.msk [vmem:[#allocation6 + $0xa0] sm:$0xff] %vm5025, %v4970
      %5047 = vst.msk [vmem:[#allocation6 + $0xa8] sm:$0xff] %vm5025, %v4972
      %5048 = vst.msk [vmem:[#allocation6 + $0xb0] sm:$0xff] %vm5025, %v4974
      %5049 = vst.msk [vmem:[#allocation6 + $0xb8] sm:$0xff] %vm5025, %v4976
      %5050 = vst.msk [vmem:[#allocation6 + $0xc0] sm:$0xff] %vm5025, %v4978
      %5051 = vst.msk [vmem:[#allocation6 + $0xc8] sm:$0xff] %vm5025, %v4980
      %5052 = vst.msk [vmem:[#allocation6 + $0xd0] sm:$0xff] %vm5025, %v4982
      %5053 = vst.msk [vmem:[#allocation6 + $0xd8] sm:$0xff] %vm5025, %v4984
      %5054 = vst.msk [vmem:[#allocation6 + $0xe0] sm:$0xff] %vm5025, %v4986
      %5055 = vst.msk [vmem:[#allocation6 + $0xe8] sm:$0xff] %vm5025, %v4988
      %5056 = vst.msk [vmem:[#allocation6 + $0xf0] sm:$0xff] %vm5025, %v4990
      %5057 = vst.msk [vmem:[#allocation6 + $0xf8] sm:$0xff] %vm5025, %v4992
      %v5058 = vld [vmem:[%s3231] sm:$0xff]
      %v5059 = vld [vmem:[%s3231 + $0x8] sm:$0xff]
      %v5060 = vld [vmem:[%s3231 + $0x18] sm:$0xff]
      %v5061 = vld [vmem:[%s3231 + $0x20] sm:$0xff]
      %v5062 = vld [vmem:[%s3231 + $0x30] sm:$0xff]
      %v5063 = vld [vmem:[%s3231 + $0x38] sm:$0xff]
      %v5064 = vld [vmem:[%s3231 + $0x48] sm:$0xff]
      %v5065 = vld [vmem:[%s3231 + $0x50] sm:$0xff]
      %v5066 = vld [vmem:[%s3231 + $0x60] sm:$0xff]
      %v5067 = vld [vmem:[%s3231 + $0x68] sm:$0xff]
      %v5068 = vld [vmem:[%s3231 + $0x78] sm:$0xff]
      %v5069 = vld [vmem:[%s3231 + $0x80] sm:$0xff]
      %v5070 = vld [vmem:[%s3231 + $0x90] sm:$0xff]
      %v5071 = vld [vmem:[%s3231 + $0x98] sm:$0xff]
      %v5072 = vld [vmem:[%s3231 + $0xa8] sm:$0xff]
      %v5073 = vld [vmem:[%s3231 + $0xb0] sm:$0xff]
      %v5074 = vld [vmem:[%s3231 + $0xc0] sm:$0xff]
      %v5075 = vld [vmem:[%s3231 + $0xc8] sm:$0xff]
      %v5076 = vld [vmem:[%s3231 + $0xd8] sm:$0xff]
      %v5077 = vld [vmem:[%s3231 + $0xe0] sm:$0xff]
      %v5078 = vld [vmem:[%s3231 + $0xf0] sm:$0xff]
      %v5079 = vld [vmem:[%s3231 + $0xf8] sm:$0xff]
      %v5080 = vld [vmem:[%s3231 + $0x108] sm:$0xff]
      %v5081 = vld [vmem:[%s3231 + $0x110] sm:$0xff]
      %v5082 = vld [vmem:[%s3231 + $0x120] sm:$0xff]
      %v5083 = vld [vmem:[%s3231 + $0x128] sm:$0xff]
      %v5084 = vld [vmem:[%s3231 + $0x138] sm:$0xff]
      %v5085 = vld [vmem:[%s3231 + $0x140] sm:$0xff]
      %v5086 = vld [vmem:[%s3231 + $0x150] sm:$0xff]
      %v5087 = vld [vmem:[%s3231 + $0x158] sm:$0xff]
      %v5088 = vld [vmem:[%s3231 + $0x168] sm:$0xff]
      %v5089 = vld [vmem:[%s3231 + $0x170] sm:$0xff]
      %5122 = vrot.lane.b32.xlu0 %v5058, 40
      %v5123 = vpop.permute.xlu0 %5122
      %5124 = vrot.lane.b32.xlu0 %v5059, 40
      %v5125 = vpop.permute.xlu0 %5124
      %5126 = vrot.lane.b32.xlu0 %v5060, 40
      %v5127 = vpop.permute.xlu0 %5126
      %5128 = vrot.lane.b32.xlu0 %v5061, 40
      %v5129 = vpop.permute.xlu0 %5128
      %5130 = vrot.lane.b32.xlu0 %v5062, 40
      %v5131 = vpop.permute.xlu0 %5130
      %5132 = vrot.lane.b32.xlu0 %v5063, 40
      %v5133 = vpop.permute.xlu0 %5132
      %5134 = vrot.lane.b32.xlu0 %v5064, 40
      %v5135 = vpop.permute.xlu0 %5134
      %5136 = vrot.lane.b32.xlu0 %v5065, 40
      %v5137 = vpop.permute.xlu0 %5136
      %5138 = vrot.lane.b32.xlu0 %v5066, 40
      %v5139 = vpop.permute.xlu0 %5138
      %5140 = vrot.lane.b32.xlu0 %v5067, 40
      %v5141 = vpop.permute.xlu0 %5140
      %5142 = vrot.lane.b32.xlu0 %v5068, 40
      %v5143 = vpop.permute.xlu0 %5142
      %5144 = vrot.lane.b32.xlu0 %v5069, 40
      %v5145 = vpop.permute.xlu0 %5144
      %5146 = vrot.lane.b32.xlu0 %v5070, 40
      %v5147 = vpop.permute.xlu0 %5146
      %5148 = vrot.lane.b32.xlu0 %v5071, 40
      %v5149 = vpop.permute.xlu0 %5148
      %5150 = vrot.lane.b32.xlu0 %v5072, 40
      %v5151 = vpop.permute.xlu0 %5150
      %5152 = vrot.lane.b32.xlu0 %v5073, 40
      %v5153 = vpop.permute.xlu0 %5152
      %5154 = vrot.lane.b32.xlu0 %v5074, 40
      %v5155 = vpop.permute.xlu0 %5154
      %5156 = vrot.lane.b32.xlu0 %v5075, 40
      %v5157 = vpop.permute.xlu0 %5156
      %5158 = vrot.lane.b32.xlu0 %v5076, 40
      %v5159 = vpop.permute.xlu0 %5158
      %5160 = vrot.lane.b32.xlu0 %v5077, 40
      %v5161 = vpop.permute.xlu0 %5160
      %5162 = vrot.lane.b32.xlu0 %v5078, 40
      %v5163 = vpop.permute.xlu0 %5162
      %5164 = vrot.lane.b32.xlu0 %v5079, 40
      %v5165 = vpop.permute.xlu0 %5164
      %5166 = vrot.lane.b32.xlu0 %v5080, 40
      %v5167 = vpop.permute.xlu0 %5166
      %5168 = vrot.lane.b32.xlu0 %v5081, 40
      %v5169 = vpop.permute.xlu0 %5168
      %5170 = vrot.lane.b32.xlu0 %v5082, 40
      %v5171 = vpop.permute.xlu0 %5170
      %5172 = vrot.lane.b32.xlu0 %v5083, 40
      %v5173 = vpop.permute.xlu0 %5172
      %5174 = vrot.lane.b32.xlu0 %v5084, 40
      %v5175 = vpop.permute.xlu0 %5174
      %5176 = vrot.lane.b32.xlu0 %v5085, 40
      %v5177 = vpop.permute.xlu0 %5176
      %5178 = vrot.lane.b32.xlu0 %v5086, 40
      %v5179 = vpop.permute.xlu0 %5178
      %5180 = vrot.lane.b32.xlu0 %v5087, 40
      %v5181 = vpop.permute.xlu0 %5180
      %5182 = vrot.lane.b32.xlu0 %v5088, 40
      %v5183 = vpop.permute.xlu0 %5182
      %5184 = vrot.lane.b32.xlu0 %v5089, 40
      %v5185 = vpop.permute.xlu0 %5184
      %vm5218 = vcmask 359744
      %5219 = vst.msk [vmem:[#allocation6] sm:$0xff] %vm5218, %v5123
      %5220 = vst.msk [vmem:[#allocation6 + $0x8] sm:$0xff] %vm5218, %v5125
      %5221 = vst.msk [vmem:[#allocation6 + $0x10] sm:$0xff] %vm5218, %v5127
      %5222 = vst.msk [vmem:[#allocation6 + $0x18] sm:$0xff] %vm5218, %v5129
      %5223 = vst.msk [vmem:[#allocation6 + $0x20] sm:$0xff] %vm5218, %v5131
      %5224 = vst.msk [vmem:[#allocation6 + $0x28] sm:$0xff] %vm5218, %v5133
      %5225 = vst.msk [vmem:[#allocation6 + $0x30] sm:$0xff] %vm5218, %v5135
      %5226 = vst.msk [vmem:[#allocation6 + $0x38] sm:$0xff] %vm5218, %v5137
      %5227 = vst.msk [vmem:[#allocation6 + $0x40] sm:$0xff] %vm5218, %v5139
      %5228 = vst.msk [vmem:[#allocation6 + $0x48] sm:$0xff] %vm5218, %v5141
      %5229 = vst.msk [vmem:[#allocation6 + $0x50] sm:$0xff] %vm5218, %v5143
      %5230 = vst.msk [vmem:[#allocation6 + $0x58] sm:$0xff] %vm5218, %v5145
      %5231 = vst.msk [vmem:[#allocation6 + $0x60] sm:$0xff] %vm5218, %v5147
      %5232 = vst.msk [vmem:[#allocation6 + $0x68] sm:$0xff] %vm5218, %v5149
      %5233 = vst.msk [vmem:[#allocation6 + $0x70] sm:$0xff] %vm5218, %v5151
      %5234 = vst.msk [vmem:[#allocation6 + $0x78] sm:$0xff] %vm5218, %v5153
      %5235 = vst.msk [vmem:[#allocation6 + $0x80] sm:$0xff] %vm5218, %v5155
      %5236 = vst.msk [vmem:[#allocation6 + $0x88] sm:$0xff] %vm5218, %v5157
      %5237 = vst.msk [vmem:[#allocation6 + $0x90] sm:$0xff] %vm5218, %v5159
      %5238 = vst.msk [vmem:[#allocation6 + $0x98] sm:$0xff] %vm5218, %v5161
      %5239 = vst.msk [vmem:[#allocation6 + $0xa0] sm:$0xff] %vm5218, %v5163
      %5240 = vst.msk [vmem:[#allocation6 + $0xa8] sm:$0xff] %vm5218, %v5165
      %5241 = vst.msk [vmem:[#allocation6 + $0xb0] sm:$0xff] %vm5218, %v5167
      %5242 = vst.msk [vmem:[#allocation6 + $0xb8] sm:$0xff] %vm5218, %v5169
      %5243 = vst.msk [vmem:[#allocation6 + $0xc0] sm:$0xff] %vm5218, %v5171
      %5244 = vst.msk [vmem:[#allocation6 + $0xc8] sm:$0xff] %vm5218, %v5173
      %5245 = vst.msk [vmem:[#allocation6 + $0xd0] sm:$0xff] %vm5218, %v5175
      %5246 = vst.msk [vmem:[#allocation6 + $0xd8] sm:$0xff] %vm5218, %v5177
      %5247 = vst.msk [vmem:[#allocation6 + $0xe0] sm:$0xff] %vm5218, %v5179
      %5248 = vst.msk [vmem:[#allocation6 + $0xe8] sm:$0xff] %vm5218, %v5181
      %5249 = vst.msk [vmem:[#allocation6 + $0xf0] sm:$0xff] %vm5218, %v5183
      %5250 = vst.msk [vmem:[#allocation6 + $0xf8] sm:$0xff] %vm5218, %v5185
      %v5251 = vld [vmem:[%s3231 + $0x1] sm:$0xff]
      %v5252 = vld [vmem:[%s3231 + $0x9] sm:$0xff]
      %v5253 = vld [vmem:[%s3231 + $0x19] sm:$0xff]
      %v5254 = vld [vmem:[%s3231 + $0x21] sm:$0xff]
      %v5255 = vld [vmem:[%s3231 + $0x31] sm:$0xff]
      %v5256 = vld [vmem:[%s3231 + $0x39] sm:$0xff]
      %v5257 = vld [vmem:[%s3231 + $0x49] sm:$0xff]
      %v5258 = vld [vmem:[%s3231 + $0x51] sm:$0xff]
      %v5259 = vld [vmem:[%s3231 + $0x61] sm:$0xff]
      %v5260 = vld [vmem:[%s3231 + $0x69] sm:$0xff]
      %v5261 = vld [vmem:[%s3231 + $0x79] sm:$0xff]
      %v5262 = vld [vmem:[%s3231 + $0x81] sm:$0xff]
      %v5263 = vld [vmem:[%s3231 + $0x91] sm:$0xff]
      %v5264 = vld [vmem:[%s3231 + $0x99] sm:$0xff]
      %v5265 = vld [vmem:[%s3231 + $0xa9] sm:$0xff]
      %v5266 = vld [vmem:[%s3231 + $0xb1] sm:$0xff]
      %v5267 = vld [vmem:[%s3231 + $0xc1] sm:$0xff]
      %v5268 = vld [vmem:[%s3231 + $0xc9] sm:$0xff]
      %v5269 = vld [vmem:[%s3231 + $0xd9] sm:$0xff]
      %v5270 = vld [vmem:[%s3231 + $0xe1] sm:$0xff]
      %v5271 = vld [vmem:[%s3231 + $0xf1] sm:$0xff]
      %v5272 = vld [vmem:[%s3231 + $0xf9] sm:$0xff]
      %v5273 = vld [vmem:[%s3231 + $0x109] sm:$0xff]
      %v5274 = vld [vmem:[%s3231 + $0x111] sm:$0xff]
      %v5275 = vld [vmem:[%s3231 + $0x121] sm:$0xff]
      %v5276 = vld [vmem:[%s3231 + $0x129] sm:$0xff]
      %v5277 = vld [vmem:[%s3231 + $0x139] sm:$0xff]
      %v5278 = vld [vmem:[%s3231 + $0x141] sm:$0xff]
      %v5279 = vld [vmem:[%s3231 + $0x151] sm:$0xff]
      %v5280 = vld [vmem:[%s3231 + $0x159] sm:$0xff]
      %v5281 = vld [vmem:[%s3231 + $0x169] sm:$0xff]
      %v5282 = vld [vmem:[%s3231 + $0x171] sm:$0xff]
      %5315 = vrot.lane.b32.xlu0 %v5251, 44
      %v5316 = vpop.permute.xlu0 %5315
      %5317 = vrot.lane.b32.xlu0 %v5252, 44
      %v5318 = vpop.permute.xlu0 %5317
      %5319 = vrot.lane.b32.xlu0 %v5253, 44
      %v5320 = vpop.permute.xlu0 %5319
      %5321 = vrot.lane.b32.xlu0 %v5254, 44
      %v5322 = vpop.permute.xlu0 %5321
      %5323 = vrot.lane.b32.xlu0 %v5255, 44
      %v5324 = vpop.permute.xlu0 %5323
      %5325 = vrot.lane.b32.xlu0 %v5256, 44
      %v5326 = vpop.permute.xlu0 %5325
      %5327 = vrot.lane.b32.xlu0 %v5257, 44
      %v5328 = vpop.permute.xlu0 %5327
      %5329 = vrot.lane.b32.xlu0 %v5258, 44
      %v5330 = vpop.permute.xlu0 %5329
      %5331 = vrot.lane.b32.xlu0 %v5259, 44
      %v5332 = vpop.permute.xlu0 %5331
      %5333 = vrot.lane.b32.xlu0 %v5260, 44
      %v5334 = vpop.permute.xlu0 %5333
      %5335 = vrot.lane.b32.xlu0 %v5261, 44
      %v5336 = vpop.permute.xlu0 %5335
      %5337 = vrot.lane.b32.xlu0 %v5262, 44
      %v5338 = vpop.permute.xlu0 %5337
      %5339 = vrot.lane.b32.xlu0 %v5263, 44
      %v5340 = vpop.permute.xlu0 %5339
      %5341 = vrot.lane.b32.xlu0 %v5264, 44
      %v5342 = vpop.permute.xlu0 %5341
      %5343 = vrot.lane.b32.xlu0 %v5265, 44
      %v5344 = vpop.permute.xlu0 %5343
      %5345 = vrot.lane.b32.xlu0 %v5266, 44
      %v5346 = vpop.permute.xlu0 %5345
      %5347 = vrot.lane.b32.xlu0 %v5267, 44
      %v5348 = vpop.permute.xlu0 %5347
      %5349 = vrot.lane.b32.xlu0 %v5268, 44
      %v5350 = vpop.permute.xlu0 %5349
      %5351 = vrot.lane.b32.xlu0 %v5269, 44
      %v5352 = vpop.permute.xlu0 %5351
      %5353 = vrot.lane.b32.xlu0 %v5270, 44
      %v5354 = vpop.permute.xlu0 %5353
      %5355 = vrot.lane.b32.xlu0 %v5271, 44
      %v5356 = vpop.permute.xlu0 %5355
      %5357 = vrot.lane.b32.xlu0 %v5272, 44
      %v5358 = vpop.permute.xlu0 %5357
      %5359 = vrot.lane.b32.xlu0 %v5273, 44
      %v5360 = vpop.permute.xlu0 %5359
      %5361 = vrot.lane.b32.xlu0 %v5274, 44
      %v5362 = vpop.permute.xlu0 %5361
      %5363 = vrot.lane.b32.xlu0 %v5275, 44
      %v5364 = vpop.permute.xlu0 %5363
      %5365 = vrot.lane.b32.xlu0 %v5276, 44
      %v5366 = vpop.permute.xlu0 %5365
      %5367 = vrot.lane.b32.xlu0 %v5277, 44
      %v5368 = vpop.permute.xlu0 %5367
      %5369 = vrot.lane.b32.xlu0 %v5278, 44
      %v5370 = vpop.permute.xlu0 %5369
      %5371 = vrot.lane.b32.xlu0 %v5279, 44
      %v5372 = vpop.permute.xlu0 %5371
      %5373 = vrot.lane.b32.xlu0 %v5280, 44
      %v5374 = vpop.permute.xlu0 %5373
      %5375 = vrot.lane.b32.xlu0 %v5281, 44
      %v5376 = vpop.permute.xlu0 %5375
      %5377 = vrot.lane.b32.xlu0 %v5282, 44
      %v5378 = vpop.permute.xlu0 %5377
      %vm5411 = vcmask 392544
      %5412 = vst.msk [vmem:[#allocation6] sm:$0xff] %vm5411, %v5316
      %5413 = vst.msk [vmem:[#allocation6 + $0x8] sm:$0xff] %vm5411, %v5318
      %5414 = vst.msk [vmem:[#allocation6 + $0x10] sm:$0xff] %vm5411, %v5320
      %5415 = vst.msk [vmem:[#allocation6 + $0x18] sm:$0xff] %vm5411, %v5322
      %5416 = vst.msk [vmem:[#allocation6 + $0x20] sm:$0xff] %vm5411, %v5324
      %5417 = vst.msk [vmem:[#allocation6 + $0x28] sm:$0xff] %vm5411, %v5326
      %5418 = vst.msk [vmem:[#allocation6 + $0x30] sm:$0xff] %vm5411, %v5328
      %5419 = vst.msk [vmem:[#allocation6 + $0x38] sm:$0xff] %vm5411, %v5330
      %5420 = vst.msk [vmem:[#allocation6 + $0x40] sm:$0xff] %vm5411, %v5332
      %5421 = vst.msk [vmem:[#allocation6 + $0x48] sm:$0xff] %vm5411, %v5334
      %5422 = vst.msk [vmem:[#allocation6 + $0x50] sm:$0xff] %vm5411, %v5336
      %5423 = vst.msk [vmem:[#allocation6 + $0x58] sm:$0xff] %vm5411, %v5338
      %5424 = vst.msk [vmem:[#allocation6 + $0x60] sm:$0xff] %vm5411, %v5340
      %5425 = vst.msk [vmem:[#allocation6 + $0x68] sm:$0xff] %vm5411, %v5342
      %5426 = vst.msk [vmem:[#allocation6 + $0x70] sm:$0xff] %vm5411, %v5344
      %5427 = vst.msk [vmem:[#allocation6 + $0x78] sm:$0xff] %vm5411, %v5346
      %5428 = vst.msk [vmem:[#allocation6 + $0x80] sm:$0xff] %vm5411, %v5348
      %5429 = vst.msk [vmem:[#allocation6 + $0x88] sm:$0xff] %vm5411, %v5350
      %5430 = vst.msk [vmem:[#allocation6 + $0x90] sm:$0xff] %vm5411, %v5352
      %5431 = vst.msk [vmem:[#allocation6 + $0x98] sm:$0xff] %vm5411, %v5354
      %5432 = vst.msk [vmem:[#allocation6 + $0xa0] sm:$0xff] %vm5411, %v5356
      %5433 = vst.msk [vmem:[#allocation6 + $0xa8] sm:$0xff] %vm5411, %v5358
      %5434 = vst.msk [vmem:[#allocation6 + $0xb0] sm:$0xff] %vm5411, %v5360
      %5435 = vst.msk [vmem:[#allocation6 + $0xb8] sm:$0xff] %vm5411, %v5362
      %5436 = vst.msk [vmem:[#allocation6 + $0xc0] sm:$0xff] %vm5411, %v5364
      %5437 = vst.msk [vmem:[#allocation6 + $0xc8] sm:$0xff] %vm5411, %v5366
      %5438 = vst.msk [vmem:[#allocation6 + $0xd0] sm:$0xff] %vm5411, %v5368
      %5439 = vst.msk [vmem:[#allocation6 + $0xd8] sm:$0xff] %vm5411, %v5370
      %5440 = vst.msk [vmem:[#allocation6 + $0xe0] sm:$0xff] %vm5411, %v5372
      %5441 = vst.msk [vmem:[#allocation6 + $0xe8] sm:$0xff] %vm5411, %v5374
      %5442 = vst.msk [vmem:[#allocation6 + $0xf0] sm:$0xff] %vm5411, %v5376
      %5443 = vst.msk [vmem:[#allocation6 + $0xf8] sm:$0xff] %vm5411, %v5378
      %v5444 = vld [vmem:[%s3231 + $0x2] sm:$0xff]
      %v5445 = vld [vmem:[%s3231 + $0xa] sm:$0xff]
      %v5446 = vld [vmem:[%s3231 + $0x1a] sm:$0xff]
      %v5447 = vld [vmem:[%s3231 + $0x22] sm:$0xff]
      %v5448 = vld [vmem:[%s3231 + $0x32] sm:$0xff]
      %v5449 = vld [vmem:[%s3231 + $0x3a] sm:$0xff]
      %v5450 = vld [vmem:[%s3231 + $0x4a] sm:$0xff]
      %v5451 = vld [vmem:[%s3231 + $0x52] sm:$0xff]
      %v5452 = vld [vmem:[%s3231 + $0x62] sm:$0xff]
      %v5453 = vld [vmem:[%s3231 + $0x6a] sm:$0xff]
      %v5454 = vld [vmem:[%s3231 + $0x7a] sm:$0xff]
      %v5455 = vld [vmem:[%s3231 + $0x82] sm:$0xff]
      %v5456 = vld [vmem:[%s3231 + $0x92] sm:$0xff]
      %v5457 = vld [vmem:[%s3231 + $0x9a] sm:$0xff]
      %v5458 = vld [vmem:[%s3231 + $0xaa] sm:$0xff]
      %v5459 = vld [vmem:[%s3231 + $0xb2] sm:$0xff]
      %v5460 = vld [vmem:[%s3231 + $0xc2] sm:$0xff]
      %v5461 = vld [vmem:[%s3231 + $0xca] sm:$0xff]
      %v5462 = vld [vmem:[%s3231 + $0xda] sm:$0xff]
      %v5463 = vld [vmem:[%s3231 + $0xe2] sm:$0xff]
      %v5464 = vld [vmem:[%s3231 + $0xf2] sm:$0xff]
      %v5465 = vld [vmem:[%s3231 + $0xfa] sm:$0xff]
      %v5466 = vld [vmem:[%s3231 + $0x10a] sm:$0xff]
      %v5467 = vld [vmem:[%s3231 + $0x112] sm:$0xff]
      %v5468 = vld [vmem:[%s3231 + $0x122] sm:$0xff]
      %v5469 = vld [vmem:[%s3231 + $0x12a] sm:$0xff]
      %v5470 = vld [vmem:[%s3231 + $0x13a] sm:$0xff]
      %v5471 = vld [vmem:[%s3231 + $0x142] sm:$0xff]
      %v5472 = vld [vmem:[%s3231 + $0x152] sm:$0xff]
      %v5473 = vld [vmem:[%s3231 + $0x15a] sm:$0xff]
      %v5474 = vld [vmem:[%s3231 + $0x16a] sm:$0xff]
      %v5475 = vld [vmem:[%s3231 + $0x172] sm:$0xff]
      %5508 = vrot.lane.b32.xlu0 %v5444, 48
      %v5509 = vpop.permute.xlu0 %5508
      %5510 = vrot.lane.b32.xlu0 %v5445, 48
      %v5511 = vpop.permute.xlu0 %5510
      %5512 = vrot.lane.b32.xlu0 %v5446, 48
      %v5513 = vpop.permute.xlu0 %5512
      %5514 = vrot.lane.b32.xlu0 %v5447, 48
      %v5515 = vpop.permute.xlu0 %5514
      %5516 = vrot.lane.b32.xlu0 %v5448, 48
      %v5517 = vpop.permute.xlu0 %5516
      %5518 = vrot.lane.b32.xlu0 %v5449, 48
      %v5519 = vpop.permute.xlu0 %5518
      %5520 = vrot.lane.b32.xlu0 %v5450, 48
      %v5521 = vpop.permute.xlu0 %5520
      %5522 = vrot.lane.b32.xlu0 %v5451, 48
      %v5523 = vpop.permute.xlu0 %5522
      %5524 = vrot.lane.b32.xlu0 %v5452, 48
      %v5525 = vpop.permute.xlu0 %5524
      %5526 = vrot.lane.b32.xlu0 %v5453, 48
      %v5527 = vpop.permute.xlu0 %5526
      %5528 = vrot.lane.b32.xlu0 %v5454, 48
      %v5529 = vpop.permute.xlu0 %5528
      %5530 = vrot.lane.b32.xlu0 %v5455, 48
      %v5531 = vpop.permute.xlu0 %5530
      %5532 = vrot.lane.b32.xlu0 %v5456, 48
      %v5533 = vpop.permute.xlu0 %5532
      %5534 = vrot.lane.b32.xlu0 %v5457, 48
      %v5535 = vpop.permute.xlu0 %5534
      %5536 = vrot.lane.b32.xlu0 %v5458, 48
      %v5537 = vpop.permute.xlu0 %5536
      %5538 = vrot.lane.b32.xlu0 %v5459, 48
      %v5539 = vpop.permute.xlu0 %5538
      %5540 = vrot.lane.b32.xlu0 %v5460, 48
      %v5541 = vpop.permute.xlu0 %5540
      %5542 = vrot.lane.b32.xlu0 %v5461, 48
      %v5543 = vpop.permute.xlu0 %5542
      %5544 = vrot.lane.b32.xlu0 %v5462, 48
      %v5545 = vpop.permute.xlu0 %5544
      %5546 = vrot.lane.b32.xlu0 %v5463, 48
      %v5547 = vpop.permute.xlu0 %5546
      %5548 = vrot.lane.b32.xlu0 %v5464, 48
      %v5549 = vpop.permute.xlu0 %5548
      %5550 = vrot.lane.b32.xlu0 %v5465, 48
      %v5551 = vpop.permute.xlu0 %5550
      %5552 = vrot.lane.b32.xlu0 %v5466, 48
      %v5553 = vpop.permute.xlu0 %5552
      %5554 = vrot.lane.b32.xlu0 %v5467, 48
      %v5555 = vpop.permute.xlu0 %5554
      %5556 = vrot.lane.b32.xlu0 %v5468, 48
      %v5557 = vpop.permute.xlu0 %5556
      %5558 = vrot.lane.b32.xlu0 %v5469, 48
      %v5559 = vpop.permute.xlu0 %5558
      %5560 = vrot.lane.b32.xlu0 %v5470, 48
      %v5561 = vpop.permute.xlu0 %5560
      %5562 = vrot.lane.b32.xlu0 %v5471, 48
      %v5563 = vpop.permute.xlu0 %5562
      %5564 = vrot.lane.b32.xlu0 %v5472, 48
      %v5565 = vpop.permute.xlu0 %5564
      %5566 = vrot.lane.b32.xlu0 %v5473, 48
      %v5567 = vpop.permute.xlu0 %5566
      %5568 = vrot.lane.b32.xlu0 %v5474, 48
      %v5569 = vpop.permute.xlu0 %5568
      %5570 = vrot.lane.b32.xlu0 %v5475, 48
      %v5571 = vpop.permute.xlu0 %5570
      %vm5604 = vcmask 425344
      %5605 = vst.msk [vmem:[#allocation6] sm:$0xff] %vm5604, %v5509
      %5606 = vst.msk [vmem:[#allocation6 + $0x8] sm:$0xff] %vm5604, %v5511
      %5607 = vst.msk [vmem:[#allocation6 + $0x10] sm:$0xff] %vm5604, %v5513
      %5608 = vst.msk [vmem:[#allocation6 + $0x18] sm:$0xff] %vm5604, %v5515
      %5609 = vst.msk [vmem:[#allocation6 + $0x20] sm:$0xff] %vm5604, %v5517
      %5610 = vst.msk [vmem:[#allocation6 + $0x28] sm:$0xff] %vm5604, %v5519
      %5611 = vst.msk [vmem:[#allocation6 + $0x30] sm:$0xff] %vm5604, %v5521
      %5612 = vst.msk [vmem:[#allocation6 + $0x38] sm:$0xff] %vm5604, %v5523
      %5613 = vst.msk [vmem:[#allocation6 + $0x40] sm:$0xff] %vm5604, %v5525
      %5614 = vst.msk [vmem:[#allocation6 + $0x48] sm:$0xff] %vm5604, %v5527
      %5615 = vst.msk [vmem:[#allocation6 + $0x50] sm:$0xff] %vm5604, %v5529
      %5616 = vst.msk [vmem:[#allocation6 + $0x58] sm:$0xff] %vm5604, %v5531
      %5617 = vst.msk [vmem:[#allocation6 + $0x60] sm:$0xff] %vm5604, %v5533
      %5618 = vst.msk [vmem:[#allocation6 + $0x68] sm:$0xff] %vm5604, %v5535
      %5619 = vst.msk [vmem:[#allocation6 + $0x70] sm:$0xff] %vm5604, %v5537
      %5620 = vst.msk [vmem:[#allocation6 + $0x78] sm:$0xff] %vm5604, %v5539
      %5621 = vst.msk [vmem:[#allocation6 + $0x80] sm:$0xff] %vm5604, %v5541
      %5622 = vst.msk [vmem:[#allocation6 + $0x88] sm:$0xff] %vm5604, %v5543
      %5623 = vst.msk [vmem:[#allocation6 + $0x90] sm:$0xff] %vm5604, %v5545
      %5624 = vst.msk [vmem:[#allocation6 + $0x98] sm:$0xff] %vm5604, %v5547
      %5625 = vst.msk [vmem:[#allocation6 + $0xa0] sm:$0xff] %vm5604, %v5549
      %5626 = vst.msk [vmem:[#allocation6 + $0xa8] sm:$0xff] %vm5604, %v5551
      %5627 = vst.msk [vmem:[#allocation6 + $0xb0] sm:$0xff] %vm5604, %v5553
      %5628 = vst.msk [vmem:[#allocation6 + $0xb8] sm:$0xff] %vm5604, %v5555
      %5629 = vst.msk [vmem:[#allocation6 + $0xc0] sm:$0xff] %vm5604, %v5557
      %5630 = vst.msk [vmem:[#allocation6 + $0xc8] sm:$0xff] %vm5604, %v5559
      %5631 = vst.msk [vmem:[#allocation6 + $0xd0] sm:$0xff] %vm5604, %v5561
      %5632 = vst.msk [vmem:[#allocation6 + $0xd8] sm:$0xff] %vm5604, %v5563
      %5633 = vst.msk [vmem:[#allocation6 + $0xe0] sm:$0xff] %vm5604, %v5565
      %5634 = vst.msk [vmem:[#allocation6 + $0xe8] sm:$0xff] %vm5604, %v5567
      %5635 = vst.msk [vmem:[#allocation6 + $0xf0] sm:$0xff] %vm5604, %v5569
      %5636 = vst.msk [vmem:[#allocation6 + $0xf8] sm:$0xff] %vm5604, %v5571
      %v5637 = vld [vmem:[%s3231 + $0x3] sm:$0xff]
      %v5638 = vld [vmem:[%s3231 + $0xb] sm:$0xff]
      %v5639 = vld [vmem:[%s3231 + $0x1b] sm:$0xff]
      %v5640 = vld [vmem:[%s3231 + $0x23] sm:$0xff]
      %v5641 = vld [vmem:[%s3231 + $0x33] sm:$0xff]
      %v5642 = vld [vmem:[%s3231 + $0x3b] sm:$0xff]
      %v5643 = vld [vmem:[%s3231 + $0x4b] sm:$0xff]
      %v5644 = vld [vmem:[%s3231 + $0x53] sm:$0xff]
      %v5645 = vld [vmem:[%s3231 + $0x63] sm:$0xff]
      %v5646 = vld [vmem:[%s3231 + $0x6b] sm:$0xff]
      %v5647 = vld [vmem:[%s3231 + $0x7b] sm:$0xff]
      %v5648 = vld [vmem:[%s3231 + $0x83] sm:$0xff]
      %v5649 = vld [vmem:[%s3231 + $0x93] sm:$0xff]
      %v5650 = vld [vmem:[%s3231 + $0x9b] sm:$0xff]
      %v5651 = vld [vmem:[%s3231 + $0xab] sm:$0xff]
      %v5652 = vld [vmem:[%s3231 + $0xb3] sm:$0xff]
      %v5653 = vld [vmem:[%s3231 + $0xc3] sm:$0xff]
      %v5654 = vld [vmem:[%s3231 + $0xcb] sm:$0xff]
      %v5655 = vld [vmem:[%s3231 + $0xdb] sm:$0xff]
      %v5656 = vld [vmem:[%s3231 + $0xe3] sm:$0xff]
      %v5657 = vld [vmem:[%s3231 + $0xf3] sm:$0xff]
      %v5658 = vld [vmem:[%s3231 + $0xfb] sm:$0xff]
      %v5659 = vld [vmem:[%s3231 + $0x10b] sm:$0xff]
      %v5660 = vld [vmem:[%s3231 + $0x113] sm:$0xff]
      %v5661 = vld [vmem:[%s3231 + $0x123] sm:$0xff]
      %v5662 = vld [vmem:[%s3231 + $0x12b] sm:$0xff]
      %v5663 = vld [vmem:[%s3231 + $0x13b] sm:$0xff]
      %v5664 = vld [vmem:[%s3231 + $0x143] sm:$0xff]
      %v5665 = vld [vmem:[%s3231 + $0x153] sm:$0xff]
      %v5666 = vld [vmem:[%s3231 + $0x15b] sm:$0xff]
      %v5667 = vld [vmem:[%s3231 + $0x16b] sm:$0xff]
      %v5668 = vld [vmem:[%s3231 + $0x173] sm:$0xff]
      %5701 = vrot.lane.b32.xlu0 %v5637, 52
      %v5702 = vpop.permute.xlu0 %5701
      %5703 = vrot.lane.b32.xlu0 %v5638, 52
      %v5704 = vpop.permute.xlu0 %5703
      %5705 = vrot.lane.b32.xlu0 %v5639, 52
      %v5706 = vpop.permute.xlu0 %5705
      %5707 = vrot.lane.b32.xlu0 %v5640, 52
      %v5708 = vpop.permute.xlu0 %5707
      %5709 = vrot.lane.b32.xlu0 %v5641, 52
      %v5710 = vpop.permute.xlu0 %5709
      %5711 = vrot.lane.b32.xlu0 %v5642, 52
      %v5712 = vpop.permute.xlu0 %5711
      %5713 = vrot.lane.b32.xlu0 %v5643, 52
      %v5714 = vpop.permute.xlu0 %5713
      %5715 = vrot.lane.b32.xlu0 %v5644, 52
      %v5716 = vpop.permute.xlu0 %5715
      %5717 = vrot.lane.b32.xlu0 %v5645, 52
      %v5718 = vpop.permute.xlu0 %5717
      %5719 = vrot.lane.b32.xlu0 %v5646, 52
      %v5720 = vpop.permute.xlu0 %5719
      %5721 = vrot.lane.b32.xlu0 %v5647, 52
      %v5722 = vpop.permute.xlu0 %5721
      %5723 = vrot.lane.b32.xlu0 %v5648, 52
      %v5724 = vpop.permute.xlu0 %5723
      %5725 = vrot.lane.b32.xlu0 %v5649, 52
      %v5726 = vpop.permute.xlu0 %5725
      %5727 = vrot.lane.b32.xlu0 %v5650, 52
      %v5728 = vpop.permute.xlu0 %5727
      %5729 = vrot.lane.b32.xlu0 %v5651, 52
      %v5730 = vpop.permute.xlu0 %5729
      %5731 = vrot.lane.b32.xlu0 %v5652, 52
      %v5732 = vpop.permute.xlu0 %5731
      %5733 = vrot.lane.b32.xlu0 %v5653, 52
      %v5734 = vpop.permute.xlu0 %5733
      %5735 = vrot.lane.b32.xlu0 %v5654, 52
      %v5736 = vpop.permute.xlu0 %5735
      %5737 = vrot.lane.b32.xlu0 %v5655, 52
      %v5738 = vpop.permute.xlu0 %5737
      %5739 = vrot.lane.b32.xlu0 %v5656, 52
      %v5740 = vpop.permute.xlu0 %5739
      %5741 = vrot.lane.b32.xlu0 %v5657, 52
      %v5742 = vpop.permute.xlu0 %5741
      %5743 = vrot.lane.b32.xlu0 %v5658, 52
      %v5744 = vpop.permute.xlu0 %5743
      %5745 = vrot.lane.b32.xlu0 %v5659, 52
      %v5746 = vpop.permute.xlu0 %5745
      %5747 = vrot.lane.b32.xlu0 %v5660, 52
      %v5748 = vpop.permute.xlu0 %5747
      %5749 = vrot.lane.b32.xlu0 %v5661, 52
      %v5750 = vpop.permute.xlu0 %5749
      %5751 = vrot.lane.b32.xlu0 %v5662, 52
      %v5752 = vpop.permute.xlu0 %5751
      %5753 = vrot.lane.b32.xlu0 %v5663, 52
      %v5754 = vpop.permute.xlu0 %5753
      %5755 = vrot.lane.b32.xlu0 %v5664, 52
      %v5756 = vpop.permute.xlu0 %5755
      %5757 = vrot.lane.b32.xlu0 %v5665, 52
      %v5758 = vpop.permute.xlu0 %5757
      %5759 = vrot.lane.b32.xlu0 %v5666, 52
      %v5760 = vpop.permute.xlu0 %5759
      %5761 = vrot.lane.b32.xlu0 %v5667, 52
      %v5762 = vpop.permute.xlu0 %5761
      %5763 = vrot.lane.b32.xlu0 %v5668, 52
      %v5764 = vpop.permute.xlu0 %5763
      %vm5797 = vcmask 458144
      %5798 = vst.msk [vmem:[#allocation6] sm:$0xff] %vm5797, %v5702
      %5799 = vst.msk [vmem:[#allocation6 + $0x8] sm:$0xff] %vm5797, %v5704
      %5800 = vst.msk [vmem:[#allocation6 + $0x10] sm:$0xff] %vm5797, %v5706
      %5801 = vst.msk [vmem:[#allocation6 + $0x18] sm:$0xff] %vm5797, %v5708
      %5802 = vst.msk [vmem:[#allocation6 + $0x20] sm:$0xff] %vm5797, %v5710
      %5803 = vst.msk [vmem:[#allocation6 + $0x28] sm:$0xff] %vm5797, %v5712
      %5804 = vst.msk [vmem:[#allocation6 + $0x30] sm:$0xff] %vm5797, %v5714
      %5805 = vst.msk [vmem:[#allocation6 + $0x38] sm:$0xff] %vm5797, %v5716
      %5806 = vst.msk [vmem:[#allocation6 + $0x40] sm:$0xff] %vm5797, %v5718
      %5807 = vst.msk [vmem:[#allocation6 + $0x48] sm:$0xff] %vm5797, %v5720
      %5808 = vst.msk [vmem:[#allocation6 + $0x50] sm:$0xff] %vm5797, %v5722
      %5809 = vst.msk [vmem:[#allocation6 + $0x58] sm:$0xff] %vm5797, %v5724
      %5810 = vst.msk [vmem:[#allocation6 + $0x60] sm:$0xff] %vm5797, %v5726
      %5811 = vst.msk [vmem:[#allocation6 + $0x68] sm:$0xff] %vm5797, %v5728
      %5812 = vst.msk [vmem:[#allocation6 + $0x70] sm:$0xff] %vm5797, %v5730
      %5813 = vst.msk [vmem:[#allocation6 + $0x78] sm:$0xff] %vm5797, %v5732
      %5814 = vst.msk [vmem:[#allocation6 + $0x80] sm:$0xff] %vm5797, %v5734
      %5815 = vst.msk [vmem:[#allocation6 + $0x88] sm:$0xff] %vm5797, %v5736
      %5816 = vst.msk [vmem:[#allocation6 + $0x90] sm:$0xff] %vm5797, %v5738
      %5817 = vst.msk [vmem:[#allocation6 + $0x98] sm:$0xff] %vm5797, %v5740
      %5818 = vst.msk [vmem:[#allocation6 + $0xa0] sm:$0xff] %vm5797, %v5742
      %5819 = vst.msk [vmem:[#allocation6 + $0xa8] sm:$0xff] %vm5797, %v5744
      %5820 = vst.msk [vmem:[#allocation6 + $0xb0] sm:$0xff] %vm5797, %v5746
      %5821 = vst.msk [vmem:[#allocation6 + $0xb8] sm:$0xff] %vm5797, %v5748
      %5822 = vst.msk [vmem:[#allocation6 + $0xc0] sm:$0xff] %vm5797, %v5750
      %5823 = vst.msk [vmem:[#allocation6 + $0xc8] sm:$0xff] %vm5797, %v5752
      %5824 = vst.msk [vmem:[#allocation6 + $0xd0] sm:$0xff] %vm5797, %v5754
      %5825 = vst.msk [vmem:[#allocation6 + $0xd8] sm:$0xff] %vm5797, %v5756
      %5826 = vst.msk [vmem:[#allocation6 + $0xe0] sm:$0xff] %vm5797, %v5758
      %5827 = vst.msk [vmem:[#allocation6 + $0xe8] sm:$0xff] %vm5797, %v5760
      %5828 = vst.msk [vmem:[#allocation6 + $0xf0] sm:$0xff] %vm5797, %v5762
      %5829 = vst.msk [vmem:[#allocation6 + $0xf8] sm:$0xff] %vm5797, %v5764
      %v5830 = vld [vmem:[%s3231 + $0x4] sm:$0xff]
      %v5831 = vld [vmem:[%s3231 + $0xc] sm:$0xff]
      %v5832 = vld [vmem:[%s3231 + $0x1c] sm:$0xff]
      %v5833 = vld [vmem:[%s3231 + $0x24] sm:$0xff]
      %v5834 = vld [vmem:[%s3231 + $0x34] sm:$0xff]
      %v5835 = vld [vmem:[%s3231 + $0x3c] sm:$0xff]
      %v5836 = vld [vmem:[%s3231 + $0x4c] sm:$0xff]
      %v5837 = vld [vmem:[%s3231 + $0x54] sm:$0xff]
      %v5838 = vld [vmem:[%s3231 + $0x64] sm:$0xff]
      %v5839 = vld [vmem:[%s3231 + $0x6c] sm:$0xff]
      %v5840 = vld [vmem:[%s3231 + $0x7c] sm:$0xff]
      %v5841 = vld [vmem:[%s3231 + $0x84] sm:$0xff]
      %v5842 = vld [vmem:[%s3231 + $0x94] sm:$0xff]
      %v5843 = vld [vmem:[%s3231 + $0x9c] sm:$0xff]
      %v5844 = vld [vmem:[%s3231 + $0xac] sm:$0xff]
      %v5845 = vld [vmem:[%s3231 + $0xb4] sm:$0xff]
      %v5846 = vld [vmem:[%s3231 + $0xc4] sm:$0xff]
      %v5847 = vld [vmem:[%s3231 + $0xcc] sm:$0xff]
      %v5848 = vld [vmem:[%s3231 + $0xdc] sm:$0xff]
      %v5849 = vld [vmem:[%s3231 + $0xe4] sm:$0xff]
      %v5850 = vld [vmem:[%s3231 + $0xf4] sm:$0xff]
      %v5851 = vld [vmem:[%s3231 + $0xfc] sm:$0xff]
      %v5852 = vld [vmem:[%s3231 + $0x10c] sm:$0xff]
      %v5853 = vld [vmem:[%s3231 + $0x114] sm:$0xff]
      %v5854 = vld [vmem:[%s3231 + $0x124] sm:$0xff]
      %v5855 = vld [vmem:[%s3231 + $0x12c] sm:$0xff]
      %v5856 = vld [vmem:[%s3231 + $0x13c] sm:$0xff]
      %v5857 = vld [vmem:[%s3231 + $0x144] sm:$0xff]
      %v5858 = vld [vmem:[%s3231 + $0x154] sm:$0xff]
      %v5859 = vld [vmem:[%s3231 + $0x15c] sm:$0xff]
      %v5860 = vld [vmem:[%s3231 + $0x16c] sm:$0xff]
      %v5861 = vld [vmem:[%s3231 + $0x174] sm:$0xff]
      %5894 = vrot.lane.b32.xlu0 %v5830, 56
      %v5895 = vpop.permute.xlu0 %5894
      %5896 = vrot.lane.b32.xlu0 %v5831, 56
      %v5897 = vpop.permute.xlu0 %5896
      %5898 = vrot.lane.b32.xlu0 %v5832, 56
      %v5899 = vpop.permute.xlu0 %5898
      %5900 = vrot.lane.b32.xlu0 %v5833, 56
      %v5901 = vpop.permute.xlu0 %5900
      %5902 = vrot.lane.b32.xlu0 %v5834, 56
      %v5903 = vpop.permute.xlu0 %5902
      %5904 = vrot.lane.b32.xlu0 %v5835, 56
      %v5905 = vpop.permute.xlu0 %5904
      %5906 = vrot.lane.b32.xlu0 %v5836, 56
      %v5907 = vpop.permute.xlu0 %5906
      %5908 = vrot.lane.b32.xlu0 %v5837, 56
      %v5909 = vpop.permute.xlu0 %5908
      %5910 = vrot.lane.b32.xlu0 %v5838, 56
      %v5911 = vpop.permute.xlu0 %5910
      %5912 = vrot.lane.b32.xlu0 %v5839, 56
      %v5913 = vpop.permute.xlu0 %5912
      %5914 = vrot.lane.b32.xlu0 %v5840, 56
      %v5915 = vpop.permute.xlu0 %5914
      %5916 = vrot.lane.b32.xlu0 %v5841, 56
      %v5917 = vpop.permute.xlu0 %5916
      %5918 = vrot.lane.b32.xlu0 %v5842, 56
      %v5919 = vpop.permute.xlu0 %5918
      %5920 = vrot.lane.b32.xlu0 %v5843, 56
      %v5921 = vpop.permute.xlu0 %5920
      %5922 = vrot.lane.b32.xlu0 %v5844, 56
      %v5923 = vpop.permute.xlu0 %5922
      %5924 = vrot.lane.b32.xlu0 %v5845, 56
      %v5925 = vpop.permute.xlu0 %5924
      %5926 = vrot.lane.b32.xlu0 %v5846, 56
      %v5927 = vpop.permute.xlu0 %5926
      %5928 = vrot.lane.b32.xlu0 %v5847, 56
      %v5929 = vpop.permute.xlu0 %5928
      %5930 = vrot.lane.b32.xlu0 %v5848, 56
      %v5931 = vpop.permute.xlu0 %5930
      %5932 = vrot.lane.b32.xlu0 %v5849, 56
      %v5933 = vpop.permute.xlu0 %5932
      %5934 = vrot.lane.b32.xlu0 %v5850, 56
      %v5935 = vpop.permute.xlu0 %5934
      %5936 = vrot.lane.b32.xlu0 %v5851, 56
      %v5937 = vpop.permute.xlu0 %5936
      %5938 = vrot.lane.b32.xlu0 %v5852, 56
      %v5939 = vpop.permute.xlu0 %5938
      %5940 = vrot.lane.b32.xlu0 %v5853, 56
      %v5941 = vpop.permute.xlu0 %5940
      %5942 = vrot.lane.b32.xlu0 %v5854, 56
      %v5943 = vpop.permute.xlu0 %5942
      %5944 = vrot.lane.b32.xlu0 %v5855, 56
      %v5945 = vpop.permute.xlu0 %5944
      %5946 = vrot.lane.b32.xlu0 %v5856, 56
      %v5947 = vpop.permute.xlu0 %5946
      %5948 = vrot.lane.b32.xlu0 %v5857, 56
      %v5949 = vpop.permute.xlu0 %5948
      %5950 = vrot.lane.b32.xlu0 %v5858, 56
      %v5951 = vpop.permute.xlu0 %5950
      %5952 = vrot.lane.b32.xlu0 %v5859, 56
      %v5953 = vpop.permute.xlu0 %5952
      %5954 = vrot.lane.b32.xlu0 %v5860, 56
      %v5955 = vpop.permute.xlu0 %5954
      %5956 = vrot.lane.b32.xlu0 %v5861, 56
      %v5957 = vpop.permute.xlu0 %5956
      %vm5990 = vcmask 490944
      %5991 = vst.msk [vmem:[#allocation6] sm:$0xff] %vm5990, %v5895
      %5992 = vst.msk [vmem:[#allocation6 + $0x8] sm:$0xff] %vm5990, %v5897
      %5993 = vst.msk [vmem:[#allocation6 + $0x10] sm:$0xff] %vm5990, %v5899
      %5994 = vst.msk [vmem:[#allocation6 + $0x18] sm:$0xff] %vm5990, %v5901
      %5995 = vst.msk [vmem:[#allocation6 + $0x20] sm:$0xff] %vm5990, %v5903
      %5996 = vst.msk [vmem:[#allocation6 + $0x28] sm:$0xff] %vm5990, %v5905
      %5997 = vst.msk [vmem:[#allocation6 + $0x30] sm:$0xff] %vm5990, %v5907
      %5998 = vst.msk [vmem:[#allocation6 + $0x38] sm:$0xff] %vm5990, %v5909
      %5999 = vst.msk [vmem:[#allocation6 + $0x40] sm:$0xff] %vm5990, %v5911
      %6000 = vst.msk [vmem:[#allocation6 + $0x48] sm:$0xff] %vm5990, %v5913
      %6001 = vst.msk [vmem:[#allocation6 + $0x50] sm:$0xff] %vm5990, %v5915
      %6002 = vst.msk [vmem:[#allocation6 + $0x58] sm:$0xff] %vm5990, %v5917
      %6003 = vst.msk [vmem:[#allocation6 + $0x60] sm:$0xff] %vm5990, %v5919
      %6004 = vst.msk [vmem:[#allocation6 + $0x68] sm:$0xff] %vm5990, %v5921
      %6005 = vst.msk [vmem:[#allocation6 + $0x70] sm:$0xff] %vm5990, %v5923
      %6006 = vst.msk [vmem:[#allocation6 + $0x78] sm:$0xff] %vm5990, %v5925
      %6007 = vst.msk [vmem:[#allocation6 + $0x80] sm:$0xff] %vm5990, %v5927
      %6008 = vst.msk [vmem:[#allocation6 + $0x88] sm:$0xff] %vm5990, %v5929
      %6009 = vst.msk [vmem:[#allocation6 + $0x90] sm:$0xff] %vm5990, %v5931
      %6010 = vst.msk [vmem:[#allocation6 + $0x98] sm:$0xff] %vm5990, %v5933
      %6011 = vst.msk [vmem:[#allocation6 + $0xa0] sm:$0xff] %vm5990, %v5935
      %6012 = vst.msk [vmem:[#allocation6 + $0xa8] sm:$0xff] %vm5990, %v5937
      %6013 = vst.msk [vmem:[#allocation6 + $0xb0] sm:$0xff] %vm5990, %v5939
      %6014 = vst.msk [vmem:[#allocation6 + $0xb8] sm:$0xff] %vm5990, %v5941
      %6015 = vst.msk [vmem:[#allocation6 + $0xc0] sm:$0xff] %vm5990, %v5943
      %6016 = vst.msk [vmem:[#allocation6 + $0xc8] sm:$0xff] %vm5990, %v5945
      %6017 = vst.msk [vmem:[#allocation6 + $0xd0] sm:$0xff] %vm5990, %v5947
      %6018 = vst.msk [vmem:[#allocation6 + $0xd8] sm:$0xff] %vm5990, %v5949
      %6019 = vst.msk [vmem:[#allocation6 + $0xe0] sm:$0xff] %vm5990, %v5951
      %6020 = vst.msk [vmem:[#allocation6 + $0xe8] sm:$0xff] %vm5990, %v5953
      %6021 = vst.msk [vmem:[#allocation6 + $0xf0] sm:$0xff] %vm5990, %v5955
      %6022 = vst.msk [vmem:[#allocation6 + $0xf8] sm:$0xff] %vm5990, %v5957
      %s6023 = scalar_lea.vmem [#allocation4], 72
      %v6024 = vld [vmem:[%s6023] sm:$0xff]
      %v6025 = vld [vmem:[%s6023 + $0x8] sm:$0xff]
      %v6026 = vld [vmem:[%s6023 + $0x18] sm:$0xff]
      %v6027 = vld [vmem:[%s6023 + $0x20] sm:$0xff]
      %v6028 = vld [vmem:[%s6023 + $0x30] sm:$0xff]
      %v6029 = vld [vmem:[%s6023 + $0x38] sm:$0xff]
      %v6030 = vld [vmem:[%s6023 + $0x48] sm:$0xff]
      %v6031 = vld [vmem:[%s6023 + $0x50] sm:$0xff]
      %v6032 = vld [vmem:[%s6023 + $0x60] sm:$0xff]
      %v6033 = vld [vmem:[%s6023 + $0x68] sm:$0xff]
      %v6034 = vld [vmem:[%s6023 + $0x78] sm:$0xff]
      %v6035 = vld [vmem:[%s6023 + $0x80] sm:$0xff]
      %v6036 = vld [vmem:[%s6023 + $0x90] sm:$0xff]
      %v6037 = vld [vmem:[%s6023 + $0x98] sm:$0xff]
      %v6038 = vld [vmem:[%s6023 + $0xa8] sm:$0xff]
      %v6039 = vld [vmem:[%s6023 + $0xb0] sm:$0xff]
      %v6040 = vld [vmem:[%s6023 + $0xc0] sm:$0xff]
      %v6041 = vld [vmem:[%s6023 + $0xc8] sm:$0xff]
      %v6042 = vld [vmem:[%s6023 + $0xd8] sm:$0xff]
      %v6043 = vld [vmem:[%s6023 + $0xe0] sm:$0xff]
      %v6044 = vld [vmem:[%s6023 + $0xf0] sm:$0xff]
      %v6045 = vld [vmem:[%s6023 + $0xf8] sm:$0xff]
      %v6046 = vld [vmem:[%s6023 + $0x108] sm:$0xff]
      %v6047 = vld [vmem:[%s6023 + $0x110] sm:$0xff]
      %v6048 = vld [vmem:[%s6023 + $0x120] sm:$0xff]
      %v6049 = vld [vmem:[%s6023 + $0x128] sm:$0xff]
      %v6050 = vld [vmem:[%s6023 + $0x138] sm:$0xff]
      %v6051 = vld [vmem:[%s6023 + $0x140] sm:$0xff]
      %v6052 = vld [vmem:[%s6023 + $0x150] sm:$0xff]
      %v6053 = vld [vmem:[%s6023 + $0x158] sm:$0xff]
      %v6054 = vld [vmem:[%s6023 + $0x168] sm:$0xff]
      %v6055 = vld [vmem:[%s6023 + $0x170] sm:$0xff]
      %6088 = vrot.lane.b32.xlu0 %v6024, 60
      %v6089 = vpop.permute.xlu0 %6088
      %6090 = vrot.lane.b32.xlu0 %v6025, 60
      %v6091 = vpop.permute.xlu0 %6090
      %6092 = vrot.lane.b32.xlu0 %v6026, 60
      %v6093 = vpop.permute.xlu0 %6092
      %6094 = vrot.lane.b32.xlu0 %v6027, 60
      %v6095 = vpop.permute.xlu0 %6094
      %6096 = vrot.lane.b32.xlu0 %v6028, 60
      %v6097 = vpop.permute.xlu0 %6096
      %6098 = vrot.lane.b32.xlu0 %v6029, 60
      %v6099 = vpop.permute.xlu0 %6098
      %6100 = vrot.lane.b32.xlu0 %v6030, 60
      %v6101 = vpop.permute.xlu0 %6100
      %6102 = vrot.lane.b32.xlu0 %v6031, 60
      %v6103 = vpop.permute.xlu0 %6102
      %6104 = vrot.lane.b32.xlu0 %v6032, 60
      %v6105 = vpop.permute.xlu0 %6104
      %6106 = vrot.lane.b32.xlu0 %v6033, 60
      %v6107 = vpop.permute.xlu0 %6106
      %6108 = vrot.lane.b32.xlu0 %v6034, 60
      %v6109 = vpop.permute.xlu0 %6108
      %6110 = vrot.lane.b32.xlu0 %v6035, 60
      %v6111 = vpop.permute.xlu0 %6110
      %6112 = vrot.lane.b32.xlu0 %v6036, 60
      %v6113 = vpop.permute.xlu0 %6112
      %6114 = vrot.lane.b32.xlu0 %v6037, 60
      %v6115 = vpop.permute.xlu0 %6114
      %6116 = vrot.lane.b32.xlu0 %v6038, 60
      %v6117 = vpop.permute.xlu0 %6116
      %6118 = vrot.lane.b32.xlu0 %v6039, 60
      %v6119 = vpop.permute.xlu0 %6118
      %6120 = vrot.lane.b32.xlu0 %v6040, 60
      %v6121 = vpop.permute.xlu0 %6120
      %6122 = vrot.lane.b32.xlu0 %v6041, 60
      %v6123 = vpop.permute.xlu0 %6122
      %6124 = vrot.lane.b32.xlu0 %v6042, 60
      %v6125 = vpop.permute.xlu0 %6124
      %6126 = vrot.lane.b32.xlu0 %v6043, 60
      %v6127 = vpop.permute.xlu0 %6126
      %6128 = vrot.lane.b32.xlu0 %v6044, 60
      %v6129 = vpop.permute.xlu0 %6128
      %6130 = vrot.lane.b32.xlu0 %v6045, 60
      %v6131 = vpop.permute.xlu0 %6130
      %6132 = vrot.lane.b32.xlu0 %v6046, 60
      %v6133 = vpop.permute.xlu0 %6132
      %6134 = vrot.lane.b32.xlu0 %v6047, 60
      %v6135 = vpop.permute.xlu0 %6134
      %6136 = vrot.lane.b32.xlu0 %v6048, 60
      %v6137 = vpop.permute.xlu0 %6136
      %6138 = vrot.lane.b32.xlu0 %v6049, 60
      %v6139 = vpop.permute.xlu0 %6138
      %6140 = vrot.lane.b32.xlu0 %v6050, 60
      %v6141 = vpop.permute.xlu0 %6140
      %6142 = vrot.lane.b32.xlu0 %v6051, 60
      %v6143 = vpop.permute.xlu0 %6142
      %6144 = vrot.lane.b32.xlu0 %v6052, 60
      %v6145 = vpop.permute.xlu0 %6144
      %6146 = vrot.lane.b32.xlu0 %v6053, 60
      %v6147 = vpop.permute.xlu0 %6146
      %6148 = vrot.lane.b32.xlu0 %v6054, 60
      %v6149 = vpop.permute.xlu0 %6148
      %6150 = vrot.lane.b32.xlu0 %v6055, 60
      %v6151 = vpop.permute.xlu0 %6150
      %vm6184 = vcmask 523744
      %6185 = vst.msk [vmem:[#allocation6] sm:$0xff] %vm6184, %v6089
      %6186 = vst.msk [vmem:[#allocation6 + $0x8] sm:$0xff] %vm6184, %v6091
      %6187 = vst.msk [vmem:[#allocation6 + $0x10] sm:$0xff] %vm6184, %v6093
      %6188 = vst.msk [vmem:[#allocation6 + $0x18] sm:$0xff] %vm6184, %v6095
      %6189 = vst.msk [vmem:[#allocation6 + $0x20] sm:$0xff] %vm6184, %v6097
      %6190 = vst.msk [vmem:[#allocation6 + $0x28] sm:$0xff] %vm6184, %v6099
      %6191 = vst.msk [vmem:[#allocation6 + $0x30] sm:$0xff] %vm6184, %v6101
      %6192 = vst.msk [vmem:[#allocation6 + $0x38] sm:$0xff] %vm6184, %v6103
      %6193 = vst.msk [vmem:[#allocation6 + $0x40] sm:$0xff] %vm6184, %v6105
      %6194 = vst.msk [vmem:[#allocation6 + $0x48] sm:$0xff] %vm6184, %v6107
      %6195 = vst.msk [vmem:[#allocation6 + $0x50] sm:$0xff] %vm6184, %v6109
      %6196 = vst.msk [vmem:[#allocation6 + $0x58] sm:$0xff] %vm6184, %v6111
      %6197 = vst.msk [vmem:[#allocation6 + $0x60] sm:$0xff] %vm6184, %v6113
      %6198 = vst.msk [vmem:[#allocation6 + $0x68] sm:$0xff] %vm6184, %v6115
      %6199 = vst.msk [vmem:[#allocation6 + $0x70] sm:$0xff] %vm6184, %v6117
      %6200 = vst.msk [vmem:[#allocation6 + $0x78] sm:$0xff] %vm6184, %v6119
      %6201 = vst.msk [vmem:[#allocation6 + $0x80] sm:$0xff] %vm6184, %v6121
      %6202 = vst.msk [vmem:[#allocation6 + $0x88] sm:$0xff] %vm6184, %v6123
      %6203 = vst.msk [vmem:[#allocation6 + $0x90] sm:$0xff] %vm6184, %v6125
      %6204 = vst.msk [vmem:[#allocation6 + $0x98] sm:$0xff] %vm6184, %v6127
      %6205 = vst.msk [vmem:[#allocation6 + $0xa0] sm:$0xff] %vm6184, %v6129
      %6206 = vst.msk [vmem:[#allocation6 + $0xa8] sm:$0xff] %vm6184, %v6131
      %6207 = vst.msk [vmem:[#allocation6 + $0xb0] sm:$0xff] %vm6184, %v6133
      %6208 = vst.msk [vmem:[#allocation6 + $0xb8] sm:$0xff] %vm6184, %v6135
      %6209 = vst.msk [vmem:[#allocation6 + $0xc0] sm:$0xff] %vm6184, %v6137
      %6210 = vst.msk [vmem:[#allocation6 + $0xc8] sm:$0xff] %vm6184, %v6139
      %6211 = vst.msk [vmem:[#allocation6 + $0xd0] sm:$0xff] %vm6184, %v6141
      %6212 = vst.msk [vmem:[#allocation6 + $0xd8] sm:$0xff] %vm6184, %v6143
      %6213 = vst.msk [vmem:[#allocation6 + $0xe0] sm:$0xff] %vm6184, %v6145
      %6214 = vst.msk [vmem:[#allocation6 + $0xe8] sm:$0xff] %vm6184, %v6147
      %6215 = vst.msk [vmem:[#allocation6 + $0xf0] sm:$0xff] %vm6184, %v6149
      %6216 = vst.msk [vmem:[#allocation6 + $0xf8] sm:$0xff] %vm6184, %v6151
      %v6217 = vld [vmem:[%s6023 + $0x1] sm:$0xff]
      %v6218 = vld [vmem:[%s6023 + $0x9] sm:$0xff]
      %v6219 = vld [vmem:[%s6023 + $0x19] sm:$0xff]
      %v6220 = vld [vmem:[%s6023 + $0x21] sm:$0xff]
      %v6221 = vld [vmem:[%s6023 + $0x31] sm:$0xff]
      %v6222 = vld [vmem:[%s6023 + $0x39] sm:$0xff]
      %v6223 = vld [vmem:[%s6023 + $0x49] sm:$0xff]
      %v6224 = vld [vmem:[%s6023 + $0x51] sm:$0xff]
      %v6225 = vld [vmem:[%s6023 + $0x61] sm:$0xff]
      %v6226 = vld [vmem:[%s6023 + $0x69] sm:$0xff]
      %v6227 = vld [vmem:[%s6023 + $0x79] sm:$0xff]
      %v6228 = vld [vmem:[%s6023 + $0x81] sm:$0xff]
      %v6229 = vld [vmem:[%s6023 + $0x91] sm:$0xff]
      %v6230 = vld [vmem:[%s6023 + $0x99] sm:$0xff]
      %v6231 = vld [vmem:[%s6023 + $0xa9] sm:$0xff]
      %v6232 = vld [vmem:[%s6023 + $0xb1] sm:$0xff]
      %v6233 = vld [vmem:[%s6023 + $0xc1] sm:$0xff]
      %v6234 = vld [vmem:[%s6023 + $0xc9] sm:$0xff]
      %v6235 = vld [vmem:[%s6023 + $0xd9] sm:$0xff]
      %v6236 = vld [vmem:[%s6023 + $0xe1] sm:$0xff]
      %v6237 = vld [vmem:[%s6023 + $0xf1] sm:$0xff]
      %v6238 = vld [vmem:[%s6023 + $0xf9] sm:$0xff]
      %v6239 = vld [vmem:[%s6023 + $0x109] sm:$0xff]
      %v6240 = vld [vmem:[%s6023 + $0x111] sm:$0xff]
      %v6241 = vld [vmem:[%s6023 + $0x121] sm:$0xff]
      %v6242 = vld [vmem:[%s6023 + $0x129] sm:$0xff]
      %v6243 = vld [vmem:[%s6023 + $0x139] sm:$0xff]
      %v6244 = vld [vmem:[%s6023 + $0x141] sm:$0xff]
      %v6245 = vld [vmem:[%s6023 + $0x151] sm:$0xff]
      %v6246 = vld [vmem:[%s6023 + $0x159] sm:$0xff]
      %v6247 = vld [vmem:[%s6023 + $0x169] sm:$0xff]
      %v6248 = vld [vmem:[%s6023 + $0x171] sm:$0xff]
      %6281 = vrot.lane.b32.xlu0 %v6217, 64
      %v6282 = vpop.permute.xlu0 %6281
      %6283 = vrot.lane.b32.xlu0 %v6218, 64
      %v6284 = vpop.permute.xlu0 %6283
      %6285 = vrot.lane.b32.xlu0 %v6219, 64
      %v6286 = vpop.permute.xlu0 %6285
      %6287 = vrot.lane.b32.xlu0 %v6220, 64
      %v6288 = vpop.permute.xlu0 %6287
      %6289 = vrot.lane.b32.xlu0 %v6221, 64
      %v6290 = vpop.permute.xlu0 %6289
      %6291 = vrot.lane.b32.xlu0 %v6222, 64
      %v6292 = vpop.permute.xlu0 %6291
      %6293 = vrot.lane.b32.xlu0 %v6223, 64
      %v6294 = vpop.permute.xlu0 %6293
      %6295 = vrot.lane.b32.xlu0 %v6224, 64
      %v6296 = vpop.permute.xlu0 %6295
      %6297 = vrot.lane.b32.xlu0 %v6225, 64
      %v6298 = vpop.permute.xlu0 %6297
      %6299 = vrot.lane.b32.xlu0 %v6226, 64
      %v6300 = vpop.permute.xlu0 %6299
      %6301 = vrot.lane.b32.xlu0 %v6227, 64
      %v6302 = vpop.permute.xlu0 %6301
      %6303 = vrot.lane.b32.xlu0 %v6228, 64
      %v6304 = vpop.permute.xlu0 %6303
      %6305 = vrot.lane.b32.xlu0 %v6229, 64
      %v6306 = vpop.permute.xlu0 %6305
      %6307 = vrot.lane.b32.xlu0 %v6230, 64
      %v6308 = vpop.permute.xlu0 %6307
      %6309 = vrot.lane.b32.xlu0 %v6231, 64
      %v6310 = vpop.permute.xlu0 %6309
      %6311 = vrot.lane.b32.xlu0 %v6232, 64
      %v6312 = vpop.permute.xlu0 %6311
      %6313 = vrot.lane.b32.xlu0 %v6233, 64
      %v6314 = vpop.permute.xlu0 %6313
      %6315 = vrot.lane.b32.xlu0 %v6234, 64
      %v6316 = vpop.permute.xlu0 %6315
      %6317 = vrot.lane.b32.xlu0 %v6235, 64
      %v6318 = vpop.permute.xlu0 %6317
      %6319 = vrot.lane.b32.xlu0 %v6236, 64
      %v6320 = vpop.permute.xlu0 %6319
      %6321 = vrot.lane.b32.xlu0 %v6237, 64
      %v6322 = vpop.permute.xlu0 %6321
      %6323 = vrot.lane.b32.xlu0 %v6238, 64
      %v6324 = vpop.permute.xlu0 %6323
      %6325 = vrot.lane.b32.xlu0 %v6239, 64
      %v6326 = vpop.permute.xlu0 %6325
      %6327 = vrot.lane.b32.xlu0 %v6240, 64
      %v6328 = vpop.permute.xlu0 %6327
      %6329 = vrot.lane.b32.xlu0 %v6241, 64
      %v6330 = vpop.permute.xlu0 %6329
      %6331 = vrot.lane.b32.xlu0 %v6242, 64
      %v6332 = vpop.permute.xlu0 %6331
      %6333 = vrot.lane.b32.xlu0 %v6243, 64
      %v6334 = vpop.permute.xlu0 %6333
      %6335 = vrot.lane.b32.xlu0 %v6244, 64
      %v6336 = vpop.permute.xlu0 %6335
      %6337 = vrot.lane.b32.xlu0 %v6245, 64
      %v6338 = vpop.permute.xlu0 %6337
      %6339 = vrot.lane.b32.xlu0 %v6246, 64
      %v6340 = vpop.permute.xlu0 %6339
      %6341 = vrot.lane.b32.xlu0 %v6247, 64
      %v6342 = vpop.permute.xlu0 %6341
      %6343 = vrot.lane.b32.xlu0 %v6248, 64
      %v6344 = vpop.permute.xlu0 %6343
      %vm6377 = vcmask 556544
      %6378 = vst.msk [vmem:[#allocation6] sm:$0xff] %vm6377, %v6282
      %6379 = vst.msk [vmem:[#allocation6 + $0x8] sm:$0xff] %vm6377, %v6284
      %6380 = vst.msk [vmem:[#allocation6 + $0x10] sm:$0xff] %vm6377, %v6286
      %6381 = vst.msk [vmem:[#allocation6 + $0x18] sm:$0xff] %vm6377, %v6288
      %6382 = vst.msk [vmem:[#allocation6 + $0x20] sm:$0xff] %vm6377, %v6290
      %6383 = vst.msk [vmem:[#allocation6 + $0x28] sm:$0xff] %vm6377, %v6292
      %6384 = vst.msk [vmem:[#allocation6 + $0x30] sm:$0xff] %vm6377, %v6294
      %6385 = vst.msk [vmem:[#allocation6 + $0x38] sm:$0xff] %vm6377, %v6296
      %6386 = vst.msk [vmem:[#allocation6 + $0x40] sm:$0xff] %vm6377, %v6298
      %6387 = vst.msk [vmem:[#allocation6 + $0x48] sm:$0xff] %vm6377, %v6300
      %6388 = vst.msk [vmem:[#allocation6 + $0x50] sm:$0xff] %vm6377, %v6302
      %6389 = vst.msk [vmem:[#allocation6 + $0x58] sm:$0xff] %vm6377, %v6304
      %6390 = vst.msk [vmem:[#allocation6 + $0x60] sm:$0xff] %vm6377, %v6306
      %6391 = vst.msk [vmem:[#allocation6 + $0x68] sm:$0xff] %vm6377, %v6308
      %6392 = vst.msk [vmem:[#allocation6 + $0x70] sm:$0xff] %vm6377, %v6310
      %6393 = vst.msk [vmem:[#allocation6 + $0x78] sm:$0xff] %vm6377, %v6312
      %6394 = vst.msk [vmem:[#allocation6 + $0x80] sm:$0xff] %vm6377, %v6314
      %6395 = vst.msk [vmem:[#allocation6 + $0x88] sm:$0xff] %vm6377, %v6316
      %6396 = vst.msk [vmem:[#allocation6 + $0x90] sm:$0xff] %vm6377, %v6318
      %6397 = vst.msk [vmem:[#allocation6 + $0x98] sm:$0xff] %vm6377, %v6320
      %6398 = vst.msk [vmem:[#allocation6 + $0xa0] sm:$0xff] %vm6377, %v6322
      %6399 = vst.msk [vmem:[#allocation6 + $0xa8] sm:$0xff] %vm6377, %v6324
      %6400 = vst.msk [vmem:[#allocation6 + $0xb0] sm:$0xff] %vm6377, %v6326
      %6401 = vst.msk [vmem:[#allocation6 + $0xb8] sm:$0xff] %vm6377, %v6328
      %6402 = vst.msk [vmem:[#allocation6 + $0xc0] sm:$0xff] %vm6377, %v6330
      %6403 = vst.msk [vmem:[#allocation6 + $0xc8] sm:$0xff] %vm6377, %v6332
      %6404 = vst.msk [vmem:[#allocation6 + $0xd0] sm:$0xff] %vm6377, %v6334
      %6405 = vst.msk [vmem:[#allocation6 + $0xd8] sm:$0xff] %vm6377, %v6336
      %6406 = vst.msk [vmem:[#allocation6 + $0xe0] sm:$0xff] %vm6377, %v6338
      %6407 = vst.msk [vmem:[#allocation6 + $0xe8] sm:$0xff] %vm6377, %v6340
      %6408 = vst.msk [vmem:[#allocation6 + $0xf0] sm:$0xff] %vm6377, %v6342
      %6409 = vst.msk [vmem:[#allocation6 + $0xf8] sm:$0xff] %vm6377, %v6344
      %v6410 = vld [vmem:[%s6023 + $0x2] sm:$0xff]
      %v6411 = vld [vmem:[%s6023 + $0xa] sm:$0xff]
      %v6412 = vld [vmem:[%s6023 + $0x1a] sm:$0xff]
      %v6413 = vld [vmem:[%s6023 + $0x22] sm:$0xff]
      %v6414 = vld [vmem:[%s6023 + $0x32] sm:$0xff]
      %v6415 = vld [vmem:[%s6023 + $0x3a] sm:$0xff]
      %v6416 = vld [vmem:[%s6023 + $0x4a] sm:$0xff]
      %v6417 = vld [vmem:[%s6023 + $0x52] sm:$0xff]
      %v6418 = vld [vmem:[%s6023 + $0x62] sm:$0xff]
      %v6419 = vld [vmem:[%s6023 + $0x6a] sm:$0xff]
      %v6420 = vld [vmem:[%s6023 + $0x7a] sm:$0xff]
      %v6421 = vld [vmem:[%s6023 + $0x82] sm:$0xff]
      %v6422 = vld [vmem:[%s6023 + $0x92] sm:$0xff]
      %v6423 = vld [vmem:[%s6023 + $0x9a] sm:$0xff]
      %v6424 = vld [vmem:[%s6023 + $0xaa] sm:$0xff]
      %v6425 = vld [vmem:[%s6023 + $0xb2] sm:$0xff]
      %v6426 = vld [vmem:[%s6023 + $0xc2] sm:$0xff]
      %v6427 = vld [vmem:[%s6023 + $0xca] sm:$0xff]
      %v6428 = vld [vmem:[%s6023 + $0xda] sm:$0xff]
      %v6429 = vld [vmem:[%s6023 + $0xe2] sm:$0xff]
      %v6430 = vld [vmem:[%s6023 + $0xf2] sm:$0xff]
      %v6431 = vld [vmem:[%s6023 + $0xfa] sm:$0xff]
      %v6432 = vld [vmem:[%s6023 + $0x10a] sm:$0xff]
      %v6433 = vld [vmem:[%s6023 + $0x112] sm:$0xff]
      %v6434 = vld [vmem:[%s6023 + $0x122] sm:$0xff]
      %v6435 = vld [vmem:[%s6023 + $0x12a] sm:$0xff]
      %v6436 = vld [vmem:[%s6023 + $0x13a] sm:$0xff]
      %v6437 = vld [vmem:[%s6023 + $0x142] sm:$0xff]
      %v6438 = vld [vmem:[%s6023 + $0x152] sm:$0xff]
      %v6439 = vld [vmem:[%s6023 + $0x15a] sm:$0xff]
      %v6440 = vld [vmem:[%s6023 + $0x16a] sm:$0xff]
      %v6441 = vld [vmem:[%s6023 + $0x172] sm:$0xff]
      %6474 = vrot.lane.b32.xlu0 %v6410, 68
      %v6475 = vpop.permute.xlu0 %6474
      %6476 = vrot.lane.b32.xlu0 %v6411, 68
      %v6477 = vpop.permute.xlu0 %6476
      %6478 = vrot.lane.b32.xlu0 %v6412, 68
      %v6479 = vpop.permute.xlu0 %6478
      %6480 = vrot.lane.b32.xlu0 %v6413, 68
      %v6481 = vpop.permute.xlu0 %6480
      %6482 = vrot.lane.b32.xlu0 %v6414, 68
      %v6483 = vpop.permute.xlu0 %6482
      %6484 = vrot.lane.b32.xlu0 %v6415, 68
      %v6485 = vpop.permute.xlu0 %6484
      %6486 = vrot.lane.b32.xlu0 %v6416, 68
      %v6487 = vpop.permute.xlu0 %6486
      %6488 = vrot.lane.b32.xlu0 %v6417, 68
      %v6489 = vpop.permute.xlu0 %6488
      %6490 = vrot.lane.b32.xlu0 %v6418, 68
      %v6491 = vpop.permute.xlu0 %6490
      %6492 = vrot.lane.b32.xlu0 %v6419, 68
      %v6493 = vpop.permute.xlu0 %6492
      %6494 = vrot.lane.b32.xlu0 %v6420, 68
      %v6495 = vpop.permute.xlu0 %6494
      %6496 = vrot.lane.b32.xlu0 %v6421, 68
      %v6497 = vpop.permute.xlu0 %6496
      %6498 = vrot.lane.b32.xlu0 %v6422, 68
      %v6499 = vpop.permute.xlu0 %6498
      %6500 = vrot.lane.b32.xlu0 %v6423, 68
      %v6501 = vpop.permute.xlu0 %6500
      %6502 = vrot.lane.b32.xlu0 %v6424, 68
      %v6503 = vpop.permute.xlu0 %6502
      %6504 = vrot.lane.b32.xlu0 %v6425, 68
      %v6505 = vpop.permute.xlu0 %6504
      %6506 = vrot.lane.b32.xlu0 %v6426, 68
      %v6507 = vpop.permute.xlu0 %6506
      %6508 = vrot.lane.b32.xlu0 %v6427, 68
      %v6509 = vpop.permute.xlu0 %6508
      %6510 = vrot.lane.b32.xlu0 %v6428, 68
      %v6511 = vpop.permute.xlu0 %6510
      %6512 = vrot.lane.b32.xlu0 %v6429, 68
      %v6513 = vpop.permute.xlu0 %6512
      %6514 = vrot.lane.b32.xlu0 %v6430, 68
      %v6515 = vpop.permute.xlu0 %6514
      %6516 = vrot.lane.b32.xlu0 %v6431, 68
      %v6517 = vpop.permute.xlu0 %6516
      %6518 = vrot.lane.b32.xlu0 %v6432, 68
      %v6519 = vpop.permute.xlu0 %6518
      %6520 = vrot.lane.b32.xlu0 %v6433, 68
      %v6521 = vpop.permute.xlu0 %6520
      %6522 = vrot.lane.b32.xlu0 %v6434, 68
      %v6523 = vpop.permute.xlu0 %6522
      %6524 = vrot.lane.b32.xlu0 %v6435, 68
      %v6525 = vpop.permute.xlu0 %6524
      %6526 = vrot.lane.b32.xlu0 %v6436, 68
      %v6527 = vpop.permute.xlu0 %6526
      %6528 = vrot.lane.b32.xlu0 %v6437, 68
      %v6529 = vpop.permute.xlu0 %6528
      %6530 = vrot.lane.b32.xlu0 %v6438, 68
      %v6531 = vpop.permute.xlu0 %6530
      %6532 = vrot.lane.b32.xlu0 %v6439, 68
      %v6533 = vpop.permute.xlu0 %6532
      %6534 = vrot.lane.b32.xlu0 %v6440, 68
      %v6535 = vpop.permute.xlu0 %6534
      %6536 = vrot.lane.b32.xlu0 %v6441, 68
      %v6537 = vpop.permute.xlu0 %6536
      %vm6570 = vcmask 589344
      %6571 = vst.msk [vmem:[#allocation6] sm:$0xff] %vm6570, %v6475
      %6572 = vst.msk [vmem:[#allocation6 + $0x8] sm:$0xff] %vm6570, %v6477
      %6573 = vst.msk [vmem:[#allocation6 + $0x10] sm:$0xff] %vm6570, %v6479
      %6574 = vst.msk [vmem:[#allocation6 + $0x18] sm:$0xff] %vm6570, %v6481
      %6575 = vst.msk [vmem:[#allocation6 + $0x20] sm:$0xff] %vm6570, %v6483
      %6576 = vst.msk [vmem:[#allocation6 + $0x28] sm:$0xff] %vm6570, %v6485
      %6577 = vst.msk [vmem:[#allocation6 + $0x30] sm:$0xff] %vm6570, %v6487
      %6578 = vst.msk [vmem:[#allocation6 + $0x38] sm:$0xff] %vm6570, %v6489
      %6579 = vst.msk [vmem:[#allocation6 + $0x40] sm:$0xff] %vm6570, %v6491
      %6580 = vst.msk [vmem:[#allocation6 + $0x48] sm:$0xff] %vm6570, %v6493
      %6581 = vst.msk [vmem:[#allocation6 + $0x50] sm:$0xff] %vm6570, %v6495
      %6582 = vst.msk [vmem:[#allocation6 + $0x58] sm:$0xff] %vm6570, %v6497
      %6583 = vst.msk [vmem:[#allocation6 + $0x60] sm:$0xff] %vm6570, %v6499
      %6584 = vst.msk [vmem:[#allocation6 + $0x68] sm:$0xff] %vm6570, %v6501
      %6585 = vst.msk [vmem:[#allocation6 + $0x70] sm:$0xff] %vm6570, %v6503
      %6586 = vst.msk [vmem:[#allocation6 + $0x78] sm:$0xff] %vm6570, %v6505
      %6587 = vst.msk [vmem:[#allocation6 + $0x80] sm:$0xff] %vm6570, %v6507
      %6588 = vst.msk [vmem:[#allocation6 + $0x88] sm:$0xff] %vm6570, %v6509
      %6589 = vst.msk [vmem:[#allocation6 + $0x90] sm:$0xff] %vm6570, %v6511
      %6590 = vst.msk [vmem:[#allocation6 + $0x98] sm:$0xff] %vm6570, %v6513
      %6591 = vst.msk [vmem:[#allocation6 + $0xa0] sm:$0xff] %vm6570, %v6515
      %6592 = vst.msk [vmem:[#allocation6 + $0xa8] sm:$0xff] %vm6570, %v6517
      %6593 = vst.msk [vmem:[#allocation6 + $0xb0] sm:$0xff] %vm6570, %v6519
      %6594 = vst.msk [vmem:[#allocation6 + $0xb8] sm:$0xff] %vm6570, %v6521
      %6595 = vst.msk [vmem:[#allocation6 + $0xc0] sm:$0xff] %vm6570, %v6523
      %6596 = vst.msk [vmem:[#allocation6 + $0xc8] sm:$0xff] %vm6570, %v6525
      %6597 = vst.msk [vmem:[#allocation6 + $0xd0] sm:$0xff] %vm6570, %v6527
      %6598 = vst.msk [vmem:[#allocation6 + $0xd8] sm:$0xff] %vm6570, %v6529
      %6599 = vst.msk [vmem:[#allocation6 + $0xe0] sm:$0xff] %vm6570, %v6531
      %6600 = vst.msk [vmem:[#allocation6 + $0xe8] sm:$0xff] %vm6570, %v6533
      %6601 = vst.msk [vmem:[#allocation6 + $0xf0] sm:$0xff] %vm6570, %v6535
      %6602 = vst.msk [vmem:[#allocation6 + $0xf8] sm:$0xff] %vm6570, %v6537
      %v6603 = vld [vmem:[%s6023 + $0x3] sm:$0xff]
      %v6604 = vld [vmem:[%s6023 + $0xb] sm:$0xff]
      %v6605 = vld [vmem:[%s6023 + $0x1b] sm:$0xff]
      %v6606 = vld [vmem:[%s6023 + $0x23] sm:$0xff]
      %v6607 = vld [vmem:[%s6023 + $0x33] sm:$0xff]
      %v6608 = vld [vmem:[%s6023 + $0x3b] sm:$0xff]
      %v6609 = vld [vmem:[%s6023 + $0x4b] sm:$0xff]
      %v6610 = vld [vmem:[%s6023 + $0x53] sm:$0xff]
      %v6611 = vld [vmem:[%s6023 + $0x63] sm:$0xff]
      %v6612 = vld [vmem:[%s6023 + $0x6b] sm:$0xff]
      %v6613 = vld [vmem:[%s6023 + $0x7b] sm:$0xff]
      %v6614 = vld [vmem:[%s6023 + $0x83] sm:$0xff]
      %v6615 = vld [vmem:[%s6023 + $0x93] sm:$0xff]
      %v6616 = vld [vmem:[%s6023 + $0x9b] sm:$0xff]
      %v6617 = vld [vmem:[%s6023 + $0xab] sm:$0xff]
      %v6618 = vld [vmem:[%s6023 + $0xb3] sm:$0xff]
      %v6619 = vld [vmem:[%s6023 + $0xc3] sm:$0xff]
      %v6620 = vld [vmem:[%s6023 + $0xcb] sm:$0xff]
      %v6621 = vld [vmem:[%s6023 + $0xdb] sm:$0xff]
      %v6622 = vld [vmem:[%s6023 + $0xe3] sm:$0xff]
      %v6623 = vld [vmem:[%s6023 + $0xf3] sm:$0xff]
      %v6624 = vld [vmem:[%s6023 + $0xfb] sm:$0xff]
      %v6625 = vld [vmem:[%s6023 + $0x10b] sm:$0xff]
      %v6626 = vld [vmem:[%s6023 + $0x113] sm:$0xff]
      %v6627 = vld [vmem:[%s6023 + $0x123] sm:$0xff]
      %v6628 = vld [vmem:[%s6023 + $0x12b] sm:$0xff]
      %v6629 = vld [vmem:[%s6023 + $0x13b] sm:$0xff]
      %v6630 = vld [vmem:[%s6023 + $0x143] sm:$0xff]
      %v6631 = vld [vmem:[%s6023 + $0x153] sm:$0xff]
      %v6632 = vld [vmem:[%s6023 + $0x15b] sm:$0xff]
      %v6633 = vld [vmem:[%s6023 + $0x16b] sm:$0xff]
      %v6634 = vld [vmem:[%s6023 + $0x173] sm:$0xff]
      %6667 = vrot.lane.b32.xlu0 %v6603, 72
      %v6668 = vpop.permute.xlu0 %6667
      %6669 = vrot.lane.b32.xlu0 %v6604, 72
      %v6670 = vpop.permute.xlu0 %6669
      %6671 = vrot.lane.b32.xlu0 %v6605, 72
      %v6672 = vpop.permute.xlu0 %6671
      %6673 = vrot.lane.b32.xlu0 %v6606, 72
      %v6674 = vpop.permute.xlu0 %6673
      %6675 = vrot.lane.b32.xlu0 %v6607, 72
      %v6676 = vpop.permute.xlu0 %6675
      %6677 = vrot.lane.b32.xlu0 %v6608, 72
      %v6678 = vpop.permute.xlu0 %6677
      %6679 = vrot.lane.b32.xlu0 %v6609, 72
      %v6680 = vpop.permute.xlu0 %6679
      %6681 = vrot.lane.b32.xlu0 %v6610, 72
      %v6682 = vpop.permute.xlu0 %6681
      %6683 = vrot.lane.b32.xlu0 %v6611, 72
      %v6684 = vpop.permute.xlu0 %6683
      %6685 = vrot.lane.b32.xlu0 %v6612, 72
      %v6686 = vpop.permute.xlu0 %6685
      %6687 = vrot.lane.b32.xlu0 %v6613, 72
      %v6688 = vpop.permute.xlu0 %6687
      %6689 = vrot.lane.b32.xlu0 %v6614, 72
      %v6690 = vpop.permute.xlu0 %6689
      %6691 = vrot.lane.b32.xlu0 %v6615, 72
      %v6692 = vpop.permute.xlu0 %6691
      %6693 = vrot.lane.b32.xlu0 %v6616, 72
      %v6694 = vpop.permute.xlu0 %6693
      %6695 = vrot.lane.b32.xlu0 %v6617, 72
      %v6696 = vpop.permute.xlu0 %6695
      %6697 = vrot.lane.b32.xlu0 %v6618, 72
      %v6698 = vpop.permute.xlu0 %6697
      %6699 = vrot.lane.b32.xlu0 %v6619, 72
      %v6700 = vpop.permute.xlu0 %6699
      %6701 = vrot.lane.b32.xlu0 %v6620, 72
      %v6702 = vpop.permute.xlu0 %6701
      %6703 = vrot.lane.b32.xlu0 %v6621, 72
      %v6704 = vpop.permute.xlu0 %6703
      %6705 = vrot.lane.b32.xlu0 %v6622, 72
      %v6706 = vpop.permute.xlu0 %6705
      %6707 = vrot.lane.b32.xlu0 %v6623, 72
      %v6708 = vpop.permute.xlu0 %6707
      %6709 = vrot.lane.b32.xlu0 %v6624, 72
      %v6710 = vpop.permute.xlu0 %6709
      %6711 = vrot.lane.b32.xlu0 %v6625, 72
      %v6712 = vpop.permute.xlu0 %6711
      %6713 = vrot.lane.b32.xlu0 %v6626, 72
      %v6714 = vpop.permute.xlu0 %6713
      %6715 = vrot.lane.b32.xlu0 %v6627, 72
      %v6716 = vpop.permute.xlu0 %6715
      %6717 = vrot.lane.b32.xlu0 %v6628, 72
      %v6718 = vpop.permute.xlu0 %6717
      %6719 = vrot.lane.b32.xlu0 %v6629, 72
      %v6720 = vpop.permute.xlu0 %6719
      %6721 = vrot.lane.b32.xlu0 %v6630, 72
      %v6722 = vpop.permute.xlu0 %6721
      %6723 = vrot.lane.b32.xlu0 %v6631, 72
      %v6724 = vpop.permute.xlu0 %6723
      %6725 = vrot.lane.b32.xlu0 %v6632, 72
      %v6726 = vpop.permute.xlu0 %6725
      %6727 = vrot.lane.b32.xlu0 %v6633, 72
      %v6728 = vpop.permute.xlu0 %6727
      %6729 = vrot.lane.b32.xlu0 %v6634, 72
      %v6730 = vpop.permute.xlu0 %6729
      %vm6763 = vcmask 622144
      %6764 = vst.msk [vmem:[#allocation6] sm:$0xff] %vm6763, %v6668
      %6765 = vst.msk [vmem:[#allocation6 + $0x8] sm:$0xff] %vm6763, %v6670
      %6766 = vst.msk [vmem:[#allocation6 + $0x10] sm:$0xff] %vm6763, %v6672
      %6767 = vst.msk [vmem:[#allocation6 + $0x18] sm:$0xff] %vm6763, %v6674
      %6768 = vst.msk [vmem:[#allocation6 + $0x20] sm:$0xff] %vm6763, %v6676
      %6769 = vst.msk [vmem:[#allocation6 + $0x28] sm:$0xff] %vm6763, %v6678
      %6770 = vst.msk [vmem:[#allocation6 + $0x30] sm:$0xff] %vm6763, %v6680
      %6771 = vst.msk [vmem:[#allocation6 + $0x38] sm:$0xff] %vm6763, %v6682
      %6772 = vst.msk [vmem:[#allocation6 + $0x40] sm:$0xff] %vm6763, %v6684
      %6773 = vst.msk [vmem:[#allocation6 + $0x48] sm:$0xff] %vm6763, %v6686
      %6774 = vst.msk [vmem:[#allocation6 + $0x50] sm:$0xff] %vm6763, %v6688
      %6775 = vst.msk [vmem:[#allocation6 + $0x58] sm:$0xff] %vm6763, %v6690
      %6776 = vst.msk [vmem:[#allocation6 + $0x60] sm:$0xff] %vm6763, %v6692
      %6777 = vst.msk [vmem:[#allocation6 + $0x68] sm:$0xff] %vm6763, %v6694
      %6778 = vst.msk [vmem:[#allocation6 + $0x70] sm:$0xff] %vm6763, %v6696
      %6779 = vst.msk [vmem:[#allocation6 + $0x78] sm:$0xff] %vm6763, %v6698
      %6780 = vst.msk [vmem:[#allocation6 + $0x80] sm:$0xff] %vm6763, %v6700
      %6781 = vst.msk [vmem:[#allocation6 + $0x88] sm:$0xff] %vm6763, %v6702
      %6782 = vst.msk [vmem:[#allocation6 + $0x90] sm:$0xff] %vm6763, %v6704
      %6783 = vst.msk [vmem:[#allocation6 + $0x98] sm:$0xff] %vm6763, %v6706
      %6784 = vst.msk [vmem:[#allocation6 + $0xa0] sm:$0xff] %vm6763, %v6708
      %6785 = vst.msk [vmem:[#allocation6 + $0xa8] sm:$0xff] %vm6763, %v6710
      %6786 = vst.msk [vmem:[#allocation6 + $0xb0] sm:$0xff] %vm6763, %v6712
      %6787 = vst.msk [vmem:[#allocation6 + $0xb8] sm:$0xff] %vm6763, %v6714
      %6788 = vst.msk [vmem:[#allocation6 + $0xc0] sm:$0xff] %vm6763, %v6716
      %6789 = vst.msk [vmem:[#allocation6 + $0xc8] sm:$0xff] %vm6763, %v6718
      %6790 = vst.msk [vmem:[#allocation6 + $0xd0] sm:$0xff] %vm6763, %v6720
      %6791 = vst.msk [vmem:[#allocation6 + $0xd8] sm:$0xff] %vm6763, %v6722
      %6792 = vst.msk [vmem:[#allocation6 + $0xe0] sm:$0xff] %vm6763, %v6724
      %6793 = vst.msk [vmem:[#allocation6 + $0xe8] sm:$0xff] %vm6763, %v6726
      %6794 = vst.msk [vmem:[#allocation6 + $0xf0] sm:$0xff] %vm6763, %v6728
      %6795 = vst.msk [vmem:[#allocation6 + $0xf8] sm:$0xff] %vm6763, %v6730
      %v6796 = vld [vmem:[%s6023 + $0x4] sm:$0xff]
      %v6797 = vld [vmem:[%s6023 + $0xc] sm:$0xff]
      %v6798 = vld [vmem:[%s6023 + $0x1c] sm:$0xff]
      %v6799 = vld [vmem:[%s6023 + $0x24] sm:$0xff]
      %v6800 = vld [vmem:[%s6023 + $0x34] sm:$0xff]
      %v6801 = vld [vmem:[%s6023 + $0x3c] sm:$0xff]
      %v6802 = vld [vmem:[%s6023 + $0x4c] sm:$0xff]
      %v6803 = vld [vmem:[%s6023 + $0x54] sm:$0xff]
      %v6804 = vld [vmem:[%s6023 + $0x64] sm:$0xff]
      %v6805 = vld [vmem:[%s6023 + $0x6c] sm:$0xff]
      %v6806 = vld [vmem:[%s6023 + $0x7c] sm:$0xff]
      %v6807 = vld [vmem:[%s6023 + $0x84] sm:$0xff]
      %v6808 = vld [vmem:[%s6023 + $0x94] sm:$0xff]
      %v6809 = vld [vmem:[%s6023 + $0x9c] sm:$0xff]
      %v6810 = vld [vmem:[%s6023 + $0xac] sm:$0xff]
      %v6811 = vld [vmem:[%s6023 + $0xb4] sm:$0xff]
      %v6812 = vld [vmem:[%s6023 + $0xc4] sm:$0xff]
      %v6813 = vld [vmem:[%s6023 + $0xcc] sm:$0xff]
      %v6814 = vld [vmem:[%s6023 + $0xdc] sm:$0xff]
      %v6815 = vld [vmem:[%s6023 + $0xe4] sm:$0xff]
      %v6816 = vld [vmem:[%s6023 + $0xf4] sm:$0xff]
      %v6817 = vld [vmem:[%s6023 + $0xfc] sm:$0xff]
      %v6818 = vld [vmem:[%s6023 + $0x10c] sm:$0xff]
      %v6819 = vld [vmem:[%s6023 + $0x114] sm:$0xff]
      %v6820 = vld [vmem:[%s6023 + $0x124] sm:$0xff]
      %v6821 = vld [vmem:[%s6023 + $0x12c] sm:$0xff]
      %v6822 = vld [vmem:[%s6023 + $0x13c] sm:$0xff]
      %v6823 = vld [vmem:[%s6023 + $0x144] sm:$0xff]
      %v6824 = vld [vmem:[%s6023 + $0x154] sm:$0xff]
      %v6825 = vld [vmem:[%s6023 + $0x15c] sm:$0xff]
      %v6826 = vld [vmem:[%s6023 + $0x16c] sm:$0xff]
      %v6827 = vld [vmem:[%s6023 + $0x174] sm:$0xff]
      %6860 = vrot.lane.b32.xlu0 %v6796, 76
      %v6861 = vpop.permute.xlu0 %6860
      %6862 = vrot.lane.b32.xlu0 %v6797, 76
      %v6863 = vpop.permute.xlu0 %6862
      %6864 = vrot.lane.b32.xlu0 %v6798, 76
      %v6865 = vpop.permute.xlu0 %6864
      %6866 = vrot.lane.b32.xlu0 %v6799, 76
      %v6867 = vpop.permute.xlu0 %6866
      %6868 = vrot.lane.b32.xlu0 %v6800, 76
      %v6869 = vpop.permute.xlu0 %6868
      %6870 = vrot.lane.b32.xlu0 %v6801, 76
      %v6871 = vpop.permute.xlu0 %6870
      %6872 = vrot.lane.b32.xlu0 %v6802, 76
      %v6873 = vpop.permute.xlu0 %6872
      %6874 = vrot.lane.b32.xlu0 %v6803, 76
      %v6875 = vpop.permute.xlu0 %6874
      %6876 = vrot.lane.b32.xlu0 %v6804, 76
      %v6877 = vpop.permute.xlu0 %6876
      %6878 = vrot.lane.b32.xlu0 %v6805, 76
      %v6879 = vpop.permute.xlu0 %6878
      %6880 = vrot.lane.b32.xlu0 %v6806, 76
      %v6881 = vpop.permute.xlu0 %6880
      %6882 = vrot.lane.b32.xlu0 %v6807, 76
      %v6883 = vpop.permute.xlu0 %6882
      %6884 = vrot.lane.b32.xlu0 %v6808, 76
      %v6885 = vpop.permute.xlu0 %6884
      %6886 = vrot.lane.b32.xlu0 %v6809, 76
      %v6887 = vpop.permute.xlu0 %6886
      %6888 = vrot.lane.b32.xlu0 %v6810, 76
      %v6889 = vpop.permute.xlu0 %6888
      %6890 = vrot.lane.b32.xlu0 %v6811, 76
      %v6891 = vpop.permute.xlu0 %6890
      %6892 = vrot.lane.b32.xlu0 %v6812, 76
      %v6893 = vpop.permute.xlu0 %6892
      %6894 = vrot.lane.b32.xlu0 %v6813, 76
      %v6895 = vpop.permute.xlu0 %6894
      %6896 = vrot.lane.b32.xlu0 %v6814, 76
      %v6897 = vpop.permute.xlu0 %6896
      %6898 = vrot.lane.b32.xlu0 %v6815, 76
      %v6899 = vpop.permute.xlu0 %6898
      %6900 = vrot.lane.b32.xlu0 %v6816, 76
      %v6901 = vpop.permute.xlu0 %6900
      %6902 = vrot.lane.b32.xlu0 %v6817, 76
      %v6903 = vpop.permute.xlu0 %6902
      %6904 = vrot.lane.b32.xlu0 %v6818, 76
      %v6905 = vpop.permute.xlu0 %6904
      %6906 = vrot.lane.b32.xlu0 %v6819, 76
      %v6907 = vpop.permute.xlu0 %6906
      %6908 = vrot.lane.b32.xlu0 %v6820, 76
      %v6909 = vpop.permute.xlu0 %6908
      %6910 = vrot.lane.b32.xlu0 %v6821, 76
      %v6911 = vpop.permute.xlu0 %6910
      %6912 = vrot.lane.b32.xlu0 %v6822, 76
      %v6913 = vpop.permute.xlu0 %6912
      %6914 = vrot.lane.b32.xlu0 %v6823, 76
      %v6915 = vpop.permute.xlu0 %6914
      %6916 = vrot.lane.b32.xlu0 %v6824, 76
      %v6917 = vpop.permute.xlu0 %6916
      %6918 = vrot.lane.b32.xlu0 %v6825, 76
      %v6919 = vpop.permute.xlu0 %6918
      %6920 = vrot.lane.b32.xlu0 %v6826, 76
      %v6921 = vpop.permute.xlu0 %6920
      %6922 = vrot.lane.b32.xlu0 %v6827, 76
      %v6923 = vpop.permute.xlu0 %6922
      %vm6956 = vcmask 654944
      %6957 = vst.msk [vmem:[#allocation6] sm:$0xff] %vm6956, %v6861
      %6958 = vst.msk [vmem:[#allocation6 + $0x8] sm:$0xff] %vm6956, %v6863
      %6959 = vst.msk [vmem:[#allocation6 + $0x10] sm:$0xff] %vm6956, %v6865
      %6960 = vst.msk [vmem:[#allocation6 + $0x18] sm:$0xff] %vm6956, %v6867
      %6961 = vst.msk [vmem:[#allocation6 + $0x20] sm:$0xff] %vm6956, %v6869
      %6962 = vst.msk [vmem:[#allocation6 + $0x28] sm:$0xff] %vm6956, %v6871
      %6963 = vst.msk [vmem:[#allocation6 + $0x30] sm:$0xff] %vm6956, %v6873
      %6964 = vst.msk [vmem:[#allocation6 + $0x38] sm:$0xff] %vm6956, %v6875
      %6965 = vst.msk [vmem:[#allocation6 + $0x40] sm:$0xff] %vm6956, %v6877
      %6966 = vst.msk [vmem:[#allocation6 + $0x48] sm:$0xff] %vm6956, %v6879
      %6967 = vst.msk [vmem:[#allocation6 + $0x50] sm:$0xff] %vm6956, %v6881
      %6968 = vst.msk [vmem:[#allocation6 + $0x58] sm:$0xff] %vm6956, %v6883
      %6969 = vst.msk [vmem:[#allocation6 + $0x60] sm:$0xff] %vm6956, %v6885
      %6970 = vst.msk [vmem:[#allocation6 + $0x68] sm:$0xff] %vm6956, %v6887
      %6971 = vst.msk [vmem:[#allocation6 + $0x70] sm:$0xff] %vm6956, %v6889
      %6972 = vst.msk [vmem:[#allocation6 + $0x78] sm:$0xff] %vm6956, %v6891
      %6973 = vst.msk [vmem:[#allocation6 + $0x80] sm:$0xff] %vm6956, %v6893
      %6974 = vst.msk [vmem:[#allocation6 + $0x88] sm:$0xff] %vm6956, %v6895
      %6975 = vst.msk [vmem:[#allocation6 + $0x90] sm:$0xff] %vm6956, %v6897
      %6976 = vst.msk [vmem:[#allocation6 + $0x98] sm:$0xff] %vm6956, %v6899
      %6977 = vst.msk [vmem:[#allocation6 + $0xa0] sm:$0xff] %vm6956, %v6901
      %6978 = vst.msk [vmem:[#allocation6 + $0xa8] sm:$0xff] %vm6956, %v6903
      %6979 = vst.msk [vmem:[#allocation6 + $0xb0] sm:$0xff] %vm6956, %v6905
      %6980 = vst.msk [vmem:[#allocation6 + $0xb8] sm:$0xff] %vm6956, %v6907
      %6981 = vst.msk [vmem:[#allocation6 + $0xc0] sm:$0xff] %vm6956, %v6909
      %6982 = vst.msk [vmem:[#allocation6 + $0xc8] sm:$0xff] %vm6956, %v6911
      %6983 = vst.msk [vmem:[#allocation6 + $0xd0] sm:$0xff] %vm6956, %v6913
      %6984 = vst.msk [vmem:[#allocation6 + $0xd8] sm:$0xff] %vm6956, %v6915
      %6985 = vst.msk [vmem:[#allocation6 + $0xe0] sm:$0xff] %vm6956, %v6917
      %6986 = vst.msk [vmem:[#allocation6 + $0xe8] sm:$0xff] %vm6956, %v6919
      %6987 = vst.msk [vmem:[#allocation6 + $0xf0] sm:$0xff] %vm6956, %v6921
      %6988 = vst.msk [vmem:[#allocation6 + $0xf8] sm:$0xff] %vm6956, %v6923
      %s6989 = scalar_lea.vmem [#allocation4], 96
      %v6990 = vld [vmem:[%s6989] sm:$0xff]
      %v6991 = vld [vmem:[%s6989 + $0x8] sm:$0xff]
      %v6992 = vld [vmem:[%s6989 + $0x18] sm:$0xff]
      %v6993 = vld [vmem:[%s6989 + $0x20] sm:$0xff]
      %v6994 = vld [vmem:[%s6989 + $0x30] sm:$0xff]
      %v6995 = vld [vmem:[%s6989 + $0x38] sm:$0xff]
      %v6996 = vld [vmem:[%s6989 + $0x48] sm:$0xff]
      %v6997 = vld [vmem:[%s6989 + $0x50] sm:$0xff]
      %v6998 = vld [vmem:[%s6989 + $0x60] sm:$0xff]
      %v6999 = vld [vmem:[%s6989 + $0x68] sm:$0xff]
      %v7000 = vld [vmem:[%s6989 + $0x78] sm:$0xff]
      %v7001 = vld [vmem:[%s6989 + $0x80] sm:$0xff]
      %v7002 = vld [vmem:[%s6989 + $0x90] sm:$0xff]
      %v7003 = vld [vmem:[%s6989 + $0x98] sm:$0xff]
      %v7004 = vld [vmem:[%s6989 + $0xa8] sm:$0xff]
      %v7005 = vld [vmem:[%s6989 + $0xb0] sm:$0xff]
      %v7006 = vld [vmem:[%s6989 + $0xc0] sm:$0xff]
      %v7007 = vld [vmem:[%s6989 + $0xc8] sm:$0xff]
      %v7008 = vld [vmem:[%s6989 + $0xd8] sm:$0xff]
      %v7009 = vld [vmem:[%s6989 + $0xe0] sm:$0xff]
      %v7010 = vld [vmem:[%s6989 + $0xf0] sm:$0xff]
      %v7011 = vld [vmem:[%s6989 + $0xf8] sm:$0xff]
      %v7012 = vld [vmem:[%s6989 + $0x108] sm:$0xff]
      %v7013 = vld [vmem:[%s6989 + $0x110] sm:$0xff]
      %v7014 = vld [vmem:[%s6989 + $0x120] sm:$0xff]
      %v7015 = vld [vmem:[%s6989 + $0x128] sm:$0xff]
      %v7016 = vld [vmem:[%s6989 + $0x138] sm:$0xff]
      %v7017 = vld [vmem:[%s6989 + $0x140] sm:$0xff]
      %v7018 = vld [vmem:[%s6989 + $0x150] sm:$0xff]
      %v7019 = vld [vmem:[%s6989 + $0x158] sm:$0xff]
      %v7020 = vld [vmem:[%s6989 + $0x168] sm:$0xff]
      %v7021 = vld [vmem:[%s6989 + $0x170] sm:$0xff]
      %7054 = vrot.lane.b32.xlu0 %v6990, 80
      %v7055 = vpop.permute.xlu0 %7054
      %7056 = vrot.lane.b32.xlu0 %v6991, 80
      %v7057 = vpop.permute.xlu0 %7056
      %7058 = vrot.lane.b32.xlu0 %v6992, 80
      %v7059 = vpop.permute.xlu0 %7058
      %7060 = vrot.lane.b32.xlu0 %v6993, 80
      %v7061 = vpop.permute.xlu0 %7060
      %7062 = vrot.lane.b32.xlu0 %v6994, 80
      %v7063 = vpop.permute.xlu0 %7062
      %7064 = vrot.lane.b32.xlu0 %v6995, 80
      %v7065 = vpop.permute.xlu0 %7064
      %7066 = vrot.lane.b32.xlu0 %v6996, 80
      %v7067 = vpop.permute.xlu0 %7066
      %7068 = vrot.lane.b32.xlu0 %v6997, 80
      %v7069 = vpop.permute.xlu0 %7068
      %7070 = vrot.lane.b32.xlu0 %v6998, 80
      %v7071 = vpop.permute.xlu0 %7070
      %7072 = vrot.lane.b32.xlu0 %v6999, 80
      %v7073 = vpop.permute.xlu0 %7072
      %7074 = vrot.lane.b32.xlu0 %v7000, 80
      %v7075 = vpop.permute.xlu0 %7074
      %7076 = vrot.lane.b32.xlu0 %v7001, 80
      %v7077 = vpop.permute.xlu0 %7076
      %7078 = vrot.lane.b32.xlu0 %v7002, 80
      %v7079 = vpop.permute.xlu0 %7078
      %7080 = vrot.lane.b32.xlu0 %v7003, 80
      %v7081 = vpop.permute.xlu0 %7080
      %7082 = vrot.lane.b32.xlu0 %v7004, 80
      %v7083 = vpop.permute.xlu0 %7082
      %7084 = vrot.lane.b32.xlu0 %v7005, 80
      %v7085 = vpop.permute.xlu0 %7084
      %7086 = vrot.lane.b32.xlu0 %v7006, 80
      %v7087 = vpop.permute.xlu0 %7086
      %7088 = vrot.lane.b32.xlu0 %v7007, 80
      %v7089 = vpop.permute.xlu0 %7088
      %7090 = vrot.lane.b32.xlu0 %v7008, 80
      %v7091 = vpop.permute.xlu0 %7090
      %7092 = vrot.lane.b32.xlu0 %v7009, 80
      %v7093 = vpop.permute.xlu0 %7092
      %7094 = vrot.lane.b32.xlu0 %v7010, 80
      %v7095 = vpop.permute.xlu0 %7094
      %7096 = vrot.lane.b32.xlu0 %v7011, 80
      %v7097 = vpop.permute.xlu0 %7096
      %7098 = vrot.lane.b32.xlu0 %v7012, 80
      %v7099 = vpop.permute.xlu0 %7098
      %7100 = vrot.lane.b32.xlu0 %v7013, 80
      %v7101 = vpop.permute.xlu0 %7100
      %7102 = vrot.lane.b32.xlu0 %v7014, 80
      %v7103 = vpop.permute.xlu0 %7102
      %7104 = vrot.lane.b32.xlu0 %v7015, 80
      %v7105 = vpop.permute.xlu0 %7104
      %7106 = vrot.lane.b32.xlu0 %v7016, 80
      %v7107 = vpop.permute.xlu0 %7106
      %7108 = vrot.lane.b32.xlu0 %v7017, 80
      %v7109 = vpop.permute.xlu0 %7108
      %7110 = vrot.lane.b32.xlu0 %v7018, 80
      %v7111 = vpop.permute.xlu0 %7110
      %7112 = vrot.lane.b32.xlu0 %v7019, 80
      %v7113 = vpop.permute.xlu0 %7112
      %7114 = vrot.lane.b32.xlu0 %v7020, 80
      %v7115 = vpop.permute.xlu0 %7114
      %7116 = vrot.lane.b32.xlu0 %v7021, 80
      %v7117 = vpop.permute.xlu0 %7116
      %vm7150 = vcmask 687744
      %7151 = vst.msk [vmem:[#allocation6] sm:$0xff] %vm7150, %v7055
      %7152 = vst.msk [vmem:[#allocation6 + $0x8] sm:$0xff] %vm7150, %v7057
      %7153 = vst.msk [vmem:[#allocation6 + $0x10] sm:$0xff] %vm7150, %v7059
      %7154 = vst.msk [vmem:[#allocation6 + $0x18] sm:$0xff] %vm7150, %v7061
      %7155 = vst.msk [vmem:[#allocation6 + $0x20] sm:$0xff] %vm7150, %v7063
      %7156 = vst.msk [vmem:[#allocation6 + $0x28] sm:$0xff] %vm7150, %v7065
      %7157 = vst.msk [vmem:[#allocation6 + $0x30] sm:$0xff] %vm7150, %v7067
      %7158 = vst.msk [vmem:[#allocation6 + $0x38] sm:$0xff] %vm7150, %v7069
      %7159 = vst.msk [vmem:[#allocation6 + $0x40] sm:$0xff] %vm7150, %v7071
      %7160 = vst.msk [vmem:[#allocation6 + $0x48] sm:$0xff] %vm7150, %v7073
      %7161 = vst.msk [vmem:[#allocation6 + $0x50] sm:$0xff] %vm7150, %v7075
      %7162 = vst.msk [vmem:[#allocation6 + $0x58] sm:$0xff] %vm7150, %v7077
      %7163 = vst.msk [vmem:[#allocation6 + $0x60] sm:$0xff] %vm7150, %v7079
      %7164 = vst.msk [vmem:[#allocation6 + $0x68] sm:$0xff] %vm7150, %v7081
      %7165 = vst.msk [vmem:[#allocation6 + $0x70] sm:$0xff] %vm7150, %v7083
      %7166 = vst.msk [vmem:[#allocation6 + $0x78] sm:$0xff] %vm7150, %v7085
      %7167 = vst.msk [vmem:[#allocation6 + $0x80] sm:$0xff] %vm7150, %v7087
      %7168 = vst.msk [vmem:[#allocation6 + $0x88] sm:$0xff] %vm7150, %v7089
      %7169 = vst.msk [vmem:[#allocation6 + $0x90] sm:$0xff] %vm7150, %v7091
      %7170 = vst.msk [vmem:[#allocation6 + $0x98] sm:$0xff] %vm7150, %v7093
      %7171 = vst.msk [vmem:[#allocation6 + $0xa0] sm:$0xff] %vm7150, %v7095
      %7172 = vst.msk [vmem:[#allocation6 + $0xa8] sm:$0xff] %vm7150, %v7097
      %7173 = vst.msk [vmem:[#allocation6 + $0xb0] sm:$0xff] %vm7150, %v7099
      %7174 = vst.msk [vmem:[#allocation6 + $0xb8] sm:$0xff] %vm7150, %v7101
      %7175 = vst.msk [vmem:[#allocation6 + $0xc0] sm:$0xff] %vm7150, %v7103
      %7176 = vst.msk [vmem:[#allocation6 + $0xc8] sm:$0xff] %vm7150, %v7105
      %7177 = vst.msk [vmem:[#allocation6 + $0xd0] sm:$0xff] %vm7150, %v7107
      %7178 = vst.msk [vmem:[#allocation6 + $0xd8] sm:$0xff] %vm7150, %v7109
      %7179 = vst.msk [vmem:[#allocation6 + $0xe0] sm:$0xff] %vm7150, %v7111
      %7180 = vst.msk [vmem:[#allocation6 + $0xe8] sm:$0xff] %vm7150, %v7113
      %7181 = vst.msk [vmem:[#allocation6 + $0xf0] sm:$0xff] %vm7150, %v7115
      %7182 = vst.msk [vmem:[#allocation6 + $0xf8] sm:$0xff] %vm7150, %v7117
      %v7183 = vld [vmem:[%s6989 + $0x1] sm:$0xff]
      %v7184 = vld [vmem:[%s6989 + $0x9] sm:$0xff]
      %v7185 = vld [vmem:[%s6989 + $0x19] sm:$0xff]
      %v7186 = vld [vmem:[%s6989 + $0x21] sm:$0xff]
      %v7187 = vld [vmem:[%s6989 + $0x31] sm:$0xff]
      %v7188 = vld [vmem:[%s6989 + $0x39] sm:$0xff]
      %v7189 = vld [vmem:[%s6989 + $0x49] sm:$0xff]
      %v7190 = vld [vmem:[%s6989 + $0x51] sm:$0xff]
      %v7191 = vld [vmem:[%s6989 + $0x61] sm:$0xff]
      %v7192 = vld [vmem:[%s6989 + $0x69] sm:$0xff]
      %v7193 = vld [vmem:[%s6989 + $0x79] sm:$0xff]
      %v7194 = vld [vmem:[%s6989 + $0x81] sm:$0xff]
      %v7195 = vld [vmem:[%s6989 + $0x91] sm:$0xff]
      %v7196 = vld [vmem:[%s6989 + $0x99] sm:$0xff]
      %v7197 = vld [vmem:[%s6989 + $0xa9] sm:$0xff]
      %v7198 = vld [vmem:[%s6989 + $0xb1] sm:$0xff]
      %v7199 = vld [vmem:[%s6989 + $0xc1] sm:$0xff]
      %v7200 = vld [vmem:[%s6989 + $0xc9] sm:$0xff]
      %v7201 = vld [vmem:[%s6989 + $0xd9] sm:$0xff]
      %v7202 = vld [vmem:[%s6989 + $0xe1] sm:$0xff]
      %v7203 = vld [vmem:[%s6989 + $0xf1] sm:$0xff]
      %v7204 = vld [vmem:[%s6989 + $0xf9] sm:$0xff]
      %v7205 = vld [vmem:[%s6989 + $0x109] sm:$0xff]
      %v7206 = vld [vmem:[%s6989 + $0x111] sm:$0xff]
      %v7207 = vld [vmem:[%s6989 + $0x121] sm:$0xff]
      %v7208 = vld [vmem:[%s6989 + $0x129] sm:$0xff]
      %v7209 = vld [vmem:[%s6989 + $0x139] sm:$0xff]
      %v7210 = vld [vmem:[%s6989 + $0x141] sm:$0xff]
      %v7211 = vld [vmem:[%s6989 + $0x151] sm:$0xff]
      %v7212 = vld [vmem:[%s6989 + $0x159] sm:$0xff]
      %v7213 = vld [vmem:[%s6989 + $0x169] sm:$0xff]
      %v7214 = vld [vmem:[%s6989 + $0x171] sm:$0xff]
      %7247 = vrot.lane.b32.xlu0 %v7183, 84
      %v7248 = vpop.permute.xlu0 %7247
      %7249 = vrot.lane.b32.xlu0 %v7184, 84
      %v7250 = vpop.permute.xlu0 %7249
      %7251 = vrot.lane.b32.xlu0 %v7185, 84
      %v7252 = vpop.permute.xlu0 %7251
      %7253 = vrot.lane.b32.xlu0 %v7186, 84
      %v7254 = vpop.permute.xlu0 %7253
      %7255 = vrot.lane.b32.xlu0 %v7187, 84
      %v7256 = vpop.permute.xlu0 %7255
      %7257 = vrot.lane.b32.xlu0 %v7188, 84
      %v7258 = vpop.permute.xlu0 %7257
      %7259 = vrot.lane.b32.xlu0 %v7189, 84
      %v7260 = vpop.permute.xlu0 %7259
      %7261 = vrot.lane.b32.xlu0 %v7190, 84
      %v7262 = vpop.permute.xlu0 %7261
      %7263 = vrot.lane.b32.xlu0 %v7191, 84
      %v7264 = vpop.permute.xlu0 %7263
      %7265 = vrot.lane.b32.xlu0 %v7192, 84
      %v7266 = vpop.permute.xlu0 %7265
      %7267 = vrot.lane.b32.xlu0 %v7193, 84
      %v7268 = vpop.permute.xlu0 %7267
      %7269 = vrot.lane.b32.xlu0 %v7194, 84
      %v7270 = vpop.permute.xlu0 %7269
      %7271 = vrot.lane.b32.xlu0 %v7195, 84
      %v7272 = vpop.permute.xlu0 %7271
      %7273 = vrot.lane.b32.xlu0 %v7196, 84
      %v7274 = vpop.permute.xlu0 %7273
      %7275 = vrot.lane.b32.xlu0 %v7197, 84
      %v7276 = vpop.permute.xlu0 %7275
      %7277 = vrot.lane.b32.xlu0 %v7198, 84
      %v7278 = vpop.permute.xlu0 %7277
      %7279 = vrot.lane.b32.xlu0 %v7199, 84
      %v7280 = vpop.permute.xlu0 %7279
      %7281 = vrot.lane.b32.xlu0 %v7200, 84
      %v7282 = vpop.permute.xlu0 %7281
      %7283 = vrot.lane.b32.xlu0 %v7201, 84
      %v7284 = vpop.permute.xlu0 %7283
      %7285 = vrot.lane.b32.xlu0 %v7202, 84
      %v7286 = vpop.permute.xlu0 %7285
      %7287 = vrot.lane.b32.xlu0 %v7203, 84
      %v7288 = vpop.permute.xlu0 %7287
      %7289 = vrot.lane.b32.xlu0 %v7204, 84
      %v7290 = vpop.permute.xlu0 %7289
      %7291 = vrot.lane.b32.xlu0 %v7205, 84
      %v7292 = vpop.permute.xlu0 %7291
      %7293 = vrot.lane.b32.xlu0 %v7206, 84
      %v7294 = vpop.permute.xlu0 %7293
      %7295 = vrot.lane.b32.xlu0 %v7207, 84
      %v7296 = vpop.permute.xlu0 %7295
      %7297 = vrot.lane.b32.xlu0 %v7208, 84
      %v7298 = vpop.permute.xlu0 %7297
      %7299 = vrot.lane.b32.xlu0 %v7209, 84
      %v7300 = vpop.permute.xlu0 %7299
      %7301 = vrot.lane.b32.xlu0 %v7210, 84
      %v7302 = vpop.permute.xlu0 %7301
      %7303 = vrot.lane.b32.xlu0 %v7211, 84
      %v7304 = vpop.permute.xlu0 %7303
      %7305 = vrot.lane.b32.xlu0 %v7212, 84
      %v7306 = vpop.permute.xlu0 %7305
      %7307 = vrot.lane.b32.xlu0 %v7213, 84
      %v7308 = vpop.permute.xlu0 %7307
      %7309 = vrot.lane.b32.xlu0 %v7214, 84
      %v7310 = vpop.permute.xlu0 %7309
      %vm7343 = vcmask 720544
      %7344 = vst.msk [vmem:[#allocation6] sm:$0xff] %vm7343, %v7248
      %7345 = vst.msk [vmem:[#allocation6 + $0x8] sm:$0xff] %vm7343, %v7250
      %7346 = vst.msk [vmem:[#allocation6 + $0x10] sm:$0xff] %vm7343, %v7252
      %7347 = vst.msk [vmem:[#allocation6 + $0x18] sm:$0xff] %vm7343, %v7254
      %7348 = vst.msk [vmem:[#allocation6 + $0x20] sm:$0xff] %vm7343, %v7256
      %7349 = vst.msk [vmem:[#allocation6 + $0x28] sm:$0xff] %vm7343, %v7258
      %7350 = vst.msk [vmem:[#allocation6 + $0x30] sm:$0xff] %vm7343, %v7260
      %7351 = vst.msk [vmem:[#allocation6 + $0x38] sm:$0xff] %vm7343, %v7262
      %7352 = vst.msk [vmem:[#allocation6 + $0x40] sm:$0xff] %vm7343, %v7264
      %7353 = vst.msk [vmem:[#allocation6 + $0x48] sm:$0xff] %vm7343, %v7266
      %7354 = vst.msk [vmem:[#allocation6 + $0x50] sm:$0xff] %vm7343, %v7268
      %7355 = vst.msk [vmem:[#allocation6 + $0x58] sm:$0xff] %vm7343, %v7270
      %7356 = vst.msk [vmem:[#allocation6 + $0x60] sm:$0xff] %vm7343, %v7272
      %7357 = vst.msk [vmem:[#allocation6 + $0x68] sm:$0xff] %vm7343, %v7274
      %7358 = vst.msk [vmem:[#allocation6 + $0x70] sm:$0xff] %vm7343, %v7276
      %7359 = vst.msk [vmem:[#allocation6 + $0x78] sm:$0xff] %vm7343, %v7278
      %7360 = vst.msk [vmem:[#allocation6 + $0x80] sm:$0xff] %vm7343, %v7280
      %7361 = vst.msk [vmem:[#allocation6 + $0x88] sm:$0xff] %vm7343, %v7282
      %7362 = vst.msk [vmem:[#allocation6 + $0x90] sm:$0xff] %vm7343, %v7284
      %7363 = vst.msk [vmem:[#allocation6 + $0x98] sm:$0xff] %vm7343, %v7286
      %7364 = vst.msk [vmem:[#allocation6 + $0xa0] sm:$0xff] %vm7343, %v7288
      %7365 = vst.msk [vmem:[#allocation6 + $0xa8] sm:$0xff] %vm7343, %v7290
      %7366 = vst.msk [vmem:[#allocation6 + $0xb0] sm:$0xff] %vm7343, %v7292
      %7367 = vst.msk [vmem:[#allocation6 + $0xb8] sm:$0xff] %vm7343, %v7294
      %7368 = vst.msk [vmem:[#allocation6 + $0xc0] sm:$0xff] %vm7343, %v7296
      %7369 = vst.msk [vmem:[#allocation6 + $0xc8] sm:$0xff] %vm7343, %v7298
      %7370 = vst.msk [vmem:[#allocation6 + $0xd0] sm:$0xff] %vm7343, %v7300
      %7371 = vst.msk [vmem:[#allocation6 + $0xd8] sm:$0xff] %vm7343, %v7302
      %7372 = vst.msk [vmem:[#allocation6 + $0xe0] sm:$0xff] %vm7343, %v7304
      %7373 = vst.msk [vmem:[#allocation6 + $0xe8] sm:$0xff] %vm7343, %v7306
      %7374 = vst.msk [vmem:[#allocation6 + $0xf0] sm:$0xff] %vm7343, %v7308
      %7375 = vst.msk [vmem:[#allocation6 + $0xf8] sm:$0xff] %vm7343, %v7310
      %v7376 = vld [vmem:[%s6989 + $0x2] sm:$0xff]
      %v7377 = vld [vmem:[%s6989 + $0xa] sm:$0xff]
      %v7378 = vld [vmem:[%s6989 + $0x1a] sm:$0xff]
      %v7379 = vld [vmem:[%s6989 + $0x22] sm:$0xff]
      %v7380 = vld [vmem:[%s6989 + $0x32] sm:$0xff]
      %v7381 = vld [vmem:[%s6989 + $0x3a] sm:$0xff]
      %v7382 = vld [vmem:[%s6989 + $0x4a] sm:$0xff]
      %v7383 = vld [vmem:[%s6989 + $0x52] sm:$0xff]
      %v7384 = vld [vmem:[%s6989 + $0x62] sm:$0xff]
      %v7385 = vld [vmem:[%s6989 + $0x6a] sm:$0xff]
      %v7386 = vld [vmem:[%s6989 + $0x7a] sm:$0xff]
      %v7387 = vld [vmem:[%s6989 + $0x82] sm:$0xff]
      %v7388 = vld [vmem:[%s6989 + $0x92] sm:$0xff]
      %v7389 = vld [vmem:[%s6989 + $0x9a] sm:$0xff]
      %v7390 = vld [vmem:[%s6989 + $0xaa] sm:$0xff]
      %v7391 = vld [vmem:[%s6989 + $0xb2] sm:$0xff]
      %v7392 = vld [vmem:[%s6989 + $0xc2] sm:$0xff]
      %v7393 = vld [vmem:[%s6989 + $0xca] sm:$0xff]
      %v7394 = vld [vmem:[%s6989 + $0xda] sm:$0xff]
      %v7395 = vld [vmem:[%s6989 + $0xe2] sm:$0xff]
      %v7396 = vld [vmem:[%s6989 + $0xf2] sm:$0xff]
      %v7397 = vld [vmem:[%s6989 + $0xfa] sm:$0xff]
      %v7398 = vld [vmem:[%s6989 + $0x10a] sm:$0xff]
      %v7399 = vld [vmem:[%s6989 + $0x112] sm:$0xff]
      %v7400 = vld [vmem:[%s6989 + $0x122] sm:$0xff]
      %v7401 = vld [vmem:[%s6989 + $0x12a] sm:$0xff]
      %v7402 = vld [vmem:[%s6989 + $0x13a] sm:$0xff]
      %v7403 = vld [vmem:[%s6989 + $0x142] sm:$0xff]
      %v7404 = vld [vmem:[%s6989 + $0x152] sm:$0xff]
      %v7405 = vld [vmem:[%s6989 + $0x15a] sm:$0xff]
      %v7406 = vld [vmem:[%s6989 + $0x16a] sm:$0xff]
      %v7407 = vld [vmem:[%s6989 + $0x172] sm:$0xff]
      %7440 = vrot.lane.b32.xlu0 %v7376, 88
      %v7441 = vpop.permute.xlu0 %7440
      %7442 = vrot.lane.b32.xlu0 %v7377, 88
      %v7443 = vpop.permute.xlu0 %7442
      %7444 = vrot.lane.b32.xlu0 %v7378, 88
      %v7445 = vpop.permute.xlu0 %7444
      %7446 = vrot.lane.b32.xlu0 %v7379, 88
      %v7447 = vpop.permute.xlu0 %7446
      %7448 = vrot.lane.b32.xlu0 %v7380, 88
      %v7449 = vpop.permute.xlu0 %7448
      %7450 = vrot.lane.b32.xlu0 %v7381, 88
      %v7451 = vpop.permute.xlu0 %7450
      %7452 = vrot.lane.b32.xlu0 %v7382, 88
      %v7453 = vpop.permute.xlu0 %7452
      %7454 = vrot.lane.b32.xlu0 %v7383, 88
      %v7455 = vpop.permute.xlu0 %7454
      %7456 = vrot.lane.b32.xlu0 %v7384, 88
      %v7457 = vpop.permute.xlu0 %7456
      %7458 = vrot.lane.b32.xlu0 %v7385, 88
      %v7459 = vpop.permute.xlu0 %7458
      %7460 = vrot.lane.b32.xlu0 %v7386, 88
      %v7461 = vpop.permute.xlu0 %7460
      %7462 = vrot.lane.b32.xlu0 %v7387, 88
      %v7463 = vpop.permute.xlu0 %7462
      %7464 = vrot.lane.b32.xlu0 %v7388, 88
      %v7465 = vpop.permute.xlu0 %7464
      %7466 = vrot.lane.b32.xlu0 %v7389, 88
      %v7467 = vpop.permute.xlu0 %7466
      %7468 = vrot.lane.b32.xlu0 %v7390, 88
      %v7469 = vpop.permute.xlu0 %7468
      %7470 = vrot.lane.b32.xlu0 %v7391, 88
      %v7471 = vpop.permute.xlu0 %7470
      %7472 = vrot.lane.b32.xlu0 %v7392, 88
      %v7473 = vpop.permute.xlu0 %7472
      %7474 = vrot.lane.b32.xlu0 %v7393, 88
      %v7475 = vpop.permute.xlu0 %7474
      %7476 = vrot.lane.b32.xlu0 %v7394, 88
      %v7477 = vpop.permute.xlu0 %7476
      %7478 = vrot.lane.b32.xlu0 %v7395, 88
      %v7479 = vpop.permute.xlu0 %7478
      %7480 = vrot.lane.b32.xlu0 %v7396, 88
      %v7481 = vpop.permute.xlu0 %7480
      %7482 = vrot.lane.b32.xlu0 %v7397, 88
      %v7483 = vpop.permute.xlu0 %7482
      %7484 = vrot.lane.b32.xlu0 %v7398, 88
      %v7485 = vpop.permute.xlu0 %7484
      %7486 = vrot.lane.b32.xlu0 %v7399, 88
      %v7487 = vpop.permute.xlu0 %7486
      %7488 = vrot.lane.b32.xlu0 %v7400, 88
      %v7489 = vpop.permute.xlu0 %7488
      %7490 = vrot.lane.b32.xlu0 %v7401, 88
      %v7491 = vpop.permute.xlu0 %7490
      %7492 = vrot.lane.b32.xlu0 %v7402, 88
      %v7493 = vpop.permute.xlu0 %7492
      %7494 = vrot.lane.b32.xlu0 %v7403, 88
      %v7495 = vpop.permute.xlu0 %7494
      %7496 = vrot.lane.b32.xlu0 %v7404, 88
      %v7497 = vpop.permute.xlu0 %7496
      %7498 = vrot.lane.b32.xlu0 %v7405, 88
      %v7499 = vpop.permute.xlu0 %7498
      %7500 = vrot.lane.b32.xlu0 %v7406, 88
      %v7501 = vpop.permute.xlu0 %7500
      %7502 = vrot.lane.b32.xlu0 %v7407, 88
      %v7503 = vpop.permute.xlu0 %7502
      %vm7536 = vcmask 753344
      %7537 = vst.msk [vmem:[#allocation6] sm:$0xff] %vm7536, %v7441
      %7538 = vst.msk [vmem:[#allocation6 + $0x8] sm:$0xff] %vm7536, %v7443
      %7539 = vst.msk [vmem:[#allocation6 + $0x10] sm:$0xff] %vm7536, %v7445
      %7540 = vst.msk [vmem:[#allocation6 + $0x18] sm:$0xff] %vm7536, %v7447
      %7541 = vst.msk [vmem:[#allocation6 + $0x20] sm:$0xff] %vm7536, %v7449
      %7542 = vst.msk [vmem:[#allocation6 + $0x28] sm:$0xff] %vm7536, %v7451
      %7543 = vst.msk [vmem:[#allocation6 + $0x30] sm:$0xff] %vm7536, %v7453
      %7544 = vst.msk [vmem:[#allocation6 + $0x38] sm:$0xff] %vm7536, %v7455
      %7545 = vst.msk [vmem:[#allocation6 + $0x40] sm:$0xff] %vm7536, %v7457
      %7546 = vst.msk [vmem:[#allocation6 + $0x48] sm:$0xff] %vm7536, %v7459
      %7547 = vst.msk [vmem:[#allocation6 + $0x50] sm:$0xff] %vm7536, %v7461
      %7548 = vst.msk [vmem:[#allocation6 + $0x58] sm:$0xff] %vm7536, %v7463
      %7549 = vst.msk [vmem:[#allocation6 + $0x60] sm:$0xff] %vm7536, %v7465
      %7550 = vst.msk [vmem:[#allocation6 + $0x68] sm:$0xff] %vm7536, %v7467
      %7551 = vst.msk [vmem:[#allocation6 + $0x70] sm:$0xff] %vm7536, %v7469
      %7552 = vst.msk [vmem:[#allocation6 + $0x78] sm:$0xff] %vm7536, %v7471
      %7553 = vst.msk [vmem:[#allocation6 + $0x80] sm:$0xff] %vm7536, %v7473
      %7554 = vst.msk [vmem:[#allocation6 + $0x88] sm:$0xff] %vm7536, %v7475
      %7555 = vst.msk [vmem:[#allocation6 + $0x90] sm:$0xff] %vm7536, %v7477
      %7556 = vst.msk [vmem:[#allocation6 + $0x98] sm:$0xff] %vm7536, %v7479
      %7557 = vst.msk [vmem:[#allocation6 + $0xa0] sm:$0xff] %vm7536, %v7481
      %7558 = vst.msk [vmem:[#allocation6 + $0xa8] sm:$0xff] %vm7536, %v7483
      %7559 = vst.msk [vmem:[#allocation6 + $0xb0] sm:$0xff] %vm7536, %v7485
      %7560 = vst.msk [vmem:[#allocation6 + $0xb8] sm:$0xff] %vm7536, %v7487
      %7561 = vst.msk [vmem:[#allocation6 + $0xc0] sm:$0xff] %vm7536, %v7489
      %7562 = vst.msk [vmem:[#allocation6 + $0xc8] sm:$0xff] %vm7536, %v7491
      %7563 = vst.msk [vmem:[#allocation6 + $0xd0] sm:$0xff] %vm7536, %v7493
      %7564 = vst.msk [vmem:[#allocation6 + $0xd8] sm:$0xff] %vm7536, %v7495
      %7565 = vst.msk [vmem:[#allocation6 + $0xe0] sm:$0xff] %vm7536, %v7497
      %7566 = vst.msk [vmem:[#allocation6 + $0xe8] sm:$0xff] %vm7536, %v7499
      %7567 = vst.msk [vmem:[#allocation6 + $0xf0] sm:$0xff] %vm7536, %v7501
      %7568 = vst.msk [vmem:[#allocation6 + $0xf8] sm:$0xff] %vm7536, %v7503
      %v7569 = vld [vmem:[%s6989 + $0x3] sm:$0xff]
      %v7570 = vld [vmem:[%s6989 + $0xb] sm:$0xff]
      %v7571 = vld [vmem:[%s6989 + $0x1b] sm:$0xff]
      %v7572 = vld [vmem:[%s6989 + $0x23] sm:$0xff]
      %v7573 = vld [vmem:[%s6989 + $0x33] sm:$0xff]
      %v7574 = vld [vmem:[%s6989 + $0x3b] sm:$0xff]
      %v7575 = vld [vmem:[%s6989 + $0x4b] sm:$0xff]
      %v7576 = vld [vmem:[%s6989 + $0x53] sm:$0xff]
      %v7577 = vld [vmem:[%s6989 + $0x63] sm:$0xff]
      %v7578 = vld [vmem:[%s6989 + $0x6b] sm:$0xff]
      %v7579 = vld [vmem:[%s6989 + $0x7b] sm:$0xff]
      %v7580 = vld [vmem:[%s6989 + $0x83] sm:$0xff]
      %v7581 = vld [vmem:[%s6989 + $0x93] sm:$0xff]
      %v7582 = vld [vmem:[%s6989 + $0x9b] sm:$0xff]
      %v7583 = vld [vmem:[%s6989 + $0xab] sm:$0xff]
      %v7584 = vld [vmem:[%s6989 + $0xb3] sm:$0xff]
      %v7585 = vld [vmem:[%s6989 + $0xc3] sm:$0xff]
      %v7586 = vld [vmem:[%s6989 + $0xcb] sm:$0xff]
      %v7587 = vld [vmem:[%s6989 + $0xdb] sm:$0xff]
      %v7588 = vld [vmem:[%s6989 + $0xe3] sm:$0xff]
      %v7589 = vld [vmem:[%s6989 + $0xf3] sm:$0xff]
      %v7590 = vld [vmem:[%s6989 + $0xfb] sm:$0xff]
      %v7591 = vld [vmem:[%s6989 + $0x10b] sm:$0xff]
      %v7592 = vld [vmem:[%s6989 + $0x113] sm:$0xff]
      %v7593 = vld [vmem:[%s6989 + $0x123] sm:$0xff]
      %v7594 = vld [vmem:[%s6989 + $0x12b] sm:$0xff]
      %v7595 = vld [vmem:[%s6989 + $0x13b] sm:$0xff]
      %v7596 = vld [vmem:[%s6989 + $0x143] sm:$0xff]
      %v7597 = vld [vmem:[%s6989 + $0x153] sm:$0xff]
      %v7598 = vld [vmem:[%s6989 + $0x15b] sm:$0xff]
      %v7599 = vld [vmem:[%s6989 + $0x16b] sm:$0xff]
      %v7600 = vld [vmem:[%s6989 + $0x173] sm:$0xff]
      %7633 = vrot.lane.b32.xlu0 %v7569, 92
      %v7634 = vpop.permute.xlu0 %7633
      %7635 = vrot.lane.b32.xlu0 %v7570, 92
      %v7636 = vpop.permute.xlu0 %7635
      %7637 = vrot.lane.b32.xlu0 %v7571, 92
      %v7638 = vpop.permute.xlu0 %7637
      %7639 = vrot.lane.b32.xlu0 %v7572, 92
      %v7640 = vpop.permute.xlu0 %7639
      %7641 = vrot.lane.b32.xlu0 %v7573, 92
      %v7642 = vpop.permute.xlu0 %7641
      %7643 = vrot.lane.b32.xlu0 %v7574, 92
      %v7644 = vpop.permute.xlu0 %7643
      %7645 = vrot.lane.b32.xlu0 %v7575, 92
      %v7646 = vpop.permute.xlu0 %7645
      %7647 = vrot.lane.b32.xlu0 %v7576, 92
      %v7648 = vpop.permute.xlu0 %7647
      %7649 = vrot.lane.b32.xlu0 %v7577, 92
      %v7650 = vpop.permute.xlu0 %7649
      %7651 = vrot.lane.b32.xlu0 %v7578, 92
      %v7652 = vpop.permute.xlu0 %7651
      %7653 = vrot.lane.b32.xlu0 %v7579, 92
      %v7654 = vpop.permute.xlu0 %7653
      %7655 = vrot.lane.b32.xlu0 %v7580, 92
      %v7656 = vpop.permute.xlu0 %7655
      %7657 = vrot.lane.b32.xlu0 %v7581, 92
      %v7658 = vpop.permute.xlu0 %7657
      %7659 = vrot.lane.b32.xlu0 %v7582, 92
      %v7660 = vpop.permute.xlu0 %7659
      %7661 = vrot.lane.b32.xlu0 %v7583, 92
      %v7662 = vpop.permute.xlu0 %7661
      %7663 = vrot.lane.b32.xlu0 %v7584, 92
      %v7664 = vpop.permute.xlu0 %7663
      %7665 = vrot.lane.b32.xlu0 %v7585, 92
      %v7666 = vpop.permute.xlu0 %7665
      %7667 = vrot.lane.b32.xlu0 %v7586, 92
      %v7668 = vpop.permute.xlu0 %7667
      %7669 = vrot.lane.b32.xlu0 %v7587, 92
      %v7670 = vpop.permute.xlu0 %7669
      %7671 = vrot.lane.b32.xlu0 %v7588, 92
      %v7672 = vpop.permute.xlu0 %7671
      %7673 = vrot.lane.b32.xlu0 %v7589, 92
      %v7674 = vpop.permute.xlu0 %7673
      %7675 = vrot.lane.b32.xlu0 %v7590, 92
      %v7676 = vpop.permute.xlu0 %7675
      %7677 = vrot.lane.b32.xlu0 %v7591, 92
      %v7678 = vpop.permute.xlu0 %7677
      %7679 = vrot.lane.b32.xlu0 %v7592, 92
      %v7680 = vpop.permute.xlu0 %7679
      %7681 = vrot.lane.b32.xlu0 %v7593, 92
      %v7682 = vpop.permute.xlu0 %7681
      %7683 = vrot.lane.b32.xlu0 %v7594, 92
      %v7684 = vpop.permute.xlu0 %7683
      %7685 = vrot.lane.b32.xlu0 %v7595, 92
      %v7686 = vpop.permute.xlu0 %7685
      %7687 = vrot.lane.b32.xlu0 %v7596, 92
      %v7688 = vpop.permute.xlu0 %7687
      %7689 = vrot.lane.b32.xlu0 %v7597, 92
      %v7690 = vpop.permute.xlu0 %7689
      %7691 = vrot.lane.b32.xlu0 %v7598, 92
      %v7692 = vpop.permute.xlu0 %7691
      %7693 = vrot.lane.b32.xlu0 %v7599, 92
      %v7694 = vpop.permute.xlu0 %7693
      %7695 = vrot.lane.b32.xlu0 %v7600, 92
      %v7696 = vpop.permute.xlu0 %7695
      %vm7729 = vcmask 786144
      %7730 = vst.msk [vmem:[#allocation6] sm:$0xff] %vm7729, %v7634
      %7731 = vst.msk [vmem:[#allocation6 + $0x8] sm:$0xff] %vm7729, %v7636
      %7732 = vst.msk [vmem:[#allocation6 + $0x10] sm:$0xff] %vm7729, %v7638
      %7733 = vst.msk [vmem:[#allocation6 + $0x18] sm:$0xff] %vm7729, %v7640
      %7734 = vst.msk [vmem:[#allocation6 + $0x20] sm:$0xff] %vm7729, %v7642
      %7735 = vst.msk [vmem:[#allocation6 + $0x28] sm:$0xff] %vm7729, %v7644
      %7736 = vst.msk [vmem:[#allocation6 + $0x30] sm:$0xff] %vm7729, %v7646
      %7737 = vst.msk [vmem:[#allocation6 + $0x38] sm:$0xff] %vm7729, %v7648
      %7738 = vst.msk [vmem:[#allocation6 + $0x40] sm:$0xff] %vm7729, %v7650
      %7739 = vst.msk [vmem:[#allocation6 + $0x48] sm:$0xff] %vm7729, %v7652
      %7740 = vst.msk [vmem:[#allocation6 + $0x50] sm:$0xff] %vm7729, %v7654
      %7741 = vst.msk [vmem:[#allocation6 + $0x58] sm:$0xff] %vm7729, %v7656
      %7742 = vst.msk [vmem:[#allocation6 + $0x60] sm:$0xff] %vm7729, %v7658
      %7743 = vst.msk [vmem:[#allocation6 + $0x68] sm:$0xff] %vm7729, %v7660
      %7744 = vst.msk [vmem:[#allocation6 + $0x70] sm:$0xff] %vm7729, %v7662
      %7745 = vst.msk [vmem:[#allocation6 + $0x78] sm:$0xff] %vm7729, %v7664
      %7746 = vst.msk [vmem:[#allocation6 + $0x80] sm:$0xff] %vm7729, %v7666
      %7747 = vst.msk [vmem:[#allocation6 + $0x88] sm:$0xff] %vm7729, %v7668
      %7748 = vst.msk [vmem:[#allocation6 + $0x90] sm:$0xff] %vm7729, %v7670
      %7749 = vst.msk [vmem:[#allocation6 + $0x98] sm:$0xff] %vm7729, %v7672
      %7750 = vst.msk [vmem:[#allocation6 + $0xa0] sm:$0xff] %vm7729, %v7674
      %7751 = vst.msk [vmem:[#allocation6 + $0xa8] sm:$0xff] %vm7729, %v7676
      %7752 = vst.msk [vmem:[#allocation6 + $0xb0] sm:$0xff] %vm7729, %v7678
      %7753 = vst.msk [vmem:[#allocation6 + $0xb8] sm:$0xff] %vm7729, %v7680
      %7754 = vst.msk [vmem:[#allocation6 + $0xc0] sm:$0xff] %vm7729, %v7682
      %7755 = vst.msk [vmem:[#allocation6 + $0xc8] sm:$0xff] %vm7729, %v7684
      %7756 = vst.msk [vmem:[#allocation6 + $0xd0] sm:$0xff] %vm7729, %v7686
      %7757 = vst.msk [vmem:[#allocation6 + $0xd8] sm:$0xff] %vm7729, %v7688
      %7758 = vst.msk [vmem:[#allocation6 + $0xe0] sm:$0xff] %vm7729, %v7690
      %7759 = vst.msk [vmem:[#allocation6 + $0xe8] sm:$0xff] %vm7729, %v7692
      %7760 = vst.msk [vmem:[#allocation6 + $0xf0] sm:$0xff] %vm7729, %v7694
      %7761 = vst.msk [vmem:[#allocation6 + $0xf8] sm:$0xff] %vm7729, %v7696
      %v7762 = vld [vmem:[%s6989 + $0x4] sm:$0xff]
      %v7763 = vld [vmem:[%s6989 + $0xc] sm:$0xff]
      %v7764 = vld [vmem:[%s6989 + $0x1c] sm:$0xff]
      %v7765 = vld [vmem:[%s6989 + $0x24] sm:$0xff]
      %v7766 = vld [vmem:[%s6989 + $0x34] sm:$0xff]
      %v7767 = vld [vmem:[%s6989 + $0x3c] sm:$0xff]
      %v7768 = vld [vmem:[%s6989 + $0x4c] sm:$0xff]
      %v7769 = vld [vmem:[%s6989 + $0x54] sm:$0xff]
      %v7770 = vld [vmem:[%s6989 + $0x64] sm:$0xff]
      %v7771 = vld [vmem:[%s6989 + $0x6c] sm:$0xff]
      %v7772 = vld [vmem:[%s6989 + $0x7c] sm:$0xff]
      %v7773 = vld [vmem:[%s6989 + $0x84] sm:$0xff]
      %v7774 = vld [vmem:[%s6989 + $0x94] sm:$0xff]
      %v7775 = vld [vmem:[%s6989 + $0x9c] sm:$0xff]
      %v7776 = vld [vmem:[%s6989 + $0xac] sm:$0xff]
      %v7777 = vld [vmem:[%s6989 + $0xb4] sm:$0xff]
      %v7778 = vld [vmem:[%s6989 + $0xc4] sm:$0xff]
      %v7779 = vld [vmem:[%s6989 + $0xcc] sm:$0xff]
      %v7780 = vld [vmem:[%s6989 + $0xdc] sm:$0xff]
      %v7781 = vld [vmem:[%s6989 + $0xe4] sm:$0xff]
      %v7782 = vld [vmem:[%s6989 + $0xf4] sm:$0xff]
      %v7783 = vld [vmem:[%s6989 + $0xfc] sm:$0xff]
      %v7784 = vld [vmem:[%s6989 + $0x10c] sm:$0xff]
      %v7785 = vld [vmem:[%s6989 + $0x114] sm:$0xff]
      %v7786 = vld [vmem:[%s6989 + $0x124] sm:$0xff]
      %v7787 = vld [vmem:[%s6989 + $0x12c] sm:$0xff]
      %v7788 = vld [vmem:[%s6989 + $0x13c] sm:$0xff]
      %v7789 = vld [vmem:[%s6989 + $0x144] sm:$0xff]
      %v7790 = vld [vmem:[%s6989 + $0x154] sm:$0xff]
      %v7791 = vld [vmem:[%s6989 + $0x15c] sm:$0xff]
      %v7792 = vld [vmem:[%s6989 + $0x16c] sm:$0xff]
      %v7793 = vld [vmem:[%s6989 + $0x174] sm:$0xff]
      %7826 = vrot.lane.b32.xlu0 %v7762, 96
      %v7827 = vpop.permute.xlu0 %7826
      %7828 = vrot.lane.b32.xlu0 %v7763, 96
      %v7829 = vpop.permute.xlu0 %7828
      %7830 = vrot.lane.b32.xlu0 %v7764, 96
      %v7831 = vpop.permute.xlu0 %7830
      %7832 = vrot.lane.b32.xlu0 %v7765, 96
      %v7833 = vpop.permute.xlu0 %7832
      %7834 = vrot.lane.b32.xlu0 %v7766, 96
      %v7835 = vpop.permute.xlu0 %7834
      %7836 = vrot.lane.b32.xlu0 %v7767, 96
      %v7837 = vpop.permute.xlu0 %7836
      %7838 = vrot.lane.b32.xlu0 %v7768, 96
      %v7839 = vpop.permute.xlu0 %7838
      %7840 = vrot.lane.b32.xlu0 %v7769, 96
      %v7841 = vpop.permute.xlu0 %7840
      %7842 = vrot.lane.b32.xlu0 %v7770, 96
      %v7843 = vpop.permute.xlu0 %7842
      %7844 = vrot.lane.b32.xlu0 %v7771, 96
      %v7845 = vpop.permute.xlu0 %7844
      %7846 = vrot.lane.b32.xlu0 %v7772, 96
      %v7847 = vpop.permute.xlu0 %7846
      %7848 = vrot.lane.b32.xlu0 %v7773, 96
      %v7849 = vpop.permute.xlu0 %7848
      %7850 = vrot.lane.b32.xlu0 %v7774, 96
      %v7851 = vpop.permute.xlu0 %7850
      %7852 = vrot.lane.b32.xlu0 %v7775, 96
      %v7853 = vpop.permute.xlu0 %7852
      %7854 = vrot.lane.b32.xlu0 %v7776, 96
      %v7855 = vpop.permute.xlu0 %7854
      %7856 = vrot.lane.b32.xlu0 %v7777, 96
      %v7857 = vpop.permute.xlu0 %7856
      %7858 = vrot.lane.b32.xlu0 %v7778, 96
      %v7859 = vpop.permute.xlu0 %7858
      %7860 = vrot.lane.b32.xlu0 %v7779, 96
      %v7861 = vpop.permute.xlu0 %7860
      %7862 = vrot.lane.b32.xlu0 %v7780, 96
      %v7863 = vpop.permute.xlu0 %7862
      %7864 = vrot.lane.b32.xlu0 %v7781, 96
      %v7865 = vpop.permute.xlu0 %7864
      %7866 = vrot.lane.b32.xlu0 %v7782, 96
      %v7867 = vpop.permute.xlu0 %7866
      %7868 = vrot.lane.b32.xlu0 %v7783, 96
      %v7869 = vpop.permute.xlu0 %7868
      %7870 = vrot.lane.b32.xlu0 %v7784, 96
      %v7871 = vpop.permute.xlu0 %7870
      %7872 = vrot.lane.b32.xlu0 %v7785, 96
      %v7873 = vpop.permute.xlu0 %7872
      %7874 = vrot.lane.b32.xlu0 %v7786, 96
      %v7875 = vpop.permute.xlu0 %7874
      %7876 = vrot.lane.b32.xlu0 %v7787, 96
      %v7877 = vpop.permute.xlu0 %7876
      %7878 = vrot.lane.b32.xlu0 %v7788, 96
      %v7879 = vpop.permute.xlu0 %7878
      %7880 = vrot.lane.b32.xlu0 %v7789, 96
      %v7881 = vpop.permute.xlu0 %7880
      %7882 = vrot.lane.b32.xlu0 %v7790, 96
      %v7883 = vpop.permute.xlu0 %7882
      %7884 = vrot.lane.b32.xlu0 %v7791, 96
      %v7885 = vpop.permute.xlu0 %7884
      %7886 = vrot.lane.b32.xlu0 %v7792, 96
      %v7887 = vpop.permute.xlu0 %7886
      %7888 = vrot.lane.b32.xlu0 %v7793, 96
      %v7889 = vpop.permute.xlu0 %7888
      %vm7922 = vcmask 818944
      %7923 = vst.msk [vmem:[#allocation6] sm:$0xff] %vm7922, %v7827
      %7924 = vst.msk [vmem:[#allocation6 + $0x8] sm:$0xff] %vm7922, %v7829
      %7925 = vst.msk [vmem:[#allocation6 + $0x10] sm:$0xff] %vm7922, %v7831
      %7926 = vst.msk [vmem:[#allocation6 + $0x18] sm:$0xff] %vm7922, %v7833
      %7927 = vst.msk [vmem:[#allocation6 + $0x20] sm:$0xff] %vm7922, %v7835
      %7928 = vst.msk [vmem:[#allocation6 + $0x28] sm:$0xff] %vm7922, %v7837
      %7929 = vst.msk [vmem:[#allocation6 + $0x30] sm:$0xff] %vm7922, %v7839
      %7930 = vst.msk [vmem:[#allocation6 + $0x38] sm:$0xff] %vm7922, %v7841
      %7931 = vst.msk [vmem:[#allocation6 + $0x40] sm:$0xff] %vm7922, %v7843
      %7932 = vst.msk [vmem:[#allocation6 + $0x48] sm:$0xff] %vm7922, %v7845
      %7933 = vst.msk [vmem:[#allocation6 + $0x50] sm:$0xff] %vm7922, %v7847
      %7934 = vst.msk [vmem:[#allocation6 + $0x58] sm:$0xff] %vm7922, %v7849
      %7935 = vst.msk [vmem:[#allocation6 + $0x60] sm:$0xff] %vm7922, %v7851
      %7936 = vst.msk [vmem:[#allocation6 + $0x68] sm:$0xff] %vm7922, %v7853
      %7937 = vst.msk [vmem:[#allocation6 + $0x70] sm:$0xff] %vm7922, %v7855
      %7938 = vst.msk [vmem:[#allocation6 + $0x78] sm:$0xff] %vm7922, %v7857
      %7939 = vst.msk [vmem:[#allocation6 + $0x80] sm:$0xff] %vm7922, %v7859
      %7940 = vst.msk [vmem:[#allocation6 + $0x88] sm:$0xff] %vm7922, %v7861
      %7941 = vst.msk [vmem:[#allocation6 + $0x90] sm:$0xff] %vm7922, %v7863
      %7942 = vst.msk [vmem:[#allocation6 + $0x98] sm:$0xff] %vm7922, %v7865
      %7943 = vst.msk [vmem:[#allocation6 + $0xa0] sm:$0xff] %vm7922, %v7867
      %7944 = vst.msk [vmem:[#allocation6 + $0xa8] sm:$0xff] %vm7922, %v7869
      %7945 = vst.msk [vmem:[#allocation6 + $0xb0] sm:$0xff] %vm7922, %v7871
      %7946 = vst.msk [vmem:[#allocation6 + $0xb8] sm:$0xff] %vm7922, %v7873
      %7947 = vst.msk [vmem:[#allocation6 + $0xc0] sm:$0xff] %vm7922, %v7875
      %7948 = vst.msk [vmem:[#allocation6 + $0xc8] sm:$0xff] %vm7922, %v7877
      %7949 = vst.msk [vmem:[#allocation6 + $0xd0] sm:$0xff] %vm7922, %v7879
      %7950 = vst.msk [vmem:[#allocation6 + $0xd8] sm:$0xff] %vm7922, %v7881
      %7951 = vst.msk [vmem:[#allocation6 + $0xe0] sm:$0xff] %vm7922, %v7883
      %7952 = vst.msk [vmem:[#allocation6 + $0xe8] sm:$0xff] %vm7922, %v7885
      %7953 = vst.msk [vmem:[#allocation6 + $0xf0] sm:$0xff] %vm7922, %v7887
      %7954 = vst.msk [vmem:[#allocation6 + $0xf8] sm:$0xff] %vm7922, %v7889
      %v7955 = vld [vmem:[#allocation5] sm:$0xff]
      %v7956 = vld [vmem:[#allocation5 + $0x8] sm:$0xff]
      %v7957 = vld [vmem:[#allocation5 + $0x10] sm:$0xff]
      %v7958 = vld [vmem:[#allocation5 + $0x18] sm:$0xff]
      %v7959 = vld [vmem:[#allocation5 + $0x20] sm:$0xff]
      %v7960 = vld [vmem:[#allocation5 + $0x28] sm:$0xff]
      %v7961 = vld [vmem:[#allocation5 + $0x30] sm:$0xff]
      %v7962 = vld [vmem:[#allocation5 + $0x38] sm:$0xff]
      %v7963 = vld [vmem:[#allocation5 + $0x40] sm:$0xff]
      %v7964 = vld [vmem:[#allocation5 + $0x48] sm:$0xff]
      %v7965 = vld [vmem:[#allocation5 + $0x50] sm:$0xff]
      %v7966 = vld [vmem:[#allocation5 + $0x58] sm:$0xff]
      %v7967 = vld [vmem:[#allocation5 + $0x60] sm:$0xff]
      %v7968 = vld [vmem:[#allocation5 + $0x68] sm:$0xff]
      %v7969 = vld [vmem:[#allocation5 + $0x70] sm:$0xff]
      %v7970 = vld [vmem:[#allocation5 + $0x78] sm:$0xff]
      %v7971 = vld [vmem:[#allocation5 + $0x80] sm:$0xff]
      %v7972 = vld [vmem:[#allocation5 + $0x88] sm:$0xff]
      %v7973 = vld [vmem:[#allocation5 + $0x90] sm:$0xff]
      %v7974 = vld [vmem:[#allocation5 + $0x98] sm:$0xff]
      %v7975 = vld [vmem:[#allocation5 + $0xa0] sm:$0xff]
      %v7976 = vld [vmem:[#allocation5 + $0xa8] sm:$0xff]
      %v7977 = vld [vmem:[#allocation5 + $0xb0] sm:$0xff]
      %v7978 = vld [vmem:[#allocation5 + $0xb8] sm:$0xff]
      %v7979 = vld [vmem:[#allocation5 + $0xc0] sm:$0xff]
      %v7980 = vld [vmem:[#allocation5 + $0xc8] sm:$0xff]
      %v7981 = vld [vmem:[#allocation5 + $0xd0] sm:$0xff]
      %v7982 = vld [vmem:[#allocation5 + $0xd8] sm:$0xff]
      %v7983 = vld [vmem:[#allocation5 + $0xe0] sm:$0xff]
      %v7984 = vld [vmem:[#allocation5 + $0xe8] sm:$0xff]
      %v7985 = vld [vmem:[#allocation5 + $0xf0] sm:$0xff]
      %v7986 = vld [vmem:[#allocation5 + $0xf8] sm:$0xff]
      %v7987 = vld [vmem:[%s5] sm:$0xff]
      %v7988 = vld [vmem:[%s5 + $0x8] sm:$0xff]
      %v7989 = vld [vmem:[%s5 + $0x10] sm:$0xff]
      %v7990 = vld [vmem:[%s5 + $0x18] sm:$0xff]
      %v7991 = vld [vmem:[%s5 + $0x20] sm:$0xf]
      %vm7992 = vcmask 293888
      %v7994 = vsel %vm7992, %v7955, 0
      %v7997 = vsel %vm7992, %v7956, 0
      %v8000 = vsel %vm7992, %v7957, 0
      %v8003 = vsel %vm7992, %v7958, 0
      %v8006 = vsel %vm7992, %v7959, 0
      %v8009 = vsel %vm7992, %v7960, 0
      %v8012 = vsel %vm7992, %v7961, 0
      %v8015 = vsel %vm7992, %v7962, 0
      %v8018 = vsel %vm7992, %v7963, 0
      %v8021 = vsel %vm7992, %v7964, 0
      %v8024 = vsel %vm7992, %v7965, 0
      %v8027 = vsel %vm7992, %v7966, 0
      %v8030 = vsel %vm7992, %v7967, 0
      %v8033 = vsel %vm7992, %v7968, 0
      %v8036 = vsel %vm7992, %v7969, 0
      %v8039 = vsel %vm7992, %v7970, 0
      %v8042 = vsel %vm7992, %v7971, 0
      %v8045 = vsel %vm7992, %v7972, 0
      %v8048 = vsel %vm7992, %v7973, 0
      %v8051 = vsel %vm7992, %v7974, 0
      %v8054 = vsel %vm7992, %v7975, 0
      %v8057 = vsel %vm7992, %v7976, 0
      %v8060 = vsel %vm7992, %v7977, 0
      %v8063 = vsel %vm7992, %v7978, 0
      %v8066 = vsel %vm7992, %v7979, 0
      %v8069 = vsel %vm7992, %v7980, 0
      %v8072 = vsel %vm7992, %v7981, 0
      %v8075 = vsel %vm7992, %v7982, 0
      %v8078 = vsel %vm7992, %v7983, 0
      %v8081 = vsel %vm7992, %v7984, 0
      %v8084 = vsel %vm7992, %v7985, 0
      %v8087 = vsel %vm7992, %v7986, 0
      %v8090 = vsel %vm558, %v7991, 0
      %8092 = vmatprep.subr.mxu0 0.0
      %8093 = vmatpush1.msra.mxu0 0.0
      %8094 = vmatprep.subr.mxu0 0.0
      %8095 = vmatpush1.msra.mxu0 0.0
      %8096 = vmatprep.subr.mxu0 0.0
      %8097 = vmatpush1.msra.mxu0 0.0
      %8098 = vmatprep.subr.mxu0 0.0
      %8099 = vmatpush1.msra.mxu0 0.0
      %8100 = vmatprep.subr.mxu0 0.0
      %8101 = vmatpush1.msra.mxu0 0.0
      %8102 = vmatprep.subr.mxu0 0.0
      %8103 = vmatpush1.msra.mxu0 0.0
      %8104 = vmatprep.subr.mxu0 0.0
      %8105 = vmatpush1.msra.mxu0 0.0
      %8106 = vmatprep.subr.mxu0 0.0
      %8107 = vmatpush1.msra.mxu0 0.0
      %8108 = vmatprep.subr.mxu0 0.0
      %8109 = vmatpush1.msra.mxu0 0.0
      %8110 = vmatprep.subr.mxu0 0.0
      %8111 = vmatpush1.msra.mxu0 0.0
      %8112 = vmatprep.subr.mxu0 0.0
      %8113 = vmatpush1.msra.mxu0 0.0
      %8114 = vmatprep.subr.mxu0 0.0
      %8115 = vmatpush1.msra.mxu0 %v8090
      %8116 = vmatprep.subr.mxu0 0.0
      %8117 = vmatpush1.msra.mxu0 %v7990
      %8118 = vmatprep.subr.mxu0 0.0
      %8119 = vmatpush1.msra.mxu0 %v7989
      %8120 = vmatprep.subr.mxu0 0.0
      %8121 = vmatpush1.msra.mxu0 %v7988
      %8122 = vmatprep.subr.mxu0 0.0
      %8123 = vmatpush1.msra.mxu0 %v7987
      %8124 = vmatprep.subr.mxu0 0.0
      %8125 = vmatpush2.msra.mxu0 0.0
      %8126 = vmatprep.subr.mxu0 0.0
      %8127 = vmatpush2.msra.mxu0 0.0
      %8128 = vmatprep.subr.mxu0 0.0
      %8129 = vmatpush2.msra.mxu0 0.0
      %8130 = vmatprep.subr.mxu0 0.0
      %8131 = vmatpush2.msra.mxu0 0.0
      %8132 = vmatprep.subr.mxu0 0.0
      %8133 = vmatpush2.msra.mxu0 0.0
      %8134 = vmatprep.subr.mxu0 0.0
      %8135 = vmatpush2.msra.mxu0 0.0
      %8136 = vmatprep.subr.mxu0 0.0
      %8137 = vmatpush2.msra.mxu0 0.0
      %8138 = vmatprep.subr.mxu0 0.0
      %8139 = vmatpush2.msra.mxu0 0.0
      %8140 = vmatprep.subr.mxu0 0.0
      %8141 = vmatpush2.msra.mxu0 0.0
      %8142 = vmatprep.subr.mxu0 0.0
      %8143 = vmatpush2.msra.mxu0 0.0
      %8144 = vmatprep.subr.mxu0 0.0
      %8145 = vmatpush2.msra.mxu0 0.0
      %8146 = vmatprep.subr.mxu0 0.0
      %8147 = vmatpush2.msra.mxu0 0.0
      %8148 = vmatprep.subr.mxu0 0.0
      %8149 = vmatpush2.msra.mxu0 0.0
      %8150 = vmatprep.subr.mxu0 0.0
      %8151 = vmatpush2.msra.mxu0 0.0
      %8152 = vmatprep.subr.mxu0 0.0
      %8153 = vmatpush2.msra.mxu0 0.0
      %8154 = vmatprep.subr.mxu0 0.0
      %8155 = vmatpush2.msra.mxu0 0.0
      %8156 = vmatprep.mubr.f32.mxu0 0.0
      %8157 = vmatmul.mubr.f32.gmra.mxu0 %v7994
      %v8158 = vpop.f32.mrf.mxu0
      %v8159 = vadd.f32 0.0, %v8158
      %v8160 = vpop.f32.mrf.mxu0
      %8161 = vmatprep.mubr.f32.mxu0 0.0
      %8162 = vmatmul.mubr.f32.gmra.mxu0 %v7997
      %v8163 = vpop.f32.mrf.mxu0
      %v8164 = vadd.f32 0.0, %v8163
      %v8165 = vpop.f32.mrf.mxu0
      %8166 = vmatprep.mubr.f32.mxu0 0.0
      %8167 = vmatmul.mubr.f32.gmra.mxu0 %v8000
      %v8168 = vpop.f32.mrf.mxu0
      %v8169 = vadd.f32 0.0, %v8168
      %v8170 = vpop.f32.mrf.mxu0
      %8171 = vmatprep.mubr.f32.mxu0 0.0
      %8172 = vmatmul.mubr.f32.gmra.mxu0 %v8003
      %v8173 = vpop.f32.mrf.mxu0
      %v8174 = vadd.f32 0.0, %v8173
      %v8175 = vpop.f32.mrf.mxu0
      %8176 = vmatprep.mubr.f32.mxu0 0.0
      %8177 = vmatmul.mubr.f32.gmra.mxu0 %v8006
      %v8178 = vpop.f32.mrf.mxu0
      %v8179 = vadd.f32 0.0, %v8178
      %v8180 = vpop.f32.mrf.mxu0
      %8181 = vmatprep.mubr.f32.mxu0 0.0
      %8182 = vmatmul.mubr.f32.gmra.mxu0 %v8009
      %v8183 = vpop.f32.mrf.mxu0
      %v8184 = vadd.f32 0.0, %v8183
      %v8185 = vpop.f32.mrf.mxu0
      %8186 = vmatprep.mubr.f32.mxu0 0.0
      %8187 = vmatmul.mubr.f32.gmra.mxu0 %v8012
      %v8188 = vpop.f32.mrf.mxu0
      %v8189 = vadd.f32 0.0, %v8188
      %v8190 = vpop.f32.mrf.mxu0
      %8191 = vmatprep.mubr.f32.mxu0 0.0
      %8192 = vmatmul.mubr.f32.gmra.mxu0 %v8015
      %v8193 = vpop.f32.mrf.mxu0
      %v8194 = vadd.f32 0.0, %v8193
      %v8195 = vpop.f32.mrf.mxu0
      %8196 = vmatprep.mubr.f32.mxu0 0.0
      %8197 = vmatmul.mubr.f32.gmra.mxu0 %v8018
      %v8198 = vpop.f32.mrf.mxu0
      %v8199 = vadd.f32 0.0, %v8198
      %v8200 = vpop.f32.mrf.mxu0
      %8201 = vmatprep.mubr.f32.mxu0 0.0
      %8202 = vmatmul.mubr.f32.gmra.mxu0 %v8021
      %v8203 = vpop.f32.mrf.mxu0
      %v8204 = vadd.f32 0.0, %v8203
      %v8205 = vpop.f32.mrf.mxu0
      %8206 = vmatprep.mubr.f32.mxu0 0.0
      %8207 = vmatmul.mubr.f32.gmra.mxu0 %v8024
      %v8208 = vpop.f32.mrf.mxu0
      %v8209 = vadd.f32 0.0, %v8208
      %v8210 = vpop.f32.mrf.mxu0
      %8211 = vmatprep.mubr.f32.mxu0 0.0
      %8212 = vmatmul.mubr.f32.gmra.mxu0 %v8027
      %v8213 = vpop.f32.mrf.mxu0
      %v8214 = vadd.f32 0.0, %v8213
      %v8215 = vpop.f32.mrf.mxu0
      %8216 = vmatprep.mubr.f32.mxu0 0.0
      %8217 = vmatmul.mubr.f32.gmra.mxu0 %v8030
      %v8218 = vpop.f32.mrf.mxu0
      %v8219 = vadd.f32 0.0, %v8218
      %v8220 = vpop.f32.mrf.mxu0
      %8221 = vmatprep.mubr.f32.mxu0 0.0
      %8222 = vmatmul.mubr.f32.gmra.mxu0 %v8033
      %v8223 = vpop.f32.mrf.mxu0
      %v8224 = vadd.f32 0.0, %v8223
      %v8225 = vpop.f32.mrf.mxu0
      %8226 = vmatprep.mubr.f32.mxu0 0.0
      %8227 = vmatmul.mubr.f32.gmra.mxu0 %v8036
      %v8228 = vpop.f32.mrf.mxu0
      %v8229 = vadd.f32 0.0, %v8228
      %v8230 = vpop.f32.mrf.mxu0
      %8231 = vmatprep.mubr.f32.mxu0 0.0
      %8232 = vmatmul.mubr.f32.gmra.mxu0 %v8039
      %v8233 = vpop.f32.mrf.mxu0
      %v8234 = vadd.f32 0.0, %v8233
      %v8235 = vpop.f32.mrf.mxu0
      %8236 = vmatprep.mubr.f32.mxu0 0.0
      %8237 = vmatmul.mubr.f32.gmra.mxu0 %v8042
      %v8238 = vpop.f32.mrf.mxu0
      %v8239 = vadd.f32 0.0, %v8238
      %v8240 = vpop.f32.mrf.mxu0
      %8241 = vmatprep.mubr.f32.mxu0 0.0
      %8242 = vmatmul.mubr.f32.gmra.mxu0 %v8045
      %v8243 = vpop.f32.mrf.mxu0
      %v8244 = vadd.f32 0.0, %v8243
      %v8245 = vpop.f32.mrf.mxu0
      %8246 = vmatprep.mubr.f32.mxu0 0.0
      %8247 = vmatmul.mubr.f32.gmra.mxu0 %v8048
      %v8248 = vpop.f32.mrf.mxu0
      %v8249 = vadd.f32 0.0, %v8248
      %v8250 = vpop.f32.mrf.mxu0
      %8251 = vmatprep.mubr.f32.mxu0 0.0
      %8252 = vmatmul.mubr.f32.gmra.mxu0 %v8051
      %v8253 = vpop.f32.mrf.mxu0
      %v8254 = vadd.f32 0.0, %v8253
      %v8255 = vpop.f32.mrf.mxu0
      %8256 = vmatprep.mubr.f32.mxu0 0.0
      %8257 = vmatmul.mubr.f32.gmra.mxu0 %v8054
      %v8258 = vpop.f32.mrf.mxu0
      %v8259 = vadd.f32 0.0, %v8258
      %v8260 = vpop.f32.mrf.mxu0
      %8261 = vmatprep.mubr.f32.mxu0 0.0
      %8262 = vmatmul.mubr.f32.gmra.mxu0 %v8057
      %v8263 = vpop.f32.mrf.mxu0
      %v8264 = vadd.f32 0.0, %v8263
      %v8265 = vpop.f32.mrf.mxu0
      %8266 = vmatprep.mubr.f32.mxu0 0.0
      %8267 = vmatmul.mubr.f32.gmra.mxu0 %v8060
      %v8268 = vpop.f32.mrf.mxu0
      %v8269 = vadd.f32 0.0, %v8268
      %v8270 = vpop.f32.mrf.mxu0
      %8271 = vmatprep.mubr.f32.mxu0 0.0
      %8272 = vmatmul.mubr.f32.gmra.mxu0 %v8063
      %v8273 = vpop.f32.mrf.mxu0
      %v8274 = vadd.f32 0.0, %v8273
      %v8275 = vpop.f32.mrf.mxu0
      %8276 = vmatprep.mubr.f32.mxu0 0.0
      %8277 = vmatmul.mubr.f32.gmra.mxu0 %v8066
      %v8278 = vpop.f32.mrf.mxu0
      %v8279 = vadd.f32 0.0, %v8278
      %v8280 = vpop.f32.mrf.mxu0
      %8281 = vmatprep.mubr.f32.mxu0 0.0
      %8282 = vmatmul.mubr.f32.gmra.mxu0 %v8069
      %v8283 = vpop.f32.mrf.mxu0
      %v8284 = vadd.f32 0.0, %v8283
      %v8285 = vpop.f32.mrf.mxu0
      %8286 = vmatprep.mubr.f32.mxu0 0.0
      %8287 = vmatmul.mubr.f32.gmra.mxu0 %v8072
      %v8288 = vpop.f32.mrf.mxu0
      %v8289 = vadd.f32 0.0, %v8288
      %v8290 = vpop.f32.mrf.mxu0
      %8291 = vmatprep.mubr.f32.mxu0 0.0
      %8292 = vmatmul.mubr.f32.gmra.mxu0 %v8075
      %v8293 = vpop.f32.mrf.mxu0
      %v8294 = vadd.f32 0.0, %v8293
      %v8295 = vpop.f32.mrf.mxu0
      %8296 = vmatprep.mubr.f32.mxu0 0.0
      %8297 = vmatmul.mubr.f32.gmra.mxu0 %v8078
      %v8298 = vpop.f32.mrf.mxu0
      %v8299 = vadd.f32 0.0, %v8298
      %v8300 = vpop.f32.mrf.mxu0
      %8301 = vmatprep.mubr.f32.mxu0 0.0
      %8302 = vmatmul.mubr.f32.gmra.mxu0 %v8081
      %v8303 = vpop.f32.mrf.mxu0
      %v8304 = vadd.f32 0.0, %v8303
      %v8305 = vpop.f32.mrf.mxu0
      %8306 = vmatprep.mubr.f32.mxu0 0.0
      %8307 = vmatmul.mubr.f32.gmra.mxu0 %v8084
      %v8308 = vpop.f32.mrf.mxu0
      %v8309 = vadd.f32 0.0, %v8308
      %v8310 = vpop.f32.mrf.mxu0
      %8311 = vmatprep.mubr.f32.mxu0 0.0
      %8312 = vmatmul.mubr.f32.gmra.mxu0 %v8087
      %v8313 = vpop.f32.mrf.mxu0
      %v8314 = vadd.f32 0.0, %v8313
      %v8315 = vpop.f32.mrf.mxu0
      %8316 = vdwg.mxu0
      %v8317 = vld [vmem:[#allocation6] sm:$0xff]
      %v8318 = vld [vmem:[#allocation6 + $0x8] sm:$0xff]
      %v8319 = vld [vmem:[#allocation6 + $0x10] sm:$0xff]
      %v8320 = vld [vmem:[#allocation6 + $0x18] sm:$0xff]
      %v8321 = vld [vmem:[#allocation6 + $0x20] sm:$0xff]
      %v8322 = vld [vmem:[#allocation6 + $0x28] sm:$0xff]
      %v8323 = vld [vmem:[#allocation6 + $0x30] sm:$0xff]
      %v8324 = vld [vmem:[#allocation6 + $0x38] sm:$0xff]
      %v8325 = vld [vmem:[#allocation6 + $0x40] sm:$0xff]
      %v8326 = vld [vmem:[#allocation6 + $0x48] sm:$0xff]
      %v8327 = vld [vmem:[#allocation6 + $0x50] sm:$0xff]
      %v8328 = vld [vmem:[#allocation6 + $0x58] sm:$0xff]
      %v8329 = vld [vmem:[#allocation6 + $0x60] sm:$0xff]
      %v8330 = vld [vmem:[#allocation6 + $0x68] sm:$0xff]
      %v8331 = vld [vmem:[#allocation6 + $0x70] sm:$0xff]
      %v8332 = vld [vmem:[#allocation6 + $0x78] sm:$0xff]
      %v8333 = vld [vmem:[#allocation6 + $0x80] sm:$0xff]
      %v8334 = vld [vmem:[#allocation6 + $0x88] sm:$0xff]
      %v8335 = vld [vmem:[#allocation6 + $0x90] sm:$0xff]
      %v8336 = vld [vmem:[#allocation6 + $0x98] sm:$0xff]
      %v8337 = vld [vmem:[#allocation6 + $0xa0] sm:$0xff]
      %v8338 = vld [vmem:[#allocation6 + $0xa8] sm:$0xff]
      %v8339 = vld [vmem:[#allocation6 + $0xb0] sm:$0xff]
      %v8340 = vld [vmem:[#allocation6 + $0xb8] sm:$0xff]
      %v8341 = vld [vmem:[#allocation6 + $0xc0] sm:$0xff]
      %v8342 = vld [vmem:[#allocation6 + $0xc8] sm:$0xff]
      %v8343 = vld [vmem:[#allocation6 + $0xd0] sm:$0xff]
      %v8344 = vld [vmem:[#allocation6 + $0xd8] sm:$0xff]
      %v8345 = vld [vmem:[#allocation6 + $0xe0] sm:$0xff]
      %v8346 = vld [vmem:[#allocation6 + $0xe8] sm:$0xff]
      %v8347 = vld [vmem:[#allocation6 + $0xf0] sm:$0xff]
      %v8348 = vld [vmem:[#allocation6 + $0xf8] sm:$0xff]
      %v8349 = vld [vmem:[%s6] sm:$0xff]
      %v8350 = vld [vmem:[%s6 + $0x8] sm:$0xff]
      %v8351 = vld [vmem:[%s6 + $0x10] sm:$0xff]
      %v8352 = vld [vmem:[%s6 + $0x18] sm:$0xff]
      %v8353 = vld [vmem:[%s6 + $0x20] sm:$0xff]
      %v8354 = vld [vmem:[%s6 + $0x28] sm:$0xff]
      %v8355 = vld [vmem:[%s6 + $0x30] sm:$0xff]
      %v8356 = vld [vmem:[%s6 + $0x38] sm:$0xff]
      %v8357 = vld [vmem:[%s6 + $0x40] sm:$0xff]
      %v8358 = vld [vmem:[%s6 + $0x48] sm:$0xff]
      %v8359 = vld [vmem:[%s6 + $0x50] sm:$0xff]
      %v8360 = vld [vmem:[%s6 + $0x58] sm:$0xff]
      %v8361 = vld [vmem:[%s6 + $0x60] sm:$0xf]
      %vm8362 = vcmask 818176
      %v8364 = vsel %vm8362, %v8317, 0
      %v8367 = vsel %vm8362, %v8318, 0
      %v8370 = vsel %vm8362, %v8319, 0
      %v8373 = vsel %vm8362, %v8320, 0
      %v8376 = vsel %vm8362, %v8321, 0
      %v8379 = vsel %vm8362, %v8322, 0
      %v8382 = vsel %vm8362, %v8323, 0
      %v8385 = vsel %vm8362, %v8324, 0
      %v8388 = vsel %vm8362, %v8325, 0
      %v8391 = vsel %vm8362, %v8326, 0
      %v8394 = vsel %vm8362, %v8327, 0
      %v8397 = vsel %vm8362, %v8328, 0
      %v8400 = vsel %vm8362, %v8329, 0
      %v8403 = vsel %vm8362, %v8330, 0
      %v8406 = vsel %vm8362, %v8331, 0
      %v8409 = vsel %vm8362, %v8332, 0
      %v8412 = vsel %vm8362, %v8333, 0
      %v8415 = vsel %vm8362, %v8334, 0
      %v8418 = vsel %vm8362, %v8335, 0
      %v8421 = vsel %vm8362, %v8336, 0
      %v8424 = vsel %vm8362, %v8337, 0
      %v8427 = vsel %vm8362, %v8338, 0
      %v8430 = vsel %vm8362, %v8339, 0
      %v8433 = vsel %vm8362, %v8340, 0
      %v8436 = vsel %vm8362, %v8341, 0
      %v8439 = vsel %vm8362, %v8342, 0
      %v8442 = vsel %vm8362, %v8343, 0
      %v8445 = vsel %vm8362, %v8344, 0
      %v8448 = vsel %vm8362, %v8345, 0
      %v8451 = vsel %vm8362, %v8346, 0
      %v8454 = vsel %vm8362, %v8347, 0
      %v8457 = vsel %vm8362, %v8348, 0
      %v8460 = vsel %vm558, %v8361, 0
      %8462 = vmatprep.subr.mxu0 0.0
      %8463 = vmatpush1.msra.mxu0 0.0
      %8464 = vmatprep.subr.mxu0 0.0
      %8465 = vmatpush1.msra.mxu0 0.0
      %8466 = vmatprep.subr.mxu0 0.0
      %8467 = vmatpush1.msra.mxu0 0.0
      %8468 = vmatprep.subr.mxu0 0.0
      %8469 = vmatpush1.msra.mxu0 %v8460
      %8470 = vmatprep.subr.mxu0 0.0
      %8471 = vmatpush1.msra.mxu0 %v8360
      %8472 = vmatprep.subr.mxu0 0.0
      %8473 = vmatpush1.msra.mxu0 %v8359
      %8474 = vmatprep.subr.mxu0 0.0
      %8475 = vmatpush1.msra.mxu0 %v8358
      %8476 = vmatprep.subr.mxu0 0.0
      %8477 = vmatpush1.msra.mxu0 %v8357
      %8478 = vmatprep.subr.mxu0 0.0
      %8479 = vmatpush1.msra.mxu0 %v8356
      %8480 = vmatprep.subr.mxu0 0.0
      %8481 = vmatpush1.msra.mxu0 %v8355
      %8482 = vmatprep.subr.mxu0 0.0
      %8483 = vmatpush1.msra.mxu0 %v8354
      %8484 = vmatprep.subr.mxu0 0.0
      %8485 = vmatpush1.msra.mxu0 %v8353
      %8486 = vmatprep.subr.mxu0 0.0
      %8487 = vmatpush1.msra.mxu0 %v8352
      %8488 = vmatprep.subr.mxu0 0.0
      %8489 = vmatpush1.msra.mxu0 %v8351
      %8490 = vmatprep.subr.mxu0 0.0
      %8491 = vmatpush1.msra.mxu0 %v8350
      %8492 = vmatprep.subr.mxu0 0.0
      %8493 = vmatpush1.msra.mxu0 %v8349
      %8494 = vmatprep.subr.mxu0 0.0
      %8495 = vmatpush2.msra.mxu0 0.0
      %8496 = vmatprep.subr.mxu0 0.0
      %8497 = vmatpush2.msra.mxu0 0.0
      %8498 = vmatprep.subr.mxu0 0.0
      %8499 = vmatpush2.msra.mxu0 0.0
      %8500 = vmatprep.subr.mxu0 0.0
      %8501 = vmatpush2.msra.mxu0 0.0
      %8502 = vmatprep.subr.mxu0 0.0
      %8503 = vmatpush2.msra.mxu0 0.0
      %8504 = vmatprep.subr.mxu0 0.0
      %8505 = vmatpush2.msra.mxu0 0.0
      %8506 = vmatprep.subr.mxu0 0.0
      %8507 = vmatpush2.msra.mxu0 0.0
      %8508 = vmatprep.subr.mxu0 0.0
      %8509 = vmatpush2.msra.mxu0 0.0
      %8510 = vmatprep.subr.mxu0 0.0
      %8511 = vmatpush2.msra.mxu0 0.0
      %8512 = vmatprep.subr.mxu0 0.0
      %8513 = vmatpush2.msra.mxu0 0.0
      %8514 = vmatprep.subr.mxu0 0.0
      %8515 = vmatpush2.msra.mxu0 0.0
      %8516 = vmatprep.subr.mxu0 0.0
      %8517 = vmatpush2.msra.mxu0 0.0
      %8518 = vmatprep.subr.mxu0 0.0
      %8519 = vmatpush2.msra.mxu0 0.0
      %8520 = vmatprep.subr.mxu0 0.0
      %8521 = vmatpush2.msra.mxu0 0.0
      %8522 = vmatprep.subr.mxu0 0.0
      %8523 = vmatpush2.msra.mxu0 0.0
      %8524 = vmatprep.subr.mxu0 0.0
      %8525 = vmatpush2.msra.mxu0 0.0
      %8526 = vmatprep.mubr.f32.mxu0 0.0
      %8527 = vmatmul.mubr.f32.gmra.mxu0 %v8364
      %v8528 = vpop.f32.mrf.mxu0
      %v8529 = vadd.f32 0.0, %v8528
      %v8530 = vpop.f32.mrf.mxu0
      %8531 = vmatprep.mubr.f32.mxu0 0.0
      %8532 = vmatmul.mubr.f32.gmra.mxu0 %v8367
      %v8533 = vpop.f32.mrf.mxu0
      %v8534 = vadd.f32 0.0, %v8533
      %v8535 = vpop.f32.mrf.mxu0
      %8536 = vmatprep.mubr.f32.mxu0 0.0
      %8537 = vmatmul.mubr.f32.gmra.mxu0 %v8370
      %v8538 = vpop.f32.mrf.mxu0
      %v8539 = vadd.f32 0.0, %v8538
      %v8540 = vpop.f32.mrf.mxu0
      %8541 = vmatprep.mubr.f32.mxu0 0.0
      %8542 = vmatmul.mubr.f32.gmra.mxu0 %v8373
      %v8543 = vpop.f32.mrf.mxu0
      %v8544 = vadd.f32 0.0, %v8543
      %v8545 = vpop.f32.mrf.mxu0
      %8546 = vmatprep.mubr.f32.mxu0 0.0
      %8547 = vmatmul.mubr.f32.gmra.mxu0 %v8376
      %v8548 = vpop.f32.mrf.mxu0
      %v8549 = vadd.f32 0.0, %v8548
      %v8550 = vpop.f32.mrf.mxu0
      %8551 = vmatprep.mubr.f32.mxu0 0.0
      %8552 = vmatmul.mubr.f32.gmra.mxu0 %v8379
      %v8553 = vpop.f32.mrf.mxu0
      %v8554 = vadd.f32 0.0, %v8553
      %v8555 = vpop.f32.mrf.mxu0
      %8556 = vmatprep.mubr.f32.mxu0 0.0
      %8557 = vmatmul.mubr.f32.gmra.mxu0 %v8382
      %v8558 = vpop.f32.mrf.mxu0
      %v8559 = vadd.f32 0.0, %v8558
      %v8560 = vpop.f32.mrf.mxu0
      %8561 = vmatprep.mubr.f32.mxu0 0.0
      %8562 = vmatmul.mubr.f32.gmra.mxu0 %v8385
      %v8563 = vpop.f32.mrf.mxu0
      %v8564 = vadd.f32 0.0, %v8563
      %v8565 = vpop.f32.mrf.mxu0
      %8566 = vmatprep.mubr.f32.mxu0 0.0
      %8567 = vmatmul.mubr.f32.gmra.mxu0 %v8388
      %v8568 = vpop.f32.mrf.mxu0
      %v8569 = vadd.f32 0.0, %v8568
      %v8570 = vpop.f32.mrf.mxu0
      %8571 = vmatprep.mubr.f32.mxu0 0.0
      %8572 = vmatmul.mubr.f32.gmra.mxu0 %v8391
      %v8573 = vpop.f32.mrf.mxu0
      %v8574 = vadd.f32 0.0, %v8573
      %v8575 = vpop.f32.mrf.mxu0
      %8576 = vmatprep.mubr.f32.mxu0 0.0
      %8577 = vmatmul.mubr.f32.gmra.mxu0 %v8394
      %v8578 = vpop.f32.mrf.mxu0
      %v8579 = vadd.f32 0.0, %v8578
      %v8580 = vpop.f32.mrf.mxu0
      %8581 = vmatprep.mubr.f32.mxu0 0.0
      %8582 = vmatmul.mubr.f32.gmra.mxu0 %v8397
      %v8583 = vpop.f32.mrf.mxu0
      %v8584 = vadd.f32 0.0, %v8583
      %v8585 = vpop.f32.mrf.mxu0
      %8586 = vmatprep.mubr.f32.mxu0 0.0
      %8587 = vmatmul.mubr.f32.gmra.mxu0 %v8400
      %v8588 = vpop.f32.mrf.mxu0
      %v8589 = vadd.f32 0.0, %v8588
      %v8590 = vpop.f32.mrf.mxu0
      %8591 = vmatprep.mubr.f32.mxu0 0.0
      %8592 = vmatmul.mubr.f32.gmra.mxu0 %v8403
      %v8593 = vpop.f32.mrf.mxu0
      %v8594 = vadd.f32 0.0, %v8593
      %v8595 = vpop.f32.mrf.mxu0
      %8596 = vmatprep.mubr.f32.mxu0 0.0
      %8597 = vmatmul.mubr.f32.gmra.mxu0 %v8406
      %v8598 = vpop.f32.mrf.mxu0
      %v8599 = vadd.f32 0.0, %v8598
      %v8600 = vpop.f32.mrf.mxu0
      %8601 = vmatprep.mubr.f32.mxu0 0.0
      %8602 = vmatmul.mubr.f32.gmra.mxu0 %v8409
      %v8603 = vpop.f32.mrf.mxu0
      %v8604 = vadd.f32 0.0, %v8603
      %v8605 = vpop.f32.mrf.mxu0
      %8606 = vmatprep.mubr.f32.mxu0 0.0
      %8607 = vmatmul.mubr.f32.gmra.mxu0 %v8412
      %v8608 = vpop.f32.mrf.mxu0
      %v8609 = vadd.f32 0.0, %v8608
      %v8610 = vpop.f32.mrf.mxu0
      %8611 = vmatprep.mubr.f32.mxu0 0.0
      %8612 = vmatmul.mubr.f32.gmra.mxu0 %v8415
      %v8613 = vpop.f32.mrf.mxu0
      %v8614 = vadd.f32 0.0, %v8613
      %v8615 = vpop.f32.mrf.mxu0
      %8616 = vmatprep.mubr.f32.mxu0 0.0
      %8617 = vmatmul.mubr.f32.gmra.mxu0 %v8418
      %v8618 = vpop.f32.mrf.mxu0
      %v8619 = vadd.f32 0.0, %v8618
      %v8620 = vpop.f32.mrf.mxu0
      %8621 = vmatprep.mubr.f32.mxu0 0.0
      %8622 = vmatmul.mubr.f32.gmra.mxu0 %v8421
      %v8623 = vpop.f32.mrf.mxu0
      %v8624 = vadd.f32 0.0, %v8623
      %v8625 = vpop.f32.mrf.mxu0
      %8626 = vmatprep.mubr.f32.mxu0 0.0
      %8627 = vmatmul.mubr.f32.gmra.mxu0 %v8424
      %v8628 = vpop.f32.mrf.mxu0
      %v8629 = vadd.f32 0.0, %v8628
      %v8630 = vpop.f32.mrf.mxu0
      %8631 = vmatprep.mubr.f32.mxu0 0.0
      %8632 = vmatmul.mubr.f32.gmra.mxu0 %v8427
      %v8633 = vpop.f32.mrf.mxu0
      %v8634 = vadd.f32 0.0, %v8633
      %v8635 = vpop.f32.mrf.mxu0
      %8636 = vmatprep.mubr.f32.mxu0 0.0
      %8637 = vmatmul.mubr.f32.gmra.mxu0 %v8430
      %v8638 = vpop.f32.mrf.mxu0
      %v8639 = vadd.f32 0.0, %v8638
      %v8640 = vpop.f32.mrf.mxu0
      %8641 = vmatprep.mubr.f32.mxu0 0.0
      %8642 = vmatmul.mubr.f32.gmra.mxu0 %v8433
      %v8643 = vpop.f32.mrf.mxu0
      %v8644 = vadd.f32 0.0, %v8643
      %v8645 = vpop.f32.mrf.mxu0
      %8646 = vmatprep.mubr.f32.mxu0 0.0
      %8647 = vmatmul.mubr.f32.gmra.mxu0 %v8436
      %v8648 = vpop.f32.mrf.mxu0
      %v8649 = vadd.f32 0.0, %v8648
      %v8650 = vpop.f32.mrf.mxu0
      %8651 = vmatprep.mubr.f32.mxu0 0.0
      %8652 = vmatmul.mubr.f32.gmra.mxu0 %v8439
      %v8653 = vpop.f32.mrf.mxu0
      %v8654 = vadd.f32 0.0, %v8653
      %v8655 = vpop.f32.mrf.mxu0
      %8656 = vmatprep.mubr.f32.mxu0 0.0
      %8657 = vmatmul.mubr.f32.gmra.mxu0 %v8442
      %v8658 = vpop.f32.mrf.mxu0
      %v8659 = vadd.f32 0.0, %v8658
      %v8660 = vpop.f32.mrf.mxu0
      %8661 = vmatprep.mubr.f32.mxu0 0.0
      %8662 = vmatmul.mubr.f32.gmra.mxu0 %v8445
      %v8663 = vpop.f32.mrf.mxu0
      %v8664 = vadd.f32 0.0, %v8663
      %v8665 = vpop.f32.mrf.mxu0
      %8666 = vmatprep.mubr.f32.mxu0 0.0
      %8667 = vmatmul.mubr.f32.gmra.mxu0 %v8448
      %v8668 = vpop.f32.mrf.mxu0
      %v8669 = vadd.f32 0.0, %v8668
      %v8670 = vpop.f32.mrf.mxu0
      %8671 = vmatprep.mubr.f32.mxu0 0.0
      %8672 = vmatmul.mubr.f32.gmra.mxu0 %v8451
      %v8673 = vpop.f32.mrf.mxu0
      %v8674 = vadd.f32 0.0, %v8673
      %v8675 = vpop.f32.mrf.mxu0
      %8676 = vmatprep.mubr.f32.mxu0 0.0
      %8677 = vmatmul.mubr.f32.gmra.mxu0 %v8454
      %v8678 = vpop.f32.mrf.mxu0
      %v8679 = vadd.f32 0.0, %v8678
      %v8680 = vpop.f32.mrf.mxu0
      %8681 = vmatprep.mubr.f32.mxu0 0.0
      %8682 = vmatmul.mubr.f32.gmra.mxu0 %v8457
      %v8683 = vpop.f32.mrf.mxu0
      %v8684 = vadd.f32 0.0, %v8683
      %v8685 = vpop.f32.mrf.mxu0
      %8686 = vdwg.mxu0
      %v8687 = vld [vmem:[#allocation7] sm:$0xff]
      %v8688 = vld [vmem:[#allocation7 + $0x8] sm:$0xff]
      %v8689 = vld [vmem:[#allocation7 + $0x10] sm:$0xff]
      %v8690 = vld [vmem:[#allocation7 + $0x18] sm:$0xff]
      %v8691 = vld [vmem:[#allocation7 + $0x20] sm:$0xff]
      %v8692 = vld [vmem:[#allocation7 + $0x28] sm:$0xff]
      %v8693 = vld [vmem:[#allocation7 + $0x30] sm:$0xff]
      %v8694 = vld [vmem:[#allocation7 + $0x38] sm:$0xff]
      %v8695 = vld [vmem:[#allocation7 + $0x40] sm:$0xff]
      %v8696 = vld [vmem:[#allocation7 + $0x48] sm:$0xff]
      %v8697 = vld [vmem:[#allocation7 + $0x50] sm:$0xff]
      %v8698 = vld [vmem:[#allocation7 + $0x58] sm:$0xff]
      %v8699 = vld [vmem:[#allocation7 + $0x60] sm:$0xff]
      %v8700 = vld [vmem:[#allocation7 + $0x68] sm:$0xff]
      %v8701 = vld [vmem:[#allocation7 + $0x70] sm:$0xff]
      %v8702 = vld [vmem:[#allocation7 + $0x78] sm:$0xff]
      %v8703 = vld [vmem:[#allocation7 + $0x80] sm:$0xff]
      %v8704 = vld [vmem:[#allocation7 + $0x88] sm:$0xff]
      %v8705 = vld [vmem:[#allocation7 + $0x90] sm:$0xff]
      %v8706 = vld [vmem:[#allocation7 + $0x98] sm:$0xff]
      %v8707 = vld [vmem:[#allocation7 + $0xa0] sm:$0xff]
      %v8708 = vld [vmem:[#allocation7 + $0xa8] sm:$0xff]
      %v8709 = vld [vmem:[#allocation7 + $0xb0] sm:$0xff]
      %v8710 = vld [vmem:[#allocation7 + $0xb8] sm:$0xff]
      %v8711 = vld [vmem:[#allocation7 + $0xc0] sm:$0xff]
      %v8712 = vld [vmem:[#allocation7 + $0xc8] sm:$0xff]
      %v8713 = vld [vmem:[#allocation7 + $0xd0] sm:$0xff]
      %v8714 = vld [vmem:[#allocation7 + $0xd8] sm:$0xff]
      %v8715 = vld [vmem:[#allocation7 + $0xe0] sm:$0xff]
      %v8716 = vld [vmem:[#allocation7 + $0xe8] sm:$0xff]
      %v8717 = vld [vmem:[#allocation7 + $0xf0] sm:$0xff]
      %v8718 = vld [vmem:[#allocation7 + $0xf8] sm:$0xff]
      %v8719 = vld [vmem:[%s3] sm:$0xf]
      %v8720 = vld [vmem:[%s4] sm:$0x1]
      %v8722 = vlaneseq
      %v8723 = vshrl.u32 %v8722, 7
      %v8724 = vsub.s32 0, %v8723
      %v8725 = vrot.slane %v8720, %v8724
      %v8728 = vsel %vm279, %v8687, 0
      %v8731 = vsel %vm279, %v8688, 0
      %v8734 = vsel %vm279, %v8689, 0
      %v8737 = vsel %vm279, %v8690, 0
      %v8740 = vsel %vm279, %v8691, 0
      %v8743 = vsel %vm279, %v8692, 0
      %v8746 = vsel %vm279, %v8693, 0
      %v8749 = vsel %vm279, %v8694, 0
      %v8752 = vsel %vm279, %v8695, 0
      %v8755 = vsel %vm279, %v8696, 0
      %v8758 = vsel %vm279, %v8697, 0
      %v8761 = vsel %vm279, %v8698, 0
      %v8764 = vsel %vm279, %v8699, 0
      %v8767 = vsel %vm279, %v8700, 0
      %v8770 = vsel %vm279, %v8701, 0
      %v8773 = vsel %vm279, %v8702, 0
      %v8776 = vsel %vm279, %v8703, 0
      %v8779 = vsel %vm279, %v8704, 0
      %v8782 = vsel %vm279, %v8705, 0
      %v8785 = vsel %vm279, %v8706, 0
      %v8788 = vsel %vm279, %v8707, 0
      %v8791 = vsel %vm279, %v8708, 0
      %v8794 = vsel %vm279, %v8709, 0
      %v8797 = vsel %vm279, %v8710, 0
      %v8800 = vsel %vm279, %v8711, 0
      %v8803 = vsel %vm279, %v8712, 0
      %v8806 = vsel %vm279, %v8713, 0
      %v8809 = vsel %vm279, %v8714, 0
      %v8812 = vsel %vm279, %v8715, 0
      %v8815 = vsel %vm279, %v8716, 0
      %v8818 = vsel %vm279, %v8717, 0
      %v8821 = vsel %vm279, %v8718, 0
      %v8824 = vsel %vm558, %v8719, 0
      %8826 = vmatprep.subr.mxu0 0.0
      %8827 = vmatpush1.msra.mxu0 0.0
      %8828 = vmatprep.subr.mxu0 0.0
      %8829 = vmatpush1.msra.mxu0 0.0
      %8830 = vmatprep.subr.mxu0 0.0
      %8831 = vmatpush1.msra.mxu0 0.0
      %8832 = vmatprep.subr.mxu0 0.0
      %8833 = vmatpush1.msra.mxu0 0.0
      %8834 = vmatprep.subr.mxu0 0.0
      %8835 = vmatpush1.msra.mxu0 0.0
      %8836 = vmatprep.subr.mxu0 0.0
      %8837 = vmatpush1.msra.mxu0 0.0
      %8838 = vmatprep.subr.mxu0 0.0
      %8839 = vmatpush1.msra.mxu0 0.0
      %8840 = vmatprep.subr.mxu0 0.0
      %8841 = vmatpush1.msra.mxu0 0.0
      %8842 = vmatprep.subr.mxu0 0.0
      %8843 = vmatpush1.msra.mxu0 0.0
      %8844 = vmatprep.subr.mxu0 0.0
      %8845 = vmatpush1.msra.mxu0 0.0
      %8846 = vmatprep.subr.mxu0 0.0
      %8847 = vmatpush1.msra.mxu0 0.0
      %8848 = vmatprep.subr.mxu0 0.0
      %8849 = vmatpush1.msra.mxu0 0.0
      %8850 = vmatprep.subr.mxu0 0.0
      %8851 = vmatpush1.msra.mxu0 0.0
      %8852 = vmatprep.subr.mxu0 0.0
      %8853 = vmatpush1.msra.mxu0 0.0
      %8854 = vmatprep.subr.mxu0 0.0
      %8855 = vmatpush1.msra.mxu0 0.0
      %8856 = vmatprep.subr.mxu0 0.0
      %8857 = vmatpush1.msra.mxu0 %v8824
      %8858 = vmatprep.subr.mxu0 0.0
      %8859 = vmatpush2.msra.mxu0 0.0
      %8860 = vmatprep.subr.mxu0 0.0
      %8861 = vmatpush2.msra.mxu0 0.0
      %8862 = vmatprep.subr.mxu0 0.0
      %8863 = vmatpush2.msra.mxu0 0.0
      %8864 = vmatprep.subr.mxu0 0.0
      %8865 = vmatpush2.msra.mxu0 0.0
      %8866 = vmatprep.subr.mxu0 0.0
      %8867 = vmatpush2.msra.mxu0 0.0
      %8868 = vmatprep.subr.mxu0 0.0
      %8869 = vmatpush2.msra.mxu0 0.0
      %8870 = vmatprep.subr.mxu0 0.0
      %8871 = vmatpush2.msra.mxu0 0.0
      %8872 = vmatprep.subr.mxu0 0.0
      %8873 = vmatpush2.msra.mxu0 0.0
      %8874 = vmatprep.subr.mxu0 0.0
      %8875 = vmatpush2.msra.mxu0 0.0
      %8876 = vmatprep.subr.mxu0 0.0
      %8877 = vmatpush2.msra.mxu0 0.0
      %8878 = vmatprep.subr.mxu0 0.0
      %8879 = vmatpush2.msra.mxu0 0.0
      %8880 = vmatprep.subr.mxu0 0.0
      %8881 = vmatpush2.msra.mxu0 0.0
      %8882 = vmatprep.subr.mxu0 0.0
      %8883 = vmatpush2.msra.mxu0 0.0
      %8884 = vmatprep.subr.mxu0 0.0
      %8885 = vmatpush2.msra.mxu0 0.0
      %8886 = vmatprep.subr.mxu0 0.0
      %8887 = vmatpush2.msra.mxu0 0.0
      %8888 = vmatprep.subr.mxu0 0.0
      %8889 = vmatpush2.msra.mxu0 0.0
      %8890 = vmatprep.mubr.f32.mxu0 0.0
      %8891 = vmatmul.mubr.f32.gmra.mxu0 %v8728
      %v8892 = vpop.f32.mrf.mxu0
      %v8893 = vadd.f32 %v8725, %v8892
      %v8894 = vpop.f32.mrf.mxu0
      %8895 = vmatprep.mubr.f32.mxu0 0.0
      %8896 = vmatmul.mubr.f32.gmra.mxu0 %v8731
      %v8897 = vpop.f32.mrf.mxu0
      %v8898 = vadd.f32 %v8725, %v8897
      %v8899 = vpop.f32.mrf.mxu0
      %8900 = vmatprep.mubr.f32.mxu0 0.0
      %8901 = vmatmul.mubr.f32.gmra.mxu0 %v8734
      %v8902 = vpop.f32.mrf.mxu0
      %v8903 = vadd.f32 %v8725, %v8902
      %v8904 = vpop.f32.mrf.mxu0
      %8905 = vmatprep.mubr.f32.mxu0 0.0
      %8906 = vmatmul.mubr.f32.gmra.mxu0 %v8737
      %v8907 = vpop.f32.mrf.mxu0
      %v8908 = vadd.f32 %v8725, %v8907
      %v8909 = vpop.f32.mrf.mxu0
      %8910 = vmatprep.mubr.f32.mxu0 0.0
      %8911 = vmatmul.mubr.f32.gmra.mxu0 %v8740
      %v8912 = vpop.f32.mrf.mxu0
      %v8913 = vadd.f32 %v8725, %v8912
      %v8914 = vpop.f32.mrf.mxu0
      %8915 = vmatprep.mubr.f32.mxu0 0.0
      %8916 = vmatmul.mubr.f32.gmra.mxu0 %v8743
      %v8917 = vpop.f32.mrf.mxu0
      %v8918 = vadd.f32 %v8725, %v8917
      %v8919 = vpop.f32.mrf.mxu0
      %8920 = vmatprep.mubr.f32.mxu0 0.0
      %8921 = vmatmul.mubr.f32.gmra.mxu0 %v8746
      %v8922 = vpop.f32.mrf.mxu0
      %v8923 = vadd.f32 %v8725, %v8922
      %v8924 = vpop.f32.mrf.mxu0
      %8925 = vmatprep.mubr.f32.mxu0 0.0
      %8926 = vmatmul.mubr.f32.gmra.mxu0 %v8749
      %v8927 = vpop.f32.mrf.mxu0
      %v8928 = vadd.f32 %v8725, %v8927
      %v8929 = vpop.f32.mrf.mxu0
      %8930 = vmatprep.mubr.f32.mxu0 0.0
      %8931 = vmatmul.mubr.f32.gmra.mxu0 %v8752
      %v8932 = vpop.f32.mrf.mxu0
      %v8933 = vadd.f32 %v8725, %v8932
      %v8934 = vpop.f32.mrf.mxu0
      %8935 = vmatprep.mubr.f32.mxu0 0.0
      %8936 = vmatmul.mubr.f32.gmra.mxu0 %v8755
      %v8937 = vpop.f32.mrf.mxu0
      %v8938 = vadd.f32 %v8725, %v8937
      %v8939 = vpop.f32.mrf.mxu0
      %8940 = vmatprep.mubr.f32.mxu0 0.0
      %8941 = vmatmul.mubr.f32.gmra.mxu0 %v8758
      %v8942 = vpop.f32.mrf.mxu0
      %v8943 = vadd.f32 %v8725, %v8942
      %v8944 = vpop.f32.mrf.mxu0
      %8945 = vmatprep.mubr.f32.mxu0 0.0
      %8946 = vmatmul.mubr.f32.gmra.mxu0 %v8761
      %v8947 = vpop.f32.mrf.mxu0
      %v8948 = vadd.f32 %v8725, %v8947
      %v8949 = vpop.f32.mrf.mxu0
      %8950 = vmatprep.mubr.f32.mxu0 0.0
      %8951 = vmatmul.mubr.f32.gmra.mxu0 %v8764
      %v8952 = vpop.f32.mrf.mxu0
      %v8953 = vadd.f32 %v8725, %v8952
      %v8954 = vpop.f32.mrf.mxu0
      %8955 = vmatprep.mubr.f32.mxu0 0.0
      %8956 = vmatmul.mubr.f32.gmra.mxu0 %v8767
      %v8957 = vpop.f32.mrf.mxu0
      %v8958 = vadd.f32 %v8725, %v8957
      %v8959 = vpop.f32.mrf.mxu0
      %8960 = vmatprep.mubr.f32.mxu0 0.0
      %8961 = vmatmul.mubr.f32.gmra.mxu0 %v8770
      %v8962 = vpop.f32.mrf.mxu0
      %v8963 = vadd.f32 %v8725, %v8962
      %v8964 = vpop.f32.mrf.mxu0
      %8965 = vmatprep.mubr.f32.mxu0 0.0
      %8966 = vmatmul.mubr.f32.gmra.mxu0 %v8773
      %v8967 = vpop.f32.mrf.mxu0
      %v8968 = vadd.f32 %v8725, %v8967
      %v8969 = vpop.f32.mrf.mxu0
      %8970 = vmatprep.mubr.f32.mxu0 0.0
      %8971 = vmatmul.mubr.f32.gmra.mxu0 %v8776
      %v8972 = vpop.f32.mrf.mxu0
      %v8973 = vadd.f32 %v8725, %v8972
      %v8974 = vpop.f32.mrf.mxu0
      %8975 = vmatprep.mubr.f32.mxu0 0.0
      %8976 = vmatmul.mubr.f32.gmra.mxu0 %v8779
      %v8977 = vpop.f32.mrf.mxu0
      %v8978 = vadd.f32 %v8725, %v8977
      %v8979 = vpop.f32.mrf.mxu0
      %8980 = vmatprep.mubr.f32.mxu0 0.0
      %8981 = vmatmul.mubr.f32.gmra.mxu0 %v8782
      %v8982 = vpop.f32.mrf.mxu0
      %v8983 = vadd.f32 %v8725, %v8982
      %v8984 = vpop.f32.mrf.mxu0
      %8985 = vmatprep.mubr.f32.mxu0 0.0
      %8986 = vmatmul.mubr.f32.gmra.mxu0 %v8785
      %v8987 = vpop.f32.mrf.mxu0
      %v8988 = vadd.f32 %v8725, %v8987
      %v8989 = vpop.f32.mrf.mxu0
      %8990 = vmatprep.mubr.f32.mxu0 0.0
      %8991 = vmatmul.mubr.f32.gmra.mxu0 %v8788
      %v8992 = vpop.f32.mrf.mxu0
      %v8993 = vadd.f32 %v8725, %v8992
      %v8994 = vpop.f32.mrf.mxu0
      %8995 = vmatprep.mubr.f32.mxu0 0.0
      %8996 = vmatmul.mubr.f32.gmra.mxu0 %v8791
      %v8997 = vpop.f32.mrf.mxu0
      %v8998 = vadd.f32 %v8725, %v8997
      %v8999 = vpop.f32.mrf.mxu0
      %9000 = vmatprep.mubr.f32.mxu0 0.0
      %9001 = vmatmul.mubr.f32.gmra.mxu0 %v8794
      %v9002 = vpop.f32.mrf.mxu0
      %v9003 = vadd.f32 %v8725, %v9002
      %v9004 = vpop.f32.mrf.mxu0
      %9005 = vmatprep.mubr.f32.mxu0 0.0
      %9006 = vmatmul.mubr.f32.gmra.mxu0 %v8797
      %v9007 = vpop.f32.mrf.mxu0
      %v9008 = vadd.f32 %v8725, %v9007
      %v9009 = vpop.f32.mrf.mxu0
      %9010 = vmatprep.mubr.f32.mxu0 0.0
      %9011 = vmatmul.mubr.f32.gmra.mxu0 %v8800
      %v9012 = vpop.f32.mrf.mxu0
      %v9013 = vadd.f32 %v8725, %v9012
      %v9014 = vpop.f32.mrf.mxu0
      %9015 = vmatprep.mubr.f32.mxu0 0.0
      %9016 = vmatmul.mubr.f32.gmra.mxu0 %v8803
      %v9017 = vpop.f32.mrf.mxu0
      %v9018 = vadd.f32 %v8725, %v9017
      %v9019 = vpop.f32.mrf.mxu0
      %9020 = vmatprep.mubr.f32.mxu0 0.0
      %9021 = vmatmul.mubr.f32.gmra.mxu0 %v8806
      %v9022 = vpop.f32.mrf.mxu0
      %v9023 = vadd.f32 %v8725, %v9022
      %v9024 = vpop.f32.mrf.mxu0
      %9025 = vmatprep.mubr.f32.mxu0 0.0
      %9026 = vmatmul.mubr.f32.gmra.mxu0 %v8809
      %v9027 = vpop.f32.mrf.mxu0
      %v9028 = vadd.f32 %v8725, %v9027
      %v9029 = vpop.f32.mrf.mxu0
      %9030 = vmatprep.mubr.f32.mxu0 0.0
      %9031 = vmatmul.mubr.f32.gmra.mxu0 %v8812
      %v9032 = vpop.f32.mrf.mxu0
      %v9033 = vadd.f32 %v8725, %v9032
      %v9034 = vpop.f32.mrf.mxu0
      %9035 = vmatprep.mubr.f32.mxu0 0.0
      %9036 = vmatmul.mubr.f32.gmra.mxu0 %v8815
      %v9037 = vpop.f32.mrf.mxu0
      %v9038 = vadd.f32 %v8725, %v9037
      %v9039 = vpop.f32.mrf.mxu0
      %9040 = vmatprep.mubr.f32.mxu0 0.0
      %9041 = vmatmul.mubr.f32.gmra.mxu0 %v8818
      %v9042 = vpop.f32.mrf.mxu0
      %v9043 = vadd.f32 %v8725, %v9042
      %v9044 = vpop.f32.mrf.mxu0
      %9045 = vmatprep.mubr.f32.mxu0 0.0
      %9046 = vmatmul.mubr.f32.gmra.mxu0 %v8821
      %v9047 = vpop.f32.mrf.mxu0
      %v9048 = vadd.f32 %v8725, %v9047
      %v9049 = vpop.f32.mrf.mxu0
      %9050 = vdwg.mxu0
      %9083 = vrot.lane.b32.xlu0 %v8159, 4
      %v9084 = vpop.permute.xlu0 %9083
      %9085 = vrot.lane.b32.xlu0 %v8164, 4
      %v9086 = vpop.permute.xlu0 %9085
      %9087 = vrot.lane.b32.xlu0 %v8169, 4
      %v9088 = vpop.permute.xlu0 %9087
      %9089 = vrot.lane.b32.xlu0 %v8174, 4
      %v9090 = vpop.permute.xlu0 %9089
      %9091 = vrot.lane.b32.xlu0 %v8179, 4
      %v9092 = vpop.permute.xlu0 %9091
      %9093 = vrot.lane.b32.xlu0 %v8184, 4
      %v9094 = vpop.permute.xlu0 %9093
      %9095 = vrot.lane.b32.xlu0 %v8189, 4
      %v9096 = vpop.permute.xlu0 %9095
      %9097 = vrot.lane.b32.xlu0 %v8194, 4
      %v9098 = vpop.permute.xlu0 %9097
      %9099 = vrot.lane.b32.xlu0 %v8199, 4
      %v9100 = vpop.permute.xlu0 %9099
      %9101 = vrot.lane.b32.xlu0 %v8204, 4
      %v9102 = vpop.permute.xlu0 %9101
      %9103 = vrot.lane.b32.xlu0 %v8209, 4
      %v9104 = vpop.permute.xlu0 %9103
      %9105 = vrot.lane.b32.xlu0 %v8214, 4
      %v9106 = vpop.permute.xlu0 %9105
      %9107 = vrot.lane.b32.xlu0 %v8219, 4
      %v9108 = vpop.permute.xlu0 %9107
      %9109 = vrot.lane.b32.xlu0 %v8224, 4
      %v9110 = vpop.permute.xlu0 %9109
      %9111 = vrot.lane.b32.xlu0 %v8229, 4
      %v9112 = vpop.permute.xlu0 %9111
      %9113 = vrot.lane.b32.xlu0 %v8234, 4
      %v9114 = vpop.permute.xlu0 %9113
      %9115 = vrot.lane.b32.xlu0 %v8239, 4
      %v9116 = vpop.permute.xlu0 %9115
      %9117 = vrot.lane.b32.xlu0 %v8244, 4
      %v9118 = vpop.permute.xlu0 %9117
      %9119 = vrot.lane.b32.xlu0 %v8249, 4
      %v9120 = vpop.permute.xlu0 %9119
      %9121 = vrot.lane.b32.xlu0 %v8254, 4
      %v9122 = vpop.permute.xlu0 %9121
      %9123 = vrot.lane.b32.xlu0 %v8259, 4
      %v9124 = vpop.permute.xlu0 %9123
      %9125 = vrot.lane.b32.xlu0 %v8264, 4
      %v9126 = vpop.permute.xlu0 %9125
      %9127 = vrot.lane.b32.xlu0 %v8269, 4
      %v9128 = vpop.permute.xlu0 %9127
      %9129 = vrot.lane.b32.xlu0 %v8274, 4
      %v9130 = vpop.permute.xlu0 %9129
      %9131 = vrot.lane.b32.xlu0 %v8279, 4
      %v9132 = vpop.permute.xlu0 %9131
      %9133 = vrot.lane.b32.xlu0 %v8284, 4
      %v9134 = vpop.permute.xlu0 %9133
      %9135 = vrot.lane.b32.xlu0 %v8289, 4
      %v9136 = vpop.permute.xlu0 %9135
      %9137 = vrot.lane.b32.xlu0 %v8294, 4
      %v9138 = vpop.permute.xlu0 %9137
      %9139 = vrot.lane.b32.xlu0 %v8299, 4
      %v9140 = vpop.permute.xlu0 %9139
      %9141 = vrot.lane.b32.xlu0 %v8304, 4
      %v9142 = vpop.permute.xlu0 %9141
      %9143 = vrot.lane.b32.xlu0 %v8309, 4
      %v9144 = vpop.permute.xlu0 %9143
      %9145 = vrot.lane.b32.xlu0 %v8314, 4
      %v9146 = vpop.permute.xlu0 %9145
      %9211 = vrot.lane.b32.xlu0 %v8529, 12
      %v9212 = vpop.permute.xlu0 %9211
      %9213 = vrot.lane.b32.xlu0 %v8534, 12
      %v9214 = vpop.permute.xlu0 %9213
      %9215 = vrot.lane.b32.xlu0 %v8539, 12
      %v9216 = vpop.permute.xlu0 %9215
      %9217 = vrot.lane.b32.xlu0 %v8544, 12
      %v9218 = vpop.permute.xlu0 %9217
      %9219 = vrot.lane.b32.xlu0 %v8549, 12
      %v9220 = vpop.permute.xlu0 %9219
      %9221 = vrot.lane.b32.xlu0 %v8554, 12
      %v9222 = vpop.permute.xlu0 %9221
      %9223 = vrot.lane.b32.xlu0 %v8559, 12
      %v9224 = vpop.permute.xlu0 %9223
      %9225 = vrot.lane.b32.xlu0 %v8564, 12
      %v9226 = vpop.permute.xlu0 %9225
      %9227 = vrot.lane.b32.xlu0 %v8569, 12
      %v9228 = vpop.permute.xlu0 %9227
      %9229 = vrot.lane.b32.xlu0 %v8574, 12
      %v9230 = vpop.permute.xlu0 %9229
      %9231 = vrot.lane.b32.xlu0 %v8579, 12
      %v9232 = vpop.permute.xlu0 %9231
      %9233 = vrot.lane.b32.xlu0 %v8584, 12
      %v9234 = vpop.permute.xlu0 %9233
      %9235 = vrot.lane.b32.xlu0 %v8589, 12
      %v9236 = vpop.permute.xlu0 %9235
      %9237 = vrot.lane.b32.xlu0 %v8594, 12
      %v9238 = vpop.permute.xlu0 %9237
      %9239 = vrot.lane.b32.xlu0 %v8599, 12
      %v9240 = vpop.permute.xlu0 %9239
      %9241 = vrot.lane.b32.xlu0 %v8604, 12
      %v9242 = vpop.permute.xlu0 %9241
      %9243 = vrot.lane.b32.xlu0 %v8609, 12
      %v9244 = vpop.permute.xlu0 %9243
      %9245 = vrot.lane.b32.xlu0 %v8614, 12
      %v9246 = vpop.permute.xlu0 %9245
      %9247 = vrot.lane.b32.xlu0 %v8619, 12
      %v9248 = vpop.permute.xlu0 %9247
      %9249 = vrot.lane.b32.xlu0 %v8624, 12
      %v9250 = vpop.permute.xlu0 %9249
      %9251 = vrot.lane.b32.xlu0 %v8629, 12
      %v9252 = vpop.permute.xlu0 %9251
      %9253 = vrot.lane.b32.xlu0 %v8634, 12
      %v9254 = vpop.permute.xlu0 %9253
      %9255 = vrot.lane.b32.xlu0 %v8639, 12
      %v9256 = vpop.permute.xlu0 %9255
      %9257 = vrot.lane.b32.xlu0 %v8644, 12
      %v9258 = vpop.permute.xlu0 %9257
      %9259 = vrot.lane.b32.xlu0 %v8649, 12
      %v9260 = vpop.permute.xlu0 %9259
      %9261 = vrot.lane.b32.xlu0 %v8654, 12
      %v9262 = vpop.permute.xlu0 %9261
      %9263 = vrot.lane.b32.xlu0 %v8659, 12
      %v9264 = vpop.permute.xlu0 %9263
      %9265 = vrot.lane.b32.xlu0 %v8664, 12
      %v9266 = vpop.permute.xlu0 %9265
      %9267 = vrot.lane.b32.xlu0 %v8669, 12
      %v9268 = vpop.permute.xlu0 %9267
      %9269 = vrot.lane.b32.xlu0 %v8674, 12
      %v9270 = vpop.permute.xlu0 %9269
      %9271 = vrot.lane.b32.xlu0 %v8679, 12
      %v9272 = vpop.permute.xlu0 %9271
      %9273 = vrot.lane.b32.xlu0 %v8684, 12
      %v9274 = vpop.permute.xlu0 %9273
      %9339 = vrot.lane.b32.xlu0 %v8893, 20
      %v9340 = vpop.permute.xlu0 %9339
      %9341 = vrot.lane.b32.xlu0 %v8898, 20
      %v9342 = vpop.permute.xlu0 %9341
      %9343 = vrot.lane.b32.xlu0 %v8903, 20
      %v9344 = vpop.permute.xlu0 %9343
      %9345 = vrot.lane.b32.xlu0 %v8908, 20
      %v9346 = vpop.permute.xlu0 %9345
      %9347 = vrot.lane.b32.xlu0 %v8913, 20
      %v9348 = vpop.permute.xlu0 %9347
      %9349 = vrot.lane.b32.xlu0 %v8918, 20
      %v9350 = vpop.permute.xlu0 %9349
      %9351 = vrot.lane.b32.xlu0 %v8923, 20
      %v9352 = vpop.permute.xlu0 %9351
      %9353 = vrot.lane.b32.xlu0 %v8928, 20
      %v9354 = vpop.permute.xlu0 %9353
      %9355 = vrot.lane.b32.xlu0 %v8933, 20
      %v9356 = vpop.permute.xlu0 %9355
      %9357 = vrot.lane.b32.xlu0 %v8938, 20
      %v9358 = vpop.permute.xlu0 %9357
      %9359 = vrot.lane.b32.xlu0 %v8943, 20
      %v9360 = vpop.permute.xlu0 %9359
      %9361 = vrot.lane.b32.xlu0 %v8948, 20
      %v9362 = vpop.permute.xlu0 %9361
      %9363 = vrot.lane.b32.xlu0 %v8953, 20
      %v9364 = vpop.permute.xlu0 %9363
      %9365 = vrot.lane.b32.xlu0 %v8958, 20
      %v9366 = vpop.permute.xlu0 %9365
      %9367 = vrot.lane.b32.xlu0 %v8963, 20
      %v9368 = vpop.permute.xlu0 %9367
      %9369 = vrot.lane.b32.xlu0 %v8968, 20
      %v9370 = vpop.permute.xlu0 %9369
      %9371 = vrot.lane.b32.xlu0 %v8973, 20
      %v9372 = vpop.permute.xlu0 %9371
      %9373 = vrot.lane.b32.xlu0 %v8978, 20
      %v9374 = vpop.permute.xlu0 %9373
      %9375 = vrot.lane.b32.xlu0 %v8983, 20
      %v9376 = vpop.permute.xlu0 %9375
      %9377 = vrot.lane.b32.xlu0 %v8988, 20
      %v9378 = vpop.permute.xlu0 %9377
      %9379 = vrot.lane.b32.xlu0 %v8993, 20
      %v9380 = vpop.permute.xlu0 %9379
      %9381 = vrot.lane.b32.xlu0 %v8998, 20
      %v9382 = vpop.permute.xlu0 %9381
      %9383 = vrot.lane.b32.xlu0 %v9003, 20
      %v9384 = vpop.permute.xlu0 %9383
      %9385 = vrot.lane.b32.xlu0 %v9008, 20
      %v9386 = vpop.permute.xlu0 %9385
      %9387 = vrot.lane.b32.xlu0 %v9013, 20
      %v9388 = vpop.permute.xlu0 %9387
      %9389 = vrot.lane.b32.xlu0 %v9018, 20
      %v9390 = vpop.permute.xlu0 %9389
      %9391 = vrot.lane.b32.xlu0 %v9023, 20
      %v9392 = vpop.permute.xlu0 %9391
      %9393 = vrot.lane.b32.xlu0 %v9028, 20
      %v9394 = vpop.permute.xlu0 %9393
      %9395 = vrot.lane.b32.xlu0 %v9033, 20
      %v9396 = vpop.permute.xlu0 %9395
      %9397 = vrot.lane.b32.xlu0 %v9038, 20
      %v9398 = vpop.permute.xlu0 %9397
      %9399 = vrot.lane.b32.xlu0 %v9043, 20
      %v9400 = vpop.permute.xlu0 %9399
      %9401 = vrot.lane.b32.xlu0 %v9048, 20
      %v9402 = vpop.permute.xlu0 %9401
      %v9435 = vsel %vm279, %v629, %v9084
      %v9436 = vsel %vm279, %v634, %v9086
      %v9437 = vsel %vm279, %v639, %v9088
      %v9438 = vsel %vm279, %v644, %v9090
      %v9439 = vsel %vm279, %v649, %v9092
      %v9440 = vsel %vm279, %v654, %v9094
      %v9441 = vsel %vm279, %v659, %v9096
      %v9442 = vsel %vm279, %v664, %v9098
      %v9443 = vsel %vm279, %v669, %v9100
      %v9444 = vsel %vm279, %v674, %v9102
      %v9445 = vsel %vm279, %v679, %v9104
      %v9446 = vsel %vm279, %v684, %v9106
      %v9447 = vsel %vm279, %v689, %v9108
      %v9448 = vsel %vm279, %v694, %v9110
      %v9449 = vsel %vm279, %v699, %v9112
      %v9450 = vsel %vm279, %v704, %v9114
      %v9451 = vsel %vm279, %v709, %v9116
      %v9452 = vsel %vm279, %v714, %v9118
      %v9453 = vsel %vm279, %v719, %v9120
      %v9454 = vsel %vm279, %v724, %v9122
      %v9455 = vsel %vm279, %v729, %v9124
      %v9456 = vsel %vm279, %v734, %v9126
      %v9457 = vsel %vm279, %v739, %v9128
      %v9458 = vsel %vm279, %v744, %v9130
      %v9459 = vsel %vm279, %v749, %v9132
      %v9460 = vsel %vm279, %v754, %v9134
      %v9461 = vsel %vm279, %v759, %v9136
      %v9462 = vsel %vm279, %v764, %v9138
      %v9463 = vsel %vm279, %v769, %v9140
      %v9464 = vsel %vm279, %v774, %v9142
      %v9465 = vsel %vm279, %v779, %v9144
      %v9466 = vsel %vm279, %v784, %v9146
      %vm9467 = vcmask 97280
      %v9468 = vsel %vm9467, %v9435, %v9212
      %v9469 = vsel %vm9467, %v9436, %v9214
      %v9470 = vsel %vm9467, %v9437, %v9216
      %v9471 = vsel %vm9467, %v9438, %v9218
      %v9472 = vsel %vm9467, %v9439, %v9220
      %v9473 = vsel %vm9467, %v9440, %v9222
      %v9474 = vsel %vm9467, %v9441, %v9224
      %v9475 = vsel %vm9467, %v9442, %v9226
      %v9476 = vsel %vm9467, %v9443, %v9228
      %v9477 = vsel %vm9467, %v9444, %v9230
      %v9478 = vsel %vm9467, %v9445, %v9232
      %v9479 = vsel %vm9467, %v9446, %v9234
      %v9480 = vsel %vm9467, %v9447, %v9236
      %v9481 = vsel %vm9467, %v9448, %v9238
      %v9482 = vsel %vm9467, %v9449, %v9240
      %v9483 = vsel %vm9467, %v9450, %v9242
      %v9484 = vsel %vm9467, %v9451, %v9244
      %v9485 = vsel %vm9467, %v9452, %v9246
      %v9486 = vsel %vm9467, %v9453, %v9248
      %v9487 = vsel %vm9467, %v9454, %v9250
      %v9488 = vsel %vm9467, %v9455, %v9252
      %v9489 = vsel %vm9467, %v9456, %v9254
      %v9490 = vsel %vm9467, %v9457, %v9256
      %v9491 = vsel %vm9467, %v9458, %v9258
      %v9492 = vsel %vm9467, %v9459, %v9260
      %v9493 = vsel %vm9467, %v9460, %v9262
      %v9494 = vsel %vm9467, %v9461, %v9264
      %v9495 = vsel %vm9467, %v9462, %v9266
      %v9496 = vsel %vm9467, %v9463, %v9268
      %v9497 = vsel %vm9467, %v9464, %v9270
      %v9498 = vsel %vm9467, %v9465, %v9272
      %v9499 = vsel %vm9467, %v9466, %v9274
      %vm9500 = vcmask 162816
      %v9501 = vsel %vm9500, %v9468, %v9340
      %v9502 = vsel %vm9500, %v9469, %v9342
      %v9503 = vsel %vm9500, %v9470, %v9344
      %v9504 = vsel %vm9500, %v9471, %v9346
      %v9505 = vsel %vm9500, %v9472, %v9348
      %v9506 = vsel %vm9500, %v9473, %v9350
      %v9507 = vsel %vm9500, %v9474, %v9352
      %v9508 = vsel %vm9500, %v9475, %v9354
      %v9509 = vsel %vm9500, %v9476, %v9356
      %v9510 = vsel %vm9500, %v9477, %v9358
      %v9511 = vsel %vm9500, %v9478, %v9360
      %v9512 = vsel %vm9500, %v9479, %v9362
      %v9513 = vsel %vm9500, %v9480, %v9364
      %v9514 = vsel %vm9500, %v9481, %v9366
      %v9515 = vsel %vm9500, %v9482, %v9368
      %v9516 = vsel %vm9500, %v9483, %v9370
      %v9517 = vsel %vm9500, %v9484, %v9372
      %v9518 = vsel %vm9500, %v9485, %v9374
      %v9519 = vsel %vm9500, %v9486, %v9376
      %v9520 = vsel %vm9500, %v9487, %v9378
      %v9521 = vsel %vm9500, %v9488, %v9380
      %v9522 = vsel %vm9500, %v9489, %v9382
      %v9523 = vsel %vm9500, %v9490, %v9384
      %v9524 = vsel %vm9500, %v9491, %v9386
      %v9525 = vsel %vm9500, %v9492, %v9388
      %v9526 = vsel %vm9500, %v9493, %v9390
      %v9527 = vsel %vm9500, %v9494, %v9392
      %v9528 = vsel %vm9500, %v9495, %v9394
      %v9529 = vsel %vm9500, %v9496, %v9396
      %v9530 = vsel %vm9500, %v9497, %v9398
      %v9531 = vsel %vm9500, %v9498, %v9400
      %v9532 = vsel %vm9500, %v9499, %v9402
      %vm9533 = vcmask 195584
      %9534 = vst.msk [vmem:[%s278] sm:$0xff] %vm9533, %v9501
      %9535 = vst.msk [vmem:[%s278 + $0x8] sm:$0xff] %vm9533, %v9502
      %9536 = vst.msk [vmem:[%s278 + $0x10] sm:$0xff] %vm9533, %v9503
      %9537 = vst.msk [vmem:[%s278 + $0x18] sm:$0xff] %vm9533, %v9504
      %9538 = vst.msk [vmem:[%s278 + $0x20] sm:$0xff] %vm9533, %v9505
      %9539 = vst.msk [vmem:[%s278 + $0x28] sm:$0xff] %vm9533, %v9506
      %9540 = vst.msk [vmem:[%s278 + $0x30] sm:$0xff] %vm9533, %v9507
      %9541 = vst.msk [vmem:[%s278 + $0x38] sm:$0xff] %vm9533, %v9508
      %9542 = vst.msk [vmem:[%s278 + $0x40] sm:$0xff] %vm9533, %v9509
      %9543 = vst.msk [vmem:[%s278 + $0x48] sm:$0xff] %vm9533, %v9510
      %9544 = vst.msk [vmem:[%s278 + $0x50] sm:$0xff] %vm9533, %v9511
      %9545 = vst.msk [vmem:[%s278 + $0x58] sm:$0xff] %vm9533, %v9512
      %9546 = vst.msk [vmem:[%s278 + $0x60] sm:$0xff] %vm9533, %v9513
      %9547 = vst.msk [vmem:[%s278 + $0x68] sm:$0xff] %vm9533, %v9514
      %9548 = vst.msk [vmem:[%s278 + $0x70] sm:$0xff] %vm9533, %v9515
      %9549 = vst.msk [vmem:[%s278 + $0x78] sm:$0xff] %vm9533, %v9516
      %9550 = vst.msk [vmem:[%s278 + $0x80] sm:$0xff] %vm9533, %v9517
      %9551 = vst.msk [vmem:[%s278 + $0x88] sm:$0xff] %vm9533, %v9518
      %9552 = vst.msk [vmem:[%s278 + $0x90] sm:$0xff] %vm9533, %v9519
      %9553 = vst.msk [vmem:[%s278 + $0x98] sm:$0xff] %vm9533, %v9520
      %9554 = vst.msk [vmem:[%s278 + $0xa0] sm:$0xff] %vm9533, %v9521
      %9555 = vst.msk [vmem:[%s278 + $0xa8] sm:$0xff] %vm9533, %v9522
      %9556 = vst.msk [vmem:[%s278 + $0xb0] sm:$0xff] %vm9533, %v9523
      %9557 = vst.msk [vmem:[%s278 + $0xb8] sm:$0xff] %vm9533, %v9524
      %9558 = vst.msk [vmem:[%s278 + $0xc0] sm:$0xff] %vm9533, %v9525
      %9559 = vst.msk [vmem:[%s278 + $0xc8] sm:$0xff] %vm9533, %v9526
      %9560 = vst.msk [vmem:[%s278 + $0xd0] sm:$0xff] %vm9533, %v9527
      %9561 = vst.msk [vmem:[%s278 + $0xd8] sm:$0xff] %vm9533, %v9528
      %9562 = vst.msk [vmem:[%s278 + $0xe0] sm:$0xff] %vm9533, %v9529
      %9563 = vst.msk [vmem:[%s278 + $0xe8] sm:$0xff] %vm9533, %v9530
      %9564 = vst.msk [vmem:[%s278 + $0xf0] sm:$0xff] %vm9533, %v9531
      %9565 = vst.msk [vmem:[%s278 + $0xf8] sm:$0xff] %vm9533, %v9532
      %p9566 = scmp.lt.s32.totalorder %s18, 1
      %s9567 = scalar_select %p9566, %s18, 1
      %s9568 = smul.addr %s9567, 32
      %s9569 = smul.addr %s9568, 8
      %s9570 = scalar_lea.vmem %s7, %s9569
      // Predicated region
      $region49: #{tpu_custom_call.1} parent=47 // pred_check
        %p9571 = pneg %p188
      $region50: #{tpu_custom_call.1} parent=47 // pred_check_branch
        %9573 = sbr.rel (%p9571) target = $region52
      $region51: #{tpu_custom_call.1} parent=47 // pred_region
        _
      $region52: #{tpu_custom_call.1} parent=47 // pred_fallthru
        _
    $region48: #{tpu_custom_call.1} parent=5 // pred_fallthru
      _
    %p9574 = scmp.le.s32.totalorder 2, %s13
    // Predicated region
    $region53: #{tpu_custom_call.1} parent=5 // pred_check
      %p9575 = pneg %p9574
    $region54: #{tpu_custom_call.1} parent=5 // pred_check_branch
      %9577 = sbr.rel (%p9575) target = $region56
    $region55: #{tpu_custom_call.1} parent=5 // pred_region
      %s9578 = ssub.s32 %s13, 2
      // Predicated region
      $region57: #{tpu_custom_call.1} parent=55 // pred_check
        %p9579 = pneg %p194
      $region58: #{tpu_custom_call.1} parent=55 // pred_check_branch
        %9581 = sbr.rel (%p9579) target = $region60
      $region59: #{tpu_custom_call.1} parent=55 // pred_region
        %p9582 = scmp.lt.s32.totalorder %s19, 1
        %s9583 = scalar_select %p9582, %s19, 1
        %s9584 = smul.addr %s9583, 32
        %s9585 = smul.addr %s9584, 8
        %s9586 = scalar_lea.vmem %s7, %s9585
      $region60: #{tpu_custom_call.1} parent=55 // pred_fallthru
        _
    $region56: #{tpu_custom_call.1} parent=5 // pred_fallthru
      _
  $region6: #{tpu_custom_call.1} parent=0 // loop_footer
    %s17 = sadd.s32 1, %s13
  $region7: #{tpu_custom_call.1} parent=0 // loop_footer_branch
    %12 = sbr.rel target = $region3
  $region8: #{tpu_custom_call.1} parent=0 // loop_exit
    _

</llo_original>
